<compile_context>
chip_gen: v5e
topology: v5e:2x2
jax: 0.10.0
libtpu: 0.0.40
codegen_flags: <defaults>
</compile_context>

<pallas_src>
import functools

import numpy as np
import jax
import jax.numpy as jnp
from jax import lax
from jax.experimental import pallas as pl
from jax.experimental.pallas import tpu as pltpu

BN_EPS = 1e-3


def _round_up(x, m):
    return ((x + m - 1) // m) * m


def _vmem_limit():
    """Generation-aware VMEM budget (v5e/v6e: 128 MiB, v7x: 64 MiB per core)."""
    try:
        cap = int(pltpu.get_tpu_info().vmem_capacity_bytes)
    except Exception:
        cap = 64 * 1024 * 1024
    return max(32 * 1024 * 1024, min(int(cap * 0.7), 100 * 1024 * 1024))


# ------------- kernel 1: fused 1x1x1 reduce convs -> padded halo layout -------

def _reduce_to_halo_kernel(x_ref, w_ref, scale_ref, shift_ref, o_ref,
                           *, H, W, Wp):
    """relu(bn(x @ w)) for one (n, t) plane, stored into zero-padded halo rows."""
    t = pl.program_id(1)
    nt = pl.num_programs(1)                      # = T + 2

    # Zero the whole padded plane: covers the two temporal halo planes and the
    # spatial padding rows / columns of interior planes.
    o_ref[...] = jnp.zeros_like(o_ref)

    @pl.when(jnp.logical_and(t >= 1, t <= nt - 2))
    def _():
        y = jnp.dot(x_ref[...], w_ref[...], preferred_element_type=jnp.float32)
        y = jnp.maximum(y * scale_ref[...] + shift_ref[...], 0.0)
        y = y.astype(o_ref.dtype)
        for h in range(H):                       # static sublane-offset stores
            r0 = (h + 1) * Wp + 1
            o_ref[r0:r0 + W, :] = y[h * W:(h + 1) * W, :]


def reduce_to_halo(x4d, wa, sa, fa, *, H, W, Wp, Rp):
    """Fused (b1a || b2a) pointwise convs, output in padded halo layout (bf16)."""
    N, T, HW, Cin = x4d.shape
    Coutp = wa.shape[1]                          # multiple of 128: lane-dense
    kernel = functools.partial(_reduce_to_halo_kernel, H=H, W=W, Wp=Wp)
    return pl.pallas_call(
        kernel,
        out_shape=jax.ShapeDtypeStruct((N, T + 2, Rp, Coutp), jnp.bfloat16),
        grid_spec=pltpu.PrefetchScalarGridSpec(
            num_scalar_prefetch=0,
            grid=(N, T + 2),
            in_specs=[
                pl.BlockSpec(
                    (None, None, HW, Cin),
                    lambda n, t: (n, jnp.maximum(jnp.minimum(t - 1, T - 1), 0),
                                  0, 0)),
                pl.BlockSpec((Cin, Coutp), lambda n, t: (0, 0)),
                pl.BlockSpec((1, Coutp), lambda n, t: (0, 0)),
                pl.BlockSpec((1, Coutp), lambda n, t: (0, 0)),
            ],
            out_specs=pl.BlockSpec((None, None, Rp, Coutp),
                                   lambda n, t: (n, t, 0, 0)),
        ),
        compiler_params=pltpu.CompilerParams(
            dimension_semantics=("parallel", "parallel"),
            vmem_limit_bytes=_vmem_limit()),
    )(x4d, wa, sa, fa)


# ------------------- kernel 2: fused spatial inception stage ------------------

def _spatial_kernel(x0, x1, x2, u0, u1, u2,
                    w0_ref, w1_ref, w2_ref, w3_ref, scale_ref, shift_ref,
                    o_ref, *, H, Wp, C1p):
    R = H * Wp                  # output rows per plane (incl. dead pad columns)
    L2 = (H + 2) * Wp           # rows of the kw-reduced pool intermediate

    xp0, xp1, xp2 = x0[...], x1[...], x2[...]          # (Rp, Cin) bf16

    # branch 0: 1x1x1 conv on the centre tap only.
    xc = xp1[Wp + 1:Wp + 1 + R, :]
    y0 = jnp.dot(xc, w0_ref[...], preferred_element_type=jnp.float32)

    # branch 3: separable zero-padded 3x3x3 max-pool (T planes -> kw shifts ->
    # kh*Wp shifts; 6 vmax passes), then 1x1x1 conv.
    mt = jnp.maximum(jnp.maximum(xp0, xp1), xp2)
    mw = jnp.maximum(jnp.maximum(mt[0:L2, :], mt[1:L2 + 1, :]), mt[2:L2 + 2, :])
    mp = jnp.maximum(jnp.maximum(mw[0:R, :], mw[Wp:Wp + R, :]),
                     mw[2 * Wp:2 * Wp + R, :])
    y3 = jnp.dot(mp, w3_ref[...], preferred_element_type=jnp.float32)

    # branches 1/2: each 3x3x3 conv as ONE big-K matmul over 27 bf16 taps
    # (taps stay bf16: no f32 upcast, half the VMEM of the previous version).
    def taps(p0, p1, p2):
        planes = (p0, p1, p2)
        return jnp.concatenate(
            [planes[kt][kh * Wp + kw:kh * Wp + kw + R, :]
             for kt in range(3) for kh in range(3) for kw in range(3)],
            axis=-1)

    up0, up1, up2 = u0[...], u1[...], u2[...]          # (Rp, C1p + C3p) bf16
    y1 = jnp.dot(taps(up0[:, :C1p], up1[:, :C1p], up2[:, :C1p]),
                 w1_ref[...], preferred_element_type=jnp.float32)
    y2 = jnp.dot(taps(up0[:, C1p:], up1[:, C1p:], up2[:, C1p:]),
                 w2_ref[...], preferred_element_type=jnp.float32)

    # per-branch folded BatchNorm (inference) + ReLU, slice-stored into one
    # output block: no concat copy, no (R, Ctot) f32 intermediate.
    sc, sh = scale_ref[...], shift_ref[...]
    c = 0
    for y in (y0, y1, y2, y3):
        cw = y.shape[-1]
        z = jnp.maximum(y * sc[:, c:c + cw] + sh[:, c:c + cw], 0.0)
        o_ref[:, c:c + cw] = z.astype(o_ref.dtype)
        c += cw


def inception_spatial(x_halo, u_halo, p, *, H, W, Wp):
    N, Tp, Rp, Cin = x_halo.shape
    T = Tp - 2
    Cu = u_halo.shape[-1]
    Ctot = p["scale"].shape[1]
    R_out = H * Wp
    # Static bounds check: the furthest tap (kt=kh=kw=2) of the last output row
    # must stay inside the padded plane buffer (no silent OOB VMEM reads).
    assert 2 * Wp + 2 + R_out <= Rp, (Wp, R_out, Rp)

    kernel = functools.partial(_spatial_kernel, H=H, Wp=Wp, C1p=p["C1p"])

    def plane_specs(C):
        # the same padded array is passed three times; copy k reads plane t+k.
        return [pl.BlockSpec((None, None, Rp, C),
                             lambda n, t, k=k: (n, t + k, 0, 0))
                for k in range(3)]

    def full2d(arr):
        return pl.BlockSpec(arr.shape, lambda n, t: (0, 0))

    in_specs = (plane_specs(Cin) + plane_specs(Cu)
                + [full2d(p["w0"]), full2d(p["w1"]), full2d(p["w2"]),
                   full2d(p["w3"]), full2d(p["scale"]), full2d(p["shift"])])

    return pl.pallas_call(
        kernel,
        out_shape=jax.ShapeDtypeStruct((N, T, R_out, Ctot), jnp.bfloat16),
        grid_spec=pltpu.PrefetchScalarGridSpec(
            num_scalar_prefetch=0,
            grid=(N, T),
            in_specs=in_specs,
            out_specs=pl.BlockSpec((None, None, R_out, Ctot),
                                   lambda n, t: (n, t, 0, 0)),
        ),
        compiler_params=pltpu.CompilerParams(
            dimension_semantics=("parallel", "parallel"),
            vmem_limit_bytes=_vmem_limit()),
    )(x_halo, x_halo, x_halo, u_halo, u_halo, u_halo,
      p["w0"], p["w1"], p["w2"], p["w3"], p["scale"], p["shift"])


# -------------------------------- host glue -----------------------------------

def _pad_flat(a, Wp):
    """(N,T,H,W,C) -> zero-padded, row-flattened (N, T+2, (H+2)*Wp + 2, C).

    Real pixel (t, h, w) lands at row (h+1)*Wp + (w+1) of plane t+1; the +2 row
    slack covers the furthest (kt=kh=kw=2) tap of the last output row.
    """
    N, T, H, W, C = a.shape
    ap = jnp.pad(a, ((0, 0), (1, 1), (1, 1), (1, Wp - W - 1), (0, 0)))
    ap = ap.reshape(N, T + 2, (H + 2) * Wp, C)
    return jnp.pad(ap, ((0, 0), (0, 0), (0, 2), (0, 0)))


def _pack_params(params):
    w0, s0, f0 = params["b0"]
    w1a, s1a, f1a = params["b1a"]
    w1b, s1b, f1b = params["b1b"]
    w2a, s2a, f2a = params["b2a"]
    w2b, s2b, f2b = params["b2b"]
    w3b, s3b, f3b = params["b3b"]
    Cin, C1 = w1a.shape
    C3 = w2a.shape[1]
    # pad each reduce width to a lane-register multiple: lane-dense pointwise
    # stores + lane-aligned u1/u2 split and tap concatenation downstream.
    C1p, C3p = _round_up(C1, 128), _round_up(C3, 128)

    wa = jnp.zeros((Cin, C1p + C3p), jnp.float32)
    wa = wa.at[:, :C1].set(w1a).at[:, C1p:C1p + C3].set(w2a)
    sa = jnp.zeros((1, C1p + C3p), jnp.float32)
    sa = sa.at[:, :C1].set(s1a).at[:, C1p:C1p + C3].set(s2a)
    fa = jnp.zeros((1, C1p + C3p), jnp.float32)
    fa = fa.at[:, :C1].set(f1a).at[:, C1p:C1p + C3].set(f2a)

    # 3x3x3 kernels: pad Cin to the lane-padded width (zero rows for the pad
    # channels) and reshape to (27*Cinp, Cout) -> single big-K matmul per tap
    # order (kt, kh, kw, cin) matching the kernel's concatenation order.
    w1 = jnp.pad(w1b, ((0, 0), (0, 0), (0, 0), (0, C1p - C1), (0, 0)))
    w2 = jnp.pad(w2b, ((0, 0), (0, 0), (0, 0), (0, C3p - C3), (0, 0)))

    return {
        "C1p": C1p,
        "wa": wa.astype(jnp.bfloat16), "sa": sa, "fa": fa,
        "w0": w0.astype(jnp.bfloat16),
        "w1": w1.reshape(27 * C1p, -1).astype(jnp.bfloat16),
        "w2": w2.reshape(27 * C3p, -1).astype(jnp.bfloat16),
        "w3": w3b.astype(jnp.bfloat16),
        "scale": jnp.concatenate([s0, s1b, s2b, s3b], axis=1),
        "shift": jnp.concatenate([f0, f1b, f2b, f3b], axis=1),
    }


def inception_forward(x_ncdhw, params):
    N, Cin, T, H, W = x_ncdhw.shape
    p = _pack_params(params)
    Wp = _round_up(W + 2, 8)            # sublane-aligned row pitch
    Rp = (H + 2) * Wp + 2               # rows per padded plane (+2 tap slack)

    x_nd = jnp.transpose(x_ncdhw, (0, 2, 3, 4, 1)).astype(jnp.bfloat16)  # NDHWC

    # stage 1: fused (b1a || b2a) 1x1x1 reduce convs, written straight into the
    # zero-padded halo layout (no host pad/reshape/channel-split round trips).
    u_halo = reduce_to_halo(x_nd.reshape(N, T, H * W, Cin),
                            p["wa"], p["sa"], p["fa"], H=H, W=W, Wp=Wp, Rp=Rp)

    # x in the same halo layout for b0 / max-pool / b3.
    x_halo = _pad_flat(x_nd, Wp)

    # stage 2: single fused spatial kernel (b0, b1b, b2b, pool+b3b) -> one
    # lane-contiguous bf16 output block per (n, t).
    out_flat = inception_spatial(x_halo, u_halo, p, H=H, W=W, Wp=Wp)

    Ctot = out_flat.shape[-1]
    # columns w >= W of each row group are computed from padding reads and are
    # garbage by construction; they MUST be sliced off here.
    out = out_flat.reshape(N, T, H, Wp, Ctot)[:, :, :, :W, :]
    return jnp.transpose(out, (0, 4, 1, 2, 3)).astype(jnp.float32)   # NCDHW f32


# ---------------------------- parameter construction ---------------------------

def make_unit3d_params(key, cin, cout, ksize):
    kw_, kg, kb, km, kv = jax.random.split(key, 5)
    if ksize == 1:
        w = 0.1 * jax.random.normal(kw_, (cin, cout), jnp.float32)
    else:
        w = 0.05 * jax.random.normal(kw_, (3, 3, 3, cin, cout), jnp.float32)
    gamma = 1.0 + 0.1 * jax.random.normal(kg, (cout,), jnp.float32)
    beta = 0.1 * jax.random.normal(kb, (cout,), jnp.float32)
    rmean = 0.1 * jax.random.normal(km, (cout,), jnp.float32)
    rvar = 1.0 + 0.1 * jax.random.uniform(kv, (cout,), jnp.float32)
    scale = gamma / jnp.sqrt(rvar + BN_EPS)
    shift = beta - rmean * scale
    return w, scale.reshape(1, cout), shift.reshape(1, cout)


def init_inception_params(key, in_channels, out_channels):
    keys = jax.random.split(key, 6)
    return {
        "b0":  make_unit3d_params(keys[0], in_channels,     out_channels[0], 1),
        "b1a": make_unit3d_params(keys[1], in_channels,     out_channels[1], 1),
        "b1b": make_unit3d_params(keys[2], out_channels[1], out_channels[2], 3),
        "b2a": make_unit3d_params(keys[3], in_channels,     out_channels[3], 1),
        "b2b": make_unit3d_params(keys[4], out_channels[3], out_channels[4], 3),
        "b3b": make_unit3d_params(keys[5], in_channels,     out_channels[5], 1),
    }


# ------------------------ pure-JAX f32 reference (no Pallas) -------------------

def _ref_bn_relu(y, scale, shift):
    y = y * scale.reshape(1, -1, 1, 1, 1) + shift.reshape(1, -1, 1, 1, 1)
    return jnp.maximum(y, 0.0)


def _ref_unit3d_1x1(x, w, scale, shift):
    Cin, Cout = w.shape
    wk = jnp.transpose(w, (1, 0)).reshape(Cout, Cin, 1, 1, 1)
    y = lax.conv_general_dilated(
        x, wk, (1, 1, 1), [(0, 0)] * 3,
        dimension_numbers=("NCDHW", "OIDHW", "NCDHW"))
    return _ref_bn_relu(y, scale, shift)


def _ref_unit3d_3x3(x, w, scale, shift):
    wk = jnp.transpose(w, (4, 3, 0, 1, 2))        # (Cout, Cin, kt, kh, kw)
    y = lax.conv_general_dilated(
        x, wk, (1, 1, 1), [(1, 1)] * 3,
        dimension_numbers=("NCDHW", "OIDHW", "NCDHW"))
    return _ref_bn_relu(y, scale, shift)


def _ref_maxpool_same(x):
    xp = jnp.pad(x, ((0, 0), (0, 0), (1, 1), (1, 1), (1, 1)))   # zero pad (F.pad)
    return lax.reduce_window(
        xp, -jnp.inf, lax.max, (1, 1, 3, 3, 3), (1, 1, 1, 1, 1), "VALID")


def ref_forward(x, params):
    b0 = _ref_unit3d_1x1(x, *params["b0"])
    b1 = _ref_unit3d_3x3(_ref_unit3d_1x1(x, *params["b1a"]), *params["b1b"])
    b2 = _ref_unit3d_3x3(_ref_unit3d_1x1(x, *params["b2a"]), *params["b2b"])
    b3 = _ref_unit3d_1x1(_ref_maxpool_same(x), *params["b3b"])
    return jnp.concatenate([b0, b1, b2, b3], axis=1)


# ----------------------------------- main --------------------------------------

if __name__ == "__main__":
    key = jax.random.PRNGKey(0)
    k_x, k_p = jax.random.split(key)

    N, Cin, T, H, W = 2, 8, 4, 8, 8
    out_channels = (16, 8, 16, 8, 16, 16)

    x = jax.random.normal(k_x, (N, Cin, T, H, W), jnp.float32)
    params = init_inception_params(k_p, Cin, out_channels)

    fwd = jax.jit(inception_forward)
    out = jax.block_until_ready(fwd(x, params))

    expected_c = (out_channels[0] + out_channels[2]
                  + out_channels[4] + out_channels[5])
    assert out.shape == (N, expected_c, T, H, W), out.shape

    ref = jax.block_until_ready(ref_forward(x, params))
    max_err = float(np.max(np.abs(np.asarray(out) - np.asarray(ref))))
    assert np.allclose(np.asarray(out), np.asarray(ref),
                       rtol=2e-2, atol=2e-2), max_err

    print("KERNEL_OK")
</pallas_src>

<mosaic_0001>
module attributes {stable_mosaic.version = 11 : i64} {
  func.func @_reduce_to_halo_kernel(%arg0: i32, %arg1: i32, %arg2: memref<1x1x64x8xbf16, #tpu.memory_space<vmem>>, %arg3: memref<8x256xbf16, #tpu.memory_space<vmem>>, %arg4: memref<1x256xf32, #tpu.memory_space<vmem>>, %arg5: memref<1x256xf32, #tpu.memory_space<vmem>>, %arg6: memref<1x1x162x256xbf16, #tpu.memory_space<vmem>>) attributes {dimension_semantics = [#tpu.dimension_semantics<parallel>, #tpu.dimension_semantics<parallel>], iteration_bounds = array<i64: 2, 6>, scalar_prefetch = 0 : i64, scratch_operands = 0 : i64, tpu.core_type = #tpu.core_type<tc>, window_params = [{transform_indices = @transform_0, window_bounds = array<i64: 1, 1, 64, 8>}, {pipeline_mode = #tpu.pipeline_mode<synchronous>, transform_indices = @transform_1, window_bounds = array<i64: 8, 256>}, {pipeline_mode = #tpu.pipeline_mode<synchronous>, transform_indices = @transform_2, window_bounds = array<i64: 1, 256>}, {pipeline_mode = #tpu.pipeline_mode<synchronous>, transform_indices = @transform_3, window_bounds = array<i64: 1, 256>}, {transform_indices = @transform_4, window_bounds = array<i64: 1, 1, 162, 256>}]} {
    %cst = arith.constant 0.000000e+00 : bf16
    %0 = vector.broadcast %cst : bf16 to vector<162x256xbf16>
    %c0 = arith.constant 0 : index
    %c0_0 = arith.constant 0 : index
    %c0_1 = arith.constant 0 : index
    %c0_2 = arith.constant 0 : index
    %1 = vector.load %arg6[%c0, %c0_0, %c0_1, %c0_2] : memref<1x1x162x256xbf16, #tpu.memory_space<vmem>>, vector<1x1x162x256xbf16>
    %2 = vector.shape_cast %1 : vector<1x1x162x256xbf16> to vector<162x256xbf16>
    %3 = vector.shape_cast %0 : vector<162x256xbf16> to vector<1x1x162x256xbf16>
    tpu.vector_store %arg6[%c0, %c0_0, %c0_1, %c0_2], %3 {strides = array<i32>} : memref<1x1x162x256xbf16, #tpu.memory_space<vmem>>, vector<1x1x162x256xbf16>,
    %c1_i32 = arith.constant 1 : i32
    %4 = arith.cmpi sge, %arg1, %c1_i32 : i32
    %c4_i32 = arith.constant 4 : i32
    %5 = arith.cmpi sle, %arg1, %c4_i32 : i32
    %6 = arith.andi %4, %5 : i1
    %7 = arith.extui %6 : i1 to i32
    %c0_i32 = arith.constant 0 : i32
    %8 = arith.cmpi ne, %7, %c0_i32 : i32
    scf.if %8 {
      %c0_3 = arith.constant 0 : index
      %c0_4 = arith.constant 0 : index
      %c0_5 = arith.constant 0 : index
      %c0_6 = arith.constant 0 : index
      %9 = vector.load %arg2[%c0_3, %c0_4, %c0_5, %c0_6] : memref<1x1x64x8xbf16, #tpu.memory_space<vmem>>, vector<1x1x64x8xbf16>
      %10 = vector.shape_cast %9 : vector<1x1x64x8xbf16> to vector<64x8xbf16>
      %c0_7 = arith.constant 0 : index
      %c0_8 = arith.constant 0 : index
      %11 = vector.load %arg3[%c0_7, %c0_8] : memref<8x256xbf16, #tpu.memory_space<vmem>>, vector<8x256xbf16>
      %cst_9 = arith.constant dense<0.000000e+00> : vector<64x256xf32>
      %12 = tpu.matmul %10, %11, %cst_9 {dimension_numbers = #tpu.dot_dimension_numbers<[1], [0], [0], [1], [0, 0, 1, 1], [], []>} : vector<64x8xbf16>, vector<8x256xbf16>, vector<64x256xf32> -> vector<64x256xf32>
      %c0_10 = arith.constant 0 : index
      %c0_11 = arith.constant 0 : index
      %13 = vector.load %arg4[%c0_10, %c0_11] : memref<1x256xf32, #tpu.memory_space<vmem>>, vector<1x256xf32>
      %14 = vector.broadcast %13 : vector<1x256xf32> to vector<64x256xf32>
      %15 = arith.mulf %12, %14 : vector<64x256xf32>
      %c0_12 = arith.constant 0 : index
      %c0_13 = arith.constant 0 : index
      %16 = vector.load %arg5[%c0_12, %c0_13] : memref<1x256xf32, #tpu.memory_space<vmem>>, vector<1x256xf32>
      %17 = vector.broadcast %16 : vector<1x256xf32> to vector<64x256xf32>
      %18 = arith.addf %15, %17 : vector<64x256xf32>
      %cst_14 = arith.constant 0.000000e+00 : f32
      %19 = vector.broadcast %cst_14 : f32 to vector<64x256xf32>
      %20 = arith.maximumf %18, %19 : vector<64x256xf32>
      %21 = arith.truncf %20 : vector<64x256xf32> to vector<64x256xbf16>
      %22 = vector.extract_strided_slice %21 {offsets = [0, 0], sizes = [8, 256], strides = [1, 1]} : vector<64x256xbf16> to vector<8x256xbf16>
      %c0_15 = arith.constant 0 : index
      %c0_16 = arith.constant 0 : index
      %c17 = arith.constant 17 : index
      %c0_17 = arith.constant 0 : index
      %23 = vector.load %arg6[%c0_15, %c0_16, %c17, %c0_17] : memref<1x1x162x256xbf16, #tpu.memory_space<vmem>>, vector<1x1x8x256xbf16>
      %24 = vector.shape_cast %23 : vector<1x1x8x256xbf16> to vector<8x256xbf16>
      %25 = vector.shape_cast %22 : vector<8x256xbf16> to vector<1x1x8x256xbf16>
      tpu.vector_store %arg6[%c0_15, %c0_16, %c17, %c0_17], %25 {strides = array<i32>} : memref<1x1x162x256xbf16, #tpu.memory_space<vmem>>, vector<1x1x8x256xbf16>,
      %26 = vector.extract_strided_slice %21 {offsets = [8, 0], sizes = [8, 256], strides = [1, 1]} : vector<64x256xbf16> to vector<8x256xbf16>
      %c0_18 = arith.constant 0 : index
      %c0_19 = arith.constant 0 : index
      %c33 = arith.constant 33 : index
      %c0_20 = arith.constant 0 : index
      %27 = vector.load %arg6[%c0_18, %c0_19, %c33, %c0_20] : memref<1x1x162x256xbf16, #tpu.memory_space<vmem>>, vector<1x1x8x256xbf16>
      %28 = vector.shape_cast %27 : vector<1x1x8x256xbf16> to vector<8x256xbf16>
      %29 = vector.shape_cast %26 : vector<8x256xbf16> to vector<1x1x8x256xbf16>
      tpu.vector_store %arg6[%c0_18, %c0_19, %c33, %c0_20], %29 {strides = array<i32>} : memref<1x1x162x256xbf16, #tpu.memory_space<vmem>>, vector<1x1x8x256xbf16>,
      %30 = vector.extract_strided_slice %21 {offsets = [16, 0], sizes = [8, 256], strides = [1, 1]} : vector<64x256xbf16> to vector<8x256xbf16>
      %c0_21 = arith.constant 0 : index
      %c0_22 = arith.constant 0 : index
      %c49 = arith.constant 49 : index
      %c0_23 = arith.constant 0 : index
      %31 = vector.load %arg6[%c0_21, %c0_22, %c49, %c0_23] : memref<1x1x162x256xbf16, #tpu.memory_space<vmem>>, vector<1x1x8x256xbf16>
      %32 = vector.shape_cast %31 : vector<1x1x8x256xbf16> to vector<8x256xbf16>
      %33 = vector.shape_cast %30 : vector<8x256xbf16> to vector<1x1x8x256xbf16>
      tpu.vector_store %arg6[%c0_21, %c0_22, %c49, %c0_23], %33 {strides = array<i32>} : memref<1x1x162x256xbf16, #tpu.memory_space<vmem>>, vector<1x1x8x256xbf16>,
      %34 = vector.extract_strided_slice %21 {offsets = [24, 0], sizes = [8, 256], strides = [1, 1]} : vector<64x256xbf16> to vector<8x256xbf16>
      %c0_24 = arith.constant 0 : index
      %c0_25 = arith.constant 0 : index
      %c65 = arith.constant 65 : index
      %c0_26 = arith.constant 0 : index
      %35 = vector.load %arg6[%c0_24, %c0_25, %c65, %c0_26] : memref<1x1x162x256xbf16, #tpu.memory_space<vmem>>, vector<1x1x8x256xbf16>
      %36 = vector.shape_cast %35 : vector<1x1x8x256xbf16> to vector<8x256xbf16>
      %37 = vector.shape_cast %34 : vector<8x256xbf16> to vector<1x1x8x256xbf16>
      tpu.vector_store %arg6[%c0_24, %c0_25, %c65, %c0_26], %37 {strides = array<i32>} : memref<1x1x162x256xbf16, #tpu.memory_space<vmem>>, vector<1x1x8x256xbf16>,
      %38 = vector.extract_strided_slice %21 {offsets = [32, 0], sizes = [8, 256], strides = [1, 1]} : vector<64x256xbf16> to vector<8x256xbf16>
      %c0_27 = arith.constant 0 : index
      %c0_28 = arith.constant 0 : index
      %c81 = arith.constant 81 : index
      %c0_29 = arith.constant 0 : index
      %39 = vector.load %arg6[%c0_27, %c0_28, %c81, %c0_29] : memref<1x1x162x256xbf16, #tpu.memory_space<vmem>>, vector<1x1x8x256xbf16>
      %40 = vector.shape_cast %39 : vector<1x1x8x256xbf16> to vector<8x256xbf16>
      %41 = vector.shape_cast %38 : vector<8x256xbf16> to vector<1x1x8x256xbf16>
      tpu.vector_store %arg6[%c0_27, %c0_28, %c81, %c0_29], %41 {strides = array<i32>} : memref<1x1x162x256xbf16, #tpu.memory_space<vmem>>, vector<1x1x8x256xbf16>,
      %42 = vector.extract_strided_slice %21 {offsets = [40, 0], sizes = [8, 256], strides = [1, 1]} : vector<64x256xbf16> to vector<8x256xbf16>
      %c0_30 = arith.constant 0 : index
      %c0_31 = arith.constant 0 : index
      %c97 = arith.constant 97 : index
      %c0_32 = arith.constant 0 : index
      %43 = vector.load %arg6[%c0_30, %c0_31, %c97, %c0_32] : memref<1x1x162x256xbf16, #tpu.memory_space<vmem>>, vector<1x1x8x256xbf16>
      %44 = vector.shape_cast %43 : vector<1x1x8x256xbf16> to vector<8x256xbf16>
      %45 = vector.shape_cast %42 : vector<8x256xbf16> to vector<1x1x8x256xbf16>
      tpu.vector_store %arg6[%c0_30, %c0_31, %c97, %c0_32], %45 {strides = array<i32>} : memref<1x1x162x256xbf16, #tpu.memory_space<vmem>>, vector<1x1x8x256xbf16>,
      %46 = vector.extract_strided_slice %21 {offsets = [48, 0], sizes = [8, 256], strides = [1, 1]} : vector<64x256xbf16> to vector<8x256xbf16>
      %c0_33 = arith.constant 0 : index
      %c0_34 = arith.constant 0 : index
      %c113 = arith.constant 113 : index
      %c0_35 = arith.constant 0 : index
      %47 = vector.load %arg6[%c0_33, %c0_34, %c113, %c0_35] : memref<1x1x162x256xbf16, #tpu.memory_space<vmem>>, vector<1x1x8x256xbf16>
      %48 = vector.shape_cast %47 : vector<1x1x8x256xbf16> to vector<8x256xbf16>
      %49 = vector.shape_cast %46 : vector<8x256xbf16> to vector<1x1x8x256xbf16>
      tpu.vector_store %arg6[%c0_33, %c0_34, %c113, %c0_35], %49 {strides = array<i32>} : memref<1x1x162x256xbf16, #tpu.memory_space<vmem>>, vector<1x1x8x256xbf16>,
      %50 = vector.extract_strided_slice %21 {offsets = [56, 0], sizes = [8, 256], strides = [1, 1]} : vector<64x256xbf16> to vector<8x256xbf16>
      %c0_36 = arith.constant 0 : index
      %c0_37 = arith.constant 0 : index
      %c129 = arith.constant 129 : index
      %c0_38 = arith.constant 0 : index
      %51 = vector.load %arg6[%c0_36, %c0_37, %c129, %c0_38] : memref<1x1x162x256xbf16, #tpu.memory_space<vmem>>, vector<1x1x8x256xbf16>
      %52 = vector.shape_cast %51 : vector<1x1x8x256xbf16> to vector<8x256xbf16>
      %53 = vector.shape_cast %50 : vector<8x256xbf16> to vector<1x1x8x256xbf16>
      tpu.vector_store %arg6[%c0_36, %c0_37, %c129, %c0_38], %53 {strides = array<i32>} : memref<1x1x162x256xbf16, #tpu.memory_space<vmem>>, vector<1x1x8x256xbf16>,
    } else {
    }
    return
  }
  func.func @transform_0(%arg0: i32, %arg1: i32) -> (i32, i32, i32, i32) {
    %c1_i32 = arith.constant 1 : i32
    %0 = arith.subi %arg1, %c1_i32 : i32
    %c3_i32 = arith.constant 3 : i32
    %1 = arith.minsi %0, %c3_i32 : i32
    %c0_i32 = arith.constant 0 : i32
    %2 = arith.maxsi %1, %c0_i32 : i32
    %c0_i32_0 = arith.constant 0 : i32
    %c0_i32_1 = arith.constant 0 : i32
    %c0_i32_2 = arith.constant 0 : i32
    return %arg0, %2, %c0_i32_0, %c0_i32_1 : i32, i32, i32, i32
  }
  func.func @transform_1(%arg0: i32, %arg1: i32) -> (i32, i32) {
    %c0_i32 = arith.constant 0 : i32
    %c0_i32_0 = arith.constant 0 : i32
    %c0_i32_1 = arith.constant 0 : i32
    return %c0_i32, %c0_i32_0 : i32, i32
  }
  func.func @transform_2(%arg0: i32, %arg1: i32) -> (i32, i32) {
    %c0_i32 = arith.constant 0 : i32
    %c0_i32_0 = arith.constant 0 : i32
    %c0_i32_1 = arith.constant 0 : i32
    return %c0_i32, %c0_i32_0 : i32, i32
  }
  func.func @transform_3(%arg0: i32, %arg1: i32) -> (i32, i32) {
    %c0_i32 = arith.constant 0 : i32
    %c0_i32_0 = arith.constant 0 : i32
    %c0_i32_1 = arith.constant 0 : i32
    return %c0_i32, %c0_i32_0 : i32, i32
  }
  func.func @transform_4(%arg0: i32, %arg1: i32) -> (i32, i32, i32, i32) {
    %c0_i32 = arith.constant 0 : i32
    %c0_i32_0 = arith.constant 0 : i32
    %c0_i32_1 = arith.constant 0 : i32
    return %arg0, %arg1, %c0_i32, %c0_i32_0 : i32, i32, i32, i32
  }
}

module attributes {stable_mosaic.version = 11 : i64} {
  func.func @_spatial_kernel(%arg0: i32, %arg1: i32, %arg2: memref<1x1x162x8xbf16, #tpu.memory_space<vmem>>, %arg3: memref<1x1x162x8xbf16, #tpu.memory_space<vmem>>, %arg4: memref<1x1x162x8xbf16, #tpu.memory_space<vmem>>, %arg5: memref<1x1x162x256xbf16, #tpu.memory_space<vmem>>, %arg6: memref<1x1x162x256xbf16, #tpu.memory_space<vmem>>, %arg7: memref<1x1x162x256xbf16, #tpu.memory_space<vmem>>, %arg8: memref<8x16xbf16, #tpu.memory_space<vmem>>, %arg9: memref<3456x16xbf16, #tpu.memory_space<vmem>>, %arg10: memref<3456x16xbf16, #tpu.memory_space<vmem>>, %arg11: memref<8x16xbf16, #tpu.memory_space<vmem>>, %arg12: memref<1x64xf32, #tpu.memory_space<vmem>>, %arg13: memref<1x64xf32, #tpu.memory_space<vmem>>, %arg14: memref<1x1x128x64xbf16, #tpu.memory_space<vmem>>) attributes {dimension_semantics = [#tpu.dimension_semantics<parallel>, #tpu.dimension_semantics<parallel>], iteration_bounds = array<i64: 2, 4>, scalar_prefetch = 0 : i64, scratch_operands = 0 : i64, tpu.core_type = #tpu.core_type<tc>, window_params = [{transform_indices = @transform_0, window_bounds = array<i64: 1, 1, 162, 8>}, {transform_indices = @transform_1, window_bounds = array<i64: 1, 1, 162, 8>}, {transform_indices = @transform_2, window_bounds = array<i64: 1, 1, 162, 8>}, {transform_indices = @transform_3, window_bounds = array<i64: 1, 1, 162, 256>}, {transform_indices = @transform_4, window_bounds = array<i64: 1, 1, 162, 256>}, {transform_indices = @transform_5, window_bounds = array<i64: 1, 1, 162, 256>}, {pipeline_mode = #tpu.pipeline_mode<synchronous>, transform_indices = @transform_6, window_bounds = array<i64: 8, 16>}, {pipeline_mode = #tpu.pipeline_mode<synchronous>, transform_indices = @transform_7, window_bounds = array<i64: 3456, 16>}, {pipeline_mode = #tpu.pipeline_mode<synchronous>, transform_indices = @transform_8, window_bounds = array<i64: 3456, 16>}, {pipeline_mode = #tpu.pipeline_mode<synchronous>, transform_indices = @transform_9, window_bounds = array<i64: 8, 16>}, {pipeline_mode = #tpu.pipeline_mode<synchronous>, transform_indices = @transform_10, window_bounds = array<i64: 1, 64>}, {pipeline_mode = #tpu.pipeline_mode<synchronous>, transform_indices = @transform_11, window_bounds = array<i64: 1, 64>}, {transform_indices = @transform_12, window_bounds = array<i64: 1, 1, 128, 64>}]} {
    %c0 = arith.constant 0 : index
    %c0_0 = arith.constant 0 : index
    %c0_1 = arith.constant 0 : index
    %c0_2 = arith.constant 0 : index
    %0 = vector.load %arg2[%c0, %c0_0, %c0_1, %c0_2] : memref<1x1x162x8xbf16, #tpu.memory_space<vmem>>, vector<1x1x162x8xbf16>
    %1 = vector.shape_cast %0 : vector<1x1x162x8xbf16> to vector<162x8xbf16>
    %c0_3 = arith.constant 0 : index
    %c0_4 = arith.constant 0 : index
    %c0_5 = arith.constant 0 : index
    %c0_6 = arith.constant 0 : index
    %2 = vector.load %arg3[%c0_3, %c0_4, %c0_5, %c0_6] : memref<1x1x162x8xbf16, #tpu.memory_space<vmem>>, vector<1x1x162x8xbf16>
    %3 = vector.shape_cast %2 : vector<1x1x162x8xbf16> to vector<162x8xbf16>
    %c0_7 = arith.constant 0 : index
    %c0_8 = arith.constant 0 : index
    %c0_9 = arith.constant 0 : index
    %c0_10 = arith.constant 0 : index
    %4 = vector.load %arg4[%c0_7, %c0_8, %c0_9, %c0_10] : memref<1x1x162x8xbf16, #tpu.memory_space<vmem>>, vector<1x1x162x8xbf16>
    %5 = vector.shape_cast %4 : vector<1x1x162x8xbf16> to vector<162x8xbf16>
    %6 = vector.extract_strided_slice %3 {offsets = [17, 0], sizes = [128, 8], strides = [1, 1]} : vector<162x8xbf16> to vector<128x8xbf16>
    %c0_11 = arith.constant 0 : index
    %c0_12 = arith.constant 0 : index
    %7 = vector.load %arg8[%c0_11, %c0_12] : memref<8x16xbf16, #tpu.memory_space<vmem>>, vector<8x16xbf16>
    %cst = arith.constant dense<0.000000e+00> : vector<128x16xf32>
    %8 = tpu.matmul %6, %7, %cst {dimension_numbers = #tpu.dot_dimension_numbers<[1], [0], [0], [1], [0, 0, 1, 1], [], []>} : vector<128x8xbf16>, vector<8x16xbf16>, vector<128x16xf32> -> vector<128x16xf32>
    %9 = arith.maximumf %1, %3 : vector<162x8xbf16>
    %10 = arith.maximumf %9, %5 : vector<162x8xbf16>
    %11 = vector.extract_strided_slice %10 {offsets = [0, 0], sizes = [160, 8], strides = [1, 1]} : vector<162x8xbf16> to vector<160x8xbf16>
    %12 = vector.extract_strided_slice %10 {offsets = [1, 0], sizes = [160, 8], strides = [1, 1]} : vector<162x8xbf16> to vector<160x8xbf16>
    %13 = arith.maximumf %11, %12 : vector<160x8xbf16>
    %14 = vector.extract_strided_slice %10 {offsets = [2, 0], sizes = [160, 8], strides = [1, 1]} : vector<162x8xbf16> to vector<160x8xbf16>
    %15 = arith.maximumf %13, %14 : vector<160x8xbf16>
    %16 = vector.extract_strided_slice %15 {offsets = [0, 0], sizes = [128, 8], strides = [1, 1]} : vector<160x8xbf16> to vector<128x8xbf16>
    %17 = vector.extract_strided_slice %15 {offsets = [16, 0], sizes = [128, 8], strides = [1, 1]} : vector<160x8xbf16> to vector<128x8xbf16>
    %18 = arith.maximumf %16, %17 : vector<128x8xbf16>
    %19 = vector.extract_strided_slice %15 {offsets = [32, 0], sizes = [128, 8], strides = [1, 1]} : vector<160x8xbf16> to vector<128x8xbf16>
    %20 = arith.maximumf %18, %19 : vector<128x8xbf16>
    %c0_13 = arith.constant 0 : index
    %c0_14 = arith.constant 0 : index
    %21 = vector.load %arg11[%c0_13, %c0_14] : memref<8x16xbf16, #tpu.memory_space<vmem>>, vector<8x16xbf16>
    %cst_15 = arith.constant dense<0.000000e+00> : vector<128x16xf32>
    %22 = tpu.matmul %20, %21, %cst_15 {dimension_numbers = #tpu.dot_dimension_numbers<[1], [0], [0], [1], [0, 0, 1, 1], [], []>} : vector<128x8xbf16>, vector<8x16xbf16>, vector<128x16xf32> -> vector<128x16xf32>
    %c0_16 = arith.constant 0 : index
    %c0_17 = arith.constant 0 : index
    %c0_18 = arith.constant 0 : index
    %c0_19 = arith.constant 0 : index
    %23 = vector.load %arg5[%c0_16, %c0_17, %c0_18, %c0_19] : memref<1x1x162x256xbf16, #tpu.memory_space<vmem>>, vector<1x1x162x256xbf16>
    %24 = vector.shape_cast %23 : vector<1x1x162x256xbf16> to vector<162x256xbf16>
    %c0_20 = arith.constant 0 : index
    %c0_21 = arith.constant 0 : index
    %c0_22 = arith.constant 0 : index
    %c0_23 = arith.constant 0 : index
    %25 = vector.load %arg6[%c0_20, %c0_21, %c0_22, %c0_23] : memref<1x1x162x256xbf16, #tpu.memory_space<vmem>>, vector<1x1x162x256xbf16>
    %26 = vector.shape_cast %25 : vector<1x1x162x256xbf16> to vector<162x256xbf16>
    %c0_24 = arith.constant 0 : index
    %c0_25 = arith.constant 0 : index
    %c0_26 = arith.constant 0 : index
    %c0_27 = arith.constant 0 : index
    %27 = vector.load %arg7[%c0_24, %c0_25, %c0_26, %c0_27] : memref<1x1x162x256xbf16, #tpu.memory_space<vmem>>, vector<1x1x162x256xbf16>
    %28 = vector.shape_cast %27 : vector<1x1x162x256xbf16> to vector<162x256xbf16>
    %29 = vector.extract_strided_slice %24 {offsets = [0, 0], sizes = [162, 128], strides = [1, 1]} : vector<162x256xbf16> to vector<162x128xbf16>
    %30 = vector.extract_strided_slice %26 {offsets = [0, 0], sizes = [162, 128], strides = [1, 1]} : vector<162x256xbf16> to vector<162x128xbf16>
    %31 = vector.extract_strided_slice %28 {offsets = [0, 0], sizes = [162, 128], strides = [1, 1]} : vector<162x256xbf16> to vector<162x128xbf16>
    %32 = vector.extract_strided_slice %29 {offsets = [0, 0], sizes = [128, 128], strides = [1, 1]} : vector<162x128xbf16> to vector<128x128xbf16>
    %33 = vector.extract_strided_slice %29 {offsets = [1, 0], sizes = [128, 128], strides = [1, 1]} : vector<162x128xbf16> to vector<128x128xbf16>
    %34 = vector.extract_strided_slice %29 {offsets = [2, 0], sizes = [128, 128], strides = [1, 1]} : vector<162x128xbf16> to vector<128x128xbf16>
    %35 = vector.extract_strided_slice %29 {offsets = [16, 0], sizes = [128, 128], strides = [1, 1]} : vector<162x128xbf16> to vector<128x128xbf16>
    %36 = vector.extract_strided_slice %29 {offsets = [17, 0], sizes = [128, 128], strides = [1, 1]} : vector<162x128xbf16> to vector<128x128xbf16>
    %37 = vector.extract_strided_slice %29 {offsets = [18, 0], sizes = [128, 128], strides = [1, 1]} : vector<162x128xbf16> to vector<128x128xbf16>
    %38 = vector.extract_strided_slice %29 {offsets = [32, 0], sizes = [128, 128], strides = [1, 1]} : vector<162x128xbf16> to vector<128x128xbf16>
    %39 = vector.extract_strided_slice %29 {offsets = [33, 0], sizes = [128, 128], strides = [1, 1]} : vector<162x128xbf16> to vector<128x128xbf16>
    %40 = vector.extract_strided_slice %29 {offsets = [34, 0], sizes = [128, 128], strides = [1, 1]} : vector<162x128xbf16> to vector<128x128xbf16>
    %41 = vector.extract_strided_slice %30 {offsets = [0, 0], sizes = [128, 128], strides = [1, 1]} : vector<162x128xbf16> to vector<128x128xbf16>
    %42 = vector.extract_strided_slice %30 {offsets = [1, 0], sizes = [128, 128], strides = [1, 1]} : vector<162x128xbf16> to vector<128x128xbf16>
    %43 = vector.extract_strided_slice %30 {offsets = [2, 0], sizes = [128, 128], strides = [1, 1]} : vector<162x128xbf16> to vector<128x128xbf16>
    %44 = vector.extract_strided_slice %30 {offsets = [16, 0], sizes = [128, 128], strides = [1, 1]} : vector<162x128xbf16> to vector<128x128xbf16>
    %45 = vector.extract_strided_slice %30 {offsets = [17, 0], sizes = [128, 128], strides = [1, 1]} : vector<162x128xbf16> to vector<128x128xbf16>
    %46 = vector.extract_strided_slice %30 {offsets = [18, 0], sizes = [128, 128], strides = [1, 1]} : vector<162x128xbf16> to vector<128x128xbf16>
    %47 = vector.extract_strided_slice %30 {offsets = [32, 0], sizes = [128, 128], strides = [1, 1]} : vector<162x128xbf16> to vector<128x128xbf16>
    %48 = vector.extract_strided_slice %30 {offsets = [33, 0], sizes = [128, 128], strides = [1, 1]} : vector<162x128xbf16> to vector<128x128xbf16>
    %49 = vector.extract_strided_slice %30 {offsets = [34, 0], sizes = [128, 128], strides = [1, 1]} : vector<162x128xbf16> to vector<128x128xbf16>
    %50 = vector.extract_strided_slice %31 {offsets = [0, 0], sizes = [128, 128], strides = [1, 1]} : vector<162x128xbf16> to vector<128x128xbf16>
    %51 = vector.extract_strided_slice %31 {offsets = [1, 0], sizes = [128, 128], strides = [1, 1]} : vector<162x128xbf16> to vector<128x128xbf16>
    %52 = vector.extract_strided_slice %31 {offsets = [2, 0], sizes = [128, 128], strides = [1, 1]} : vector<162x128xbf16> to vector<128x128xbf16>
    %53 = vector.extract_strided_slice %31 {offsets = [16, 0], sizes = [128, 128], strides = [1, 1]} : vector<162x128xbf16> to vector<128x128xbf16>
    %54 = vector.extract_strided_slice %31 {offsets = [17, 0], sizes = [128, 128], strides = [1, 1]} : vector<162x128xbf16> to vector<128x128xbf16>
    %55 = vector.extract_strided_slice %31 {offsets = [18, 0], sizes = [128, 128], strides = [1, 1]} : vector<162x128xbf16> to vector<128x128xbf16>
    %56 = vector.extract_strided_slice %31 {offsets = [32, 0], sizes = [128, 128], strides = [1, 1]} : vector<162x128xbf16> to vector<128x128xbf16>
    %57 = vector.extract_strided_slice %31 {offsets = [33, 0], sizes = [128, 128], strides = [1, 1]} : vector<162x128xbf16> to vector<128x128xbf16>
    %58 = vector.extract_strided_slice %31 {offsets = [34, 0], sizes = [128, 128], strides = [1, 1]} : vector<162x128xbf16> to vector<128x128xbf16>
    %59 = tpu.concatenate %32, %33, %34, %35, %36, %37, %38, %39, %40, %41, %42, %43, %44, %45, %46, %47 in 1 : vector<128x128xbf16>, vector<128x128xbf16>, vector<128x128xbf16>, vector<128x128xbf16>, vector<128x128xbf16>, vector<128x128xbf16>, vector<128x128xbf16>, vector<128x128xbf16>, vector<128x128xbf16>, vector<128x128xbf16>, vector<128x128xbf16>, vector<128x128xbf16>, vector<128x128xbf16>, vector<128x128xbf16>, vector<128x128xbf16>, vector<128x128xbf16> -> vector<128x2048xbf16>
    %60 = tpu.concatenate %48, %49, %50, %51, %52, %53, %54, %55, %56, %57, %58 in 1 : vector<128x128xbf16>, vector<128x128xbf16>, vector<128x128xbf16>, vector<128x128xbf16>, vector<128x128xbf16>, vector<128x128xbf16>, vector<128x128xbf16>, vector<128x128xbf16>, vector<128x128xbf16>, vector<128x128xbf16>, vector<128x128xbf16> -> vector<128x1408xbf16>
    %61 = tpu.concatenate %59, %60 in 1 : vector<128x2048xbf16>, vector<128x1408xbf16> -> vector<128x3456xbf16>
    %c0_28 = arith.constant 0 : index
    %c0_29 = arith.constant 0 : index
    %62 = vector.load %arg9[%c0_28, %c0_29] : memref<3456x16xbf16, #tpu.memory_space<vmem>>, vector<3456x16xbf16>
    %cst_30 = arith.constant dense<0.000000e+00> : vector<128x16xf32>
    %63 = tpu.matmul %61, %62, %cst_30 {dimension_numbers = #tpu.dot_dimension_numbers<[1], [0], [0], [1], [0, 0, 1, 1], [], []>} : vector<128x3456xbf16>, vector<3456x16xbf16>, vector<128x16xf32> -> vector<128x16xf32>
    %64 = vector.extract_strided_slice %24 {offsets = [0, 128], sizes = [162, 128], strides = [1, 1]} : vector<162x256xbf16> to vector<162x128xbf16>
    %65 = vector.extract_strided_slice %26 {offsets = [0, 128], sizes = [162, 128], strides = [1, 1]} : vector<162x256xbf16> to vector<162x128xbf16>
    %66 = vector.extract_strided_slice %28 {offsets = [0, 128], sizes = [162, 128], strides = [1, 1]} : vector<162x256xbf16> to vector<162x128xbf16>
    %67 = vector.extract_strided_slice %64 {offsets = [0, 0], sizes = [128, 128], strides = [1, 1]} : vector<162x128xbf16> to vector<128x128xbf16>
    %68 = vector.extract_strided_slice %64 {offsets = [1, 0], sizes = [128, 128], strides = [1, 1]} : vector<162x128xbf16> to vector<128x128xbf16>
    %69 = vector.extract_strided_slice %64 {offsets = [2, 0], sizes = [128, 128], strides = [1, 1]} : vector<162x128xbf16> to vector<128x128xbf16>
    %70 = vector.extract_strided_slice %64 {offsets = [16, 0], sizes = [128, 128], strides = [1, 1]} : vector<162x128xbf16> to vector<128x128xbf16>
    %71 = vector.extract_strided_slice %64 {offsets = [17, 0], sizes = [128, 128], strides = [1, 1]} : vector<162x128xbf16> to vector<128x128xbf16>
    %72 = vector.extract_strided_slice %64 {offsets = [18, 0], sizes = [128, 128], strides = [1, 1]} : vector<162x128xbf16> to vector<128x128xbf16>
    %73 = vector.extract_strided_slice %64 {offsets = [32, 0], sizes = [128, 128], strides = [1, 1]} : vector<162x128xbf16> to vector<128x128xbf16>
    %74 = vector.extract_strided_slice %64 {offsets = [33, 0], sizes = [128, 128], strides = [1, 1]} : vector<162x128xbf16> to vector<128x128xbf16>
    %75 = vector.extract_strided_slice %64 {offsets = [34, 0], sizes = [128, 128], strides = [1, 1]} : vector<162x128xbf16> to vector<128x128xbf16>
    %76 = vector.extract_strided_slice %65 {offsets = [0, 0], sizes = [128, 128], strides = [1, 1]} : vector<162x128xbf16> to vector<128x128xbf16>
    %77 = vector.extract_strided_slice %65 {offsets = [1, 0], sizes = [128, 128], strides = [1, 1]} : vector<162x128xbf16> to vector<128x128xbf16>
    %78 = vector.extract_strided_slice %65 {offsets = [2, 0], sizes = [128, 128], strides = [1, 1]} : vector<162x128xbf16> to vector<128x128xbf16>
    %79 = vector.extract_strided_slice %65 {offsets = [16, 0], sizes = [128, 128], strides = [1, 1]} : vector<162x128xbf16> to vector<128x128xbf16>
    %80 = vector.extract_strided_slice %65 {offsets = [17, 0], sizes = [128, 128], strides = [1, 1]} : vector<162x128xbf16> to vector<128x128xbf16>
    %81 = vector.extract_strided_slice %65 {offsets = [18, 0], sizes = [128, 128], strides = [1, 1]} : vector<162x128xbf16> to vector<128x128xbf16>
    %82 = vector.extract_strided_slice %65 {offsets = [32, 0], sizes = [128, 128], strides = [1, 1]} : vector<162x128xbf16> to vector<128x128xbf16>
    %83 = vector.extract_strided_slice %65 {offsets = [33, 0], sizes = [128, 128], strides = [1, 1]} : vector<162x128xbf16> to vector<128x128xbf16>
    %84 = vector.extract_strided_slice %65 {offsets = [34, 0], sizes = [128, 128], strides = [1, 1]} : vector<162x128xbf16> to vector<128x128xbf16>
    %85 = vector.extract_strided_slice %66 {offsets = [0, 0], sizes = [128, 128], strides = [1, 1]} : vector<162x128xbf16> to vector<128x128xbf16>
    %86 = vector.extract_strided_slice %66 {offsets = [1, 0], sizes = [128, 128], strides = [1, 1]} : vector<162x128xbf16> to vector<128x128xbf16>
    %87 = vector.extract_strided_slice %66 {offsets = [2, 0], sizes = [128, 128], strides = [1, 1]} : vector<162x128xbf16> to vector<128x128xbf16>
    %88 = vector.extract_strided_slice %66 {offsets = [16, 0], sizes = [128, 128], strides = [1, 1]} : vector<162x128xbf16> to vector<128x128xbf16>
    %89 = vector.extract_strided_slice %66 {offsets = [17, 0], sizes = [128, 128], strides = [1, 1]} : vector<162x128xbf16> to vector<128x128xbf16>
    %90 = vector.extract_strided_slice %66 {offsets = [18, 0], sizes = [128, 128], strides = [1, 1]} : vector<162x128xbf16> to vector<128x128xbf16>
    %91 = vector.extract_strided_slice %66 {offsets = [32, 0], sizes = [128, 128], strides = [1, 1]} : vector<162x128xbf16> to vector<128x128xbf16>
    %92 = vector.extract_strided_slice %66 {offsets = [33, 0], sizes = [128, 128], strides = [1, 1]} : vector<162x128xbf16> to vector<128x128xbf16>
    %93 = vector.extract_strided_slice %66 {offsets = [34, 0], sizes = [128, 128], strides = [1, 1]} : vector<162x128xbf16> to vector<128x128xbf16>
    %94 = tpu.concatenate %67, %68, %69, %70, %71, %72, %73, %74, %75, %76, %77, %78, %79, %80, %81, %82 in 1 : vector<128x128xbf16>, vector<128x128xbf16>, vector<128x128xbf16>, vector<128x128xbf16>, vector<128x128xbf16>, vector<128x128xbf16>, vector<128x128xbf16>, vector<128x128xbf16>, vector<128x128xbf16>, vector<128x128xbf16>, vector<128x128xbf16>, vector<128x128xbf16>, vector<128x128xbf16>, vector<128x128xbf16>, vector<128x128xbf16>, vector<128x128xbf16> -> vector<128x2048xbf16>
    %95 = tpu.concatenate %83, %84, %85, %86, %87, %88, %89, %90, %91, %92, %93 in 1 : vector<128x128xbf16>, vector<128x128xbf16>, vector<128x128xbf16>, vector<128x128xbf16>, vector<128x128xbf16>, vector<128x128xbf16>, vector<128x128xbf16>, vector<128x128xbf16>, vector<128x128xbf16>, vector<128x128xbf16>, vector<128x128xbf16> -> vector<128x1408xbf16>
    %96 = tpu.concatenate %94, %95 in 1 : vector<128x2048xbf16>, vector<128x1408xbf16> -> vector<128x3456xbf16>
    %c0_31 = arith.constant 0 : index
    %c0_32 = arith.constant 0 : index
    %97 = vector.load %arg10[%c0_31, %c0_32] : memref<3456x16xbf16, #tpu.memory_space<vmem>>, vector<3456x16xbf16>
    %cst_33 = arith.constant dense<0.000000e+00> : vector<128x16xf32>
    %98 = tpu.matmul %96, %97, %cst_33 {dimension_numbers = #tpu.dot_dimension_numbers<[1], [0], [0], [1], [0, 0, 1, 1], [], []>} : vector<128x3456xbf16>, vector<3456x16xbf16>, vector<128x16xf32> -> vector<128x16xf32>
    %c0_34 = arith.constant 0 : index
    %c0_35 = arith.constant 0 : index
    %99 = vector.load %arg12[%c0_34, %c0_35] : memref<1x64xf32, #tpu.memory_space<vmem>>, vector<1x64xf32>
    %c0_36 = arith.constant 0 : index
    %c0_37 = arith.constant 0 : index
    %100 = vector.load %arg13[%c0_36, %c0_37] : memref<1x64xf32, #tpu.memory_space<vmem>>, vector<1x64xf32>
    %101 = vector.extract_strided_slice %99 {offsets = [0, 0], sizes = [1, 16], strides = [1, 1]} : vector<1x64xf32> to vector<1x16xf32>
    %102 = vector.broadcast %101 : vector<1x16xf32> to vector<128x16xf32>
    %103 = arith.mulf %8, %102 : vector<128x16xf32>
    %104 = vector.extract_strided_slice %100 {offsets = [0, 0], sizes = [1, 16], strides = [1, 1]} : vector<1x64xf32> to vector<1x16xf32>
    %105 = vector.broadcast %104 : vector<1x16xf32> to vector<128x16xf32>
    %106 = arith.addf %103, %105 : vector<128x16xf32>
    %cst_38 = arith.constant 0.000000e+00 : f32
    %107 = vector.broadcast %cst_38 : f32 to vector<128x16xf32>
    %108 = arith.maximumf %106, %107 : vector<128x16xf32>
    %109 = arith.truncf %108 : vector<128x16xf32> to vector<128x16xbf16>
    %c0_39 = arith.constant 0 : index
    %c0_40 = arith.constant 0 : index
    %c0_41 = arith.constant 0 : index
    %c0_42 = arith.constant 0 : index
    %110 = vector.load %arg14[%c0_39, %c0_40, %c0_41, %c0_42] : memref<1x1x128x64xbf16, #tpu.memory_space<vmem>>, vector<1x1x128x16xbf16>
    %111 = vector.shape_cast %110 : vector<1x1x128x16xbf16> to vector<128x16xbf16>
    %112 = vector.shape_cast %109 : vector<128x16xbf16> to vector<1x1x128x16xbf16>
    tpu.vector_store %arg14[%c0_39, %c0_40, %c0_41, %c0_42], %112 {strides = array<i32>} : memref<1x1x128x64xbf16, #tpu.memory_space<vmem>>, vector<1x1x128x16xbf16>,
    %113 = vector.extract_strided_slice %99 {offsets = [0, 16], sizes = [1, 16], strides = [1, 1]} : vector<1x64xf32> to vector<1x16xf32>
    %114 = vector.broadcast %113 : vector<1x16xf32> to vector<128x16xf32>
    %115 = arith.mulf %63, %114 : vector<128x16xf32>
    %116 = vector.extract_strided_slice %100 {offsets = [0, 16], sizes = [1, 16], strides = [1, 1]} : vector<1x64xf32> to vector<1x16xf32>
    %117 = vector.broadcast %116 : vector<1x16xf32> to vector<128x16xf32>
    %118 = arith.addf %115, %117 : vector<128x16xf32>
    %cst_43 = arith.constant 0.000000e+00 : f32
    %119 = vector.broadcast %cst_43 : f32 to vector<128x16xf32>
    %120 = arith.maximumf %118, %119 : vector<128x16xf32>
    %121 = arith.truncf %120 : vector<128x16xf32> to vector<128x16xbf16>
    %c0_44 = arith.constant 0 : index
    %c0_45 = arith.constant 0 : index
    %c0_46 = arith.constant 0 : index
    %c16 = arith.constant 16 : index
    %122 = vector.load %arg14[%c0_44, %c0_45, %c0_46, %c16] : memref<1x1x128x64xbf16, #tpu.memory_space<vmem>>, vector<1x1x128x16xbf16>
    %123 = vector.shape_cast %122 : vector<1x1x128x16xbf16> to vector<128x16xbf16>
    %124 = vector.shape_cast %121 : vector<128x16xbf16> to vector<1x1x128x16xbf16>
    tpu.vector_store %arg14[%c0_44, %c0_45, %c0_46, %c16], %124 {strides = array<i32>} : memref<1x1x128x64xbf16, #tpu.memory_space<vmem>>, vector<1x1x128x16xbf16>,
    %125 = vector.extract_strided_slice %99 {offsets = [0, 32], sizes = [1, 16], strides = [1, 1]} : vector<1x64xf32> to vector<1x16xf32>
    %126 = vector.broadcast %125 : vector<1x16xf32> to vector<128x16xf32>
    %127 = arith.mulf %98, %126 : vector<128x16xf32>
    %128 = vector.extract_strided_slice %100 {offsets = [0, 32], sizes = [1, 16], strides = [1, 1]} : vector<1x64xf32> to vector<1x16xf32>
    %129 = vector.broadcast %128 : vector<1x16xf32> to vector<128x16xf32>
    %130 = arith.addf %127, %129 : vector<128x16xf32>
    %cst_47 = arith.constant 0.000000e+00 : f32
    %131 = vector.broadcast %cst_47 : f32 to vector<128x16xf32>
    %132 = arith.maximumf %130, %131 : vector<128x16xf32>
    %133 = arith.truncf %132 : vector<128x16xf32> to vector<128x16xbf16>
    %c0_48 = arith.constant 0 : index
    %c0_49 = arith.constant 0 : index
    %c0_50 = arith.constant 0 : index
    %c32 = arith.constant 32 : index
    %134 = vector.load %arg14[%c0_48, %c0_49, %c0_50, %c32] : memref<1x1x128x64xbf16, #tpu.memory_space<vmem>>, vector<1x1x128x16xbf16>
    %135 = vector.shape_cast %134 : vector<1x1x128x16xbf16> to vector<128x16xbf16>
    %136 = vector.shape_cast %133 : vector<128x16xbf16> to vector<1x1x128x16xbf16>
    tpu.vector_store %arg14[%c0_48, %c0_49, %c0_50, %c32], %136 {strides = array<i32>} : memref<1x1x128x64xbf16, #tpu.memory_space<vmem>>, vector<1x1x128x16xbf16>,
    %137 = vector.extract_strided_slice %99 {offsets = [0, 48], sizes = [1, 16], strides = [1, 1]} : vector<1x64xf32> to vector<1x16xf32>
    %138 = vector.broadcast %137 : vector<1x16xf32> to vector<128x16xf32>
    %139 = arith.mulf %22, %138 : vector<128x16xf32>
    %140 = vector.extract_strided_slice %100 {offsets = [0, 48], sizes = [1, 16], strides = [1, 1]} : vector<1x64xf32> to vector<1x16xf32>
    %141 = vector.broadcast %140 : vector<1x16xf32> to vector<128x16xf32>
    %142 = arith.addf %139, %141 : vector<128x16xf32>
    %cst_51 = arith.constant 0.000000e+00 : f32
    %143 = vector.broadcast %cst_51 : f32 to vector<128x16xf32>
    %144 = arith.maximumf %142, %143 : vector<128x16xf32>
    %145 = arith.truncf %144 : vector<128x16xf32> to vector<128x16xbf16>
    %c0_52 = arith.constant 0 : index
    %c0_53 = arith.constant 0 : index
    %c0_54 = arith.constant 0 : index
    %c48 = arith.constant 48 : index
    %146 = vector.load %arg14[%c0_52, %c0_53, %c0_54, %c48] : memref<1x1x128x64xbf16, #tpu.memory_space<vmem>>, vector<1x1x128x16xbf16>
    %147 = vector.shape_cast %146 : vector<1x1x128x16xbf16> to vector<128x16xbf16>
    %148 = vector.shape_cast %145 : vector<128x16xbf16> to vector<1x1x128x16xbf16>
    tpu.vector_store %arg14[%c0_52, %c0_53, %c0_54, %c48], %148 {strides = array<i32>} : memref<1x1x128x64xbf16, #tpu.memory_space<vmem>>, vector<1x1x128x16xbf16>,
    return
  }
  func.func @transform_0(%arg0: i32, %arg1: i32) -> (i32, i32, i32, i32) {
    %c0_i32 = arith.constant 0 : i32
    %0 = arith.addi %arg1, %c0_i32 : i32
    %c0_i32_0 = arith.constant 0 : i32
    %c0_i32_1 = arith.constant 0 : i32
    %c0_i32_2 = arith.constant 0 : i32
    return %arg0, %0, %c0_i32_0, %c0_i32_1 : i32, i32, i32, i32
  }
  func.func @transform_1(%arg0: i32, %arg1: i32) -> (i32, i32, i32, i32) {
    %c1_i32 = arith.constant 1 : i32
    %0 = arith.addi %arg1, %c1_i32 : i32
    %c0_i32 = arith.constant 0 : i32
    %c0_i32_0 = arith.constant 0 : i32
    %c0_i32_1 = arith.constant 0 : i32
    return %arg0, %0, %c0_i32, %c0_i32_0 : i32, i32, i32, i32
  }
  func.func @transform_2(%arg0: i32, %arg1: i32) -> (i32, i32, i32, i32) {
    %c2_i32 = arith.constant 2 : i32
    %0 = arith.addi %arg1, %c2_i32 : i32
    %c0_i32 = arith.constant 0 : i32
    %c0_i32_0 = arith.constant 0 : i32
    %c0_i32_1 = arith.constant 0 : i32
    return %arg0, %0, %c0_i32, %c0_i32_0 : i32, i32, i32, i32
  }
  func.func @transform_3(%arg0: i32, %arg1: i32) -> (i32, i32, i32, i32) {
    %c0_i32 = arith.constant 0 : i32
    %0 = arith.addi %arg1, %c0_i32 : i32
    %c0_i32_0 = arith.constant 0 : i32
    %c0_i32_1 = arith.constant 0 : i32
    %c0_i32_2 = arith.constant 0 : i32
    return %arg0, %0, %c0_i32_0, %c0_i32_1 : i32, i32, i32, i32
  }
  func.func @transform_4(%arg0: i32, %arg1: i32) -> (i32, i32, i32, i32) {
    %c1_i32 = arith.constant 1 : i32
    %0 = arith.addi %arg1, %c1_i32 : i32
    %c0_i32 = arith.constant 0 : i32
    %c0_i32_0 = arith.constant 0 : i32
    %c0_i32_1 = arith.constant 0 : i32
    return %arg0, %0, %c0_i32, %c0_i32_0 : i32, i32, i32, i32
  }
  func.func @transform_5(%arg0: i32, %arg1: i32) -> (i32, i32, i32, i32) {
    %c2_i32 = arith.constant 2 : i32
    %0 = arith.addi %arg1, %c2_i32 : i32
    %c0_i32 = arith.constant 0 : i32
    %c0_i32_0 = arith.constant 0 : i32
    %c0_i32_1 = arith.constant 0 : i32
    return %arg0, %0, %c0_i32, %c0_i32_0 : i32, i32, i32, i32
  }
  func.func @transform_6(%arg0: i32, %arg1: i32) -> (i32, i32) {
    %c0_i32 = arith.constant 0 : i32
    %c0_i32_0 = arith.constant 0 : i32
    %c0_i32_1 = arith.constant 0 : i32
    return %c0_i32, %c0_i32_0 : i32, i32
  }
  func.func @transform_7(%arg0: i32, %arg1: i32) -> (i32, i32) {
    %c0_i32 = arith.constant 0 : i32
    %c0_i32_0 = arith.constant 0 : i32
    %c0_i32_1 = arith.constant 0 : i32
    return %c0_i32, %c0_i32_0 : i32, i32
  }
  func.func @transform_8(%arg0: i32, %arg1: i32) -> (i32, i32) {
    %c0_i32 = arith.constant 0 : i32
    %c0_i32_0 = arith.constant 0 : i32
    %c0_i32_1 = arith.constant 0 : i32
    return %c0_i32, %c0_i32_0 : i32, i32
  }
  func.func @transform_9(%arg0: i32, %arg1: i32) -> (i32, i32) {
    %c0_i32 = arith.constant 0 : i32
    %c0_i32_0 = arith.constant 0 : i32
    %c0_i32_1 = arith.constant 0 : i32
    return %c0_i32, %c0_i32_0 : i32, i32
  }
  func.func @transform_10(%arg0: i32, %arg1: i32) -> (i32, i32) {
    %c0_i32 = arith.constant 0 : i32
    %c0_i32_0 = arith.constant 0 : i32
    %c0_i32_1 = arith.constant 0 : i32
    return %c0_i32, %c0_i32_0 : i32, i32
  }
  func.func @transform_11(%arg0: i32, %arg1: i32) -> (i32, i32) {
    %c0_i32 = arith.constant 0 : i32
    %c0_i32_0 = arith.constant 0 : i32
    %c0_i32_1 = arith.constant 0 : i32
    return %c0_i32, %c0_i32_0 : i32, i32
  }
  func.func @transform_12(%arg0: i32, %arg1: i32) -> (i32, i32, i32, i32) {
    %c0_i32 = arith.constant 0 : i32
    %c0_i32_0 = arith.constant 0 : i32
    %c0_i32_1 = arith.constant 0 : i32
    return %arg0, %arg1, %c0_i32, %c0_i32_0 : i32, i32, i32, i32
  }
}

</mosaic_0001>

<llo_original>
// kernel: inception_forward.2
$region0: #{inception_forward.2}
  #allocation0 [shape = 'u32[]', space=smem, size = 0x4, offset = 0x4, fixed_abs, tag = 'smem constant byte address 0x4 - core index']
  #allocation1 [shape = 'u32[72,128]{1,0:T(1,128)}', space=vmem, size = 0x9000, scoped, tag = 'internal scratch']
  %s0 = inlined_call_operand.vmem [shape: bf16[2,4,64,8], index: 0, kind: input, shape index: {}]
  %s1 = inlined_call_operand.vmem [shape: bf16[8,256], index: 1, kind: input, shape index: {}]
  %s2 = inlined_call_operand.vmem [shape: f32[1,256], index: 2, kind: input, shape index: {}]
  %s3 = inlined_call_operand.vmem [shape: f32[1,256], index: 3, kind: input, shape index: {}]
  %s4 = inlined_call_operand.vmem [shape: bf16[2,6,162,256], index: 4, kind: output, shape index: {}]
  %s5 = sld [smem:[#allocation0]]
  $region53: #{inception_forward.2} parent=0
    _
  %s7 = ssub.s32 1, %s5
  %s8 = scalar_select 0, %s7, %s5
  loop: start=0, step=1, limit=14
  $region2: #{inception_forward.2} parent=0 // loop_pre_header
    _
  $region3: #{inception_forward.2} parent=0 // loop_header
    %s10 = sphi 0, %s14
    %p11 = scmp.ge.s32.totalorder %s10, 14
    %s17 = sphi 0, %s29
    %s18 = sphi 0, %s25
    %s19 = sphi 0, %s17
    %s20 = sphi 0, %s18
    %s21 = sphi 0, %s19
    %s22 = sphi 0, %s20
    %s44 = sphi 0, %s46
    %s47 = sphi 0, %s44
    %s48 = sphi 0, %s47
    %s64 = sphi 0, %s48
    %s68 = sphi 0, %s68
    %s70 = sphi 0, %s68
    %s71 = sphi 0, %s70
    %s85 = sphi 0, %s71
    %s89 = sphi 0, %s89
    %s91 = sphi 0, %s89
    %s92 = sphi 0, %s91
    %s106 = sphi 0, %s92
    %s110 = sphi 0, %s110
    %s112 = sphi 0, %s110
    %s113 = sphi 0, %s112
    %s127 = sphi 0, %s113
    %s135 = sphi 0, %s137
    %s138 = sphi 0, %s135
    %s139 = sphi 0, %s138
    %s155 = sphi 0, %s139
  $region4: #{inception_forward.2} parent=0 // loop_header_branch
    %13 = sbr.rel (%p11) target = $region8
  $region5: #{inception_forward.2} parent=0 // loop_body
    %s15 = ssub.s32 %s10, 1
    %s16 = ssub.s32 %s10, 2
    %s23 = sadd.s32 1, %s18
    %p24 = scmp.ge.s32.totalorder %s23, 6
    %s25 = scalar_select %p24, 0, %s23
    %s26 = sadd.s32 1, %s17
    %s27 = scalar_select %p24, %s26, %s17
    %p28 = scmp.ge.s32.totalorder %s27, 2
    %s29 = scalar_select %p28, 0, %s27
    %s30 = ssub.s32 %s18, 1
    %p31 = scmp.lt.s32.totalorder %s30, 3
    %s32 = scalar_select %p31, %s30, 3
    %p33 = scmp.gt.s32.totalorder %s32, 0
    %s34 = scalar_select %p33, %s32, 0
    %s35 = ssub.s32 %s25, 1
    %p36 = scmp.lt.s32.totalorder %s35, 3
    %s37 = scalar_select %p36, %s35, 3
    %p38 = scmp.gt.s32.totalorder %s37, 0
    %s39 = scalar_select %p38, %s37, 0
    %s40 = ssub.s32 %s17, %s29
    %s41 = ssub.s32 %s34, %s39
    %s42 = sor.u32 %s40, %s41
    %p43 = scmp.eq.s32.totalorder %s42, 0
    %s45 = sadd.s32 %s44, 1
    %s46 = scalar_select %p43, %s44, %s45
    %p49 = pneg %p43
    %p50 = scmp.eq.s32.totalorder %s10, 11
    %p51 = por %p49, %p50
    %p52 = scmp.ne.s32.totalorder %s44, %s47
    %p53 = scmp.eq.s32.totalorder %s10, 0
    %p54 = por %p52, %p53
    %p55 = scmp.ne.s32.totalorder %s44, %s47
    %p56 = scmp.eq.s32.totalorder %s15, 11
    %p57 = por %p55, %p56
    %p58 = scmp.ne.s32.totalorder %s47, %s48
    %p59 = scmp.eq.s32.totalorder %s15, 0
    %p60 = por %p58, %p59
    %p61 = scmp.ne.s32.totalorder %s47, %s48
    %p62 = scmp.eq.s32.totalorder %s16, 11
    %p63 = por %p61, %p62
    %p65 = scmp.ne.s32.totalorder %s48, %s64
    %p66 = scmp.eq.s32.totalorder %s16, 0
    %p67 = por %p65, %p66
    %s69 = sadd.s32 %s68, 1
    %p72 = scmp.eq.s32.totalorder %s10, 11
    %p73 = scmp.ne.s32.totalorder %s68, %s70
    %p74 = scmp.eq.s32.totalorder %s10, 0
    %p75 = por %p73, %p74
    %p76 = scmp.ne.s32.totalorder %s68, %s70
    %p77 = scmp.eq.s32.totalorder %s15, 11
    %p78 = por %p76, %p77
    %p79 = scmp.ne.s32.totalorder %s70, %s71
    %p80 = scmp.eq.s32.totalorder %s15, 0
    %p81 = por %p79, %p80
    %p82 = scmp.ne.s32.totalorder %s70, %s71
    %p83 = scmp.eq.s32.totalorder %s16, 11
    %p84 = por %p82, %p83
    %p86 = scmp.ne.s32.totalorder %s71, %s85
    %p87 = scmp.eq.s32.totalorder %s16, 0
    %p88 = por %p86, %p87
    %s90 = sadd.s32 %s89, 1
    %p93 = scmp.eq.s32.totalorder %s10, 11
    %p94 = scmp.ne.s32.totalorder %s89, %s91
    %p95 = scmp.eq.s32.totalorder %s10, 0
    %p96 = por %p94, %p95
    %p97 = scmp.ne.s32.totalorder %s89, %s91
    %p98 = scmp.eq.s32.totalorder %s15, 11
    %p99 = por %p97, %p98
    %p100 = scmp.ne.s32.totalorder %s91, %s92
    %p101 = scmp.eq.s32.totalorder %s15, 0
    %p102 = por %p100, %p101
    %p103 = scmp.ne.s32.totalorder %s91, %s92
    %p104 = scmp.eq.s32.totalorder %s16, 11
    %p105 = por %p103, %p104
    %p107 = scmp.ne.s32.totalorder %s92, %s106
    %p108 = scmp.eq.s32.totalorder %s16, 0
    %p109 = por %p107, %p108
    %s111 = sadd.s32 %s110, 1
    %p114 = scmp.eq.s32.totalorder %s10, 11
    %p115 = scmp.ne.s32.totalorder %s110, %s112
    %p116 = scmp.eq.s32.totalorder %s10, 0
    %p117 = por %p115, %p116
    %p118 = scmp.ne.s32.totalorder %s110, %s112
    %p119 = scmp.eq.s32.totalorder %s15, 11
    %p120 = por %p118, %p119
    %p121 = scmp.ne.s32.totalorder %s112, %s113
    %p122 = scmp.eq.s32.totalorder %s15, 0
    %p123 = por %p121, %p122
    %p124 = scmp.ne.s32.totalorder %s112, %s113
    %p125 = scmp.eq.s32.totalorder %s16, 11
    %p126 = por %p124, %p125
    %p128 = scmp.ne.s32.totalorder %s113, %s127
    %p129 = scmp.eq.s32.totalorder %s16, 0
    %p130 = por %p128, %p129
    %s131 = ssub.s32 %s17, %s29
    %s132 = ssub.s32 %s18, %s25
    %s133 = sor.u32 %s131, %s132
    %p134 = scmp.eq.s32.totalorder %s133, 0
    %s136 = sadd.s32 %s135, 1
    %s137 = scalar_select %p134, %s135, %s136
    %p140 = pneg %p134
    %p141 = scmp.eq.s32.totalorder %s10, 11
    %p142 = por %p140, %p141
    %p143 = scmp.ne.s32.totalorder %s135, %s138
    %p144 = scmp.eq.s32.totalorder %s10, 0
    %p145 = por %p143, %p144
    %p146 = scmp.ne.s32.totalorder %s135, %s138
    %p147 = scmp.eq.s32.totalorder %s15, 11
    %p148 = por %p146, %p147
    %p149 = scmp.ne.s32.totalorder %s138, %s139
    %p150 = scmp.eq.s32.totalorder %s15, 0
    %p151 = por %p149, %p150
    %p152 = scmp.ne.s32.totalorder %s138, %s139
    %p153 = scmp.eq.s32.totalorder %s16, 11
    %p154 = por %p152, %p153
    %p156 = scmp.ne.s32.totalorder %s139, %s155
    %p157 = scmp.eq.s32.totalorder %s16, 0
    %p158 = por %p156, %p157
    %p159 = scmp.le.s32.totalorder 1, %s10
    %p160 = scmp.lt.s32.totalorder %s10, 13
    %p161 = pnand %p159, %p160
    %p162 = pneg %p161
    // Predicated region
    $region9: #{inception_forward.2} parent=5 // pred_check
      _
    $region10: #{inception_forward.2} parent=5 // pred_check_branch
      %164 = sbr.rel (%p161) target = $region12
    $region11: #{inception_forward.2} parent=5 // pred_region
      %s165 = ssub.s32 %s10, 1
      // Predicated region
      $region13: #{inception_forward.2} parent=11 // pred_check
        %p166 = pneg %p81
      $region14: #{inception_forward.2} parent=11 // pred_check_branch
        %168 = sbr.rel (%p166) target = $region16
      $region15: #{inception_forward.2} parent=11 // pred_region
        _
      $region16: #{inception_forward.2} parent=11 // pred_fallthru
        _
      // Predicated region
      $region17: #{inception_forward.2} parent=11 // pred_check
        %p169 = pneg %p102
      $region18: #{inception_forward.2} parent=11 // pred_check_branch
        %171 = sbr.rel (%p169) target = $region20
      $region19: #{inception_forward.2} parent=11 // pred_region
        _
      $region20: #{inception_forward.2} parent=11 // pred_fallthru
        _
      // Predicated region
      $region21: #{inception_forward.2} parent=11 // pred_check
        %p172 = pneg %p123
      $region22: #{inception_forward.2} parent=11 // pred_check_branch
        %174 = sbr.rel (%p172) target = $region24
      $region23: #{inception_forward.2} parent=11 // pred_region
        _
      $region24: #{inception_forward.2} parent=11 // pred_fallthru
        _
    $region12: #{inception_forward.2} parent=5 // pred_fallthru
      _
    %p175 = scmp.lt.s32.totalorder %s10, 12
    // Predicated region
    $region25: #{inception_forward.2} parent=5 // pred_check
      %p176 = pneg %p175
    $region26: #{inception_forward.2} parent=5 // pred_check_branch
      %178 = sbr.rel (%p176) target = $region28
    $region27: #{inception_forward.2} parent=5 // pred_region
      // Predicated region
      $region29: #{inception_forward.2} parent=27 // pred_check
        %p179 = pneg %p54
      $region30: #{inception_forward.2} parent=27 // pred_check_branch
        %181 = sbr.rel (%p179) target = $region32
      $region31: #{inception_forward.2} parent=27 // pred_region
        %s182 = ssub.s32 %s18, 1
        %p183 = scmp.lt.s32.totalorder %s182, 3
        %s184 = scalar_select %p183, %s182, 3
        %p185 = scmp.gt.s32.totalorder %s184, 0
        %s186 = scalar_select %p185, %s184, 0
        %p187 = scmp.lt.s32.totalorder %s17, 1
        %s188 = scalar_select %p187, %s17, 1
        %p189 = scmp.lt.s32.totalorder %s186, 3
        %s190 = scalar_select %p189, %s186, 3
        %s191 = smul.addr %s190, 8
        %s192 = smul.addr %s188, 32
        %s193 = sadd.s32 %s191, %s192
        %s194 = smul.addr %s193, 4
        %s195 = scalar_lea.vmem %s0, %s194
        %s196 = ssub.s32 %s18, 1
        %p197 = scmp.lt.s32.totalorder %s196, 3
        %s198 = scalar_select %p197, %s196, 3
        %p199 = scmp.gt.s32.totalorder %s198, 0
        %s200 = scalar_select %p199, %s198, 0
      $region32: #{inception_forward.2} parent=27 // pred_fallthru
        _
    $region28: #{inception_forward.2} parent=5 // pred_fallthru
      _
    %p201 = scmp.le.s32.totalorder 1, %s10
    %p202 = scmp.lt.s32.totalorder %s10, 13
    %p203 = pnand %p201, %p202
    %p204 = pneg %p203
    // Predicated region
    $region33: #{inception_forward.2} parent=5 // pred_check
      _
    $region34: #{inception_forward.2} parent=5 // pred_check_branch
      %206 = sbr.rel (%p203) target = $region36
    $region35: #{inception_forward.2} parent=5 // pred_region
      %s207 = ssub.s32 %s10, 1
      %s208 = ssub.s32 %s20, 1
      %p209 = scmp.lt.s32.totalorder %s208, 3
      %s210 = scalar_select %p209, %s208, 3
      %p211 = scmp.gt.s32.totalorder %s210, 0
      %s212 = scalar_select %p211, %s210, 0
      %p213 = scmp.lt.s32.totalorder %s19, 1
      %s214 = scalar_select %p213, %s19, 1
      %p215 = scmp.lt.s32.totalorder %s212, 3
      %s216 = scalar_select %p215, %s212, 3
      %s217 = smul.addr %s216, 8
      %s218 = smul.addr %s214, 32
      %s219 = sadd.s32 %s217, %s218
      %s220 = smul.addr %s219, 4
      %s221 = scalar_lea.vmem %s0, %s220
      %p222 = pneg %p60
      %p223 = pneg %p57
      %p224 = pneg %p81
      %p225 = pneg %p78
      %p226 = pneg %p102
      %p227 = pneg %p99
      %p228 = pneg %p123
      %p229 = pneg %p120
      %p230 = pneg %p151
      %p231 = pneg %p148
      %p232 = scmp.lt.s32.totalorder %s19, 1
      %s233 = scalar_select %p232, %s19, 1
      %p234 = scmp.lt.s32.totalorder %s20, 5
      %s235 = scalar_select %p234, %s20, 5
      %s236 = smul.addr %s235, 42
      %s237 = smul.addr %s233, 252
      %s238 = sadd.s32 %s236, %s237
      %s239 = smul.addr %s238, 4
      %s240 = scalar_lea.vmem %s4, %s239
      %s241 = ssub.s32 %s20, 1
      %p242 = scmp.lt.s32.totalorder %s241, 3
      %s243 = scalar_select %p242, %s241, 3
      %p244 = scmp.gt.s32.totalorder %s243, 0
      %s245 = scalar_select %p244, %s243, 0
      %p246 = scmp.lt.s32.totalorder %s19, 1
      %s247 = scalar_select %p246, %s19, 1
      %p248 = scmp.lt.s32.totalorder %s245, 3
      %s249 = scalar_select %p248, %s245, 3
      %s250 = smul.addr %s249, 8
      %s251 = smul.addr %s247, 32
      %s252 = sadd.s32 %s250, %s251
      %s253 = smul.addr %s252, 4
      %s254 = scalar_lea.vmem %s0, %s253
      %s255 = ssub.s32 %s20, 1
      %p256 = scmp.lt.s32.totalorder %s255, 3
      %s257 = scalar_select %p256, %s255, 3
      %p258 = scmp.gt.s32.totalorder %s257, 0
      %s259 = scalar_select %p258, %s257, 0
      %p260 = scmp.lt.s32.totalorder %s19, 1
      %s261 = scalar_select %p260, %s19, 1
      %p262 = scmp.lt.s32.totalorder %s20, 5
      %s263 = scalar_select %p262, %s20, 5
      %s264 = smul.addr %s263, 42
      %s265 = smul.addr %s261, 252
      %s266 = sadd.s32 %s264, %s265
      %s267 = smul.addr %s266, 4
      %s268 = scalar_lea.vmem %s4, %s267
      %270 = vst [vmem:[%s268] sm:$0xff] 0
      %271 = vst [vmem:[%s268 + $0x8] sm:$0xff] 0
      %272 = vst [vmem:[%s268 + $0x10] sm:$0xff] 0
      %273 = vst [vmem:[%s268 + $0x18] sm:$0xff] 0
      %274 = vst [vmem:[%s268 + $0x20] sm:$0xff] 0
      %275 = vst [vmem:[%s268 + $0x28] sm:$0xff] 0
      %276 = vst [vmem:[%s268 + $0x30] sm:$0xff] 0
      %277 = vst [vmem:[%s268 + $0x38] sm:$0xff] 0
      %278 = vst [vmem:[%s268 + $0x40] sm:$0xff] 0
      %279 = vst [vmem:[%s268 + $0x48] sm:$0xff] 0
      %280 = vst [vmem:[%s268 + $0x50] sm:$0xff] 0
      %281 = vst [vmem:[%s268 + $0x58] sm:$0xff] 0
      %282 = vst [vmem:[%s268 + $0x60] sm:$0xff] 0
      %283 = vst [vmem:[%s268 + $0x68] sm:$0xff] 0
      %284 = vst [vmem:[%s268 + $0x70] sm:$0xff] 0
      %285 = vst [vmem:[%s268 + $0x78] sm:$0xff] 0
      %286 = vst [vmem:[%s268 + $0x80] sm:$0xff] 0
      %287 = vst [vmem:[%s268 + $0x88] sm:$0xff] 0
      %288 = vst [vmem:[%s268 + $0x90] sm:$0xff] 0
      %289 = vst [vmem:[%s268 + $0x98] sm:$0xff] 0
      %290 = vst [vmem:[%s268 + $0xa0] sm:$0x11] 0
      %p291 = scmp.ge.s32.totalorder %s20, 1
      %p292 = scmp.le.s32.totalorder %s20, 4
      %p293 = pnand %p291, %p292
      %p294 = pneg %p293
      // Predicated region
      $region37: #{inception_forward.2} parent=35 // pred_check
        _
      $region38: #{inception_forward.2} parent=35 // pred_check_branch
        %296 = sbr.rel (%p293) target = $region40
      $region39: #{inception_forward.2} parent=35 // pred_region
        %v297 = vld [vmem:[%s254] sm:$0xf]
        %v298 = vld [vmem:[%s254 + $0x4] sm:$0xf]
        %v299 = vld [vmem:[%s254 + $0x8] sm:$0xf]
        %v300 = vld [vmem:[%s254 + $0xc] sm:$0xf]
        %v301 = vld [vmem:[%s254 + $0x10] sm:$0xf]
        %v302 = vld [vmem:[%s254 + $0x14] sm:$0xf]
        %v303 = vld [vmem:[%s254 + $0x18] sm:$0xf]
        %v304 = vld [vmem:[%s254 + $0x1c] sm:$0xf]
        %v305 = vld [vmem:[%s1] sm:$0xff]
        %v314 = vunpack.c.l.b16 %v297
        %v315 = vunpack.c.l.b16 %v298
        %v316 = vunpack.c.l.b16 %v299
        %v317 = vunpack.c.l.b16 %v300
        %v318 = vunpack.c.l.b16 %v301
        %v319 = vunpack.c.l.b16 %v302
        %v320 = vunpack.c.l.b16 %v303
        %v321 = vunpack.c.l.b16 %v304
        %v322 = vpack.c.b16 %v315, %v314
        %v323 = vpack.c.b16 %v317, %v316
        %v324 = vpack.c.b16 %v319, %v318
        %v325 = vpack.c.b16 %v321, %v320
        %v327 = vunpack.c.l.b16 %v305
        %v328 = vunpack.c.h.b16 %v305
        %v329 = vpack.c.b16 %v327, %v327
        %v330 = vpack.c.b16 %v328, %v328
        %vm331 = vcmask 64512
        %v333 = vsel %vm331, %v322, 0
        %v336 = vsel %vm331, %v323, 0
        %v339 = vsel %vm331, %v324, 0
        %v342 = vsel %vm331, %v325, 0
        %vm344 = vcmask 1043456
        %v346 = vsel %vm344, %v329, 0
        %v349 = vsel %vm344, %v330, 0
        %351 = vmatpush.bf16.msra.mxu0 0
        %352 = vmatpush.bf16.msra.mxu0 0
        %353 = vmatpush.bf16.msra.mxu0 0
        %354 = vmatpush.bf16.msra.mxu0 0
        %355 = vmatpush.bf16.msra.mxu0 0
        %356 = vmatpush.bf16.msra.mxu0 0
        %357 = vmatpush.bf16.msra.mxu0 0
        %358 = vmatpush.bf16.msra.mxu0 %v346
        %359 = vmatmul.bf16.gmra.mxu0 %v333
        %v360 = vpop.f32.mrf.mxu0
        %v361 = vadd.f32 0.0, %v360
        %v362 = vpop.f32.mrf.mxu0
        %v363 = vadd.f32 0.0, %v362
        %364 = vmatmul.bf16.gmra.mxu0 %v336
        %v365 = vpop.f32.mrf.mxu0
        %v366 = vadd.f32 0.0, %v365
        %v367 = vpop.f32.mrf.mxu0
        %v368 = vadd.f32 0.0, %v367
        %369 = vmatmul.bf16.gmra.mxu0 %v339
        %v370 = vpop.f32.mrf.mxu0
        %v371 = vadd.f32 0.0, %v370
        %v372 = vpop.f32.mrf.mxu0
        %v373 = vadd.f32 0.0, %v372
        %374 = vmatmul.bf16.gmra.mxu0 %v342
        %v375 = vpop.f32.mrf.mxu0
        %v376 = vadd.f32 0.0, %v375
        %v377 = vpop.f32.mrf.mxu0
        %v378 = vadd.f32 0.0, %v377
        %379 = vdwg.mxu0
        %380 = vmatpush.bf16.msra.mxu0 0
        %381 = vmatpush.bf16.msra.mxu0 0
        %382 = vmatpush.bf16.msra.mxu0 0
        %383 = vmatpush.bf16.msra.mxu0 0
        %384 = vmatpush.bf16.msra.mxu0 0
        %385 = vmatpush.bf16.msra.mxu0 0
        %386 = vmatpush.bf16.msra.mxu0 0
        %387 = vmatpush.bf16.msra.mxu0 %v349
        %388 = vmatmul.bf16.gmra.mxu0 %v333
        %v389 = vpop.f32.mrf.mxu0
        %v390 = vadd.f32 0.0, %v389
        %v391 = vpop.f32.mrf.mxu0
        %v392 = vadd.f32 0.0, %v391
        %393 = vmatmul.bf16.gmra.mxu0 %v336
        %v394 = vpop.f32.mrf.mxu0
        %v395 = vadd.f32 0.0, %v394
        %v396 = vpop.f32.mrf.mxu0
        %v397 = vadd.f32 0.0, %v396
        %398 = vmatmul.bf16.gmra.mxu0 %v339
        %v399 = vpop.f32.mrf.mxu0
        %v400 = vadd.f32 0.0, %v399
        %v401 = vpop.f32.mrf.mxu0
        %v402 = vadd.f32 0.0, %v401
        %403 = vmatmul.bf16.gmra.mxu0 %v342
        %v404 = vpop.f32.mrf.mxu0
        %v405 = vadd.f32 0.0, %v404
        %v406 = vpop.f32.mrf.mxu0
        %v407 = vadd.f32 0.0, %v406
        %408 = vdwg.mxu0
        %v409 = vld [vmem:[%s2] sm:$0x3]
        %v411 = vperm.slane %v409, 0
        %v412 = vperm.slane %v409, 1
        %v415 = vmul.f32 %v361, %v411
        %v416 = vmul.f32 %v390, %v412
        %v417 = vmul.f32 %v363, %v411
        %v418 = vmul.f32 %v392, %v412
        %v419 = vmul.f32 %v366, %v411
        %v420 = vmul.f32 %v395, %v412
        %v421 = vmul.f32 %v368, %v411
        %v422 = vmul.f32 %v397, %v412
        %v423 = vmul.f32 %v371, %v411
        %v424 = vmul.f32 %v400, %v412
        %v425 = vmul.f32 %v373, %v411
        %v426 = vmul.f32 %v402, %v412
        %v427 = vmul.f32 %v376, %v411
        %v428 = vmul.f32 %v405, %v412
        %v429 = vmul.f32 %v378, %v411
        %v430 = vmul.f32 %v407, %v412
        %v431 = vld [vmem:[%s3] sm:$0x3]
        %v433 = vperm.slane %v431, 0
        %v434 = vperm.slane %v431, 1
        %v437 = vadd.f32 %v415, %v433
        %v438 = vadd.f32 %v416, %v434
        %v439 = vadd.f32 %v417, %v433
        %v440 = vadd.f32 %v418, %v434
        %v441 = vadd.f32 %v419, %v433
        %v442 = vadd.f32 %v420, %v434
        %v443 = vadd.f32 %v421, %v433
        %v444 = vadd.f32 %v422, %v434
        %v445 = vadd.f32 %v423, %v433
        %v446 = vadd.f32 %v424, %v434
        %v447 = vadd.f32 %v425, %v433
        %v448 = vadd.f32 %v426, %v434
        %v449 = vadd.f32 %v427, %v433
        %v450 = vadd.f32 %v428, %v434
        %v451 = vadd.f32 %v429, %v433
        %v452 = vadd.f32 %v430, %v434
        %v453 = vmax.f32 %v437, 0.0
        %v454 = vmax.f32 %v438, 0.0
        %v455 = vmax.f32 %v439, 0.0
        %v456 = vmax.f32 %v440, 0.0
        %v457 = vmax.f32 %v441, 0.0
        %v458 = vmax.f32 %v442, 0.0
        %v459 = vmax.f32 %v443, 0.0
        %v460 = vmax.f32 %v444, 0.0
        %v461 = vmax.f32 %v445, 0.0
        %v462 = vmax.f32 %v446, 0.0
        %v463 = vmax.f32 %v447, 0.0
        %v464 = vmax.f32 %v448, 0.0
        %v465 = vmax.f32 %v449, 0.0
        %v466 = vmax.f32 %v450, 0.0
        %v467 = vmax.f32 %v451, 0.0
        %v468 = vmax.f32 %v452, 0.0
        %v469 = vpack.c.bf16 %v454, %v453
        %v470 = vpack.c.bf16 %v456, %v455
        %v471 = vpack.c.bf16 %v458, %v457
        %v472 = vpack.c.bf16 %v460, %v459
        %v473 = vpack.c.bf16 %v462, %v461
        %v474 = vpack.c.bf16 %v464, %v463
        %v475 = vpack.c.bf16 %v466, %v465
        %v476 = vpack.c.bf16 %v468, %v467
        %v478 = vshrl.u32 %v469, 16
        %v480 = vrot.slane %v478, 7
        %v481 = vshll.u32 %v469, 16
        %v483 = vor.u32 %v480, %v481
        %v484 = vrot.slane %v480, 4
        %vm487 = vcmask 1043456
        %vm488 = vsmask.f32 7938
        %vm489 = vmand %vm487, %vm488
        %vm490 = vcmask 1047556
        %vm491 = vsmask.f32 7954
        %vm492 = vmand %vm490, %vm491
        %vm493 = vmor %vm492, %vm489
        %v494 = vld [vmem:[%s268 + $0x10] sm:$0xff]
        %v495 = vsel %vm493, %v483, %v494
        %496 = vst [vmem:[%s268 + $0x10] sm:$0xff] %v495
        %vm497 = vcmask 1040384
        %vm498 = vsmask.f32 256
        %vm499 = vmand %vm497, %vm498
        %vm500 = vcmask 1044484
        %vm501 = vsmask.f32 4352
        %vm502 = vmand %vm500, %vm501
        %vm503 = vmor %vm502, %vm499
        %v504 = vld [vmem:[%s268 + $0x18] sm:$0x11]
        %v505 = vsel %vm503, %v484, %v504
        %506 = vst [vmem:[%s268 + $0x18] sm:$0x11] %v505
        %v508 = vshrl.u32 %v470, 16
        %v510 = vrot.slane %v508, 7
        %v511 = vshll.u32 %v470, 16
        %v513 = vor.u32 %v510, %v511
        %v514 = vrot.slane %v510, 4
        %v517 = vld [vmem:[%s268 + $0x20] sm:$0xff]
        %v518 = vsel %vm493, %v513, %v517
        %519 = vst [vmem:[%s268 + $0x20] sm:$0xff] %v518
        %v520 = vld [vmem:[%s268 + $0x28] sm:$0x11]
        %v521 = vsel %vm503, %v514, %v520
        %522 = vst [vmem:[%s268 + $0x28] sm:$0x11] %v521
        %v524 = vshrl.u32 %v471, 16
        %v526 = vrot.slane %v524, 7
        %v527 = vshll.u32 %v471, 16
        %v529 = vor.u32 %v526, %v527
        %v530 = vrot.slane %v526, 4
        %v533 = vld [vmem:[%s268 + $0x30] sm:$0xff]
        %v534 = vsel %vm493, %v529, %v533
        %535 = vst [vmem:[%s268 + $0x30] sm:$0xff] %v534
        %v536 = vld [vmem:[%s268 + $0x38] sm:$0x11]
        %v537 = vsel %vm503, %v530, %v536
        %538 = vst [vmem:[%s268 + $0x38] sm:$0x11] %v537
        %v540 = vshrl.u32 %v472, 16
        %v542 = vrot.slane %v540, 7
        %v543 = vshll.u32 %v472, 16
        %v545 = vor.u32 %v542, %v543
        %v546 = vrot.slane %v542, 4
        %v549 = vld [vmem:[%s268 + $0x40] sm:$0xff]
        %v550 = vsel %vm493, %v545, %v549
        %551 = vst [vmem:[%s268 + $0x40] sm:$0xff] %v550
        %v552 = vld [vmem:[%s268 + $0x48] sm:$0x11]
        %v553 = vsel %vm503, %v546, %v552
        %554 = vst [vmem:[%s268 + $0x48] sm:$0x11] %v553
        %v556 = vshrl.u32 %v473, 16
        %v558 = vrot.slane %v556, 7
        %v559 = vshll.u32 %v473, 16
        %v561 = vor.u32 %v558, %v559
        %v562 = vrot.slane %v558, 4
        %v565 = vld [vmem:[%s268 + $0x50] sm:$0xff]
        %v566 = vsel %vm493, %v561, %v565
        %567 = vst [vmem:[%s268 + $0x50] sm:$0xff] %v566
        %v568 = vld [vmem:[%s268 + $0x58] sm:$0x11]
        %v569 = vsel %vm503, %v562, %v568
        %570 = vst [vmem:[%s268 + $0x58] sm:$0x11] %v569
        %v572 = vshrl.u32 %v474, 16
        %v574 = vrot.slane %v572, 7
        %v575 = vshll.u32 %v474, 16
        %v577 = vor.u32 %v574, %v575
        %v578 = vrot.slane %v574, 4
        %v581 = vld [vmem:[%s268 + $0x60] sm:$0xff]
        %v582 = vsel %vm493, %v577, %v581
        %583 = vst [vmem:[%s268 + $0x60] sm:$0xff] %v582
        %v584 = vld [vmem:[%s268 + $0x68] sm:$0x11]
        %v585 = vsel %vm503, %v578, %v584
        %586 = vst [vmem:[%s268 + $0x68] sm:$0x11] %v585
        %v588 = vshrl.u32 %v475, 16
        %v590 = vrot.slane %v588, 7
        %v591 = vshll.u32 %v475, 16
        %v593 = vor.u32 %v590, %v591
        %v594 = vrot.slane %v590, 4
        %v597 = vld [vmem:[%s268 + $0x70] sm:$0xff]
        %v598 = vsel %vm493, %v593, %v597
        %599 = vst [vmem:[%s268 + $0x70] sm:$0xff] %v598
        %v600 = vld [vmem:[%s268 + $0x78] sm:$0x11]
        %v601 = vsel %vm503, %v594, %v600
        %602 = vst [vmem:[%s268 + $0x78] sm:$0x11] %v601
        %v604 = vshrl.u32 %v476, 16
        %v606 = vrot.slane %v604, 7
        %v607 = vshll.u32 %v476, 16
        %v609 = vor.u32 %v606, %v607
        %v610 = vrot.slane %v606, 4
        %v613 = vld [vmem:[%s268 + $0x80] sm:$0xff]
        %v614 = vsel %vm493, %v609, %v613
        %615 = vst [vmem:[%s268 + $0x80] sm:$0xff] %v614
        %v616 = vld [vmem:[%s268 + $0x88] sm:$0x11]
        %v617 = vsel %vm503, %v610, %v616
        %618 = vst [vmem:[%s268 + $0x88] sm:$0x11] %v617
      $region40: #{inception_forward.2} parent=35 // pred_fallthru
        _
      %p619 = scmp.lt.s32.totalorder %s19, 1
      %s620 = scalar_select %p619, %s19, 1
      %p621 = scmp.lt.s32.totalorder %s20, 5
      %s622 = scalar_select %p621, %s20, 5
      %s623 = smul.addr %s622, 42
      %s624 = smul.addr %s620, 252
      %s625 = sadd.s32 %s623, %s624
      %s626 = smul.addr %s625, 4
      %s627 = scalar_lea.vmem %s4, %s626
      // Predicated region
      $region41: #{inception_forward.2} parent=35 // pred_check
        %p628 = pneg %p148
      $region42: #{inception_forward.2} parent=35 // pred_check_branch
        %630 = sbr.rel (%p628) target = $region44
      $region43: #{inception_forward.2} parent=35 // pred_region
        _
      $region44: #{inception_forward.2} parent=35 // pred_fallthru
        _
    $region36: #{inception_forward.2} parent=5 // pred_fallthru
      _
    %p631 = scmp.le.s32.totalorder 2, %s10
    // Predicated region
    $region45: #{inception_forward.2} parent=5 // pred_check
      %p632 = pneg %p631
    $region46: #{inception_forward.2} parent=5 // pred_check_branch
      %634 = sbr.rel (%p632) target = $region48
    $region47: #{inception_forward.2} parent=5 // pred_region
      %s635 = ssub.s32 %s10, 2
      // Predicated region
      $region49: #{inception_forward.2} parent=47 // pred_check
        %p636 = pneg %p154
      $region50: #{inception_forward.2} parent=47 // pred_check_branch
        %638 = sbr.rel (%p636) target = $region52
      $region51: #{inception_forward.2} parent=47 // pred_region
        %p639 = scmp.lt.s32.totalorder %s21, 1
        %s640 = scalar_select %p639, %s21, 1
        %p641 = scmp.lt.s32.totalorder %s22, 5
        %s642 = scalar_select %p641, %s22, 5
        %s643 = smul.addr %s642, 42
        %s644 = smul.addr %s640, 252
        %s645 = sadd.s32 %s643, %s644
        %s646 = smul.addr %s645, 4
        %s647 = scalar_lea.vmem %s4, %s646
      $region52: #{inception_forward.2} parent=47 // pred_fallthru
        _
    $region48: #{inception_forward.2} parent=5 // pred_fallthru
      _
  $region6: #{inception_forward.2} parent=0 // loop_footer
    %s14 = sadd.s32 1, %s10
  $region7: #{inception_forward.2} parent=0 // loop_footer_branch
    %9 = sbr.rel target = $region3
  $region8: #{inception_forward.2} parent=0 // loop_exit
    _

// kernel: inception_forward.3
$region0: #{inception_forward.3}
  #allocation0 [shape = 'u32[]', space=smem, size = 0x4, offset = 0x4, fixed_abs, tag = 'smem constant byte address 0x4 - core index']
  #allocation1 [shape = 'u32[72,128]{1,0:T(1,128)}', space=vmem, size = 0x9000, scoped, tag = 'internal scratch']
  %s0 = inlined_call_operand.vmem [shape: bf16[2,6,162,8], index: 0, kind: input, shape index: {}, may-alias: {0,1,2}]
  %s1 = inlined_call_operand.vmem [shape: bf16[2,6,162,8], index: 1, kind: input, shape index: {}, may-alias: {0,1,2}]
  %s2 = inlined_call_operand.vmem [shape: bf16[2,6,162,8], index: 2, kind: input, shape index: {}, may-alias: {0,1,2}]
  %s3 = inlined_call_operand.vmem [shape: bf16[2,6,162,256], index: 3, kind: input, shape index: {}, may-alias: {3,4,5}]
  %s4 = inlined_call_operand.vmem [shape: bf16[2,6,162,256], index: 4, kind: input, shape index: {}, may-alias: {3,4,5}]
  %s5 = inlined_call_operand.vmem [shape: bf16[2,6,162,256], index: 5, kind: input, shape index: {}, may-alias: {3,4,5}]
  %s6 = inlined_call_operand.vmem [shape: bf16[8,16], index: 6, kind: input, shape index: {}]
  %s7 = inlined_call_operand.vmem [shape: bf16[3456,16], index: 7, kind: input, shape index: {}]
  %s8 = inlined_call_operand.vmem [shape: bf16[3456,16], index: 8, kind: input, shape index: {}]
  %s9 = inlined_call_operand.vmem [shape: bf16[8,16], index: 9, kind: input, shape index: {}]
  %s10 = inlined_call_operand.vmem [shape: f32[1,64], index: 10, kind: input, shape index: {}]
  %s11 = inlined_call_operand.vmem [shape: f32[1,64], index: 11, kind: input, shape index: {}]
  %s12 = inlined_call_operand.vmem [shape: bf16[2,4,128,64], index: 12, kind: output, shape index: {}]
  %s13 = sld [smem:[#allocation0]]
  $region81: #{inception_forward.3} parent=0
    _
  %s15 = ssub.s32 1, %s13
  %s16 = scalar_select 0, %s15, %s13
  loop: start=0, step=1, limit=10
  $region2: #{inception_forward.3} parent=0 // loop_pre_header
    _
  $region3: #{inception_forward.3} parent=0 // loop_header
    %s18 = sphi 0, %s22
    %p19 = scmp.ge.s32.totalorder %s18, 10
    %s25 = sphi 0, %s37
    %s26 = sphi 0, %s33
    %s27 = sphi 0, %s25
    %s28 = sphi 0, %s26
    %s29 = sphi 0, %s27
    %s30 = sphi 0, %s28
    %s42 = sphi 0, %s44
    %s45 = sphi 0, %s42
    %s46 = sphi 0, %s45
    %s62 = sphi 0, %s46
    %s72 = sphi 0, %s74
    %s75 = sphi 0, %s72
    %s76 = sphi 0, %s75
    %s92 = sphi 0, %s76
    %s102 = sphi 0, %s104
    %s105 = sphi 0, %s102
    %s106 = sphi 0, %s105
    %s122 = sphi 0, %s106
    %s130 = sphi 0, %s132
    %s133 = sphi 0, %s130
    %s134 = sphi 0, %s133
    %s150 = sphi 0, %s134
    %s160 = sphi 0, %s162
    %s163 = sphi 0, %s160
    %s164 = sphi 0, %s163
    %s180 = sphi 0, %s164
    %s190 = sphi 0, %s192
    %s193 = sphi 0, %s190
    %s194 = sphi 0, %s193
    %s210 = sphi 0, %s194
    %s214 = sphi 0, %s214
    %s216 = sphi 0, %s214
    %s217 = sphi 0, %s216
    %s231 = sphi 0, %s217
    %s235 = sphi 0, %s235
    %s237 = sphi 0, %s235
    %s238 = sphi 0, %s237
    %s252 = sphi 0, %s238
    %s256 = sphi 0, %s256
    %s258 = sphi 0, %s256
    %s259 = sphi 0, %s258
    %s273 = sphi 0, %s259
    %s277 = sphi 0, %s277
    %s279 = sphi 0, %s277
    %s280 = sphi 0, %s279
    %s294 = sphi 0, %s280
    %s298 = sphi 0, %s298
    %s300 = sphi 0, %s298
    %s301 = sphi 0, %s300
    %s315 = sphi 0, %s301
    %s319 = sphi 0, %s319
    %s321 = sphi 0, %s319
    %s322 = sphi 0, %s321
    %s336 = sphi 0, %s322
    %s344 = sphi 0, %s346
    %s347 = sphi 0, %s344
    %s348 = sphi 0, %s347
    %s364 = sphi 0, %s348
  $region4: #{inception_forward.3} parent=0 // loop_header_branch
    %21 = sbr.rel (%p19) target = $region8
  $region5: #{inception_forward.3} parent=0 // loop_body
    %s23 = ssub.s32 %s18, 1
    %s24 = ssub.s32 %s18, 2
    %s31 = sadd.s32 1, %s26
    %p32 = scmp.ge.s32.totalorder %s31, 4
    %s33 = scalar_select %p32, 0, %s31
    %s34 = sadd.s32 1, %s25
    %s35 = scalar_select %p32, %s34, %s25
    %p36 = scmp.ge.s32.totalorder %s35, 2
    %s37 = scalar_select %p36, 0, %s35
    %s38 = ssub.s32 %s25, %s37
    %s39 = ssub.s32 %s26, %s33
    %s40 = sor.u32 %s38, %s39
    %p41 = scmp.eq.s32.totalorder %s40, 0
    %s43 = sadd.s32 %s42, 1
    %s44 = scalar_select %p41, %s42, %s43
    %p47 = pneg %p41
    %p48 = scmp.eq.s32.totalorder %s18, 7
    %p49 = por %p47, %p48
    %p50 = scmp.ne.s32.totalorder %s42, %s45
    %p51 = scmp.eq.s32.totalorder %s18, 0
    %p52 = por %p50, %p51
    %p53 = scmp.ne.s32.totalorder %s42, %s45
    %p54 = scmp.eq.s32.totalorder %s23, 7
    %p55 = por %p53, %p54
    %p56 = scmp.ne.s32.totalorder %s45, %s46
    %p57 = scmp.eq.s32.totalorder %s23, 0
    %p58 = por %p56, %p57
    %p59 = scmp.ne.s32.totalorder %s45, %s46
    %p60 = scmp.eq.s32.totalorder %s24, 7
    %p61 = por %p59, %p60
    %p63 = scmp.ne.s32.totalorder %s46, %s62
    %p64 = scmp.eq.s32.totalorder %s24, 0
    %p65 = por %p63, %p64
    %s66 = sadd.s32 %s26, 1
    %s67 = sadd.s32 %s33, 1
    %s68 = ssub.s32 %s25, %s37
    %s69 = ssub.s32 %s66, %s67
    %s70 = sor.u32 %s68, %s69
    %p71 = scmp.eq.s32.totalorder %s70, 0
    %s73 = sadd.s32 %s72, 1
    %s74 = scalar_select %p71, %s72, %s73
    %p77 = pneg %p71
    %p78 = scmp.eq.s32.totalorder %s18, 7
    %p79 = por %p77, %p78
    %p80 = scmp.ne.s32.totalorder %s72, %s75
    %p81 = scmp.eq.s32.totalorder %s18, 0
    %p82 = por %p80, %p81
    %p83 = scmp.ne.s32.totalorder %s72, %s75
    %p84 = scmp.eq.s32.totalorder %s23, 7
    %p85 = por %p83, %p84
    %p86 = scmp.ne.s32.totalorder %s75, %s76
    %p87 = scmp.eq.s32.totalorder %s23, 0
    %p88 = por %p86, %p87
    %p89 = scmp.ne.s32.totalorder %s75, %s76
    %p90 = scmp.eq.s32.totalorder %s24, 7
    %p91 = por %p89, %p90
    %p93 = scmp.ne.s32.totalorder %s76, %s92
    %p94 = scmp.eq.s32.totalorder %s24, 0
    %p95 = por %p93, %p94
    %s96 = sadd.s32 %s26, 2
    %s97 = sadd.s32 %s33, 2
    %s98 = ssub.s32 %s25, %s37
    %s99 = ssub.s32 %s96, %s97
    %s100 = sor.u32 %s98, %s99
    %p101 = scmp.eq.s32.totalorder %s100, 0
    %s103 = sadd.s32 %s102, 1
    %s104 = scalar_select %p101, %s102, %s103
    %p107 = pneg %p101
    %p108 = scmp.eq.s32.totalorder %s18, 7
    %p109 = por %p107, %p108
    %p110 = scmp.ne.s32.totalorder %s102, %s105
    %p111 = scmp.eq.s32.totalorder %s18, 0
    %p112 = por %p110, %p111
    %p113 = scmp.ne.s32.totalorder %s102, %s105
    %p114 = scmp.eq.s32.totalorder %s23, 7
    %p115 = por %p113, %p114
    %p116 = scmp.ne.s32.totalorder %s105, %s106
    %p117 = scmp.eq.s32.totalorder %s23, 0
    %p118 = por %p116, %p117
    %p119 = scmp.ne.s32.totalorder %s105, %s106
    %p120 = scmp.eq.s32.totalorder %s24, 7
    %p121 = por %p119, %p120
    %p123 = scmp.ne.s32.totalorder %s106, %s122
    %p124 = scmp.eq.s32.totalorder %s24, 0
    %p125 = por %p123, %p124
    %s126 = ssub.s32 %s25, %s37
    %s127 = ssub.s32 %s26, %s33
    %s128 = sor.u32 %s126, %s127
    %p129 = scmp.eq.s32.totalorder %s128, 0
    %s131 = sadd.s32 %s130, 1
    %s132 = scalar_select %p129, %s130, %s131
    %p135 = pneg %p129
    %p136 = scmp.eq.s32.totalorder %s18, 7
    %p137 = por %p135, %p136
    %p138 = scmp.ne.s32.totalorder %s130, %s133
    %p139 = scmp.eq.s32.totalorder %s18, 0
    %p140 = por %p138, %p139
    %p141 = scmp.ne.s32.totalorder %s130, %s133
    %p142 = scmp.eq.s32.totalorder %s23, 7
    %p143 = por %p141, %p142
    %p144 = scmp.ne.s32.totalorder %s133, %s134
    %p145 = scmp.eq.s32.totalorder %s23, 0
    %p146 = por %p144, %p145
    %p147 = scmp.ne.s32.totalorder %s133, %s134
    %p148 = scmp.eq.s32.totalorder %s24, 7
    %p149 = por %p147, %p148
    %p151 = scmp.ne.s32.totalorder %s134, %s150
    %p152 = scmp.eq.s32.totalorder %s24, 0
    %p153 = por %p151, %p152
    %s154 = sadd.s32 %s26, 1
    %s155 = sadd.s32 %s33, 1
    %s156 = ssub.s32 %s25, %s37
    %s157 = ssub.s32 %s154, %s155
    %s158 = sor.u32 %s156, %s157
    %p159 = scmp.eq.s32.totalorder %s158, 0
    %s161 = sadd.s32 %s160, 1
    %s162 = scalar_select %p159, %s160, %s161
    %p165 = pneg %p159
    %p166 = scmp.eq.s32.totalorder %s18, 7
    %p167 = por %p165, %p166
    %p168 = scmp.ne.s32.totalorder %s160, %s163
    %p169 = scmp.eq.s32.totalorder %s18, 0
    %p170 = por %p168, %p169
    %p171 = scmp.ne.s32.totalorder %s160, %s163
    %p172 = scmp.eq.s32.totalorder %s23, 7
    %p173 = por %p171, %p172
    %p174 = scmp.ne.s32.totalorder %s163, %s164
    %p175 = scmp.eq.s32.totalorder %s23, 0
    %p176 = por %p174, %p175
    %p177 = scmp.ne.s32.totalorder %s163, %s164
    %p178 = scmp.eq.s32.totalorder %s24, 7
    %p179 = por %p177, %p178
    %p181 = scmp.ne.s32.totalorder %s164, %s180
    %p182 = scmp.eq.s32.totalorder %s24, 0
    %p183 = por %p181, %p182
    %s184 = sadd.s32 %s26, 2
    %s185 = sadd.s32 %s33, 2
    %s186 = ssub.s32 %s25, %s37
    %s187 = ssub.s32 %s184, %s185
    %s188 = sor.u32 %s186, %s187
    %p189 = scmp.eq.s32.totalorder %s188, 0
    %s191 = sadd.s32 %s190, 1
    %s192 = scalar_select %p189, %s190, %s191
    %p195 = pneg %p189
    %p196 = scmp.eq.s32.totalorder %s18, 7
    %p197 = por %p195, %p196
    %p198 = scmp.ne.s32.totalorder %s190, %s193
    %p199 = scmp.eq.s32.totalorder %s18, 0
    %p200 = por %p198, %p199
    %p201 = scmp.ne.s32.totalorder %s190, %s193
    %p202 = scmp.eq.s32.totalorder %s23, 7
    %p203 = por %p201, %p202
    %p204 = scmp.ne.s32.totalorder %s193, %s194
    %p205 = scmp.eq.s32.totalorder %s23, 0
    %p206 = por %p204, %p205
    %p207 = scmp.ne.s32.totalorder %s193, %s194
    %p208 = scmp.eq.s32.totalorder %s24, 7
    %p209 = por %p207, %p208
    %p211 = scmp.ne.s32.totalorder %s194, %s210
    %p212 = scmp.eq.s32.totalorder %s24, 0
    %p213 = por %p211, %p212
    %s215 = sadd.s32 %s214, 1
    %p218 = scmp.eq.s32.totalorder %s18, 7
    %p219 = scmp.ne.s32.totalorder %s214, %s216
    %p220 = scmp.eq.s32.totalorder %s18, 0
    %p221 = por %p219, %p220
    %p222 = scmp.ne.s32.totalorder %s214, %s216
    %p223 = scmp.eq.s32.totalorder %s23, 7
    %p224 = por %p222, %p223
    %p225 = scmp.ne.s32.totalorder %s216, %s217
    %p226 = scmp.eq.s32.totalorder %s23, 0
    %p227 = por %p225, %p226
    %p228 = scmp.ne.s32.totalorder %s216, %s217
    %p229 = scmp.eq.s32.totalorder %s24, 7
    %p230 = por %p228, %p229
    %p232 = scmp.ne.s32.totalorder %s217, %s231
    %p233 = scmp.eq.s32.totalorder %s24, 0
    %p234 = por %p232, %p233
    %s236 = sadd.s32 %s235, 1
    %p239 = scmp.eq.s32.totalorder %s18, 7
    %p240 = scmp.ne.s32.totalorder %s235, %s237
    %p241 = scmp.eq.s32.totalorder %s18, 0
    %p242 = por %p240, %p241
    %p243 = scmp.ne.s32.totalorder %s235, %s237
    %p244 = scmp.eq.s32.totalorder %s23, 7
    %p245 = por %p243, %p244
    %p246 = scmp.ne.s32.totalorder %s237, %s238
    %p247 = scmp.eq.s32.totalorder %s23, 0
    %p248 = por %p246, %p247
    %p249 = scmp.ne.s32.totalorder %s237, %s238
    %p250 = scmp.eq.s32.totalorder %s24, 7
    %p251 = por %p249, %p250
    %p253 = scmp.ne.s32.totalorder %s238, %s252
    %p254 = scmp.eq.s32.totalorder %s24, 0
    %p255 = por %p253, %p254
    %s257 = sadd.s32 %s256, 1
    %p260 = scmp.eq.s32.totalorder %s18, 7
    %p261 = scmp.ne.s32.totalorder %s256, %s258
    %p262 = scmp.eq.s32.totalorder %s18, 0
    %p263 = por %p261, %p262
    %p264 = scmp.ne.s32.totalorder %s256, %s258
    %p265 = scmp.eq.s32.totalorder %s23, 7
    %p266 = por %p264, %p265
    %p267 = scmp.ne.s32.totalorder %s258, %s259
    %p268 = scmp.eq.s32.totalorder %s23, 0
    %p269 = por %p267, %p268
    %p270 = scmp.ne.s32.totalorder %s258, %s259
    %p271 = scmp.eq.s32.totalorder %s24, 7
    %p272 = por %p270, %p271
    %p274 = scmp.ne.s32.totalorder %s259, %s273
    %p275 = scmp.eq.s32.totalorder %s24, 0
    %p276 = por %p274, %p275
    %s278 = sadd.s32 %s277, 1
    %p281 = scmp.eq.s32.totalorder %s18, 7
    %p282 = scmp.ne.s32.totalorder %s277, %s279
    %p283 = scmp.eq.s32.totalorder %s18, 0
    %p284 = por %p282, %p283
    %p285 = scmp.ne.s32.totalorder %s277, %s279
    %p286 = scmp.eq.s32.totalorder %s23, 7
    %p287 = por %p285, %p286
    %p288 = scmp.ne.s32.totalorder %s279, %s280
    %p289 = scmp.eq.s32.totalorder %s23, 0
    %p290 = por %p288, %p289
    %p291 = scmp.ne.s32.totalorder %s279, %s280
    %p292 = scmp.eq.s32.totalorder %s24, 7
    %p293 = por %p291, %p292
    %p295 = scmp.ne.s32.totalorder %s280, %s294
    %p296 = scmp.eq.s32.totalorder %s24, 0
    %p297 = por %p295, %p296
    %s299 = sadd.s32 %s298, 1
    %p302 = scmp.eq.s32.totalorder %s18, 7
    %p303 = scmp.ne.s32.totalorder %s298, %s300
    %p304 = scmp.eq.s32.totalorder %s18, 0
    %p305 = por %p303, %p304
    %p306 = scmp.ne.s32.totalorder %s298, %s300
    %p307 = scmp.eq.s32.totalorder %s23, 7
    %p308 = por %p306, %p307
    %p309 = scmp.ne.s32.totalorder %s300, %s301
    %p310 = scmp.eq.s32.totalorder %s23, 0
    %p311 = por %p309, %p310
    %p312 = scmp.ne.s32.totalorder %s300, %s301
    %p313 = scmp.eq.s32.totalorder %s24, 7
    %p314 = por %p312, %p313
    %p316 = scmp.ne.s32.totalorder %s301, %s315
    %p317 = scmp.eq.s32.totalorder %s24, 0
    %p318 = por %p316, %p317
    %s320 = sadd.s32 %s319, 1
    %p323 = scmp.eq.s32.totalorder %s18, 7
    %p324 = scmp.ne.s32.totalorder %s319, %s321
    %p325 = scmp.eq.s32.totalorder %s18, 0
    %p326 = por %p324, %p325
    %p327 = scmp.ne.s32.totalorder %s319, %s321
    %p328 = scmp.eq.s32.totalorder %s23, 7
    %p329 = por %p327, %p328
    %p330 = scmp.ne.s32.totalorder %s321, %s322
    %p331 = scmp.eq.s32.totalorder %s23, 0
    %p332 = por %p330, %p331
    %p333 = scmp.ne.s32.totalorder %s321, %s322
    %p334 = scmp.eq.s32.totalorder %s24, 7
    %p335 = por %p333, %p334
    %p337 = scmp.ne.s32.totalorder %s322, %s336
    %p338 = scmp.eq.s32.totalorder %s24, 0
    %p339 = por %p337, %p338
    %s340 = ssub.s32 %s25, %s37
    %s341 = ssub.s32 %s26, %s33
    %s342 = sor.u32 %s340, %s341
    %p343 = scmp.eq.s32.totalorder %s342, 0
    %s345 = sadd.s32 %s344, 1
    %s346 = scalar_select %p343, %s344, %s345
    %p349 = pneg %p343
    %p350 = scmp.eq.s32.totalorder %s18, 7
    %p351 = por %p349, %p350
    %p352 = scmp.ne.s32.totalorder %s344, %s347
    %p353 = scmp.eq.s32.totalorder %s18, 0
    %p354 = por %p352, %p353
    %p355 = scmp.ne.s32.totalorder %s344, %s347
    %p356 = scmp.eq.s32.totalorder %s23, 7
    %p357 = por %p355, %p356
    %p358 = scmp.ne.s32.totalorder %s347, %s348
    %p359 = scmp.eq.s32.totalorder %s23, 0
    %p360 = por %p358, %p359
    %p361 = scmp.ne.s32.totalorder %s347, %s348
    %p362 = scmp.eq.s32.totalorder %s24, 7
    %p363 = por %p361, %p362
    %p365 = scmp.ne.s32.totalorder %s348, %s364
    %p366 = scmp.eq.s32.totalorder %s24, 0
    %p367 = por %p365, %p366
    %p368 = scmp.le.s32.totalorder 1, %s18
    %p369 = scmp.lt.s32.totalorder %s18, 9
    %p370 = pnand %p368, %p369
    %p371 = pneg %p370
    // Predicated region
    $region9: #{inception_forward.3} parent=5 // pred_check
      _
    $region10: #{inception_forward.3} parent=5 // pred_check_branch
      %373 = sbr.rel (%p370) target = $region12
    $region11: #{inception_forward.3} parent=5 // pred_region
      %s374 = ssub.s32 %s18, 1
      // Predicated region
      $region13: #{inception_forward.3} parent=11 // pred_check
        %p375 = pneg %p227
      $region14: #{inception_forward.3} parent=11 // pred_check_branch
        %377 = sbr.rel (%p375) target = $region16
      $region15: #{inception_forward.3} parent=11 // pred_region
        _
      $region16: #{inception_forward.3} parent=11 // pred_fallthru
        _
      // Predicated region
      $region17: #{inception_forward.3} parent=11 // pred_check
        %p378 = pneg %p248
      $region18: #{inception_forward.3} parent=11 // pred_check_branch
        %380 = sbr.rel (%p378) target = $region20
      $region19: #{inception_forward.3} parent=11 // pred_region
        _
      $region20: #{inception_forward.3} parent=11 // pred_fallthru
        _
      // Predicated region
      $region21: #{inception_forward.3} parent=11 // pred_check
        %p381 = pneg %p269
      $region22: #{inception_forward.3} parent=11 // pred_check_branch
        %383 = sbr.rel (%p381) target = $region24
      $region23: #{inception_forward.3} parent=11 // pred_region
        _
      $region24: #{inception_forward.3} parent=11 // pred_fallthru
        _
      // Predicated region
      $region25: #{inception_forward.3} parent=11 // pred_check
        %p384 = pneg %p290
      $region26: #{inception_forward.3} parent=11 // pred_check_branch
        %386 = sbr.rel (%p384) target = $region28
      $region27: #{inception_forward.3} parent=11 // pred_region
        _
      $region28: #{inception_forward.3} parent=11 // pred_fallthru
        _
      // Predicated region
      $region29: #{inception_forward.3} parent=11 // pred_check
        %p387 = pneg %p311
      $region30: #{inception_forward.3} parent=11 // pred_check_branch
        %389 = sbr.rel (%p387) target = $region32
      $region31: #{inception_forward.3} parent=11 // pred_region
        _
      $region32: #{inception_forward.3} parent=11 // pred_fallthru
        _
      // Predicated region
      $region33: #{inception_forward.3} parent=11 // pred_check
        %p390 = pneg %p332
      $region34: #{inception_forward.3} parent=11 // pred_check_branch
        %392 = sbr.rel (%p390) target = $region36
      $region35: #{inception_forward.3} parent=11 // pred_region
        _
      $region36: #{inception_forward.3} parent=11 // pred_fallthru
        _
    $region12: #{inception_forward.3} parent=5 // pred_fallthru
      _
    %p393 = scmp.lt.s32.totalorder %s18, 8
    // Predicated region
    $region37: #{inception_forward.3} parent=5 // pred_check
      %p394 = pneg %p393
    $region38: #{inception_forward.3} parent=5 // pred_check_branch
      %396 = sbr.rel (%p394) target = $region40
    $region39: #{inception_forward.3} parent=5 // pred_region
      // Predicated region
      $region41: #{inception_forward.3} parent=39 // pred_check
        %p397 = pneg %p52
      $region42: #{inception_forward.3} parent=39 // pred_check_branch
        %399 = sbr.rel (%p397) target = $region44
      $region43: #{inception_forward.3} parent=39 // pred_region
        %p400 = scmp.lt.s32.totalorder %s25, 1
        %s401 = scalar_select %p400, %s25, 1
        %p402 = scmp.lt.s32.totalorder %s26, 5
        %s403 = scalar_select %p402, %s26, 5
        %s404 = smul.addr %s403, 21
        %s405 = smul.addr %s401, 126
        %s406 = sadd.s32 %s404, %s405
        %s407 = smul.addr %s406, 4
        %s408 = scalar_lea.vmem %s0, %s407
      $region44: #{inception_forward.3} parent=39 // pred_fallthru
        _
      // Predicated region
      $region45: #{inception_forward.3} parent=39 // pred_check
        %p409 = pneg %p82
      $region46: #{inception_forward.3} parent=39 // pred_check_branch
        %411 = sbr.rel (%p409) target = $region48
      $region47: #{inception_forward.3} parent=39 // pred_region
        %s412 = sadd.s32 %s26, 1
        %p413 = scmp.lt.s32.totalorder %s25, 1
        %s414 = scalar_select %p413, %s25, 1
        %p415 = scmp.lt.s32.totalorder %s412, 5
        %s416 = scalar_select %p415, %s412, 5
        %s417 = smul.addr %s416, 21
        %s418 = smul.addr %s414, 126
        %s419 = sadd.s32 %s417, %s418
        %s420 = smul.addr %s419, 4
        %s421 = scalar_lea.vmem %s1, %s420
        %s422 = sadd.s32 %s26, 1
      $region48: #{inception_forward.3} parent=39 // pred_fallthru
        _
      // Predicated region
      $region49: #{inception_forward.3} parent=39 // pred_check
        %p423 = pneg %p112
      $region50: #{inception_forward.3} parent=39 // pred_check_branch
        %425 = sbr.rel (%p423) target = $region52
      $region51: #{inception_forward.3} parent=39 // pred_region
        %s426 = sadd.s32 %s26, 2
        %p427 = scmp.lt.s32.totalorder %s25, 1
        %s428 = scalar_select %p427, %s25, 1
        %p429 = scmp.lt.s32.totalorder %s426, 5
        %s430 = scalar_select %p429, %s426, 5
        %s431 = smul.addr %s430, 21
        %s432 = smul.addr %s428, 126
        %s433 = sadd.s32 %s431, %s432
        %s434 = smul.addr %s433, 4
        %s435 = scalar_lea.vmem %s2, %s434
        %s436 = sadd.s32 %s26, 2
      $region52: #{inception_forward.3} parent=39 // pred_fallthru
        _
      // Predicated region
      $region53: #{inception_forward.3} parent=39 // pred_check
        %p437 = pneg %p140
      $region54: #{inception_forward.3} parent=39 // pred_check_branch
        %439 = sbr.rel (%p437) target = $region56
      $region55: #{inception_forward.3} parent=39 // pred_region
        %p440 = scmp.lt.s32.totalorder %s25, 1
        %s441 = scalar_select %p440, %s25, 1
        %p442 = scmp.lt.s32.totalorder %s26, 5
        %s443 = scalar_select %p442, %s26, 5
        %s444 = smul.addr %s443, 42
        %s445 = smul.addr %s441, 252
        %s446 = sadd.s32 %s444, %s445
        %s447 = smul.addr %s446, 4
        %s448 = scalar_lea.vmem %s3, %s447
      $region56: #{inception_forward.3} parent=39 // pred_fallthru
        _
      // Predicated region
      $region57: #{inception_forward.3} parent=39 // pred_check
        %p449 = pneg %p170
      $region58: #{inception_forward.3} parent=39 // pred_check_branch
        %451 = sbr.rel (%p449) target = $region60
      $region59: #{inception_forward.3} parent=39 // pred_region
        %s452 = sadd.s32 %s26, 1
        %p453 = scmp.lt.s32.totalorder %s25, 1
        %s454 = scalar_select %p453, %s25, 1
        %p455 = scmp.lt.s32.totalorder %s452, 5
        %s456 = scalar_select %p455, %s452, 5
        %s457 = smul.addr %s456, 42
        %s458 = smul.addr %s454, 252
        %s459 = sadd.s32 %s457, %s458
        %s460 = smul.addr %s459, 4
        %s461 = scalar_lea.vmem %s4, %s460
        %s462 = sadd.s32 %s26, 1
      $region60: #{inception_forward.3} parent=39 // pred_fallthru
        _
      // Predicated region
      $region61: #{inception_forward.3} parent=39 // pred_check
        %p463 = pneg %p200
      $region62: #{inception_forward.3} parent=39 // pred_check_branch
        %465 = sbr.rel (%p463) target = $region64
      $region63: #{inception_forward.3} parent=39 // pred_region
        %s466 = sadd.s32 %s26, 2
        %p467 = scmp.lt.s32.totalorder %s25, 1
        %s468 = scalar_select %p467, %s25, 1
        %p469 = scmp.lt.s32.totalorder %s466, 5
        %s470 = scalar_select %p469, %s466, 5
        %s471 = smul.addr %s470, 42
        %s472 = smul.addr %s468, 252
        %s473 = sadd.s32 %s471, %s472
        %s474 = smul.addr %s473, 4
        %s475 = scalar_lea.vmem %s5, %s474
        %s476 = sadd.s32 %s26, 2
      $region64: #{inception_forward.3} parent=39 // pred_fallthru
        _
    $region40: #{inception_forward.3} parent=5 // pred_fallthru
      _
    %p477 = scmp.le.s32.totalorder 1, %s18
    %p478 = scmp.lt.s32.totalorder %s18, 9
    %p479 = pnand %p477, %p478
    %p480 = pneg %p479
    // Predicated region
    $region65: #{inception_forward.3} parent=5 // pred_check
      _
    $region66: #{inception_forward.3} parent=5 // pred_check_branch
      %482 = sbr.rel (%p479) target = $region68
    $region67: #{inception_forward.3} parent=5 // pred_region
      %s483 = ssub.s32 %s18, 1
      %p484 = scmp.lt.s32.totalorder %s27, 1
      %s485 = scalar_select %p484, %s27, 1
      %p486 = scmp.lt.s32.totalorder %s28, 5
      %s487 = scalar_select %p486, %s28, 5
      %s488 = smul.addr %s487, 21
      %s489 = smul.addr %s485, 126
      %s490 = sadd.s32 %s488, %s489
      %s491 = smul.addr %s490, 4
      %s492 = scalar_lea.vmem %s0, %s491
      %p493 = pneg %p58
      %p494 = pneg %p55
      %s495 = sadd.s32 %s28, 1
      %p496 = scmp.lt.s32.totalorder %s27, 1
      %s497 = scalar_select %p496, %s27, 1
      %p498 = scmp.lt.s32.totalorder %s495, 5
      %s499 = scalar_select %p498, %s495, 5
      %s500 = smul.addr %s499, 21
      %s501 = smul.addr %s497, 126
      %s502 = sadd.s32 %s500, %s501
      %s503 = smul.addr %s502, 4
      %s504 = scalar_lea.vmem %s1, %s503
      %p505 = pneg %p88
      %p506 = pneg %p85
      %s507 = sadd.s32 %s28, 2
      %p508 = scmp.lt.s32.totalorder %s27, 1
      %s509 = scalar_select %p508, %s27, 1
      %p510 = scmp.lt.s32.totalorder %s507, 5
      %s511 = scalar_select %p510, %s507, 5
      %s512 = smul.addr %s511, 21
      %s513 = smul.addr %s509, 126
      %s514 = sadd.s32 %s512, %s513
      %s515 = smul.addr %s514, 4
      %s516 = scalar_lea.vmem %s2, %s515
      %p517 = pneg %p118
      %p518 = pneg %p115
      %p519 = scmp.lt.s32.totalorder %s27, 1
      %s520 = scalar_select %p519, %s27, 1
      %p521 = scmp.lt.s32.totalorder %s28, 5
      %s522 = scalar_select %p521, %s28, 5
      %s523 = smul.addr %s522, 42
      %s524 = smul.addr %s520, 252
      %s525 = sadd.s32 %s523, %s524
      %s526 = smul.addr %s525, 4
      %s527 = scalar_lea.vmem %s3, %s526
      %p528 = pneg %p146
      %p529 = pneg %p143
      %s530 = sadd.s32 %s28, 1
      %p531 = scmp.lt.s32.totalorder %s27, 1
      %s532 = scalar_select %p531, %s27, 1
      %p533 = scmp.lt.s32.totalorder %s530, 5
      %s534 = scalar_select %p533, %s530, 5
      %s535 = smul.addr %s534, 42
      %s536 = smul.addr %s532, 252
      %s537 = sadd.s32 %s535, %s536
      %s538 = smul.addr %s537, 4
      %s539 = scalar_lea.vmem %s4, %s538
      %p540 = pneg %p176
      %p541 = pneg %p173
      %s542 = sadd.s32 %s28, 2
      %p543 = scmp.lt.s32.totalorder %s27, 1
      %s544 = scalar_select %p543, %s27, 1
      %p545 = scmp.lt.s32.totalorder %s542, 5
      %s546 = scalar_select %p545, %s542, 5
      %s547 = smul.addr %s546, 42
      %s548 = smul.addr %s544, 252
      %s549 = sadd.s32 %s547, %s548
      %s550 = smul.addr %s549, 4
      %s551 = scalar_lea.vmem %s5, %s550
      %p552 = pneg %p206
      %p553 = pneg %p203
      %p554 = pneg %p227
      %p555 = pneg %p224
      %p556 = pneg %p248
      %p557 = pneg %p245
      %p558 = pneg %p269
      %p559 = pneg %p266
      %p560 = pneg %p290
      %p561 = pneg %p287
      %p562 = pneg %p311
      %p563 = pneg %p308
      %p564 = pneg %p332
      %p565 = pneg %p329
      %p566 = pneg %p360
      %p567 = pneg %p357
      %p568 = scmp.lt.s32.totalorder %s27, 1
      %s569 = scalar_select %p568, %s27, 1
      %p570 = scmp.lt.s32.totalorder %s28, 3
      %s571 = scalar_select %p570, %s28, 3
      %s572 = smul.addr %s571, 16
      %s573 = smul.addr %s569, 64
      %s574 = sadd.s32 %s572, %s573
      %s575 = smul.addr %s574, 4
      %s576 = scalar_lea.vmem %s12, %s575
      %p577 = scmp.lt.s32.totalorder %s27, 1
      %s578 = scalar_select %p577, %s27, 1
      %p579 = scmp.lt.s32.totalorder %s28, 5
      %s580 = scalar_select %p579, %s28, 5
      %s581 = smul.addr %s580, 21
      %s582 = smul.addr %s578, 126
      %s583 = sadd.s32 %s581, %s582
      %s584 = smul.addr %s583, 4
      %s585 = scalar_lea.vmem %s0, %s584
      %s586 = sadd.s32 %s28, 1
      %p587 = scmp.lt.s32.totalorder %s27, 1
      %s588 = scalar_select %p587, %s27, 1
      %p589 = scmp.lt.s32.totalorder %s586, 5
      %s590 = scalar_select %p589, %s586, 5
      %s591 = smul.addr %s590, 21
      %s592 = smul.addr %s588, 126
      %s593 = sadd.s32 %s591, %s592
      %s594 = smul.addr %s593, 4
      %s595 = scalar_lea.vmem %s1, %s594
      %s596 = sadd.s32 %s28, 1
      %s597 = sadd.s32 %s28, 2
      %p598 = scmp.lt.s32.totalorder %s27, 1
      %s599 = scalar_select %p598, %s27, 1
      %p600 = scmp.lt.s32.totalorder %s597, 5
      %s601 = scalar_select %p600, %s597, 5
      %s602 = smul.addr %s601, 21
      %s603 = smul.addr %s599, 126
      %s604 = sadd.s32 %s602, %s603
      %s605 = smul.addr %s604, 4
      %s606 = scalar_lea.vmem %s2, %s605
      %s607 = sadd.s32 %s28, 2
      %p608 = scmp.lt.s32.totalorder %s27, 1
      %s609 = scalar_select %p608, %s27, 1
      %p610 = scmp.lt.s32.totalorder %s28, 5
      %s611 = scalar_select %p610, %s28, 5
      %s612 = smul.addr %s611, 42
      %s613 = smul.addr %s609, 252
      %s614 = sadd.s32 %s612, %s613
      %s615 = smul.addr %s614, 4
      %s616 = scalar_lea.vmem %s3, %s615
      %s617 = sadd.s32 %s28, 1
      %p618 = scmp.lt.s32.totalorder %s27, 1
      %s619 = scalar_select %p618, %s27, 1
      %p620 = scmp.lt.s32.totalorder %s617, 5
      %s621 = scalar_select %p620, %s617, 5
      %s622 = smul.addr %s621, 42
      %s623 = smul.addr %s619, 252
      %s624 = sadd.s32 %s622, %s623
      %s625 = smul.addr %s624, 4
      %s626 = scalar_lea.vmem %s4, %s625
      %s627 = sadd.s32 %s28, 1
      %s628 = sadd.s32 %s28, 2
      %p629 = scmp.lt.s32.totalorder %s27, 1
      %s630 = scalar_select %p629, %s27, 1
      %p631 = scmp.lt.s32.totalorder %s628, 5
      %s632 = scalar_select %p631, %s628, 5
      %s633 = smul.addr %s632, 42
      %s634 = smul.addr %s630, 252
      %s635 = sadd.s32 %s633, %s634
      %s636 = smul.addr %s635, 4
      %s637 = scalar_lea.vmem %s5, %s636
      %s638 = sadd.s32 %s28, 2
      %p639 = scmp.lt.s32.totalorder %s27, 1
      %s640 = scalar_select %p639, %s27, 1
      %p641 = scmp.lt.s32.totalorder %s28, 3
      %s642 = scalar_select %p641, %s28, 3
      %s643 = smul.addr %s642, 16
      %s644 = smul.addr %s640, 64
      %s645 = sadd.s32 %s643, %s644
      %s646 = smul.addr %s645, 4
      %s647 = scalar_lea.vmem %s12, %s646
      %v649 = vld [vmem:[%s585] sm:$0xf]
      %v650 = vld [vmem:[%s585 + $0x4] sm:$0xf]
      %v651 = vld [vmem:[%s585 + $0x8] sm:$0xf]
      %v652 = vld [vmem:[%s585 + $0xc] sm:$0xf]
      %v653 = vld [vmem:[%s585 + $0x10] sm:$0xf]
      %v654 = vld [vmem:[%s585 + $0x14] sm:$0xf]
      %v655 = vld [vmem:[%s585 + $0x18] sm:$0xf]
      %v656 = vld [vmem:[%s585 + $0x1c] sm:$0xf]
      %v657 = vld [vmem:[%s585 + $0x20] sm:$0xf]
      %v658 = vld [vmem:[%s585 + $0x24] sm:$0xf]
      %v659 = vld [vmem:[%s585 + $0x28] sm:$0xf]
      %v660 = vld [vmem:[%s585 + $0x2c] sm:$0xf]
      %v661 = vld [vmem:[%s585 + $0x30] sm:$0xf]
      %v662 = vld [vmem:[%s585 + $0x34] sm:$0xf]
      %v663 = vld [vmem:[%s585 + $0x38] sm:$0xf]
      %v664 = vld [vmem:[%s585 + $0x3c] sm:$0xf]
      %v665 = vld [vmem:[%s585 + $0x40] sm:$0xf]
      %v666 = vld [vmem:[%s585 + $0x44] sm:$0xf]
      %v667 = vld [vmem:[%s585 + $0x48] sm:$0xf]
      %v668 = vld [vmem:[%s585 + $0x4c] sm:$0xf]
      %v669 = vld [vmem:[%s585 + $0x50] sm:$0x1]
      %v670 = vld [vmem:[%s595] sm:$0xf]
      %v671 = vld [vmem:[%s595 + $0x4] sm:$0xf]
      %v672 = vld [vmem:[%s595 + $0x8] sm:$0xf]
      %v673 = vld [vmem:[%s595 + $0xc] sm:$0xf]
      %v674 = vld [vmem:[%s595 + $0x10] sm:$0xf]
      %v675 = vld [vmem:[%s595 + $0x14] sm:$0xf]
      %v676 = vld [vmem:[%s595 + $0x18] sm:$0xf]
      %v677 = vld [vmem:[%s595 + $0x1c] sm:$0xf]
      %v678 = vld [vmem:[%s595 + $0x20] sm:$0xf]
      %v679 = vld [vmem:[%s595 + $0x24] sm:$0xf]
      %v680 = vld [vmem:[%s595 + $0x28] sm:$0xf]
      %v681 = vld [vmem:[%s595 + $0x2c] sm:$0xf]
      %v682 = vld [vmem:[%s595 + $0x30] sm:$0xf]
      %v683 = vld [vmem:[%s595 + $0x34] sm:$0xf]
      %v684 = vld [vmem:[%s595 + $0x38] sm:$0xf]
      %v685 = vld [vmem:[%s595 + $0x3c] sm:$0xf]
      %v686 = vld [vmem:[%s595 + $0x40] sm:$0xf]
      %v687 = vld [vmem:[%s595 + $0x44] sm:$0xf]
      %v688 = vld [vmem:[%s595 + $0x48] sm:$0xf]
      %v689 = vld [vmem:[%s595 + $0x4c] sm:$0xf]
      %v690 = vld [vmem:[%s595 + $0x50] sm:$0x1]
      %v691 = vld [vmem:[%s606] sm:$0xf]
      %v692 = vld [vmem:[%s606 + $0x4] sm:$0xf]
      %v693 = vld [vmem:[%s606 + $0x8] sm:$0xf]
      %v694 = vld [vmem:[%s606 + $0xc] sm:$0xf]
      %v695 = vld [vmem:[%s606 + $0x10] sm:$0xf]
      %v696 = vld [vmem:[%s606 + $0x14] sm:$0xf]
      %v697 = vld [vmem:[%s606 + $0x18] sm:$0xf]
      %v698 = vld [vmem:[%s606 + $0x1c] sm:$0xf]
      %v699 = vld [vmem:[%s606 + $0x20] sm:$0xf]
      %v700 = vld [vmem:[%s606 + $0x24] sm:$0xf]
      %v701 = vld [vmem:[%s606 + $0x28] sm:$0xf]
      %v702 = vld [vmem:[%s606 + $0x2c] sm:$0xf]
      %v703 = vld [vmem:[%s606 + $0x30] sm:$0xf]
      %v704 = vld [vmem:[%s606 + $0x34] sm:$0xf]
      %v705 = vld [vmem:[%s606 + $0x38] sm:$0xf]
      %v706 = vld [vmem:[%s606 + $0x3c] sm:$0xf]
      %v707 = vld [vmem:[%s606 + $0x40] sm:$0xf]
      %v708 = vld [vmem:[%s606 + $0x44] sm:$0xf]
      %v709 = vld [vmem:[%s606 + $0x48] sm:$0xf]
      %v710 = vld [vmem:[%s606 + $0x4c] sm:$0xf]
      %v711 = vld [vmem:[%s606 + $0x50] sm:$0x1]
      %v712 = vld [vmem:[%s6] sm:$0xf]
      %v730 = vunpack.c.l.b16 %v672
      %v731 = vunpack.c.l.b16 %v673
      %v732 = vunpack.c.l.b16 %v674
      %v733 = vunpack.c.l.b16 %v675
      %v734 = vunpack.c.l.b16 %v676
      %v735 = vunpack.c.l.b16 %v677
      %v736 = vunpack.c.l.b16 %v678
      %v737 = vunpack.c.l.b16 %v679
      %v738 = vunpack.c.l.b16 %v680
      %v739 = vunpack.c.l.b16 %v681
      %v740 = vunpack.c.l.b16 %v682
      %v741 = vunpack.c.l.b16 %v683
      %v742 = vunpack.c.l.b16 %v684
      %v743 = vunpack.c.l.b16 %v685
      %v744 = vunpack.c.l.b16 %v686
      %v745 = vunpack.c.l.b16 %v687
      %v746 = vunpack.c.l.b16 %v688
      %v747 = vpack.c.b16 %v731, %v730
      %v748 = vpack.c.b16 %v733, %v732
      %v749 = vpack.c.b16 %v735, %v734
      %v750 = vpack.c.b16 %v737, %v736
      %v751 = vpack.c.b16 %v739, %v738
      %v752 = vpack.c.b16 %v741, %v740
      %v753 = vpack.c.b16 %v743, %v742
      %v754 = vpack.c.b16 %v745, %v744
      %v755 = vpack.c.b16 %v746, %v746
      %vm756 = vsmask.f32 7424
      %v758 = vshrl.u32 %v747, 16
      %v760 = vshll.u32 %v747, 16
      %v762 = vrot.slane %v760, 1
      %v763 = vor.u32 %v758, %v762
      %v765 = vshll.u32 %v748, 16
      %v767 = vrot.slane %v765, 1
      %v768 = vsel %vm756, %v763, %v767
      %v769 = vshrl.u32 %v748, 16
      %v771 = vor.u32 %v769, %v767
      %v773 = vshll.u32 %v749, 16
      %v775 = vrot.slane %v773, 1
      %v776 = vsel %vm756, %v771, %v775
      %v777 = vshrl.u32 %v749, 16
      %v779 = vor.u32 %v777, %v775
      %v781 = vshll.u32 %v750, 16
      %v783 = vrot.slane %v781, 1
      %v784 = vsel %vm756, %v779, %v783
      %v785 = vshrl.u32 %v750, 16
      %v787 = vor.u32 %v785, %v783
      %v789 = vshll.u32 %v751, 16
      %v791 = vrot.slane %v789, 1
      %v792 = vsel %vm756, %v787, %v791
      %v793 = vshrl.u32 %v751, 16
      %v795 = vor.u32 %v793, %v791
      %v797 = vshll.u32 %v752, 16
      %v799 = vrot.slane %v797, 1
      %v800 = vsel %vm756, %v795, %v799
      %v801 = vshrl.u32 %v752, 16
      %v803 = vor.u32 %v801, %v799
      %v805 = vshll.u32 %v753, 16
      %v807 = vrot.slane %v805, 1
      %v808 = vsel %vm756, %v803, %v807
      %v809 = vshrl.u32 %v753, 16
      %v811 = vor.u32 %v809, %v807
      %v813 = vshll.u32 %v754, 16
      %v815 = vrot.slane %v813, 1
      %v816 = vsel %vm756, %v811, %v815
      %v817 = vshrl.u32 %v754, 16
      %v819 = vor.u32 %v817, %v815
      %v821 = vshll.u32 %v755, 16
      %v823 = vrot.slane %v821, 1
      %v824 = vsel %vm756, %v819, %v823
      %vm825 = vcmask 64512
      %v827 = vsel %vm825, %v768, 0
      %v830 = vsel %vm825, %v776, 0
      %v833 = vsel %vm825, %v784, 0
      %v836 = vsel %vm825, %v792, 0
      %v839 = vsel %vm825, %v800, 0
      %v842 = vsel %vm825, %v808, 0
      %v845 = vsel %vm825, %v816, 0
      %v848 = vsel %vm825, %v824, 0
      %vm850 = vcmask 1043456
      %v852 = vsel %vm850, %v712, 0
      %854 = vmatpush.bf16.msra.mxu0 0
      %855 = vmatpush.bf16.msra.mxu0 0
      %856 = vmatpush.bf16.msra.mxu0 0
      %857 = vmatpush.bf16.msra.mxu0 0
      %858 = vmatpush.bf16.msra.mxu0 0
      %859 = vmatpush.bf16.msra.mxu0 0
      %860 = vmatpush.bf16.msra.mxu0 0
      %861 = vmatpush.bf16.msra.mxu0 %v852
      %862 = vmatmul.bf16.gmra.mxu0 %v827
      %v863 = vpop.f32.mrf.mxu0
      %v864 = vadd.f32 0.0, %v863
      %v865 = vpop.f32.mrf.mxu0
      %v866 = vadd.f32 0.0, %v865
      %867 = vmatmul.bf16.gmra.mxu0 %v830
      %v868 = vpop.f32.mrf.mxu0
      %v869 = vadd.f32 0.0, %v868
      %v870 = vpop.f32.mrf.mxu0
      %v871 = vadd.f32 0.0, %v870
      %872 = vmatmul.bf16.gmra.mxu0 %v833
      %v873 = vpop.f32.mrf.mxu0
      %v874 = vadd.f32 0.0, %v873
      %v875 = vpop.f32.mrf.mxu0
      %v876 = vadd.f32 0.0, %v875
      %877 = vmatmul.bf16.gmra.mxu0 %v836
      %v878 = vpop.f32.mrf.mxu0
      %v879 = vadd.f32 0.0, %v878
      %v880 = vpop.f32.mrf.mxu0
      %v881 = vadd.f32 0.0, %v880
      %882 = vmatmul.bf16.gmra.mxu0 %v839
      %v883 = vpop.f32.mrf.mxu0
      %v884 = vadd.f32 0.0, %v883
      %v885 = vpop.f32.mrf.mxu0
      %v886 = vadd.f32 0.0, %v885
      %887 = vmatmul.bf16.gmra.mxu0 %v842
      %v888 = vpop.f32.mrf.mxu0
      %v889 = vadd.f32 0.0, %v888
      %v890 = vpop.f32.mrf.mxu0
      %v891 = vadd.f32 0.0, %v890
      %892 = vmatmul.bf16.gmra.mxu0 %v845
      %v893 = vpop.f32.mrf.mxu0
      %v894 = vadd.f32 0.0, %v893
      %v895 = vpop.f32.mrf.mxu0
      %v896 = vadd.f32 0.0, %v895
      %897 = vmatmul.bf16.gmra.mxu0 %v848
      %v898 = vpop.f32.mrf.mxu0
      %v899 = vadd.f32 0.0, %v898
      %v900 = vpop.f32.mrf.mxu0
      %v901 = vadd.f32 0.0, %v900
      %902 = vdwg.mxu0
      %v903 = vunpack.c.l.bf16 %v649
      %v904 = vunpack.c.l.bf16 %v650
      %v905 = vunpack.c.l.bf16 %v651
      %v906 = vunpack.c.l.bf16 %v652
      %v907 = vunpack.c.l.bf16 %v653
      %v908 = vunpack.c.l.bf16 %v654
      %v909 = vunpack.c.l.bf16 %v655
      %v910 = vunpack.c.l.bf16 %v656
      %v911 = vunpack.c.l.bf16 %v657
      %v912 = vunpack.c.l.bf16 %v658
      %v913 = vunpack.c.l.bf16 %v659
      %v914 = vunpack.c.l.bf16 %v660
      %v915 = vunpack.c.l.bf16 %v661
      %v916 = vunpack.c.l.bf16 %v662
      %v917 = vunpack.c.l.bf16 %v663
      %v918 = vunpack.c.l.bf16 %v664
      %v919 = vunpack.c.l.bf16 %v665
      %v920 = vunpack.c.l.bf16 %v666
      %v921 = vunpack.c.l.bf16 %v667
      %v922 = vunpack.c.l.bf16 %v668
      %v923 = vunpack.c.l.bf16 %v669
      %v924 = vunpack.c.l.bf16 %v670
      %v925 = vunpack.c.l.bf16 %v671
      %v926 = vunpack.c.l.bf16 %v672
      %v927 = vunpack.c.l.bf16 %v673
      %v928 = vunpack.c.l.bf16 %v674
      %v929 = vunpack.c.l.bf16 %v675
      %v930 = vunpack.c.l.bf16 %v676
      %v931 = vunpack.c.l.bf16 %v677
      %v932 = vunpack.c.l.bf16 %v678
      %v933 = vunpack.c.l.bf16 %v679
      %v934 = vunpack.c.l.bf16 %v680
      %v935 = vunpack.c.l.bf16 %v681
      %v936 = vunpack.c.l.bf16 %v682
      %v937 = vunpack.c.l.bf16 %v683
      %v938 = vunpack.c.l.bf16 %v684
      %v939 = vunpack.c.l.bf16 %v685
      %v940 = vunpack.c.l.bf16 %v686
      %v941 = vunpack.c.l.bf16 %v687
      %v942 = vunpack.c.l.bf16 %v688
      %v943 = vunpack.c.l.bf16 %v689
      %v944 = vunpack.c.l.bf16 %v690
      %v945 = vmax.f32 %v903, %v924
      %v946 = vmax.f32 %v904, %v925
      %v947 = vmax.f32 %v905, %v926
      %v948 = vmax.f32 %v906, %v927
      %v949 = vmax.f32 %v907, %v928
      %v950 = vmax.f32 %v908, %v929
      %v951 = vmax.f32 %v909, %v930
      %v952 = vmax.f32 %v910, %v931
      %v953 = vmax.f32 %v911, %v932
      %v954 = vmax.f32 %v912, %v933
      %v955 = vmax.f32 %v913, %v934
      %v956 = vmax.f32 %v914, %v935
      %v957 = vmax.f32 %v915, %v936
      %v958 = vmax.f32 %v916, %v937
      %v959 = vmax.f32 %v917, %v938
      %v960 = vmax.f32 %v918, %v939
      %v961 = vmax.f32 %v919, %v940
      %v962 = vmax.f32 %v920, %v941
      %v963 = vmax.f32 %v921, %v942
      %v964 = vmax.f32 %v922, %v943
      %v965 = vmax.f32 %v923, %v944
      %v966 = vpack.c.bf16 %v945, %v945
      %v967 = vpack.c.bf16 %v946, %v946
      %v968 = vpack.c.bf16 %v947, %v947
      %v969 = vpack.c.bf16 %v948, %v948
      %v970 = vpack.c.bf16 %v949, %v949
      %v971 = vpack.c.bf16 %v950, %v950
      %v972 = vpack.c.bf16 %v951, %v951
      %v973 = vpack.c.bf16 %v952, %v952
      %v974 = vpack.c.bf16 %v953, %v953
      %v975 = vpack.c.bf16 %v954, %v954
      %v976 = vpack.c.bf16 %v955, %v955
      %v977 = vpack.c.bf16 %v956, %v956
      %v978 = vpack.c.bf16 %v957, %v957
      %v979 = vpack.c.bf16 %v958, %v958
      %v980 = vpack.c.bf16 %v959, %v959
      %v981 = vpack.c.bf16 %v960, %v960
      %v982 = vpack.c.bf16 %v961, %v961
      %v983 = vpack.c.bf16 %v962, %v962
      %v984 = vpack.c.bf16 %v963, %v963
      %v985 = vpack.c.bf16 %v964, %v964
      %v986 = vpack.c.bf16 %v965, %v965
      %v987 = vunpack.c.l.bf16 %v966
      %v988 = vunpack.c.l.bf16 %v967
      %v989 = vunpack.c.l.bf16 %v968
      %v990 = vunpack.c.l.bf16 %v969
      %v991 = vunpack.c.l.bf16 %v970
      %v992 = vunpack.c.l.bf16 %v971
      %v993 = vunpack.c.l.bf16 %v972
      %v994 = vunpack.c.l.bf16 %v973
      %v995 = vunpack.c.l.bf16 %v974
      %v996 = vunpack.c.l.bf16 %v975
      %v997 = vunpack.c.l.bf16 %v976
      %v998 = vunpack.c.l.bf16 %v977
      %v999 = vunpack.c.l.bf16 %v978
      %v1000 = vunpack.c.l.bf16 %v979
      %v1001 = vunpack.c.l.bf16 %v980
      %v1002 = vunpack.c.l.bf16 %v981
      %v1003 = vunpack.c.l.bf16 %v982
      %v1004 = vunpack.c.l.bf16 %v983
      %v1005 = vunpack.c.l.bf16 %v984
      %v1006 = vunpack.c.l.bf16 %v985
      %v1007 = vunpack.c.l.bf16 %v986
      %v1008 = vunpack.c.l.bf16 %v691
      %v1009 = vunpack.c.l.bf16 %v692
      %v1010 = vunpack.c.l.bf16 %v693
      %v1011 = vunpack.c.l.bf16 %v694
      %v1012 = vunpack.c.l.bf16 %v695
      %v1013 = vunpack.c.l.bf16 %v696
      %v1014 = vunpack.c.l.bf16 %v697
      %v1015 = vunpack.c.l.bf16 %v698
      %v1016 = vunpack.c.l.bf16 %v699
      %v1017 = vunpack.c.l.bf16 %v700
      %v1018 = vunpack.c.l.bf16 %v701
      %v1019 = vunpack.c.l.bf16 %v702
      %v1020 = vunpack.c.l.bf16 %v703
      %v1021 = vunpack.c.l.bf16 %v704
      %v1022 = vunpack.c.l.bf16 %v705
      %v1023 = vunpack.c.l.bf16 %v706
      %v1024 = vunpack.c.l.bf16 %v707
      %v1025 = vunpack.c.l.bf16 %v708
      %v1026 = vunpack.c.l.bf16 %v709
      %v1027 = vunpack.c.l.bf16 %v710
      %v1028 = vunpack.c.l.bf16 %v711
      %v1029 = vmax.f32 %v987, %v1008
      %v1030 = vmax.f32 %v988, %v1009
      %v1031 = vmax.f32 %v989, %v1010
      %v1032 = vmax.f32 %v990, %v1011
      %v1033 = vmax.f32 %v991, %v1012
      %v1034 = vmax.f32 %v992, %v1013
      %v1035 = vmax.f32 %v993, %v1014
      %v1036 = vmax.f32 %v994, %v1015
      %v1037 = vmax.f32 %v995, %v1016
      %v1038 = vmax.f32 %v996, %v1017
      %v1039 = vmax.f32 %v997, %v1018
      %v1040 = vmax.f32 %v998, %v1019
      %v1041 = vmax.f32 %v999, %v1020
      %v1042 = vmax.f32 %v1000, %v1021
      %v1043 = vmax.f32 %v1001, %v1022
      %v1044 = vmax.f32 %v1002, %v1023
      %v1045 = vmax.f32 %v1003, %v1024
      %v1046 = vmax.f32 %v1004, %v1025
      %v1047 = vmax.f32 %v1005, %v1026
      %v1048 = vmax.f32 %v1006, %v1027
      %v1049 = vmax.f32 %v1007, %v1028
      %v1050 = vpack.c.bf16 %v1029, %v1029
      %v1051 = vpack.c.bf16 %v1030, %v1030
      %v1052 = vpack.c.bf16 %v1031, %v1031
      %v1053 = vpack.c.bf16 %v1032, %v1032
      %v1054 = vpack.c.bf16 %v1033, %v1033
      %v1055 = vpack.c.bf16 %v1034, %v1034
      %v1056 = vpack.c.bf16 %v1035, %v1035
      %v1057 = vpack.c.bf16 %v1036, %v1036
      %v1058 = vpack.c.bf16 %v1037, %v1037
      %v1059 = vpack.c.bf16 %v1038, %v1038
      %v1060 = vpack.c.bf16 %v1039, %v1039
      %v1061 = vpack.c.bf16 %v1040, %v1040
      %v1062 = vpack.c.bf16 %v1041, %v1041
      %v1063 = vpack.c.bf16 %v1042, %v1042
      %v1064 = vpack.c.bf16 %v1043, %v1043
      %v1065 = vpack.c.bf16 %v1044, %v1044
      %v1066 = vpack.c.bf16 %v1045, %v1045
      %v1067 = vpack.c.bf16 %v1046, %v1046
      %v1068 = vpack.c.bf16 %v1047, %v1047
      %v1069 = vpack.c.bf16 %v1048, %v1048
      %v1070 = vpack.c.bf16 %v1049, %v1049
      %v1071 = vunpack.c.l.bf16 %v1050
      %v1072 = vunpack.c.l.bf16 %v1051
      %v1073 = vunpack.c.l.bf16 %v1052
      %v1074 = vunpack.c.l.bf16 %v1053
      %v1075 = vunpack.c.l.bf16 %v1054
      %v1076 = vunpack.c.l.bf16 %v1055
      %v1077 = vunpack.c.l.bf16 %v1056
      %v1078 = vunpack.c.l.bf16 %v1057
      %v1079 = vunpack.c.l.bf16 %v1058
      %v1080 = vunpack.c.l.bf16 %v1059
      %v1081 = vunpack.c.l.bf16 %v1060
      %v1082 = vunpack.c.l.bf16 %v1061
      %v1083 = vunpack.c.l.bf16 %v1062
      %v1084 = vunpack.c.l.bf16 %v1063
      %v1085 = vunpack.c.l.bf16 %v1064
      %v1086 = vunpack.c.l.bf16 %v1065
      %v1087 = vunpack.c.l.bf16 %v1066
      %v1088 = vunpack.c.l.bf16 %v1067
      %v1089 = vunpack.c.l.bf16 %v1068
      %v1090 = vunpack.c.l.bf16 %v1069
      %v1091 = vunpack.c.l.bf16 %v1070
      %vm1113 = vcmask 1046528
      %v1114 = vrot.slane %v1071, 1
      %v1115 = vrot.slane %v1072, 1
      %v1116 = vsel %vm1113, %v1114, %v1115
      %v1117 = vrot.slane %v1073, 1
      %v1118 = vsel %vm1113, %v1115, %v1117
      %v1119 = vrot.slane %v1074, 1
      %v1120 = vsel %vm1113, %v1117, %v1119
      %v1121 = vrot.slane %v1075, 1
      %v1122 = vsel %vm1113, %v1119, %v1121
      %v1123 = vrot.slane %v1076, 1
      %v1124 = vsel %vm1113, %v1121, %v1123
      %v1125 = vrot.slane %v1077, 1
      %v1126 = vsel %vm1113, %v1123, %v1125
      %v1127 = vrot.slane %v1078, 1
      %v1128 = vsel %vm1113, %v1125, %v1127
      %v1129 = vrot.slane %v1079, 1
      %v1130 = vsel %vm1113, %v1127, %v1129
      %v1131 = vrot.slane %v1080, 1
      %v1132 = vsel %vm1113, %v1129, %v1131
      %v1133 = vrot.slane %v1081, 1
      %v1134 = vsel %vm1113, %v1131, %v1133
      %v1135 = vrot.slane %v1082, 1
      %v1136 = vsel %vm1113, %v1133, %v1135
      %v1137 = vrot.slane %v1083, 1
      %v1138 = vsel %vm1113, %v1135, %v1137
      %v1139 = vrot.slane %v1084, 1
      %v1140 = vsel %vm1113, %v1137, %v1139
      %v1141 = vrot.slane %v1085, 1
      %v1142 = vsel %vm1113, %v1139, %v1141
      %v1143 = vrot.slane %v1086, 1
      %v1144 = vsel %vm1113, %v1141, %v1143
      %v1145 = vrot.slane %v1087, 1
      %v1146 = vsel %vm1113, %v1143, %v1145
      %v1147 = vrot.slane %v1088, 1
      %v1148 = vsel %vm1113, %v1145, %v1147
      %v1149 = vrot.slane %v1089, 1
      %v1150 = vsel %vm1113, %v1147, %v1149
      %v1151 = vrot.slane %v1090, 1
      %v1152 = vsel %vm1113, %v1149, %v1151
      %v1153 = vrot.slane %v1091, 1
      %v1154 = vsel %vm1113, %v1151, %v1153
      %v1175 = vmax.f32 %v1071, %v1116
      %v1176 = vmax.f32 %v1072, %v1118
      %v1177 = vmax.f32 %v1073, %v1120
      %v1178 = vmax.f32 %v1074, %v1122
      %v1179 = vmax.f32 %v1075, %v1124
      %v1180 = vmax.f32 %v1076, %v1126
      %v1181 = vmax.f32 %v1077, %v1128
      %v1182 = vmax.f32 %v1078, %v1130
      %v1183 = vmax.f32 %v1079, %v1132
      %v1184 = vmax.f32 %v1080, %v1134
      %v1185 = vmax.f32 %v1081, %v1136
      %v1186 = vmax.f32 %v1082, %v1138
      %v1187 = vmax.f32 %v1083, %v1140
      %v1188 = vmax.f32 %v1084, %v1142
      %v1189 = vmax.f32 %v1085, %v1144
      %v1190 = vmax.f32 %v1086, %v1146
      %v1191 = vmax.f32 %v1087, %v1148
      %v1192 = vmax.f32 %v1088, %v1150
      %v1193 = vmax.f32 %v1089, %v1152
      %v1194 = vmax.f32 %v1090, %v1154
      %v1195 = vpack.c.bf16 %v1175, %v1175
      %v1196 = vpack.c.bf16 %v1176, %v1176
      %v1197 = vpack.c.bf16 %v1177, %v1177
      %v1198 = vpack.c.bf16 %v1178, %v1178
      %v1199 = vpack.c.bf16 %v1179, %v1179
      %v1200 = vpack.c.bf16 %v1180, %v1180
      %v1201 = vpack.c.bf16 %v1181, %v1181
      %v1202 = vpack.c.bf16 %v1182, %v1182
      %v1203 = vpack.c.bf16 %v1183, %v1183
      %v1204 = vpack.c.bf16 %v1184, %v1184
      %v1205 = vpack.c.bf16 %v1185, %v1185
      %v1206 = vpack.c.bf16 %v1186, %v1186
      %v1207 = vpack.c.bf16 %v1187, %v1187
      %v1208 = vpack.c.bf16 %v1188, %v1188
      %v1209 = vpack.c.bf16 %v1189, %v1189
      %v1210 = vpack.c.bf16 %v1190, %v1190
      %v1211 = vpack.c.bf16 %v1191, %v1191
      %v1212 = vpack.c.bf16 %v1192, %v1192
      %v1213 = vpack.c.bf16 %v1193, %v1193
      %v1214 = vpack.c.bf16 %v1194, %v1194
      %v1215 = vunpack.c.l.bf16 %v1195
      %v1216 = vunpack.c.l.bf16 %v1196
      %v1217 = vunpack.c.l.bf16 %v1197
      %v1218 = vunpack.c.l.bf16 %v1198
      %v1219 = vunpack.c.l.bf16 %v1199
      %v1220 = vunpack.c.l.bf16 %v1200
      %v1221 = vunpack.c.l.bf16 %v1201
      %v1222 = vunpack.c.l.bf16 %v1202
      %v1223 = vunpack.c.l.bf16 %v1203
      %v1224 = vunpack.c.l.bf16 %v1204
      %v1225 = vunpack.c.l.bf16 %v1205
      %v1226 = vunpack.c.l.bf16 %v1206
      %v1227 = vunpack.c.l.bf16 %v1207
      %v1228 = vunpack.c.l.bf16 %v1208
      %v1229 = vunpack.c.l.bf16 %v1209
      %v1230 = vunpack.c.l.bf16 %v1210
      %v1231 = vunpack.c.l.bf16 %v1211
      %v1232 = vunpack.c.l.bf16 %v1212
      %v1233 = vunpack.c.l.bf16 %v1213
      %v1234 = vunpack.c.l.bf16 %v1214
      %vm1235 = vcmask 1045504
      %v1236 = vrot.slane %v1071, 2
      %v1237 = vrot.slane %v1072, 2
      %v1238 = vsel %vm1235, %v1236, %v1237
      %v1239 = vrot.slane %v1073, 2
      %v1240 = vsel %vm1235, %v1237, %v1239
      %v1241 = vrot.slane %v1074, 2
      %v1242 = vsel %vm1235, %v1239, %v1241
      %v1243 = vrot.slane %v1075, 2
      %v1244 = vsel %vm1235, %v1241, %v1243
      %v1245 = vrot.slane %v1076, 2
      %v1246 = vsel %vm1235, %v1243, %v1245
      %v1247 = vrot.slane %v1077, 2
      %v1248 = vsel %vm1235, %v1245, %v1247
      %v1249 = vrot.slane %v1078, 2
      %v1250 = vsel %vm1235, %v1247, %v1249
      %v1251 = vrot.slane %v1079, 2
      %v1252 = vsel %vm1235, %v1249, %v1251
      %v1253 = vrot.slane %v1080, 2
      %v1254 = vsel %vm1235, %v1251, %v1253
      %v1255 = vrot.slane %v1081, 2
      %v1256 = vsel %vm1235, %v1253, %v1255
      %v1257 = vrot.slane %v1082, 2
      %v1258 = vsel %vm1235, %v1255, %v1257
      %v1259 = vrot.slane %v1083, 2
      %v1260 = vsel %vm1235, %v1257, %v1259
      %v1261 = vrot.slane %v1084, 2
      %v1262 = vsel %vm1235, %v1259, %v1261
      %v1263 = vrot.slane %v1085, 2
      %v1264 = vsel %vm1235, %v1261, %v1263
      %v1265 = vrot.slane %v1086, 2
      %v1266 = vsel %vm1235, %v1263, %v1265
      %v1267 = vrot.slane %v1087, 2
      %v1268 = vsel %vm1235, %v1265, %v1267
      %v1269 = vrot.slane %v1088, 2
      %v1270 = vsel %vm1235, %v1267, %v1269
      %v1271 = vrot.slane %v1089, 2
      %v1272 = vsel %vm1235, %v1269, %v1271
      %v1273 = vrot.slane %v1090, 2
      %v1274 = vsel %vm1235, %v1271, %v1273
      %v1275 = vrot.slane %v1091, 2
      %v1276 = vsel %vm1235, %v1273, %v1275
      %v1297 = vmax.f32 %v1215, %v1238
      %v1298 = vmax.f32 %v1216, %v1240
      %v1299 = vmax.f32 %v1217, %v1242
      %v1300 = vmax.f32 %v1218, %v1244
      %v1301 = vmax.f32 %v1219, %v1246
      %v1302 = vmax.f32 %v1220, %v1248
      %v1303 = vmax.f32 %v1221, %v1250
      %v1304 = vmax.f32 %v1222, %v1252
      %v1305 = vmax.f32 %v1223, %v1254
      %v1306 = vmax.f32 %v1224, %v1256
      %v1307 = vmax.f32 %v1225, %v1258
      %v1308 = vmax.f32 %v1226, %v1260
      %v1309 = vmax.f32 %v1227, %v1262
      %v1310 = vmax.f32 %v1228, %v1264
      %v1311 = vmax.f32 %v1229, %v1266
      %v1312 = vmax.f32 %v1230, %v1268
      %v1313 = vmax.f32 %v1231, %v1270
      %v1314 = vmax.f32 %v1232, %v1272
      %v1315 = vmax.f32 %v1233, %v1274
      %v1316 = vmax.f32 %v1234, %v1276
      %v1317 = vpack.c.bf16 %v1297, %v1297
      %v1318 = vpack.c.bf16 %v1298, %v1298
      %v1319 = vpack.c.bf16 %v1299, %v1299
      %v1320 = vpack.c.bf16 %v1300, %v1300
      %v1321 = vpack.c.bf16 %v1301, %v1301
      %v1322 = vpack.c.bf16 %v1302, %v1302
      %v1323 = vpack.c.bf16 %v1303, %v1303
      %v1324 = vpack.c.bf16 %v1304, %v1304
      %v1325 = vpack.c.bf16 %v1305, %v1305
      %v1326 = vpack.c.bf16 %v1306, %v1306
      %v1327 = vpack.c.bf16 %v1307, %v1307
      %v1328 = vpack.c.bf16 %v1308, %v1308
      %v1329 = vpack.c.bf16 %v1309, %v1309
      %v1330 = vpack.c.bf16 %v1310, %v1310
      %v1331 = vpack.c.bf16 %v1311, %v1311
      %v1332 = vpack.c.bf16 %v1312, %v1312
      %v1333 = vpack.c.bf16 %v1313, %v1313
      %v1334 = vpack.c.bf16 %v1314, %v1314
      %v1335 = vpack.c.bf16 %v1315, %v1315
      %v1336 = vpack.c.bf16 %v1316, %v1316
      %v1337 = vunpack.c.l.bf16 %v1317
      %v1338 = vunpack.c.l.bf16 %v1318
      %v1339 = vunpack.c.l.bf16 %v1319
      %v1340 = vunpack.c.l.bf16 %v1320
      %v1341 = vunpack.c.l.bf16 %v1321
      %v1342 = vunpack.c.l.bf16 %v1322
      %v1343 = vunpack.c.l.bf16 %v1323
      %v1344 = vunpack.c.l.bf16 %v1324
      %v1345 = vunpack.c.l.bf16 %v1325
      %v1346 = vunpack.c.l.bf16 %v1326
      %v1347 = vunpack.c.l.bf16 %v1327
      %v1348 = vunpack.c.l.bf16 %v1328
      %v1349 = vunpack.c.l.bf16 %v1329
      %v1350 = vunpack.c.l.bf16 %v1330
      %v1351 = vunpack.c.l.bf16 %v1331
      %v1352 = vunpack.c.l.bf16 %v1332
      %v1353 = vunpack.c.l.bf16 %v1333
      %v1354 = vunpack.c.l.bf16 %v1334
      %v1355 = vmax.f32 %v1337, %v1339
      %v1356 = vmax.f32 %v1338, %v1340
      %v1357 = vmax.f32 %v1339, %v1341
      %v1358 = vmax.f32 %v1340, %v1342
      %v1359 = vmax.f32 %v1341, %v1343
      %v1360 = vmax.f32 %v1342, %v1344
      %v1361 = vmax.f32 %v1343, %v1345
      %v1362 = vmax.f32 %v1344, %v1346
      %v1363 = vmax.f32 %v1345, %v1347
      %v1364 = vmax.f32 %v1346, %v1348
      %v1365 = vmax.f32 %v1347, %v1349
      %v1366 = vmax.f32 %v1348, %v1350
      %v1367 = vmax.f32 %v1349, %v1351
      %v1368 = vmax.f32 %v1350, %v1352
      %v1369 = vmax.f32 %v1351, %v1353
      %v1370 = vmax.f32 %v1352, %v1354
      %v1371 = vpack.c.bf16 %v1355, %v1355
      %v1372 = vpack.c.bf16 %v1356, %v1356
      %v1373 = vpack.c.bf16 %v1357, %v1357
      %v1374 = vpack.c.bf16 %v1358, %v1358
      %v1375 = vpack.c.bf16 %v1359, %v1359
      %v1376 = vpack.c.bf16 %v1360, %v1360
      %v1377 = vpack.c.bf16 %v1361, %v1361
      %v1378 = vpack.c.bf16 %v1362, %v1362
      %v1379 = vpack.c.bf16 %v1363, %v1363
      %v1380 = vpack.c.bf16 %v1364, %v1364
      %v1381 = vpack.c.bf16 %v1365, %v1365
      %v1382 = vpack.c.bf16 %v1366, %v1366
      %v1383 = vpack.c.bf16 %v1367, %v1367
      %v1384 = vpack.c.bf16 %v1368, %v1368
      %v1385 = vpack.c.bf16 %v1369, %v1369
      %v1386 = vpack.c.bf16 %v1370, %v1370
      %v1387 = vunpack.c.l.bf16 %v1371
      %v1388 = vunpack.c.l.bf16 %v1372
      %v1389 = vunpack.c.l.bf16 %v1373
      %v1390 = vunpack.c.l.bf16 %v1374
      %v1391 = vunpack.c.l.bf16 %v1375
      %v1392 = vunpack.c.l.bf16 %v1376
      %v1393 = vunpack.c.l.bf16 %v1377
      %v1394 = vunpack.c.l.bf16 %v1378
      %v1395 = vunpack.c.l.bf16 %v1379
      %v1396 = vunpack.c.l.bf16 %v1380
      %v1397 = vunpack.c.l.bf16 %v1381
      %v1398 = vunpack.c.l.bf16 %v1382
      %v1399 = vunpack.c.l.bf16 %v1383
      %v1400 = vunpack.c.l.bf16 %v1384
      %v1401 = vunpack.c.l.bf16 %v1385
      %v1402 = vunpack.c.l.bf16 %v1386
      %v1403 = vunpack.c.l.bf16 %v1335
      %v1404 = vunpack.c.l.bf16 %v1336
      %v1405 = vmax.f32 %v1387, %v1341
      %v1406 = vmax.f32 %v1388, %v1342
      %v1407 = vmax.f32 %v1389, %v1343
      %v1408 = vmax.f32 %v1390, %v1344
      %v1409 = vmax.f32 %v1391, %v1345
      %v1410 = vmax.f32 %v1392, %v1346
      %v1411 = vmax.f32 %v1393, %v1347
      %v1412 = vmax.f32 %v1394, %v1348
      %v1413 = vmax.f32 %v1395, %v1349
      %v1414 = vmax.f32 %v1396, %v1350
      %v1415 = vmax.f32 %v1397, %v1351
      %v1416 = vmax.f32 %v1398, %v1352
      %v1417 = vmax.f32 %v1399, %v1353
      %v1418 = vmax.f32 %v1400, %v1354
      %v1419 = vmax.f32 %v1401, %v1403
      %v1420 = vmax.f32 %v1402, %v1404
      %v1421 = vpack.c.bf16 %v1406, %v1405
      %v1422 = vpack.c.bf16 %v1408, %v1407
      %v1423 = vpack.c.bf16 %v1410, %v1409
      %v1424 = vpack.c.bf16 %v1412, %v1411
      %v1425 = vpack.c.bf16 %v1414, %v1413
      %v1426 = vpack.c.bf16 %v1416, %v1415
      %v1427 = vpack.c.bf16 %v1418, %v1417
      %v1428 = vpack.c.bf16 %v1420, %v1419
      %v1429 = vld [vmem:[%s9] sm:$0xf]
      %v1431 = vsel %vm825, %v1421, 0
      %v1434 = vsel %vm825, %v1422, 0
      %v1437 = vsel %vm825, %v1423, 0
      %v1440 = vsel %vm825, %v1424, 0
      %v1443 = vsel %vm825, %v1425, 0
      %v1446 = vsel %vm825, %v1426, 0
      %v1449 = vsel %vm825, %v1427, 0
      %v1452 = vsel %vm825, %v1428, 0
      %v1455 = vsel %vm850, %v1429, 0
      %1457 = vmatpush.bf16.msra.mxu0 0
      %1458 = vmatpush.bf16.msra.mxu0 0
      %1459 = vmatpush.bf16.msra.mxu0 0
      %1460 = vmatpush.bf16.msra.mxu0 0
      %1461 = vmatpush.bf16.msra.mxu0 0
      %1462 = vmatpush.bf16.msra.mxu0 0
      %1463 = vmatpush.bf16.msra.mxu0 0
      %1464 = vmatpush.bf16.msra.mxu0 %v1455
      %1465 = vmatmul.bf16.gmra.mxu0 %v1431
      %v1466 = vpop.f32.mrf.mxu0
      %v1467 = vadd.f32 0.0, %v1466
      %v1468 = vpop.f32.mrf.mxu0
      %v1469 = vadd.f32 0.0, %v1468
      %1470 = vmatmul.bf16.gmra.mxu0 %v1434
      %v1471 = vpop.f32.mrf.mxu0
      %v1472 = vadd.f32 0.0, %v1471
      %v1473 = vpop.f32.mrf.mxu0
      %v1474 = vadd.f32 0.0, %v1473
      %1475 = vmatmul.bf16.gmra.mxu0 %v1437
      %v1476 = vpop.f32.mrf.mxu0
      %v1477 = vadd.f32 0.0, %v1476
      %v1478 = vpop.f32.mrf.mxu0
      %v1479 = vadd.f32 0.0, %v1478
      %1480 = vmatmul.bf16.gmra.mxu0 %v1440
      %v1481 = vpop.f32.mrf.mxu0
      %v1482 = vadd.f32 0.0, %v1481
      %v1483 = vpop.f32.mrf.mxu0
      %v1484 = vadd.f32 0.0, %v1483
      %1485 = vmatmul.bf16.gmra.mxu0 %v1443
      %v1486 = vpop.f32.mrf.mxu0
      %v1487 = vadd.f32 0.0, %v1486
      %v1488 = vpop.f32.mrf.mxu0
      %v1489 = vadd.f32 0.0, %v1488
      %1490 = vmatmul.bf16.gmra.mxu0 %v1446
      %v1491 = vpop.f32.mrf.mxu0
      %v1492 = vadd.f32 0.0, %v1491
      %v1493 = vpop.f32.mrf.mxu0
      %v1494 = vadd.f32 0.0, %v1493
      %1495 = vmatmul.bf16.gmra.mxu0 %v1449
      %v1496 = vpop.f32.mrf.mxu0
      %v1497 = vadd.f32 0.0, %v1496
      %v1498 = vpop.f32.mrf.mxu0
      %v1499 = vadd.f32 0.0, %v1498
      %1500 = vmatmul.bf16.gmra.mxu0 %v1452
      %v1501 = vpop.f32.mrf.mxu0
      %v1502 = vadd.f32 0.0, %v1501
      %v1503 = vpop.f32.mrf.mxu0
      %v1504 = vadd.f32 0.0, %v1503
      %1505 = vdwg.mxu0
      %v1506 = vld [vmem:[%s616] sm:$0xff]
      %v1507 = vld [vmem:[%s616 + $0x8] sm:$0xff]
      %v1508 = vld [vmem:[%s616 + $0x10] sm:$0xff]
      %v1509 = vld [vmem:[%s616 + $0x18] sm:$0xff]
      %v1510 = vld [vmem:[%s616 + $0x20] sm:$0xff]
      %v1511 = vld [vmem:[%s616 + $0x28] sm:$0xff]
      %v1512 = vld [vmem:[%s616 + $0x30] sm:$0xff]
      %v1513 = vld [vmem:[%s616 + $0x38] sm:$0xff]
      %v1514 = vld [vmem:[%s616 + $0x40] sm:$0xff]
      %v1515 = vld [vmem:[%s616 + $0x48] sm:$0xff]
      %v1516 = vld [vmem:[%s616 + $0x50] sm:$0xff]
      %v1517 = vld [vmem:[%s616 + $0x58] sm:$0xff]
      %v1518 = vld [vmem:[%s616 + $0x60] sm:$0xff]
      %v1519 = vld [vmem:[%s616 + $0x68] sm:$0xff]
      %v1520 = vld [vmem:[%s616 + $0x70] sm:$0xff]
      %v1521 = vld [vmem:[%s616 + $0x78] sm:$0xff]
      %v1522 = vld [vmem:[%s616 + $0x80] sm:$0xff]
      %v1523 = vld [vmem:[%s616 + $0x88] sm:$0xff]
      %v1524 = vld [vmem:[%s616 + $0x90] sm:$0xff]
      %v1525 = vld [vmem:[%s616 + $0x98] sm:$0xff]
      %v1526 = vld [vmem:[%s616 + $0xa0] sm:$0x11]
      %v1527 = vld [vmem:[%s626] sm:$0xff]
      %v1528 = vld [vmem:[%s626 + $0x8] sm:$0xff]
      %v1529 = vld [vmem:[%s626 + $0x10] sm:$0xff]
      %v1530 = vld [vmem:[%s626 + $0x18] sm:$0xff]
      %v1531 = vld [vmem:[%s626 + $0x20] sm:$0xff]
      %v1532 = vld [vmem:[%s626 + $0x28] sm:$0xff]
      %v1533 = vld [vmem:[%s626 + $0x30] sm:$0xff]
      %v1534 = vld [vmem:[%s626 + $0x38] sm:$0xff]
      %v1535 = vld [vmem:[%s626 + $0x40] sm:$0xff]
      %v1536 = vld [vmem:[%s626 + $0x48] sm:$0xff]
      %v1537 = vld [vmem:[%s626 + $0x50] sm:$0xff]
      %v1538 = vld [vmem:[%s626 + $0x58] sm:$0xff]
      %v1539 = vld [vmem:[%s626 + $0x60] sm:$0xff]
      %v1540 = vld [vmem:[%s626 + $0x68] sm:$0xff]
      %v1541 = vld [vmem:[%s626 + $0x70] sm:$0xff]
      %v1542 = vld [vmem:[%s626 + $0x78] sm:$0xff]
      %v1543 = vld [vmem:[%s626 + $0x80] sm:$0xff]
      %v1544 = vld [vmem:[%s626 + $0x88] sm:$0xff]
      %v1545 = vld [vmem:[%s626 + $0x90] sm:$0xff]
      %v1546 = vld [vmem:[%s626 + $0x98] sm:$0xff]
      %v1547 = vld [vmem:[%s626 + $0xa0] sm:$0x11]
      %v1548 = vld [vmem:[%s637] sm:$0xff]
      %v1549 = vld [vmem:[%s637 + $0x8] sm:$0xff]
      %v1550 = vld [vmem:[%s637 + $0x10] sm:$0xff]
      %v1551 = vld [vmem:[%s637 + $0x18] sm:$0xff]
      %v1552 = vld [vmem:[%s637 + $0x20] sm:$0xff]
      %v1553 = vld [vmem:[%s637 + $0x28] sm:$0xff]
      %v1554 = vld [vmem:[%s637 + $0x30] sm:$0xff]
      %v1555 = vld [vmem:[%s637 + $0x38] sm:$0xff]
      %v1556 = vld [vmem:[%s637 + $0x40] sm:$0xff]
      %v1557 = vld [vmem:[%s637 + $0x48] sm:$0xff]
      %v1558 = vld [vmem:[%s637 + $0x50] sm:$0xff]
      %v1559 = vld [vmem:[%s637 + $0x58] sm:$0xff]
      %v1560 = vld [vmem:[%s637 + $0x60] sm:$0xff]
      %v1561 = vld [vmem:[%s637 + $0x68] sm:$0xff]
      %v1562 = vld [vmem:[%s637 + $0x70] sm:$0xff]
      %v1563 = vld [vmem:[%s637 + $0x78] sm:$0xff]
      %v1564 = vld [vmem:[%s637 + $0x80] sm:$0xff]
      %v1565 = vld [vmem:[%s637 + $0x88] sm:$0xff]
      %v1566 = vld [vmem:[%s637 + $0x90] sm:$0xff]
      %v1567 = vld [vmem:[%s637 + $0x98] sm:$0xff]
      %v1568 = vld [vmem:[%s637 + $0xa0] sm:$0x11]
      %v1585 = vunpack.c.l.b16 %v1506
      %v1586 = vunpack.c.l.b16 %v1507
      %v1587 = vunpack.c.l.b16 %v1508
      %v1588 = vunpack.c.l.b16 %v1509
      %v1589 = vunpack.c.l.b16 %v1510
      %v1590 = vunpack.c.l.b16 %v1511
      %v1591 = vunpack.c.l.b16 %v1512
      %v1592 = vunpack.c.l.b16 %v1513
      %v1593 = vunpack.c.l.b16 %v1514
      %v1594 = vunpack.c.l.b16 %v1515
      %v1595 = vunpack.c.l.b16 %v1516
      %v1596 = vunpack.c.l.b16 %v1517
      %v1597 = vunpack.c.l.b16 %v1518
      %v1598 = vunpack.c.l.b16 %v1519
      %v1599 = vunpack.c.l.b16 %v1520
      %v1600 = vunpack.c.l.b16 %v1521
      %v1601 = vpack.c.b16 %v1586, %v1585
      %v1602 = vpack.c.b16 %v1588, %v1587
      %v1603 = vpack.c.b16 %v1590, %v1589
      %v1604 = vpack.c.b16 %v1592, %v1591
      %v1605 = vpack.c.b16 %v1594, %v1593
      %v1606 = vpack.c.b16 %v1596, %v1595
      %v1607 = vpack.c.b16 %v1598, %v1597
      %v1608 = vpack.c.b16 %v1600, %v1599
      %v1618 = vunpack.c.l.b16 %v1522
      %v1619 = vpack.c.b16 %v1618, %v1618
      %v1621 = vshrl.u32 %v1601, 16
      %v1623 = vshll.u32 %v1601, 16
      %v1625 = vrot.slane %v1623, 1
      %v1626 = vor.u32 %v1621, %v1625
      %v1628 = vshll.u32 %v1602, 16
      %v1630 = vrot.slane %v1628, 1
      %v1631 = vsel %vm756, %v1626, %v1630
      %v1632 = vshrl.u32 %v1602, 16
      %v1634 = vor.u32 %v1632, %v1630
      %v1636 = vshll.u32 %v1603, 16
      %v1638 = vrot.slane %v1636, 1
      %v1639 = vsel %vm756, %v1634, %v1638
      %v1640 = vshrl.u32 %v1603, 16
      %v1642 = vor.u32 %v1640, %v1638
      %v1644 = vshll.u32 %v1604, 16
      %v1646 = vrot.slane %v1644, 1
      %v1647 = vsel %vm756, %v1642, %v1646
      %v1648 = vshrl.u32 %v1604, 16
      %v1650 = vor.u32 %v1648, %v1646
      %v1652 = vshll.u32 %v1605, 16
      %v1654 = vrot.slane %v1652, 1
      %v1655 = vsel %vm756, %v1650, %v1654
      %v1656 = vshrl.u32 %v1605, 16
      %v1658 = vor.u32 %v1656, %v1654
      %v1660 = vshll.u32 %v1606, 16
      %v1662 = vrot.slane %v1660, 1
      %v1663 = vsel %vm756, %v1658, %v1662
      %v1664 = vshrl.u32 %v1606, 16
      %v1666 = vor.u32 %v1664, %v1662
      %v1668 = vshll.u32 %v1607, 16
      %v1670 = vrot.slane %v1668, 1
      %v1671 = vsel %vm756, %v1666, %v1670
      %v1672 = vshrl.u32 %v1607, 16
      %v1674 = vor.u32 %v1672, %v1670
      %v1676 = vshll.u32 %v1608, 16
      %v1678 = vrot.slane %v1676, 1
      %v1679 = vsel %vm756, %v1674, %v1678
      %v1680 = vshrl.u32 %v1608, 16
      %v1682 = vor.u32 %v1680, %v1678
      %v1684 = vshll.u32 %v1619, 16
      %v1686 = vrot.slane %v1684, 1
      %v1687 = vsel %vm756, %v1682, %v1686
      %vm1696 = vcmask 1046528
      %v1697 = vrot.slane %v1601, 1
      %v1698 = vrot.slane %v1602, 1
      %v1699 = vsel %vm1696, %v1697, %v1698
      %v1700 = vrot.slane %v1603, 1
      %v1701 = vsel %vm1696, %v1698, %v1700
      %v1702 = vrot.slane %v1604, 1
      %v1703 = vsel %vm1696, %v1700, %v1702
      %v1704 = vrot.slane %v1605, 1
      %v1705 = vsel %vm1696, %v1702, %v1704
      %v1706 = vrot.slane %v1606, 1
      %v1707 = vsel %vm1696, %v1704, %v1706
      %v1708 = vrot.slane %v1607, 1
      %v1709 = vsel %vm1696, %v1706, %v1708
      %v1710 = vrot.slane %v1608, 1
      %v1711 = vsel %vm1696, %v1708, %v1710
      %v1712 = vrot.slane %v1619, 1
      %v1713 = vsel %vm1696, %v1710, %v1712
      %v1723 = vunpack.c.l.b16 %v1523
      %v1724 = vpack.c.b16 %v1723, %v1618
      %v1727 = vunpack.c.l.b16 %v1524
      %v1728 = vpack.c.b16 %v1727, %v1727
      %v1730 = vshll.u32 %v1724, 16
      %v1732 = vrot.slane %v1730, 1
      %v1733 = vsel %vm756, %v1682, %v1732
      %v1734 = vshrl.u32 %v1724, 16
      %v1736 = vor.u32 %v1734, %v1732
      %v1738 = vshll.u32 %v1728, 16
      %v1740 = vrot.slane %v1738, 1
      %v1741 = vsel %vm756, %v1736, %v1740
      %v1744 = vrot.slane %v1724, 1
      %v1745 = vsel %vm1696, %v1710, %v1744
      %v1746 = vrot.slane %v1728, 1
      %v1747 = vsel %vm1696, %v1744, %v1746
      %v1751 = vunpack.c.l.b16 %v1525
      %v1752 = vpack.c.b16 %v1751, %v1727
      %v1755 = vunpack.c.l.b16 %v1526
      %v1756 = vpack.c.b16 %v1755, %v1755
      %v1758 = vshll.u32 %v1752, 16
      %v1760 = vrot.slane %v1758, 1
      %v1761 = vsel %vm756, %v1736, %v1760
      %v1762 = vshrl.u32 %v1752, 16
      %v1764 = vor.u32 %v1762, %v1760
      %v1766 = vshll.u32 %v1756, 16
      %v1768 = vrot.slane %v1766, 1
      %v1769 = vsel %vm756, %v1764, %v1768
      %v1772 = vrot.slane %v1752, 1
      %v1773 = vsel %vm1696, %v1744, %v1772
      %v1774 = vrot.slane %v1756, 1
      %v1775 = vsel %vm1696, %v1772, %v1774
      %v1794 = vunpack.c.l.b16 %v1527
      %v1795 = vunpack.c.l.b16 %v1528
      %v1796 = vunpack.c.l.b16 %v1529
      %v1797 = vunpack.c.l.b16 %v1530
      %v1798 = vunpack.c.l.b16 %v1531
      %v1799 = vunpack.c.l.b16 %v1532
      %v1800 = vunpack.c.l.b16 %v1533
      %v1801 = vunpack.c.l.b16 %v1534
      %v1802 = vunpack.c.l.b16 %v1535
      %v1803 = vunpack.c.l.b16 %v1536
      %v1804 = vunpack.c.l.b16 %v1537
      %v1805 = vunpack.c.l.b16 %v1538
      %v1806 = vunpack.c.l.b16 %v1539
      %v1807 = vunpack.c.l.b16 %v1540
      %v1808 = vunpack.c.l.b16 %v1541
      %v1809 = vunpack.c.l.b16 %v1542
      %v1810 = vpack.c.b16 %v1795, %v1794
      %v1811 = vpack.c.b16 %v1797, %v1796
      %v1812 = vpack.c.b16 %v1799, %v1798
      %v1813 = vpack.c.b16 %v1801, %v1800
      %v1814 = vpack.c.b16 %v1803, %v1802
      %v1815 = vpack.c.b16 %v1805, %v1804
      %v1816 = vpack.c.b16 %v1807, %v1806
      %v1817 = vpack.c.b16 %v1809, %v1808
      %v1827 = vunpack.c.l.b16 %v1543
      %v1828 = vpack.c.b16 %v1827, %v1827
      %v1830 = vshrl.u32 %v1810, 16
      %v1832 = vshll.u32 %v1810, 16
      %v1834 = vrot.slane %v1832, 1
      %v1835 = vor.u32 %v1830, %v1834
      %v1837 = vshll.u32 %v1811, 16
      %v1839 = vrot.slane %v1837, 1
      %v1840 = vsel %vm756, %v1835, %v1839
      %v1841 = vshrl.u32 %v1811, 16
      %v1843 = vor.u32 %v1841, %v1839
      %v1845 = vshll.u32 %v1812, 16
      %v1847 = vrot.slane %v1845, 1
      %v1848 = vsel %vm756, %v1843, %v1847
      %v1849 = vshrl.u32 %v1812, 16
      %v1851 = vor.u32 %v1849, %v1847
      %v1853 = vshll.u32 %v1813, 16
      %v1855 = vrot.slane %v1853, 1
      %v1856 = vsel %vm756, %v1851, %v1855
      %v1857 = vshrl.u32 %v1813, 16
      %v1859 = vor.u32 %v1857, %v1855
      %v1861 = vshll.u32 %v1814, 16
      %v1863 = vrot.slane %v1861, 1
      %v1864 = vsel %vm756, %v1859, %v1863
      %v1865 = vshrl.u32 %v1814, 16
      %v1867 = vor.u32 %v1865, %v1863
      %v1869 = vshll.u32 %v1815, 16
      %v1871 = vrot.slane %v1869, 1
      %v1872 = vsel %vm756, %v1867, %v1871
      %v1873 = vshrl.u32 %v1815, 16
      %v1875 = vor.u32 %v1873, %v1871
      %v1877 = vshll.u32 %v1816, 16
      %v1879 = vrot.slane %v1877, 1
      %v1880 = vsel %vm756, %v1875, %v1879
      %v1881 = vshrl.u32 %v1816, 16
      %v1883 = vor.u32 %v1881, %v1879
      %v1885 = vshll.u32 %v1817, 16
      %v1887 = vrot.slane %v1885, 1
      %v1888 = vsel %vm756, %v1883, %v1887
      %v1889 = vshrl.u32 %v1817, 16
      %v1891 = vor.u32 %v1889, %v1887
      %v1893 = vshll.u32 %v1828, 16
      %v1895 = vrot.slane %v1893, 1
      %v1896 = vsel %vm756, %v1891, %v1895
      %v1905 = vrot.slane %v1810, 1
      %v1906 = vrot.slane %v1811, 1
      %v1907 = vsel %vm1696, %v1905, %v1906
      %v1908 = vrot.slane %v1812, 1
      %v1909 = vsel %vm1696, %v1906, %v1908
      %v1910 = vrot.slane %v1813, 1
      %v1911 = vsel %vm1696, %v1908, %v1910
      %v1912 = vrot.slane %v1814, 1
      %v1913 = vsel %vm1696, %v1910, %v1912
      %v1914 = vrot.slane %v1815, 1
      %v1915 = vsel %vm1696, %v1912, %v1914
      %v1916 = vrot.slane %v1816, 1
      %v1917 = vsel %vm1696, %v1914, %v1916
      %v1918 = vrot.slane %v1817, 1
      %v1919 = vsel %vm1696, %v1916, %v1918
      %v1920 = vrot.slane %v1828, 1
      %v1921 = vsel %vm1696, %v1918, %v1920
      %v1931 = vunpack.c.l.b16 %v1544
      %v1932 = vpack.c.b16 %v1931, %v1827
      %v1935 = vunpack.c.l.b16 %v1545
      %v1936 = vpack.c.b16 %v1935, %v1935
      %v1938 = vshll.u32 %v1932, 16
      %v1940 = vrot.slane %v1938, 1
      %v1941 = vsel %vm756, %v1891, %v1940
      %v1942 = vshrl.u32 %v1932, 16
      %v1944 = vor.u32 %v1942, %v1940
      %v1946 = vshll.u32 %v1936, 16
      %v1948 = vrot.slane %v1946, 1
      %v1949 = vsel %vm756, %v1944, %v1948
      %v1952 = vrot.slane %v1932, 1
      %v1953 = vsel %vm1696, %v1918, %v1952
      %v1954 = vrot.slane %v1936, 1
      %v1955 = vsel %vm1696, %v1952, %v1954
      %v1959 = vunpack.c.l.b16 %v1546
      %v1960 = vpack.c.b16 %v1959, %v1935
      %v1963 = vunpack.c.l.b16 %v1547
      %v1964 = vpack.c.b16 %v1963, %v1963
      %v1966 = vshll.u32 %v1960, 16
      %v1968 = vrot.slane %v1966, 1
      %v1969 = vsel %vm756, %v1944, %v1968
      %v1970 = vshrl.u32 %v1960, 16
      %v1972 = vor.u32 %v1970, %v1968
      %v1974 = vshll.u32 %v1964, 16
      %v1976 = vrot.slane %v1974, 1
      %v1977 = vsel %vm756, %v1972, %v1976
      %v1978 = vshrl.u32 %v1964, 16
      %v1996 = vunpack.c.l.b16 %v1548
      %v1997 = vunpack.c.l.b16 %v1549
      %v1998 = vunpack.c.l.b16 %v1550
      %v1999 = vunpack.c.l.b16 %v1551
      %v2000 = vunpack.c.l.b16 %v1552
      %v2001 = vunpack.c.l.b16 %v1553
      %v2002 = vunpack.c.l.b16 %v1554
      %v2003 = vunpack.c.l.b16 %v1555
      %v2004 = vunpack.c.l.b16 %v1556
      %v2005 = vunpack.c.l.b16 %v1557
      %v2006 = vunpack.c.l.b16 %v1558
      %v2007 = vunpack.c.l.b16 %v1559
      %v2008 = vunpack.c.l.b16 %v1560
      %v2009 = vunpack.c.l.b16 %v1561
      %v2010 = vunpack.c.l.b16 %v1562
      %v2011 = vunpack.c.l.b16 %v1563
      %v2012 = vpack.c.b16 %v1997, %v1996
      %v2013 = vpack.c.b16 %v1999, %v1998
      %v2014 = vpack.c.b16 %v2001, %v2000
      %v2015 = vpack.c.b16 %v2003, %v2002
      %v2016 = vpack.c.b16 %v2005, %v2004
      %v2017 = vpack.c.b16 %v2007, %v2006
      %v2018 = vpack.c.b16 %v2009, %v2008
      %v2019 = vpack.c.b16 %v2011, %v2010
      %vm2020 = vsmask.f32 256
      %v2022 = vshrl.u32 %v2012, 16
      %v2024 = vrot.slane %v2022, 7
      %v2025 = vshll.u32 %v2012, 16
      %v2027 = vor.u32 %v2024, %v2025
      %v2029 = vshrl.u32 %v2013, 16
      %v2031 = vrot.slane %v2029, 7
      %v2032 = vshll.u32 %v2013, 16
      %v2034 = vor.u32 %v2031, %v2032
      %v2035 = vsel %vm2020, %v2024, %v2034
      %v2037 = vshrl.u32 %v2014, 16
      %v2039 = vrot.slane %v2037, 7
      %v2040 = vshll.u32 %v2014, 16
      %v2042 = vor.u32 %v2039, %v2040
      %v2043 = vsel %vm2020, %v2031, %v2042
      %v2045 = vshrl.u32 %v2015, 16
      %v2047 = vrot.slane %v2045, 7
      %v2048 = vshll.u32 %v2015, 16
      %v2050 = vor.u32 %v2047, %v2048
      %v2051 = vsel %vm2020, %v2039, %v2050
      %v2053 = vshrl.u32 %v2016, 16
      %v2055 = vrot.slane %v2053, 7
      %v2056 = vshll.u32 %v2016, 16
      %v2058 = vor.u32 %v2055, %v2056
      %v2059 = vsel %vm2020, %v2047, %v2058
      %v2061 = vshrl.u32 %v2017, 16
      %v2063 = vrot.slane %v2061, 7
      %v2064 = vshll.u32 %v2017, 16
      %v2066 = vor.u32 %v2063, %v2064
      %v2067 = vsel %vm2020, %v2055, %v2066
      %v2069 = vshrl.u32 %v2018, 16
      %v2071 = vrot.slane %v2069, 7
      %v2072 = vshll.u32 %v2018, 16
      %v2074 = vor.u32 %v2071, %v2072
      %v2075 = vsel %vm2020, %v2063, %v2074
      %v2077 = vshrl.u32 %v2019, 16
      %v2079 = vrot.slane %v2077, 7
      %v2080 = vshll.u32 %v2019, 16
      %v2082 = vor.u32 %v2079, %v2080
      %v2083 = vsel %vm2020, %v2071, %v2082
      %v2085 = vunpack.c.l.b16 %v1564
      %v2086 = vpack.c.b16 %v2085, %v2085
      %v2087 = vrot.slane %v2025, 1
      %v2088 = vor.u32 %v2022, %v2087
      %v2089 = vrot.slane %v2032, 1
      %v2090 = vsel %vm756, %v2088, %v2089
      %v2091 = vor.u32 %v2029, %v2089
      %v2092 = vrot.slane %v2040, 1
      %v2093 = vsel %vm756, %v2091, %v2092
      %v2094 = vor.u32 %v2037, %v2092
      %v2095 = vrot.slane %v2048, 1
      %v2096 = vsel %vm756, %v2094, %v2095
      %v2097 = vor.u32 %v2045, %v2095
      %v2098 = vrot.slane %v2056, 1
      %v2099 = vsel %vm756, %v2097, %v2098
      %v2100 = vor.u32 %v2053, %v2098
      %v2101 = vrot.slane %v2064, 1
      %v2102 = vsel %vm756, %v2100, %v2101
      %v2103 = vor.u32 %v2061, %v2101
      %v2104 = vrot.slane %v2072, 1
      %v2105 = vsel %vm756, %v2103, %v2104
      %v2106 = vor.u32 %v2069, %v2104
      %v2107 = vrot.slane %v2080, 1
      %v2108 = vsel %vm756, %v2106, %v2107
      %v2109 = vor.u32 %v2077, %v2107
      %v2111 = vshll.u32 %v2086, 16
      %v2113 = vrot.slane %v2111, 1
      %v2114 = vsel %vm756, %v2109, %v2113
      %v2115 = vshrl.u32 %v2086, 16
      %v2118 = vunpack.c.l.b16 %v1565
      %v2119 = vpack.c.b16 %v2118, %v2085
      %v2121 = vshrl.u32 %v2119, 16
      %v2123 = vrot.slane %v2121, 7
      %v2124 = vshll.u32 %v2119, 16
      %v2126 = vor.u32 %v2123, %v2124
      %v2127 = vsel %vm2020, %v2079, %v2126
      %v2129 = vunpack.c.l.b16 %v1566
      %v2130 = vpack.c.b16 %v2129, %v2129
      %v2131 = vrot.slane %v2124, 1
      %v2132 = vsel %vm756, %v2109, %v2131
      %v2133 = vor.u32 %v2121, %v2131
      %v2135 = vshll.u32 %v2130, 16
      %v2137 = vrot.slane %v2135, 1
      %v2138 = vsel %vm756, %v2133, %v2137
      %v2139 = vshrl.u32 %v2130, 16
      %v2142 = vunpack.c.l.b16 %v1567
      %v2143 = vpack.c.b16 %v2142, %v2129
      %v2145 = vshrl.u32 %v2143, 16
      %v2147 = vrot.slane %v2145, 7
      %v2148 = vshll.u32 %v2143, 16
      %v2150 = vor.u32 %v2147, %v2148
      %v2151 = vsel %vm2020, %v2123, %v2150
      %v2153 = vunpack.c.l.b16 %v1568
      %v2154 = vpack.c.b16 %v2153, %v2153
      %v2155 = vrot.slane %v2148, 1
      %v2156 = vsel %vm756, %v2133, %v2155
      %v2157 = vor.u32 %v2145, %v2155
      %v2159 = vshll.u32 %v2154, 16
      %v2161 = vrot.slane %v2159, 1
      %v2162 = vsel %vm756, %v2157, %v2161
      %v2163 = vshrl.u32 %v2154, 16
      %v2166 = vshrl.u32 %v1856, 16
      %v2168 = vshll.u32 %v1856, 16
      %v2170 = vrot.slane %v2168, 1
      %v2171 = vor.u32 %v2166, %v2170
      %v2173 = vshll.u32 %v1864, 16
      %v2175 = vrot.slane %v2173, 1
      %v2176 = vsel %vm756, %v2171, %v2175
      %v2178 = vshrl.u32 %v2027, 16
      %v2180 = vshll.u32 %v2027, 16
      %v2182 = vrot.slane %v2180, 1
      %v2183 = vor.u32 %v2178, %v2182
      %v2185 = vshll.u32 %v2035, 16
      %v2187 = vrot.slane %v2185, 1
      %v2188 = vsel %vm756, %v2183, %v2187
      %v2190 = vshrl.u32 %v2090, 16
      %v2192 = vshll.u32 %v2090, 16
      %v2194 = vrot.slane %v2192, 1
      %v2195 = vor.u32 %v2190, %v2194
      %v2197 = vshll.u32 %v2093, 16
      %v2199 = vrot.slane %v2197, 1
      %v2200 = vsel %vm756, %v2195, %v2199
      %v2202 = vshrl.u32 %v2034, 16
      %v2204 = vshll.u32 %v2034, 16
      %v2206 = vrot.slane %v2204, 1
      %v2207 = vor.u32 %v2202, %v2206
      %v2209 = vshll.u32 %v2043, 16
      %v2211 = vrot.slane %v2209, 1
      %v2212 = vsel %vm756, %v2207, %v2211
      %v2213 = vshrl.u32 %v2093, 16
      %v2215 = vor.u32 %v2213, %v2199
      %v2217 = vshll.u32 %v2096, 16
      %v2219 = vrot.slane %v2217, 1
      %v2220 = vsel %vm756, %v2215, %v2219
      %v2222 = vshrl.u32 %v2042, 16
      %v2224 = vshll.u32 %v2042, 16
      %v2226 = vrot.slane %v2224, 1
      %v2227 = vor.u32 %v2222, %v2226
      %v2229 = vshll.u32 %v2051, 16
      %v2231 = vrot.slane %v2229, 1
      %v2232 = vsel %vm756, %v2227, %v2231
      %v2233 = vshrl.u32 %v2096, 16
      %v2235 = vor.u32 %v2233, %v2219
      %v2237 = vshll.u32 %v2099, 16
      %v2239 = vrot.slane %v2237, 1
      %v2240 = vsel %vm756, %v2235, %v2239
      %v2241 = vshrl.u32 %v1864, 16
      %v2243 = vor.u32 %v2241, %v2175
      %v2245 = vshll.u32 %v1872, 16
      %v2247 = vrot.slane %v2245, 1
      %v2248 = vsel %vm756, %v2243, %v2247
      %v2249 = vshrl.u32 %v2035, 16
      %v2251 = vor.u32 %v2249, %v2187
      %v2252 = vsel %vm756, %v2251, %v2211
      %v2253 = vshrl.u32 %v2043, 16
      %v2255 = vor.u32 %v2253, %v2211
      %v2256 = vsel %vm756, %v2255, %v2231
      %v2257 = vshrl.u32 %v2051, 16
      %v2259 = vor.u32 %v2257, %v2231
      %v2261 = vshll.u32 %v2059, 16
      %v2263 = vrot.slane %v2261, 1
      %v2264 = vsel %vm756, %v2259, %v2263
      %v2265 = vshrl.u32 %v2099, 16
      %v2267 = vor.u32 %v2265, %v2239
      %v2269 = vshll.u32 %v2102, 16
      %v2271 = vrot.slane %v2269, 1
      %v2272 = vsel %vm756, %v2267, %v2271
      %v2273 = vshrl.u32 %v1872, 16
      %v2275 = vor.u32 %v2273, %v2247
      %v2277 = vshll.u32 %v1880, 16
      %v2279 = vrot.slane %v2277, 1
      %v2280 = vsel %vm756, %v2275, %v2279
      %v2281 = vshrl.u32 %v2059, 16
      %v2283 = vor.u32 %v2281, %v2263
      %v2285 = vshll.u32 %v2067, 16
      %v2287 = vrot.slane %v2285, 1
      %v2288 = vsel %vm756, %v2283, %v2287
      %v2289 = vshrl.u32 %v2102, 16
      %v2291 = vor.u32 %v2289, %v2271
      %v2293 = vshll.u32 %v2105, 16
      %v2295 = vrot.slane %v2293, 1
      %v2296 = vsel %vm756, %v2291, %v2295
      %v2297 = vshrl.u32 %v1880, 16
      %v2299 = vor.u32 %v2297, %v2279
      %v2301 = vshll.u32 %v1888, 16
      %v2303 = vrot.slane %v2301, 1
      %v2304 = vsel %vm756, %v2299, %v2303
      %v2305 = vshrl.u32 %v2067, 16
      %v2307 = vor.u32 %v2305, %v2287
      %v2309 = vshll.u32 %v2075, 16
      %v2311 = vrot.slane %v2309, 1
      %v2312 = vsel %vm756, %v2307, %v2311
      %v2313 = vshrl.u32 %v2105, 16
      %v2315 = vor.u32 %v2313, %v2295
      %v2317 = vshll.u32 %v2108, 16
      %v2319 = vrot.slane %v2317, 1
      %v2320 = vsel %vm756, %v2315, %v2319
      %v2321 = vshrl.u32 %v1888, 16
      %v2323 = vor.u32 %v2321, %v2303
      %v2325 = vshll.u32 %v1941, 16
      %v2327 = vrot.slane %v2325, 1
      %v2328 = vsel %vm756, %v2323, %v2327
      %v2329 = vshrl.u32 %v2075, 16
      %v2331 = vor.u32 %v2329, %v2311
      %v2333 = vshll.u32 %v2083, 16
      %v2335 = vrot.slane %v2333, 1
      %v2336 = vsel %vm756, %v2331, %v2335
      %v2337 = vshrl.u32 %v2108, 16
      %v2339 = vor.u32 %v2337, %v2319
      %v2341 = vshll.u32 %v2132, 16
      %v2343 = vrot.slane %v2341, 1
      %v2344 = vsel %vm756, %v2339, %v2343
      %v2345 = vshrl.u32 %v1941, 16
      %v2347 = vor.u32 %v2345, %v2327
      %v2349 = vshll.u32 %v1969, 16
      %v2351 = vrot.slane %v2349, 1
      %v2352 = vsel %vm756, %v2347, %v2351
      %v2353 = vshrl.u32 %v2083, 16
      %v2355 = vor.u32 %v2353, %v2335
      %v2357 = vshll.u32 %v2127, 16
      %v2359 = vrot.slane %v2357, 1
      %v2360 = vsel %vm756, %v2355, %v2359
      %v2361 = vshrl.u32 %v2132, 16
      %v2363 = vor.u32 %v2361, %v2343
      %v2365 = vshll.u32 %v2156, 16
      %v2367 = vrot.slane %v2365, 1
      %v2368 = vsel %vm756, %v2363, %v2367
      %v2369 = vshrl.u32 %v1969, 16
      %v2371 = vor.u32 %v2369, %v2351
      %v2373 = vshll.u32 %v1977, 16
      %v2375 = vrot.slane %v2373, 1
      %v2376 = vsel %vm756, %v2371, %v2375
      %v2378 = vshll.u32 %v2114, 16
      %v2380 = vrot.slane %v2378, 1
      %v2381 = vsel %vm756, %v2339, %v2380
      %v2383 = vshll.u32 %v2138, 16
      %v2385 = vrot.slane %v2383, 1
      %v2386 = vsel %vm756, %v2363, %v2385
      %v2387 = vshrl.u32 %v2127, 16
      %v2389 = vor.u32 %v2387, %v2359
      %v2391 = vshll.u32 %v2151, 16
      %v2393 = vrot.slane %v2391, 1
      %v2394 = vsel %vm756, %v2389, %v2393
      %v2395 = vshrl.u32 %v2156, 16
      %v2397 = vor.u32 %v2395, %v2367
      %v2399 = vshll.u32 %v2162, 16
      %v2401 = vrot.slane %v2399, 1
      %v2402 = vsel %vm756, %v2397, %v2401
      %v2403 = vshrl.u32 %v1977, 16
      %v2405 = vor.u32 %v2403, %v2375
      %v2407 = vshll.u32 %v1978, 16
      %v2409 = vrot.slane %v2407, 1
      %v2410 = vsel %vm756, %v2405, %v2409
      %v2412 = vshll.u32 %v2079, 16
      %v2414 = vrot.slane %v2412, 1
      %v2415 = vsel %vm756, %v2355, %v2414
      %v2416 = vshrl.u32 %v2114, 16
      %v2418 = vor.u32 %v2416, %v2380
      %v2420 = vshll.u32 %v2115, 16
      %v2422 = vrot.slane %v2420, 1
      %v2423 = vsel %vm756, %v2418, %v2422
      %v2425 = vshll.u32 %v2123, 16
      %v2427 = vrot.slane %v2425, 1
      %v2428 = vsel %vm756, %v2389, %v2427
      %v2429 = vshrl.u32 %v2138, 16
      %v2431 = vor.u32 %v2429, %v2385
      %v2433 = vshll.u32 %v2139, 16
      %v2435 = vrot.slane %v2433, 1
      %v2436 = vsel %vm756, %v2431, %v2435
      %v2437 = vshrl.u32 %v2151, 16
      %v2439 = vor.u32 %v2437, %v2393
      %v2441 = vshll.u32 %v2147, 16
      %v2443 = vrot.slane %v2441, 1
      %v2444 = vsel %vm756, %v2439, %v2443
      %v2445 = vshrl.u32 %v2162, 16
      %v2447 = vor.u32 %v2445, %v2401
      %v2449 = vshll.u32 %v2163, 16
      %v2451 = vrot.slane %v2449, 1
      %v2452 = vsel %vm756, %v2447, %v2451
      %v2503 = vld [vmem:[%s7] sm:$0xf]
      %v2504 = vld [vmem:[%s7 + $0x4] sm:$0xf]
      %v2505 = vld [vmem:[%s7 + $0x8] sm:$0xf]
      %v2506 = vld [vmem:[%s7 + $0xc] sm:$0xf]
      %v2507 = vld [vmem:[%s7 + $0x10] sm:$0xf]
      %v2508 = vld [vmem:[%s7 + $0x14] sm:$0xf]
      %v2509 = vld [vmem:[%s7 + $0x18] sm:$0xf]
      %v2510 = vld [vmem:[%s7 + $0x1c] sm:$0xf]
      %v2511 = vld [vmem:[%s7 + $0x20] sm:$0xf]
      %v2512 = vld [vmem:[%s7 + $0x24] sm:$0xf]
      %v2513 = vld [vmem:[%s7 + $0x28] sm:$0xf]
      %v2514 = vld [vmem:[%s7 + $0x2c] sm:$0xf]
      %v2515 = vld [vmem:[%s7 + $0x30] sm:$0xf]
      %v2516 = vld [vmem:[%s7 + $0x34] sm:$0xf]
      %v2517 = vld [vmem:[%s7 + $0x38] sm:$0xf]
      %v2518 = vld [vmem:[%s7 + $0x3c] sm:$0xf]
      %v2519 = vld [vmem:[%s7 + $0x40] sm:$0xf]
      %v2520 = vld [vmem:[%s7 + $0x44] sm:$0xf]
      %v2521 = vld [vmem:[%s7 + $0x48] sm:$0xf]
      %v2522 = vld [vmem:[%s7 + $0x4c] sm:$0xf]
      %v2523 = vld [vmem:[%s7 + $0x50] sm:$0xf]
      %v2524 = vld [vmem:[%s7 + $0x54] sm:$0xf]
      %v2525 = vld [vmem:[%s7 + $0x58] sm:$0xf]
      %v2526 = vld [vmem:[%s7 + $0x5c] sm:$0xf]
      %v2527 = vld [vmem:[%s7 + $0x60] sm:$0xf]
      %v2528 = vld [vmem:[%s7 + $0x64] sm:$0xf]
      %v2529 = vld [vmem:[%s7 + $0x68] sm:$0xf]
      %v2530 = vld [vmem:[%s7 + $0x6c] sm:$0xf]
      %v2531 = vld [vmem:[%s7 + $0x70] sm:$0xf]
      %v2532 = vld [vmem:[%s7 + $0x74] sm:$0xf]
      %v2533 = vld [vmem:[%s7 + $0x78] sm:$0xf]
      %v2534 = vld [vmem:[%s7 + $0x7c] sm:$0xf]
      %v2535 = vld [vmem:[%s7 + $0x80] sm:$0xf]
      %v2536 = vld [vmem:[%s7 + $0x84] sm:$0xf]
      %v2537 = vld [vmem:[%s7 + $0x88] sm:$0xf]
      %v2538 = vld [vmem:[%s7 + $0x8c] sm:$0xf]
      %v2539 = vld [vmem:[%s7 + $0x90] sm:$0xf]
      %v2540 = vld [vmem:[%s7 + $0x94] sm:$0xf]
      %v2541 = vld [vmem:[%s7 + $0x98] sm:$0xf]
      %v2542 = vld [vmem:[%s7 + $0x9c] sm:$0xf]
      %v2543 = vld [vmem:[%s7 + $0xa0] sm:$0xf]
      %v2544 = vld [vmem:[%s7 + $0xa4] sm:$0xf]
      %v2545 = vld [vmem:[%s7 + $0xa8] sm:$0xf]
      %v2546 = vld [vmem:[%s7 + $0xac] sm:$0xf]
      %v2547 = vld [vmem:[%s7 + $0xb0] sm:$0xf]
      %v2548 = vld [vmem:[%s7 + $0xb4] sm:$0xf]
      %v2549 = vld [vmem:[%s7 + $0xb8] sm:$0xf]
      %v2550 = vld [vmem:[%s7 + $0xbc] sm:$0xf]
      %v2551 = vld [vmem:[%s7 + $0xc0] sm:$0xf]
      %v2552 = vld [vmem:[%s7 + $0xc4] sm:$0xf]
      %v2553 = vld [vmem:[%s7 + $0xc8] sm:$0xf]
      %v2554 = vld [vmem:[%s7 + $0xcc] sm:$0xf]
      %v2555 = vld [vmem:[%s7 + $0xd0] sm:$0xf]
      %v2556 = vld [vmem:[%s7 + $0xd4] sm:$0xf]
      %v2557 = vld [vmem:[%s7 + $0xd8] sm:$0xf]
      %v2558 = vld [vmem:[%s7 + $0xdc] sm:$0xf]
      %v2559 = vld [vmem:[%s7 + $0xe0] sm:$0xf]
      %v2560 = vld [vmem:[%s7 + $0xe4] sm:$0xf]
      %v2561 = vld [vmem:[%s7 + $0xe8] sm:$0xf]
      %v2562 = vld [vmem:[%s7 + $0xec] sm:$0xf]
      %v2563 = vld [vmem:[%s7 + $0xf0] sm:$0xf]
      %v2564 = vld [vmem:[%s7 + $0xf4] sm:$0xf]
      %v2565 = vld [vmem:[%s7 + $0xf8] sm:$0xf]
      %v2566 = vld [vmem:[%s7 + $0xfc] sm:$0xf]
      %v2567 = vld [vmem:[%s7 + $0x100] sm:$0xf]
      %v2568 = vld [vmem:[%s7 + $0x104] sm:$0xf]
      %v2569 = vld [vmem:[%s7 + $0x108] sm:$0xf]
      %v2570 = vld [vmem:[%s7 + $0x10c] sm:$0xf]
      %v2571 = vld [vmem:[%s7 + $0x110] sm:$0xf]
      %v2572 = vld [vmem:[%s7 + $0x114] sm:$0xf]
      %v2573 = vld [vmem:[%s7 + $0x118] sm:$0xf]
      %v2574 = vld [vmem:[%s7 + $0x11c] sm:$0xf]
      %v2575 = vld [vmem:[%s7 + $0x120] sm:$0xf]
      %v2576 = vld [vmem:[%s7 + $0x124] sm:$0xf]
      %v2577 = vld [vmem:[%s7 + $0x128] sm:$0xf]
      %v2578 = vld [vmem:[%s7 + $0x12c] sm:$0xf]
      %v2579 = vld [vmem:[%s7 + $0x130] sm:$0xf]
      %v2580 = vld [vmem:[%s7 + $0x134] sm:$0xf]
      %v2581 = vld [vmem:[%s7 + $0x138] sm:$0xf]
      %v2582 = vld [vmem:[%s7 + $0x13c] sm:$0xf]
      %v2583 = vld [vmem:[%s7 + $0x140] sm:$0xf]
      %v2584 = vld [vmem:[%s7 + $0x144] sm:$0xf]
      %v2585 = vld [vmem:[%s7 + $0x148] sm:$0xf]
      %v2586 = vld [vmem:[%s7 + $0x14c] sm:$0xf]
      %v2587 = vld [vmem:[%s7 + $0x150] sm:$0xf]
      %v2588 = vld [vmem:[%s7 + $0x154] sm:$0xf]
      %v2589 = vld [vmem:[%s7 + $0x158] sm:$0xf]
      %v2590 = vld [vmem:[%s7 + $0x15c] sm:$0xf]
      %v2591 = vld [vmem:[%s7 + $0x160] sm:$0xf]
      %v2592 = vld [vmem:[%s7 + $0x164] sm:$0xf]
      %v2593 = vld [vmem:[%s7 + $0x168] sm:$0xf]
      %v2594 = vld [vmem:[%s7 + $0x16c] sm:$0xf]
      %v2595 = vld [vmem:[%s7 + $0x170] sm:$0xf]
      %v2596 = vld [vmem:[%s7 + $0x174] sm:$0xf]
      %v2597 = vld [vmem:[%s7 + $0x178] sm:$0xf]
      %v2598 = vld [vmem:[%s7 + $0x17c] sm:$0xf]
      %v2599 = vld [vmem:[%s7 + $0x180] sm:$0xf]
      %v2600 = vld [vmem:[%s7 + $0x184] sm:$0xf]
      %v2601 = vld [vmem:[%s7 + $0x188] sm:$0xf]
      %v2602 = vld [vmem:[%s7 + $0x18c] sm:$0xf]
      %v2603 = vld [vmem:[%s7 + $0x190] sm:$0xf]
      %v2604 = vld [vmem:[%s7 + $0x194] sm:$0xf]
      %v2605 = vld [vmem:[%s7 + $0x198] sm:$0xf]
      %v2606 = vld [vmem:[%s7 + $0x19c] sm:$0xf]
      %v2607 = vld [vmem:[%s7 + $0x1a0] sm:$0xf]
      %v2608 = vld [vmem:[%s7 + $0x1a4] sm:$0xf]
      %v2609 = vld [vmem:[%s7 + $0x1a8] sm:$0xf]
      %v2610 = vld [vmem:[%s7 + $0x1ac] sm:$0xf]
      %v2611 = vld [vmem:[%s7 + $0x1b0] sm:$0xf]
      %v2612 = vld [vmem:[%s7 + $0x1b4] sm:$0xf]
      %v2613 = vld [vmem:[%s7 + $0x1b8] sm:$0xf]
      %v2614 = vld [vmem:[%s7 + $0x1bc] sm:$0xf]
      %v2615 = vld [vmem:[%s7 + $0x1c0] sm:$0xf]
      %v2616 = vld [vmem:[%s7 + $0x1c4] sm:$0xf]
      %v2617 = vld [vmem:[%s7 + $0x1c8] sm:$0xf]
      %v2618 = vld [vmem:[%s7 + $0x1cc] sm:$0xf]
      %v2619 = vld [vmem:[%s7 + $0x1d0] sm:$0xf]
      %v2620 = vld [vmem:[%s7 + $0x1d4] sm:$0xf]
      %v2621 = vld [vmem:[%s7 + $0x1d8] sm:$0xf]
      %v2622 = vld [vmem:[%s7 + $0x1dc] sm:$0xf]
      %v2623 = vld [vmem:[%s7 + $0x1e0] sm:$0xf]
      %v2624 = vld [vmem:[%s7 + $0x1e4] sm:$0xf]
      %v2625 = vld [vmem:[%s7 + $0x1e8] sm:$0xf]
      %v2626 = vld [vmem:[%s7 + $0x1ec] sm:$0xf]
      %v2627 = vld [vmem:[%s7 + $0x1f0] sm:$0xf]
      %v2628 = vld [vmem:[%s7 + $0x1f4] sm:$0xf]
      %v2629 = vld [vmem:[%s7 + $0x1f8] sm:$0xf]
      %v2630 = vld [vmem:[%s7 + $0x1fc] sm:$0xf]
      %v2631 = vld [vmem:[%s7 + $0x200] sm:$0xf]
      %v2632 = vld [vmem:[%s7 + $0x204] sm:$0xf]
      %v2633 = vld [vmem:[%s7 + $0x208] sm:$0xf]
      %v2634 = vld [vmem:[%s7 + $0x20c] sm:$0xf]
      %v2635 = vld [vmem:[%s7 + $0x210] sm:$0xf]
      %v2636 = vld [vmem:[%s7 + $0x214] sm:$0xf]
      %v2637 = vld [vmem:[%s7 + $0x218] sm:$0xf]
      %v2638 = vld [vmem:[%s7 + $0x21c] sm:$0xf]
      %v2639 = vld [vmem:[%s7 + $0x220] sm:$0xf]
      %v2640 = vld [vmem:[%s7 + $0x224] sm:$0xf]
      %v2641 = vld [vmem:[%s7 + $0x228] sm:$0xf]
      %v2642 = vld [vmem:[%s7 + $0x22c] sm:$0xf]
      %v2643 = vld [vmem:[%s7 + $0x230] sm:$0xf]
      %v2644 = vld [vmem:[%s7 + $0x234] sm:$0xf]
      %v2645 = vld [vmem:[%s7 + $0x238] sm:$0xf]
      %v2646 = vld [vmem:[%s7 + $0x23c] sm:$0xf]
      %v2647 = vld [vmem:[%s7 + $0x240] sm:$0xf]
      %v2648 = vld [vmem:[%s7 + $0x244] sm:$0xf]
      %v2649 = vld [vmem:[%s7 + $0x248] sm:$0xf]
      %v2650 = vld [vmem:[%s7 + $0x24c] sm:$0xf]
      %v2651 = vld [vmem:[%s7 + $0x250] sm:$0xf]
      %v2652 = vld [vmem:[%s7 + $0x254] sm:$0xf]
      %v2653 = vld [vmem:[%s7 + $0x258] sm:$0xf]
      %v2654 = vld [vmem:[%s7 + $0x25c] sm:$0xf]
      %v2655 = vld [vmem:[%s7 + $0x260] sm:$0xf]
      %v2656 = vld [vmem:[%s7 + $0x264] sm:$0xf]
      %v2657 = vld [vmem:[%s7 + $0x268] sm:$0xf]
      %v2658 = vld [vmem:[%s7 + $0x26c] sm:$0xf]
      %v2659 = vld [vmem:[%s7 + $0x270] sm:$0xf]
      %v2660 = vld [vmem:[%s7 + $0x274] sm:$0xf]
      %v2661 = vld [vmem:[%s7 + $0x278] sm:$0xf]
      %v2662 = vld [vmem:[%s7 + $0x27c] sm:$0xf]
      %v2663 = vld [vmem:[%s7 + $0x280] sm:$0xf]
      %v2664 = vld [vmem:[%s7 + $0x284] sm:$0xf]
      %v2665 = vld [vmem:[%s7 + $0x288] sm:$0xf]
      %v2666 = vld [vmem:[%s7 + $0x28c] sm:$0xf]
      %v2667 = vld [vmem:[%s7 + $0x290] sm:$0xf]
      %v2668 = vld [vmem:[%s7 + $0x294] sm:$0xf]
      %v2669 = vld [vmem:[%s7 + $0x298] sm:$0xf]
      %v2670 = vld [vmem:[%s7 + $0x29c] sm:$0xf]
      %v2671 = vld [vmem:[%s7 + $0x2a0] sm:$0xf]
      %v2672 = vld [vmem:[%s7 + $0x2a4] sm:$0xf]
      %v2673 = vld [vmem:[%s7 + $0x2a8] sm:$0xf]
      %v2674 = vld [vmem:[%s7 + $0x2ac] sm:$0xf]
      %v2675 = vld [vmem:[%s7 + $0x2b0] sm:$0xf]
      %v2676 = vld [vmem:[%s7 + $0x2b4] sm:$0xf]
      %v2677 = vld [vmem:[%s7 + $0x2b8] sm:$0xf]
      %v2678 = vld [vmem:[%s7 + $0x2bc] sm:$0xf]
      %v2679 = vld [vmem:[%s7 + $0x2c0] sm:$0xf]
      %v2680 = vld [vmem:[%s7 + $0x2c4] sm:$0xf]
      %v2681 = vld [vmem:[%s7 + $0x2c8] sm:$0xf]
      %v2682 = vld [vmem:[%s7 + $0x2cc] sm:$0xf]
      %v2683 = vld [vmem:[%s7 + $0x2d0] sm:$0xf]
      %v2684 = vld [vmem:[%s7 + $0x2d4] sm:$0xf]
      %v2685 = vld [vmem:[%s7 + $0x2d8] sm:$0xf]
      %v2686 = vld [vmem:[%s7 + $0x2dc] sm:$0xf]
      %v2687 = vld [vmem:[%s7 + $0x2e0] sm:$0xf]
      %v2688 = vld [vmem:[%s7 + $0x2e4] sm:$0xf]
      %v2689 = vld [vmem:[%s7 + $0x2e8] sm:$0xf]
      %v2690 = vld [vmem:[%s7 + $0x2ec] sm:$0xf]
      %v2691 = vld [vmem:[%s7 + $0x2f0] sm:$0xf]
      %v2692 = vld [vmem:[%s7 + $0x2f4] sm:$0xf]
      %v2693 = vld [vmem:[%s7 + $0x2f8] sm:$0xf]
      %v2694 = vld [vmem:[%s7 + $0x2fc] sm:$0xf]
      %v2695 = vld [vmem:[%s7 + $0x300] sm:$0xf]
      %v2696 = vld [vmem:[%s7 + $0x304] sm:$0xf]
      %v2697 = vld [vmem:[%s7 + $0x308] sm:$0xf]
      %v2698 = vld [vmem:[%s7 + $0x30c] sm:$0xf]
      %v2699 = vld [vmem:[%s7 + $0x310] sm:$0xf]
      %v2700 = vld [vmem:[%s7 + $0x314] sm:$0xf]
      %v2701 = vld [vmem:[%s7 + $0x318] sm:$0xf]
      %v2702 = vld [vmem:[%s7 + $0x31c] sm:$0xf]
      %v2703 = vld [vmem:[%s7 + $0x320] sm:$0xf]
      %v2704 = vld [vmem:[%s7 + $0x324] sm:$0xf]
      %v2705 = vld [vmem:[%s7 + $0x328] sm:$0xf]
      %v2706 = vld [vmem:[%s7 + $0x32c] sm:$0xf]
      %v2707 = vld [vmem:[%s7 + $0x330] sm:$0xf]
      %v2708 = vld [vmem:[%s7 + $0x334] sm:$0xf]
      %v2709 = vld [vmem:[%s7 + $0x338] sm:$0xf]
      %v2710 = vld [vmem:[%s7 + $0x33c] sm:$0xf]
      %v2711 = vld [vmem:[%s7 + $0x340] sm:$0xf]
      %v2712 = vld [vmem:[%s7 + $0x344] sm:$0xf]
      %v2713 = vld [vmem:[%s7 + $0x348] sm:$0xf]
      %v2714 = vld [vmem:[%s7 + $0x34c] sm:$0xf]
      %v2715 = vld [vmem:[%s7 + $0x350] sm:$0xf]
      %v2716 = vld [vmem:[%s7 + $0x354] sm:$0xf]
      %v2717 = vld [vmem:[%s7 + $0x358] sm:$0xf]
      %v2718 = vld [vmem:[%s7 + $0x35c] sm:$0xf]
      %v2719 = vld [vmem:[%s7 + $0x360] sm:$0xf]
      %v2720 = vld [vmem:[%s7 + $0x364] sm:$0xf]
      %v2721 = vld [vmem:[%s7 + $0x368] sm:$0xf]
      %v2722 = vld [vmem:[%s7 + $0x36c] sm:$0xf]
      %v2723 = vld [vmem:[%s7 + $0x370] sm:$0xf]
      %v2724 = vld [vmem:[%s7 + $0x374] sm:$0xf]
      %v2725 = vld [vmem:[%s7 + $0x378] sm:$0xf]
      %v2726 = vld [vmem:[%s7 + $0x37c] sm:$0xf]
      %v2727 = vld [vmem:[%s7 + $0x380] sm:$0xf]
      %v2728 = vld [vmem:[%s7 + $0x384] sm:$0xf]
      %v2729 = vld [vmem:[%s7 + $0x388] sm:$0xf]
      %v2730 = vld [vmem:[%s7 + $0x38c] sm:$0xf]
      %v2731 = vld [vmem:[%s7 + $0x390] sm:$0xf]
      %v2732 = vld [vmem:[%s7 + $0x394] sm:$0xf]
      %v2733 = vld [vmem:[%s7 + $0x398] sm:$0xf]
      %v2734 = vld [vmem:[%s7 + $0x39c] sm:$0xf]
      %v2735 = vld [vmem:[%s7 + $0x3a0] sm:$0xf]
      %v2736 = vld [vmem:[%s7 + $0x3a4] sm:$0xf]
      %v2737 = vld [vmem:[%s7 + $0x3a8] sm:$0xf]
      %v2738 = vld [vmem:[%s7 + $0x3ac] sm:$0xf]
      %v2739 = vld [vmem:[%s7 + $0x3b0] sm:$0xf]
      %v2740 = vld [vmem:[%s7 + $0x3b4] sm:$0xf]
      %v2741 = vld [vmem:[%s7 + $0x3b8] sm:$0xf]
      %v2742 = vld [vmem:[%s7 + $0x3bc] sm:$0xf]
      %v2743 = vld [vmem:[%s7 + $0x3c0] sm:$0xf]
      %v2744 = vld [vmem:[%s7 + $0x3c4] sm:$0xf]
      %v2745 = vld [vmem:[%s7 + $0x3c8] sm:$0xf]
      %v2746 = vld [vmem:[%s7 + $0x3cc] sm:$0xf]
      %v2747 = vld [vmem:[%s7 + $0x3d0] sm:$0xf]
      %v2748 = vld [vmem:[%s7 + $0x3d4] sm:$0xf]
      %v2749 = vld [vmem:[%s7 + $0x3d8] sm:$0xf]
      %v2750 = vld [vmem:[%s7 + $0x3dc] sm:$0xf]
      %v2751 = vld [vmem:[%s7 + $0x3e0] sm:$0xf]
      %v2752 = vld [vmem:[%s7 + $0x3e4] sm:$0xf]
      %v2753 = vld [vmem:[%s7 + $0x3e8] sm:$0xf]
      %v2754 = vld [vmem:[%s7 + $0x3ec] sm:$0xf]
      %v2755 = vld [vmem:[%s7 + $0x3f0] sm:$0xf]
      %v2756 = vld [vmem:[%s7 + $0x3f4] sm:$0xf]
      %v2757 = vld [vmem:[%s7 + $0x3f8] sm:$0xf]
      %v2758 = vld [vmem:[%s7 + $0x3fc] sm:$0xf]
      %v2759 = vld [vmem:[%s7 + $0x400] sm:$0xf]
      %v2760 = vld [vmem:[%s7 + $0x404] sm:$0xf]
      %v2761 = vld [vmem:[%s7 + $0x408] sm:$0xf]
      %v2762 = vld [vmem:[%s7 + $0x40c] sm:$0xf]
      %v2763 = vld [vmem:[%s7 + $0x410] sm:$0xf]
      %v2764 = vld [vmem:[%s7 + $0x414] sm:$0xf]
      %v2765 = vld [vmem:[%s7 + $0x418] sm:$0xf]
      %v2766 = vld [vmem:[%s7 + $0x41c] sm:$0xf]
      %v2767 = vld [vmem:[%s7 + $0x420] sm:$0xf]
      %v2768 = vld [vmem:[%s7 + $0x424] sm:$0xf]
      %v2769 = vld [vmem:[%s7 + $0x428] sm:$0xf]
      %v2770 = vld [vmem:[%s7 + $0x42c] sm:$0xf]
      %v2771 = vld [vmem:[%s7 + $0x430] sm:$0xf]
      %v2772 = vld [vmem:[%s7 + $0x434] sm:$0xf]
      %v2773 = vld [vmem:[%s7 + $0x438] sm:$0xf]
      %v2774 = vld [vmem:[%s7 + $0x43c] sm:$0xf]
      %v2775 = vld [vmem:[%s7 + $0x440] sm:$0xf]
      %v2776 = vld [vmem:[%s7 + $0x444] sm:$0xf]
      %v2777 = vld [vmem:[%s7 + $0x448] sm:$0xf]
      %v2778 = vld [vmem:[%s7 + $0x44c] sm:$0xf]
      %v2779 = vld [vmem:[%s7 + $0x450] sm:$0xf]
      %v2780 = vld [vmem:[%s7 + $0x454] sm:$0xf]
      %v2781 = vld [vmem:[%s7 + $0x458] sm:$0xf]
      %v2782 = vld [vmem:[%s7 + $0x45c] sm:$0xf]
      %v2783 = vld [vmem:[%s7 + $0x460] sm:$0xf]
      %v2784 = vld [vmem:[%s7 + $0x464] sm:$0xf]
      %v2785 = vld [vmem:[%s7 + $0x468] sm:$0xf]
      %v2786 = vld [vmem:[%s7 + $0x46c] sm:$0xf]
      %v2787 = vld [vmem:[%s7 + $0x470] sm:$0xf]
      %v2788 = vld [vmem:[%s7 + $0x474] sm:$0xf]
      %v2789 = vld [vmem:[%s7 + $0x478] sm:$0xf]
      %v2790 = vld [vmem:[%s7 + $0x47c] sm:$0xf]
      %v2791 = vld [vmem:[%s7 + $0x480] sm:$0xf]
      %v2792 = vld [vmem:[%s7 + $0x484] sm:$0xf]
      %v2793 = vld [vmem:[%s7 + $0x488] sm:$0xf]
      %v2794 = vld [vmem:[%s7 + $0x48c] sm:$0xf]
      %v2795 = vld [vmem:[%s7 + $0x490] sm:$0xf]
      %v2796 = vld [vmem:[%s7 + $0x494] sm:$0xf]
      %v2797 = vld [vmem:[%s7 + $0x498] sm:$0xf]
      %v2798 = vld [vmem:[%s7 + $0x49c] sm:$0xf]
      %v2799 = vld [vmem:[%s7 + $0x4a0] sm:$0xf]
      %v2800 = vld [vmem:[%s7 + $0x4a4] sm:$0xf]
      %v2801 = vld [vmem:[%s7 + $0x4a8] sm:$0xf]
      %v2802 = vld [vmem:[%s7 + $0x4ac] sm:$0xf]
      %v2803 = vld [vmem:[%s7 + $0x4b0] sm:$0xf]
      %v2804 = vld [vmem:[%s7 + $0x4b4] sm:$0xf]
      %v2805 = vld [vmem:[%s7 + $0x4b8] sm:$0xf]
      %v2806 = vld [vmem:[%s7 + $0x4bc] sm:$0xf]
      %v2807 = vld [vmem:[%s7 + $0x4c0] sm:$0xf]
      %v2808 = vld [vmem:[%s7 + $0x4c4] sm:$0xf]
      %v2809 = vld [vmem:[%s7 + $0x4c8] sm:$0xf]
      %v2810 = vld [vmem:[%s7 + $0x4cc] sm:$0xf]
      %v2811 = vld [vmem:[%s7 + $0x4d0] sm:$0xf]
      %v2812 = vld [vmem:[%s7 + $0x4d4] sm:$0xf]
      %v2813 = vld [vmem:[%s7 + $0x4d8] sm:$0xf]
      %v2814 = vld [vmem:[%s7 + $0x4dc] sm:$0xf]
      %v2815 = vld [vmem:[%s7 + $0x4e0] sm:$0xf]
      %v2816 = vld [vmem:[%s7 + $0x4e4] sm:$0xf]
      %v2817 = vld [vmem:[%s7 + $0x4e8] sm:$0xf]
      %v2818 = vld [vmem:[%s7 + $0x4ec] sm:$0xf]
      %v2819 = vld [vmem:[%s7 + $0x4f0] sm:$0xf]
      %v2820 = vld [vmem:[%s7 + $0x4f4] sm:$0xf]
      %v2821 = vld [vmem:[%s7 + $0x4f8] sm:$0xf]
      %v2822 = vld [vmem:[%s7 + $0x4fc] sm:$0xf]
      %v2823 = vld [vmem:[%s7 + $0x500] sm:$0xf]
      %v2824 = vld [vmem:[%s7 + $0x504] sm:$0xf]
      %v2825 = vld [vmem:[%s7 + $0x508] sm:$0xf]
      %v2826 = vld [vmem:[%s7 + $0x50c] sm:$0xf]
      %v2827 = vld [vmem:[%s7 + $0x510] sm:$0xf]
      %v2828 = vld [vmem:[%s7 + $0x514] sm:$0xf]
      %v2829 = vld [vmem:[%s7 + $0x518] sm:$0xf]
      %v2830 = vld [vmem:[%s7 + $0x51c] sm:$0xf]
      %v2831 = vld [vmem:[%s7 + $0x520] sm:$0xf]
      %v2832 = vld [vmem:[%s7 + $0x524] sm:$0xf]
      %v2833 = vld [vmem:[%s7 + $0x528] sm:$0xf]
      %v2834 = vld [vmem:[%s7 + $0x52c] sm:$0xf]
      %v2835 = vld [vmem:[%s7 + $0x530] sm:$0xf]
      %v2836 = vld [vmem:[%s7 + $0x534] sm:$0xf]
      %v2837 = vld [vmem:[%s7 + $0x538] sm:$0xf]
      %v2838 = vld [vmem:[%s7 + $0x53c] sm:$0xf]
      %v2839 = vld [vmem:[%s7 + $0x540] sm:$0xf]
      %v2840 = vld [vmem:[%s7 + $0x544] sm:$0xf]
      %v2841 = vld [vmem:[%s7 + $0x548] sm:$0xf]
      %v2842 = vld [vmem:[%s7 + $0x54c] sm:$0xf]
      %v2843 = vld [vmem:[%s7 + $0x550] sm:$0xf]
      %v2844 = vld [vmem:[%s7 + $0x554] sm:$0xf]
      %v2845 = vld [vmem:[%s7 + $0x558] sm:$0xf]
      %v2846 = vld [vmem:[%s7 + $0x55c] sm:$0xf]
      %v2847 = vld [vmem:[%s7 + $0x560] sm:$0xf]
      %v2848 = vld [vmem:[%s7 + $0x564] sm:$0xf]
      %v2849 = vld [vmem:[%s7 + $0x568] sm:$0xf]
      %v2850 = vld [vmem:[%s7 + $0x56c] sm:$0xf]
      %v2851 = vld [vmem:[%s7 + $0x570] sm:$0xf]
      %v2852 = vld [vmem:[%s7 + $0x574] sm:$0xf]
      %v2853 = vld [vmem:[%s7 + $0x578] sm:$0xf]
      %v2854 = vld [vmem:[%s7 + $0x57c] sm:$0xf]
      %v2855 = vld [vmem:[%s7 + $0x580] sm:$0xf]
      %v2856 = vld [vmem:[%s7 + $0x584] sm:$0xf]
      %v2857 = vld [vmem:[%s7 + $0x588] sm:$0xf]
      %v2858 = vld [vmem:[%s7 + $0x58c] sm:$0xf]
      %v2859 = vld [vmem:[%s7 + $0x590] sm:$0xf]
      %v2860 = vld [vmem:[%s7 + $0x594] sm:$0xf]
      %v2861 = vld [vmem:[%s7 + $0x598] sm:$0xf]
      %v2862 = vld [vmem:[%s7 + $0x59c] sm:$0xf]
      %v2863 = vld [vmem:[%s7 + $0x5a0] sm:$0xf]
      %v2864 = vld [vmem:[%s7 + $0x5a4] sm:$0xf]
      %v2865 = vld [vmem:[%s7 + $0x5a8] sm:$0xf]
      %v2866 = vld [vmem:[%s7 + $0x5ac] sm:$0xf]
      %v2867 = vld [vmem:[%s7 + $0x5b0] sm:$0xf]
      %v2868 = vld [vmem:[%s7 + $0x5b4] sm:$0xf]
      %v2869 = vld [vmem:[%s7 + $0x5b8] sm:$0xf]
      %v2870 = vld [vmem:[%s7 + $0x5bc] sm:$0xf]
      %v2871 = vld [vmem:[%s7 + $0x5c0] sm:$0xf]
      %v2872 = vld [vmem:[%s7 + $0x5c4] sm:$0xf]
      %v2873 = vld [vmem:[%s7 + $0x5c8] sm:$0xf]
      %v2874 = vld [vmem:[%s7 + $0x5cc] sm:$0xf]
      %v2875 = vld [vmem:[%s7 + $0x5d0] sm:$0xf]
      %v2876 = vld [vmem:[%s7 + $0x5d4] sm:$0xf]
      %v2877 = vld [vmem:[%s7 + $0x5d8] sm:$0xf]
      %v2878 = vld [vmem:[%s7 + $0x5dc] sm:$0xf]
      %v2879 = vld [vmem:[%s7 + $0x5e0] sm:$0xf]
      %v2880 = vld [vmem:[%s7 + $0x5e4] sm:$0xf]
      %v2881 = vld [vmem:[%s7 + $0x5e8] sm:$0xf]
      %v2882 = vld [vmem:[%s7 + $0x5ec] sm:$0xf]
      %v2883 = vld [vmem:[%s7 + $0x5f0] sm:$0xf]
      %v2884 = vld [vmem:[%s7 + $0x5f4] sm:$0xf]
      %v2885 = vld [vmem:[%s7 + $0x5f8] sm:$0xf]
      %v2886 = vld [vmem:[%s7 + $0x5fc] sm:$0xf]
      %v2887 = vld [vmem:[%s7 + $0x600] sm:$0xf]
      %v2888 = vld [vmem:[%s7 + $0x604] sm:$0xf]
      %v2889 = vld [vmem:[%s7 + $0x608] sm:$0xf]
      %v2890 = vld [vmem:[%s7 + $0x60c] sm:$0xf]
      %v2891 = vld [vmem:[%s7 + $0x610] sm:$0xf]
      %v2892 = vld [vmem:[%s7 + $0x614] sm:$0xf]
      %v2893 = vld [vmem:[%s7 + $0x618] sm:$0xf]
      %v2894 = vld [vmem:[%s7 + $0x61c] sm:$0xf]
      %v2895 = vld [vmem:[%s7 + $0x620] sm:$0xf]
      %v2896 = vld [vmem:[%s7 + $0x624] sm:$0xf]
      %v2897 = vld [vmem:[%s7 + $0x628] sm:$0xf]
      %v2898 = vld [vmem:[%s7 + $0x62c] sm:$0xf]
      %v2899 = vld [vmem:[%s7 + $0x630] sm:$0xf]
      %v2900 = vld [vmem:[%s7 + $0x634] sm:$0xf]
      %v2901 = vld [vmem:[%s7 + $0x638] sm:$0xf]
      %v2902 = vld [vmem:[%s7 + $0x63c] sm:$0xf]
      %v2903 = vld [vmem:[%s7 + $0x640] sm:$0xf]
      %v2904 = vld [vmem:[%s7 + $0x644] sm:$0xf]
      %v2905 = vld [vmem:[%s7 + $0x648] sm:$0xf]
      %v2906 = vld [vmem:[%s7 + $0x64c] sm:$0xf]
      %v2907 = vld [vmem:[%s7 + $0x650] sm:$0xf]
      %v2908 = vld [vmem:[%s7 + $0x654] sm:$0xf]
      %v2909 = vld [vmem:[%s7 + $0x658] sm:$0xf]
      %v2910 = vld [vmem:[%s7 + $0x65c] sm:$0xf]
      %v2911 = vld [vmem:[%s7 + $0x660] sm:$0xf]
      %v2912 = vld [vmem:[%s7 + $0x664] sm:$0xf]
      %v2913 = vld [vmem:[%s7 + $0x668] sm:$0xf]
      %v2914 = vld [vmem:[%s7 + $0x66c] sm:$0xf]
      %v2915 = vld [vmem:[%s7 + $0x670] sm:$0xf]
      %v2916 = vld [vmem:[%s7 + $0x674] sm:$0xf]
      %v2917 = vld [vmem:[%s7 + $0x678] sm:$0xf]
      %v2918 = vld [vmem:[%s7 + $0x67c] sm:$0xf]
      %v2919 = vld [vmem:[%s7 + $0x680] sm:$0xf]
      %v2920 = vld [vmem:[%s7 + $0x684] sm:$0xf]
      %v2921 = vld [vmem:[%s7 + $0x688] sm:$0xf]
      %v2922 = vld [vmem:[%s7 + $0x68c] sm:$0xf]
      %v2923 = vld [vmem:[%s7 + $0x690] sm:$0xf]
      %v2924 = vld [vmem:[%s7 + $0x694] sm:$0xf]
      %v2925 = vld [vmem:[%s7 + $0x698] sm:$0xf]
      %v2926 = vld [vmem:[%s7 + $0x69c] sm:$0xf]
      %v2927 = vld [vmem:[%s7 + $0x6a0] sm:$0xf]
      %v2928 = vld [vmem:[%s7 + $0x6a4] sm:$0xf]
      %v2929 = vld [vmem:[%s7 + $0x6a8] sm:$0xf]
      %v2930 = vld [vmem:[%s7 + $0x6ac] sm:$0xf]
      %v2931 = vld [vmem:[%s7 + $0x6b0] sm:$0xf]
      %v2932 = vld [vmem:[%s7 + $0x6b4] sm:$0xf]
      %v2933 = vld [vmem:[%s7 + $0x6b8] sm:$0xf]
      %v2934 = vld [vmem:[%s7 + $0x6bc] sm:$0xf]
      %v3367 = vunpack.c.l.b16 %v2503
      %v3368 = vunpack.c.l.b16 %v2504
      %v3369 = vunpack.c.l.b16 %v2505
      %v3370 = vunpack.c.l.b16 %v2506
      %v3371 = vunpack.c.l.b16 %v2507
      %v3372 = vunpack.c.l.b16 %v2508
      %v3373 = vunpack.c.l.b16 %v2509
      %v3374 = vunpack.c.l.b16 %v2510
      %v3375 = vunpack.c.l.b16 %v2511
      %v3376 = vunpack.c.l.b16 %v2512
      %v3377 = vunpack.c.l.b16 %v2513
      %v3378 = vunpack.c.l.b16 %v2514
      %v3379 = vunpack.c.l.b16 %v2515
      %v3380 = vunpack.c.l.b16 %v2516
      %v3381 = vunpack.c.l.b16 %v2517
      %v3382 = vunpack.c.l.b16 %v2518
      %v3383 = vunpack.c.l.b16 %v2519
      %v3384 = vunpack.c.l.b16 %v2520
      %v3385 = vunpack.c.l.b16 %v2521
      %v3386 = vunpack.c.l.b16 %v2522
      %v3387 = vunpack.c.l.b16 %v2523
      %v3388 = vunpack.c.l.b16 %v2524
      %v3389 = vunpack.c.l.b16 %v2525
      %v3390 = vunpack.c.l.b16 %v2526
      %v3391 = vunpack.c.l.b16 %v2527
      %v3392 = vunpack.c.l.b16 %v2528
      %v3393 = vunpack.c.l.b16 %v2529
      %v3394 = vunpack.c.l.b16 %v2530
      %v3395 = vunpack.c.l.b16 %v2531
      %v3396 = vunpack.c.l.b16 %v2532
      %v3397 = vunpack.c.l.b16 %v2533
      %v3398 = vunpack.c.l.b16 %v2534
      %v3399 = vunpack.c.l.b16 %v2535
      %v3400 = vunpack.c.l.b16 %v2536
      %v3401 = vunpack.c.l.b16 %v2537
      %v3402 = vunpack.c.l.b16 %v2538
      %v3403 = vunpack.c.l.b16 %v2539
      %v3404 = vunpack.c.l.b16 %v2540
      %v3405 = vunpack.c.l.b16 %v2541
      %v3406 = vunpack.c.l.b16 %v2542
      %v3407 = vunpack.c.l.b16 %v2543
      %v3408 = vunpack.c.l.b16 %v2544
      %v3409 = vunpack.c.l.b16 %v2545
      %v3410 = vunpack.c.l.b16 %v2546
      %v3411 = vunpack.c.l.b16 %v2547
      %v3412 = vunpack.c.l.b16 %v2548
      %v3413 = vunpack.c.l.b16 %v2549
      %v3414 = vunpack.c.l.b16 %v2550
      %v3415 = vunpack.c.l.b16 %v2551
      %v3416 = vunpack.c.l.b16 %v2552
      %v3417 = vunpack.c.l.b16 %v2553
      %v3418 = vunpack.c.l.b16 %v2554
      %v3419 = vunpack.c.l.b16 %v2555
      %v3420 = vunpack.c.l.b16 %v2556
      %v3421 = vunpack.c.l.b16 %v2557
      %v3422 = vunpack.c.l.b16 %v2558
      %v3423 = vunpack.c.l.b16 %v2559
      %v3424 = vunpack.c.l.b16 %v2560
      %v3425 = vunpack.c.l.b16 %v2561
      %v3426 = vunpack.c.l.b16 %v2562
      %v3427 = vunpack.c.l.b16 %v2563
      %v3428 = vunpack.c.l.b16 %v2564
      %v3429 = vunpack.c.l.b16 %v2565
      %v3430 = vunpack.c.l.b16 %v2566
      %v3431 = vunpack.c.l.b16 %v2567
      %v3432 = vunpack.c.l.b16 %v2568
      %v3433 = vunpack.c.l.b16 %v2569
      %v3434 = vunpack.c.l.b16 %v2570
      %v3435 = vunpack.c.l.b16 %v2571
      %v3436 = vunpack.c.l.b16 %v2572
      %v3437 = vunpack.c.l.b16 %v2573
      %v3438 = vunpack.c.l.b16 %v2574
      %v3439 = vunpack.c.l.b16 %v2575
      %v3440 = vunpack.c.l.b16 %v2576
      %v3441 = vunpack.c.l.b16 %v2577
      %v3442 = vunpack.c.l.b16 %v2578
      %v3443 = vunpack.c.l.b16 %v2579
      %v3444 = vunpack.c.l.b16 %v2580
      %v3445 = vunpack.c.l.b16 %v2581
      %v3446 = vunpack.c.l.b16 %v2582
      %v3447 = vunpack.c.l.b16 %v2583
      %v3448 = vunpack.c.l.b16 %v2584
      %v3449 = vunpack.c.l.b16 %v2585
      %v3450 = vunpack.c.l.b16 %v2586
      %v3451 = vunpack.c.l.b16 %v2587
      %v3452 = vunpack.c.l.b16 %v2588
      %v3453 = vunpack.c.l.b16 %v2589
      %v3454 = vunpack.c.l.b16 %v2590
      %v3455 = vunpack.c.l.b16 %v2591
      %v3456 = vunpack.c.l.b16 %v2592
      %v3457 = vunpack.c.l.b16 %v2593
      %v3458 = vunpack.c.l.b16 %v2594
      %v3459 = vunpack.c.l.b16 %v2595
      %v3460 = vunpack.c.l.b16 %v2596
      %v3461 = vunpack.c.l.b16 %v2597
      %v3462 = vunpack.c.l.b16 %v2598
      %v3463 = vunpack.c.l.b16 %v2599
      %v3464 = vunpack.c.l.b16 %v2600
      %v3465 = vunpack.c.l.b16 %v2601
      %v3466 = vunpack.c.l.b16 %v2602
      %v3467 = vunpack.c.l.b16 %v2603
      %v3468 = vunpack.c.l.b16 %v2604
      %v3469 = vunpack.c.l.b16 %v2605
      %v3470 = vunpack.c.l.b16 %v2606
      %v3471 = vunpack.c.l.b16 %v2607
      %v3472 = vunpack.c.l.b16 %v2608
      %v3473 = vunpack.c.l.b16 %v2609
      %v3474 = vunpack.c.l.b16 %v2610
      %v3475 = vunpack.c.l.b16 %v2611
      %v3476 = vunpack.c.l.b16 %v2612
      %v3477 = vunpack.c.l.b16 %v2613
      %v3478 = vunpack.c.l.b16 %v2614
      %v3479 = vunpack.c.l.b16 %v2615
      %v3480 = vunpack.c.l.b16 %v2616
      %v3481 = vunpack.c.l.b16 %v2617
      %v3482 = vunpack.c.l.b16 %v2618
      %v3483 = vunpack.c.l.b16 %v2619
      %v3484 = vunpack.c.l.b16 %v2620
      %v3485 = vunpack.c.l.b16 %v2621
      %v3486 = vunpack.c.l.b16 %v2622
      %v3487 = vunpack.c.l.b16 %v2623
      %v3488 = vunpack.c.l.b16 %v2624
      %v3489 = vunpack.c.l.b16 %v2625
      %v3490 = vunpack.c.l.b16 %v2626
      %v3491 = vunpack.c.l.b16 %v2627
      %v3492 = vunpack.c.l.b16 %v2628
      %v3493 = vunpack.c.l.b16 %v2629
      %v3494 = vunpack.c.l.b16 %v2630
      %v3495 = vunpack.c.l.b16 %v2631
      %v3496 = vunpack.c.l.b16 %v2632
      %v3497 = vunpack.c.l.b16 %v2633
      %v3498 = vunpack.c.l.b16 %v2634
      %v3499 = vunpack.c.l.b16 %v2635
      %v3500 = vunpack.c.l.b16 %v2636
      %v3501 = vunpack.c.l.b16 %v2637
      %v3502 = vunpack.c.l.b16 %v2638
      %v3503 = vunpack.c.l.b16 %v2639
      %v3504 = vunpack.c.l.b16 %v2640
      %v3505 = vunpack.c.l.b16 %v2641
      %v3506 = vunpack.c.l.b16 %v2642
      %v3507 = vunpack.c.l.b16 %v2643
      %v3508 = vunpack.c.l.b16 %v2644
      %v3509 = vunpack.c.l.b16 %v2645
      %v3510 = vunpack.c.l.b16 %v2646
      %v3511 = vunpack.c.l.b16 %v2647
      %v3512 = vunpack.c.l.b16 %v2648
      %v3513 = vunpack.c.l.b16 %v2649
      %v3514 = vunpack.c.l.b16 %v2650
      %v3515 = vunpack.c.l.b16 %v2651
      %v3516 = vunpack.c.l.b16 %v2652
      %v3517 = vunpack.c.l.b16 %v2653
      %v3518 = vunpack.c.l.b16 %v2654
      %v3519 = vunpack.c.l.b16 %v2655
      %v3520 = vunpack.c.l.b16 %v2656
      %v3521 = vunpack.c.l.b16 %v2657
      %v3522 = vunpack.c.l.b16 %v2658
      %v3523 = vunpack.c.l.b16 %v2659
      %v3524 = vunpack.c.l.b16 %v2660
      %v3525 = vunpack.c.l.b16 %v2661
      %v3526 = vunpack.c.l.b16 %v2662
      %v3527 = vunpack.c.l.b16 %v2663
      %v3528 = vunpack.c.l.b16 %v2664
      %v3529 = vunpack.c.l.b16 %v2665
      %v3530 = vunpack.c.l.b16 %v2666
      %v3531 = vunpack.c.l.b16 %v2667
      %v3532 = vunpack.c.l.b16 %v2668
      %v3533 = vunpack.c.l.b16 %v2669
      %v3534 = vunpack.c.l.b16 %v2670
      %v3535 = vunpack.c.l.b16 %v2671
      %v3536 = vunpack.c.l.b16 %v2672
      %v3537 = vunpack.c.l.b16 %v2673
      %v3538 = vunpack.c.l.b16 %v2674
      %v3539 = vunpack.c.l.b16 %v2675
      %v3540 = vunpack.c.l.b16 %v2676
      %v3541 = vunpack.c.l.b16 %v2677
      %v3542 = vunpack.c.l.b16 %v2678
      %v3543 = vunpack.c.l.b16 %v2679
      %v3544 = vunpack.c.l.b16 %v2680
      %v3545 = vunpack.c.l.b16 %v2681
      %v3546 = vunpack.c.l.b16 %v2682
      %v3547 = vunpack.c.l.b16 %v2683
      %v3548 = vunpack.c.l.b16 %v2684
      %v3549 = vunpack.c.l.b16 %v2685
      %v3550 = vunpack.c.l.b16 %v2686
      %v3551 = vunpack.c.l.b16 %v2687
      %v3552 = vunpack.c.l.b16 %v2688
      %v3553 = vunpack.c.l.b16 %v2689
      %v3554 = vunpack.c.l.b16 %v2690
      %v3555 = vunpack.c.l.b16 %v2691
      %v3556 = vunpack.c.l.b16 %v2692
      %v3557 = vunpack.c.l.b16 %v2693
      %v3558 = vunpack.c.l.b16 %v2694
      %v3559 = vunpack.c.l.b16 %v2695
      %v3560 = vunpack.c.l.b16 %v2696
      %v3561 = vunpack.c.l.b16 %v2697
      %v3562 = vunpack.c.l.b16 %v2698
      %v3563 = vunpack.c.l.b16 %v2699
      %v3564 = vunpack.c.l.b16 %v2700
      %v3565 = vunpack.c.l.b16 %v2701
      %v3566 = vunpack.c.l.b16 %v2702
      %v3567 = vunpack.c.l.b16 %v2703
      %v3568 = vunpack.c.l.b16 %v2704
      %v3569 = vunpack.c.l.b16 %v2705
      %v3570 = vunpack.c.l.b16 %v2706
      %v3571 = vunpack.c.l.b16 %v2707
      %v3572 = vunpack.c.l.b16 %v2708
      %v3573 = vunpack.c.l.b16 %v2709
      %v3574 = vunpack.c.l.b16 %v2710
      %v3575 = vunpack.c.l.b16 %v2711
      %v3576 = vunpack.c.l.b16 %v2712
      %v3577 = vunpack.c.l.b16 %v2713
      %v3578 = vunpack.c.l.b16 %v2714
      %v3579 = vunpack.c.l.b16 %v2715
      %v3580 = vunpack.c.l.b16 %v2716
      %v3581 = vunpack.c.l.b16 %v2717
      %v3582 = vunpack.c.l.b16 %v2718
      %v3583 = vunpack.c.l.b16 %v2719
      %v3584 = vunpack.c.l.b16 %v2720
      %v3585 = vunpack.c.l.b16 %v2721
      %v3586 = vunpack.c.l.b16 %v2722
      %v3587 = vunpack.c.l.b16 %v2723
      %v3588 = vunpack.c.l.b16 %v2724
      %v3589 = vunpack.c.l.b16 %v2725
      %v3590 = vunpack.c.l.b16 %v2726
      %v3591 = vunpack.c.l.b16 %v2727
      %v3592 = vunpack.c.l.b16 %v2728
      %v3593 = vunpack.c.l.b16 %v2729
      %v3594 = vunpack.c.l.b16 %v2730
      %v3595 = vunpack.c.l.b16 %v2731
      %v3596 = vunpack.c.l.b16 %v2732
      %v3597 = vunpack.c.l.b16 %v2733
      %v3598 = vunpack.c.l.b16 %v2734
      %v3599 = vunpack.c.l.b16 %v2735
      %v3600 = vunpack.c.l.b16 %v2736
      %v3601 = vunpack.c.l.b16 %v2737
      %v3602 = vunpack.c.l.b16 %v2738
      %v3603 = vunpack.c.l.b16 %v2739
      %v3604 = vunpack.c.l.b16 %v2740
      %v3605 = vunpack.c.l.b16 %v2741
      %v3606 = vunpack.c.l.b16 %v2742
      %v3607 = vunpack.c.l.b16 %v2743
      %v3608 = vunpack.c.l.b16 %v2744
      %v3609 = vunpack.c.l.b16 %v2745
      %v3610 = vunpack.c.l.b16 %v2746
      %v3611 = vunpack.c.l.b16 %v2747
      %v3612 = vunpack.c.l.b16 %v2748
      %v3613 = vunpack.c.l.b16 %v2749
      %v3614 = vunpack.c.l.b16 %v2750
      %v3615 = vunpack.c.l.b16 %v2751
      %v3616 = vunpack.c.l.b16 %v2752
      %v3617 = vunpack.c.l.b16 %v2753
      %v3618 = vunpack.c.l.b16 %v2754
      %v3619 = vunpack.c.l.b16 %v2755
      %v3620 = vunpack.c.l.b16 %v2756
      %v3621 = vunpack.c.l.b16 %v2757
      %v3622 = vunpack.c.l.b16 %v2758
      %v3623 = vunpack.c.l.b16 %v2759
      %v3624 = vunpack.c.l.b16 %v2760
      %v3625 = vunpack.c.l.b16 %v2761
      %v3626 = vunpack.c.l.b16 %v2762
      %v3627 = vunpack.c.l.b16 %v2763
      %v3628 = vunpack.c.l.b16 %v2764
      %v3629 = vunpack.c.l.b16 %v2765
      %v3630 = vunpack.c.l.b16 %v2766
      %v3631 = vunpack.c.l.b16 %v2767
      %v3632 = vunpack.c.l.b16 %v2768
      %v3633 = vunpack.c.l.b16 %v2769
      %v3634 = vunpack.c.l.b16 %v2770
      %v3635 = vunpack.c.l.b16 %v2771
      %v3636 = vunpack.c.l.b16 %v2772
      %v3637 = vunpack.c.l.b16 %v2773
      %v3638 = vunpack.c.l.b16 %v2774
      %v3639 = vunpack.c.l.b16 %v2775
      %v3640 = vunpack.c.l.b16 %v2776
      %v3641 = vunpack.c.l.b16 %v2777
      %v3642 = vunpack.c.l.b16 %v2778
      %v3643 = vunpack.c.l.b16 %v2779
      %v3644 = vunpack.c.l.b16 %v2780
      %v3645 = vunpack.c.l.b16 %v2781
      %v3646 = vunpack.c.l.b16 %v2782
      %v3647 = vunpack.c.l.b16 %v2783
      %v3648 = vunpack.c.l.b16 %v2784
      %v3649 = vunpack.c.l.b16 %v2785
      %v3650 = vunpack.c.l.b16 %v2786
      %v3651 = vunpack.c.l.b16 %v2787
      %v3652 = vunpack.c.l.b16 %v2788
      %v3653 = vunpack.c.l.b16 %v2789
      %v3654 = vunpack.c.l.b16 %v2790
      %v3655 = vunpack.c.l.b16 %v2791
      %v3656 = vunpack.c.l.b16 %v2792
      %v3657 = vunpack.c.l.b16 %v2793
      %v3658 = vunpack.c.l.b16 %v2794
      %v3659 = vunpack.c.l.b16 %v2795
      %v3660 = vunpack.c.l.b16 %v2796
      %v3661 = vunpack.c.l.b16 %v2797
      %v3662 = vunpack.c.l.b16 %v2798
      %v3663 = vunpack.c.l.b16 %v2799
      %v3664 = vunpack.c.l.b16 %v2800
      %v3665 = vunpack.c.l.b16 %v2801
      %v3666 = vunpack.c.l.b16 %v2802
      %v3667 = vunpack.c.l.b16 %v2803
      %v3668 = vunpack.c.l.b16 %v2804
      %v3669 = vunpack.c.l.b16 %v2805
      %v3670 = vunpack.c.l.b16 %v2806
      %v3671 = vunpack.c.l.b16 %v2807
      %v3672 = vunpack.c.l.b16 %v2808
      %v3673 = vunpack.c.l.b16 %v2809
      %v3674 = vunpack.c.l.b16 %v2810
      %v3675 = vunpack.c.l.b16 %v2811
      %v3676 = vunpack.c.l.b16 %v2812
      %v3677 = vunpack.c.l.b16 %v2813
      %v3678 = vunpack.c.l.b16 %v2814
      %v3679 = vunpack.c.l.b16 %v2815
      %v3680 = vunpack.c.l.b16 %v2816
      %v3681 = vunpack.c.l.b16 %v2817
      %v3682 = vunpack.c.l.b16 %v2818
      %v3683 = vunpack.c.l.b16 %v2819
      %v3684 = vunpack.c.l.b16 %v2820
      %v3685 = vunpack.c.l.b16 %v2821
      %v3686 = vunpack.c.l.b16 %v2822
      %v3687 = vunpack.c.l.b16 %v2823
      %v3688 = vunpack.c.l.b16 %v2824
      %v3689 = vunpack.c.l.b16 %v2825
      %v3690 = vunpack.c.l.b16 %v2826
      %v3691 = vunpack.c.l.b16 %v2827
      %v3692 = vunpack.c.l.b16 %v2828
      %v3693 = vunpack.c.l.b16 %v2829
      %v3694 = vunpack.c.l.b16 %v2830
      %v3695 = vunpack.c.l.b16 %v2831
      %v3696 = vunpack.c.l.b16 %v2832
      %v3697 = vunpack.c.l.b16 %v2833
      %v3698 = vunpack.c.l.b16 %v2834
      %v3699 = vunpack.c.l.b16 %v2835
      %v3700 = vunpack.c.l.b16 %v2836
      %v3701 = vunpack.c.l.b16 %v2837
      %v3702 = vunpack.c.l.b16 %v2838
      %v3703 = vunpack.c.l.b16 %v2839
      %v3704 = vunpack.c.l.b16 %v2840
      %v3705 = vunpack.c.l.b16 %v2841
      %v3706 = vunpack.c.l.b16 %v2842
      %v3707 = vunpack.c.l.b16 %v2843
      %v3708 = vunpack.c.l.b16 %v2844
      %v3709 = vunpack.c.l.b16 %v2845
      %v3710 = vunpack.c.l.b16 %v2846
      %v3711 = vunpack.c.l.b16 %v2847
      %v3712 = vunpack.c.l.b16 %v2848
      %v3713 = vunpack.c.l.b16 %v2849
      %v3714 = vunpack.c.l.b16 %v2850
      %v3715 = vunpack.c.l.b16 %v2851
      %v3716 = vunpack.c.l.b16 %v2852
      %v3717 = vunpack.c.l.b16 %v2853
      %v3718 = vunpack.c.l.b16 %v2854
      %v3719 = vunpack.c.l.b16 %v2855
      %v3720 = vunpack.c.l.b16 %v2856
      %v3721 = vunpack.c.l.b16 %v2857
      %v3722 = vunpack.c.l.b16 %v2858
      %v3723 = vunpack.c.l.b16 %v2859
      %v3724 = vunpack.c.l.b16 %v2860
      %v3725 = vunpack.c.l.b16 %v2861
      %v3726 = vunpack.c.l.b16 %v2862
      %v3727 = vunpack.c.l.b16 %v2863
      %v3728 = vunpack.c.l.b16 %v2864
      %v3729 = vunpack.c.l.b16 %v2865
      %v3730 = vunpack.c.l.b16 %v2866
      %v3731 = vunpack.c.l.b16 %v2867
      %v3732 = vunpack.c.l.b16 %v2868
      %v3733 = vunpack.c.l.b16 %v2869
      %v3734 = vunpack.c.l.b16 %v2870
      %v3735 = vunpack.c.l.b16 %v2871
      %v3736 = vunpack.c.l.b16 %v2872
      %v3737 = vunpack.c.l.b16 %v2873
      %v3738 = vunpack.c.l.b16 %v2874
      %v3739 = vunpack.c.l.b16 %v2875
      %v3740 = vunpack.c.l.b16 %v2876
      %v3741 = vunpack.c.l.b16 %v2877
      %v3742 = vunpack.c.l.b16 %v2878
      %v3743 = vunpack.c.l.b16 %v2879
      %v3744 = vunpack.c.l.b16 %v2880
      %v3745 = vunpack.c.l.b16 %v2881
      %v3746 = vunpack.c.l.b16 %v2882
      %v3747 = vunpack.c.l.b16 %v2883
      %v3748 = vunpack.c.l.b16 %v2884
      %v3749 = vunpack.c.l.b16 %v2885
      %v3750 = vunpack.c.l.b16 %v2886
      %v3751 = vunpack.c.l.b16 %v2887
      %v3752 = vunpack.c.l.b16 %v2888
      %v3753 = vunpack.c.l.b16 %v2889
      %v3754 = vunpack.c.l.b16 %v2890
      %v3755 = vunpack.c.l.b16 %v2891
      %v3756 = vunpack.c.l.b16 %v2892
      %v3757 = vunpack.c.l.b16 %v2893
      %v3758 = vunpack.c.l.b16 %v2894
      %v3759 = vunpack.c.l.b16 %v2895
      %v3760 = vunpack.c.l.b16 %v2896
      %v3761 = vunpack.c.l.b16 %v2897
      %v3762 = vunpack.c.l.b16 %v2898
      %v3763 = vunpack.c.l.b16 %v2899
      %v3764 = vunpack.c.l.b16 %v2900
      %v3765 = vunpack.c.l.b16 %v2901
      %v3766 = vunpack.c.l.b16 %v2902
      %v3767 = vunpack.c.l.b16 %v2903
      %v3768 = vunpack.c.l.b16 %v2904
      %v3769 = vunpack.c.l.b16 %v2905
      %v3770 = vunpack.c.l.b16 %v2906
      %v3771 = vunpack.c.l.b16 %v2907
      %v3772 = vunpack.c.l.b16 %v2908
      %v3773 = vunpack.c.l.b16 %v2909
      %v3774 = vunpack.c.l.b16 %v2910
      %v3775 = vunpack.c.l.b16 %v2911
      %v3776 = vunpack.c.l.b16 %v2912
      %v3777 = vunpack.c.l.b16 %v2913
      %v3778 = vunpack.c.l.b16 %v2914
      %v3779 = vunpack.c.l.b16 %v2915
      %v3780 = vunpack.c.l.b16 %v2916
      %v3781 = vunpack.c.l.b16 %v2917
      %v3782 = vunpack.c.l.b16 %v2918
      %v3783 = vunpack.c.l.b16 %v2919
      %v3784 = vunpack.c.l.b16 %v2920
      %v3785 = vunpack.c.l.b16 %v2921
      %v3786 = vunpack.c.l.b16 %v2922
      %v3787 = vunpack.c.l.b16 %v2923
      %v3788 = vunpack.c.l.b16 %v2924
      %v3789 = vunpack.c.l.b16 %v2925
      %v3790 = vunpack.c.l.b16 %v2926
      %v3791 = vunpack.c.l.b16 %v2927
      %v3792 = vunpack.c.l.b16 %v2928
      %v3793 = vunpack.c.l.b16 %v2929
      %v3794 = vunpack.c.l.b16 %v2930
      %v3795 = vunpack.c.l.b16 %v2931
      %v3796 = vunpack.c.l.b16 %v2932
      %v3797 = vunpack.c.l.b16 %v2933
      %v3798 = vunpack.c.l.b16 %v2934
      %v3799 = vpack.c.b16 %v3368, %v3367
      %v3800 = vpack.c.b16 %v3370, %v3369
      %v3801 = vpack.c.b16 %v3372, %v3371
      %v3802 = vpack.c.b16 %v3374, %v3373
      %v3803 = vpack.c.b16 %v3376, %v3375
      %v3804 = vpack.c.b16 %v3378, %v3377
      %v3805 = vpack.c.b16 %v3380, %v3379
      %v3806 = vpack.c.b16 %v3382, %v3381
      %v3807 = vpack.c.b16 %v3384, %v3383
      %v3808 = vpack.c.b16 %v3386, %v3385
      %v3809 = vpack.c.b16 %v3388, %v3387
      %v3810 = vpack.c.b16 %v3390, %v3389
      %v3811 = vpack.c.b16 %v3392, %v3391
      %v3812 = vpack.c.b16 %v3394, %v3393
      %v3813 = vpack.c.b16 %v3396, %v3395
      %v3814 = vpack.c.b16 %v3398, %v3397
      %v3815 = vpack.c.b16 %v3400, %v3399
      %v3816 = vpack.c.b16 %v3402, %v3401
      %v3817 = vpack.c.b16 %v3404, %v3403
      %v3818 = vpack.c.b16 %v3406, %v3405
      %v3819 = vpack.c.b16 %v3408, %v3407
      %v3820 = vpack.c.b16 %v3410, %v3409
      %v3821 = vpack.c.b16 %v3412, %v3411
      %v3822 = vpack.c.b16 %v3414, %v3413
      %v3823 = vpack.c.b16 %v3416, %v3415
      %v3824 = vpack.c.b16 %v3418, %v3417
      %v3825 = vpack.c.b16 %v3420, %v3419
      %v3826 = vpack.c.b16 %v3422, %v3421
      %v3827 = vpack.c.b16 %v3424, %v3423
      %v3828 = vpack.c.b16 %v3426, %v3425
      %v3829 = vpack.c.b16 %v3428, %v3427
      %v3830 = vpack.c.b16 %v3430, %v3429
      %v3831 = vpack.c.b16 %v3432, %v3431
      %v3832 = vpack.c.b16 %v3434, %v3433
      %v3833 = vpack.c.b16 %v3436, %v3435
      %v3834 = vpack.c.b16 %v3438, %v3437
      %v3835 = vpack.c.b16 %v3440, %v3439
      %v3836 = vpack.c.b16 %v3442, %v3441
      %v3837 = vpack.c.b16 %v3444, %v3443
      %v3838 = vpack.c.b16 %v3446, %v3445
      %v3839 = vpack.c.b16 %v3448, %v3447
      %v3840 = vpack.c.b16 %v3450, %v3449
      %v3841 = vpack.c.b16 %v3452, %v3451
      %v3842 = vpack.c.b16 %v3454, %v3453
      %v3843 = vpack.c.b16 %v3456, %v3455
      %v3844 = vpack.c.b16 %v3458, %v3457
      %v3845 = vpack.c.b16 %v3460, %v3459
      %v3846 = vpack.c.b16 %v3462, %v3461
      %v3847 = vpack.c.b16 %v3464, %v3463
      %v3848 = vpack.c.b16 %v3466, %v3465
      %v3849 = vpack.c.b16 %v3468, %v3467
      %v3850 = vpack.c.b16 %v3470, %v3469
      %v3851 = vpack.c.b16 %v3472, %v3471
      %v3852 = vpack.c.b16 %v3474, %v3473
      %v3853 = vpack.c.b16 %v3476, %v3475
      %v3854 = vpack.c.b16 %v3478, %v3477
      %v3855 = vpack.c.b16 %v3480, %v3479
      %v3856 = vpack.c.b16 %v3482, %v3481
      %v3857 = vpack.c.b16 %v3484, %v3483
      %v3858 = vpack.c.b16 %v3486, %v3485
      %v3859 = vpack.c.b16 %v3488, %v3487
      %v3860 = vpack.c.b16 %v3490, %v3489
      %v3861 = vpack.c.b16 %v3492, %v3491
      %v3862 = vpack.c.b16 %v3494, %v3493
      %v3863 = vpack.c.b16 %v3496, %v3495
      %v3864 = vpack.c.b16 %v3498, %v3497
      %v3865 = vpack.c.b16 %v3500, %v3499
      %v3866 = vpack.c.b16 %v3502, %v3501
      %v3867 = vpack.c.b16 %v3504, %v3503
      %v3868 = vpack.c.b16 %v3506, %v3505
      %v3869 = vpack.c.b16 %v3508, %v3507
      %v3870 = vpack.c.b16 %v3510, %v3509
      %v3871 = vpack.c.b16 %v3512, %v3511
      %v3872 = vpack.c.b16 %v3514, %v3513
      %v3873 = vpack.c.b16 %v3516, %v3515
      %v3874 = vpack.c.b16 %v3518, %v3517
      %v3875 = vpack.c.b16 %v3520, %v3519
      %v3876 = vpack.c.b16 %v3522, %v3521
      %v3877 = vpack.c.b16 %v3524, %v3523
      %v3878 = vpack.c.b16 %v3526, %v3525
      %v3879 = vpack.c.b16 %v3528, %v3527
      %v3880 = vpack.c.b16 %v3530, %v3529
      %v3881 = vpack.c.b16 %v3532, %v3531
      %v3882 = vpack.c.b16 %v3534, %v3533
      %v3883 = vpack.c.b16 %v3536, %v3535
      %v3884 = vpack.c.b16 %v3538, %v3537
      %v3885 = vpack.c.b16 %v3540, %v3539
      %v3886 = vpack.c.b16 %v3542, %v3541
      %v3887 = vpack.c.b16 %v3544, %v3543
      %v3888 = vpack.c.b16 %v3546, %v3545
      %v3889 = vpack.c.b16 %v3548, %v3547
      %v3890 = vpack.c.b16 %v3550, %v3549
      %v3891 = vpack.c.b16 %v3552, %v3551
      %v3892 = vpack.c.b16 %v3554, %v3553
      %v3893 = vpack.c.b16 %v3556, %v3555
      %v3894 = vpack.c.b16 %v3558, %v3557
      %v3895 = vpack.c.b16 %v3560, %v3559
      %v3896 = vpack.c.b16 %v3562, %v3561
      %v3897 = vpack.c.b16 %v3564, %v3563
      %v3898 = vpack.c.b16 %v3566, %v3565
      %v3899 = vpack.c.b16 %v3568, %v3567
      %v3900 = vpack.c.b16 %v3570, %v3569
      %v3901 = vpack.c.b16 %v3572, %v3571
      %v3902 = vpack.c.b16 %v3574, %v3573
      %v3903 = vpack.c.b16 %v3576, %v3575
      %v3904 = vpack.c.b16 %v3578, %v3577
      %v3905 = vpack.c.b16 %v3580, %v3579
      %v3906 = vpack.c.b16 %v3582, %v3581
      %v3907 = vpack.c.b16 %v3584, %v3583
      %v3908 = vpack.c.b16 %v3586, %v3585
      %v3909 = vpack.c.b16 %v3588, %v3587
      %v3910 = vpack.c.b16 %v3590, %v3589
      %v3911 = vpack.c.b16 %v3592, %v3591
      %v3912 = vpack.c.b16 %v3594, %v3593
      %v3913 = vpack.c.b16 %v3596, %v3595
      %v3914 = vpack.c.b16 %v3598, %v3597
      %v3915 = vpack.c.b16 %v3600, %v3599
      %v3916 = vpack.c.b16 %v3602, %v3601
      %v3917 = vpack.c.b16 %v3604, %v3603
      %v3918 = vpack.c.b16 %v3606, %v3605
      %v3919 = vpack.c.b16 %v3608, %v3607
      %v3920 = vpack.c.b16 %v3610, %v3609
      %v3921 = vpack.c.b16 %v3612, %v3611
      %v3922 = vpack.c.b16 %v3614, %v3613
      %v3923 = vpack.c.b16 %v3616, %v3615
      %v3924 = vpack.c.b16 %v3618, %v3617
      %v3925 = vpack.c.b16 %v3620, %v3619
      %v3926 = vpack.c.b16 %v3622, %v3621
      %v3927 = vpack.c.b16 %v3624, %v3623
      %v3928 = vpack.c.b16 %v3626, %v3625
      %v3929 = vpack.c.b16 %v3628, %v3627
      %v3930 = vpack.c.b16 %v3630, %v3629
      %v3931 = vpack.c.b16 %v3632, %v3631
      %v3932 = vpack.c.b16 %v3634, %v3633
      %v3933 = vpack.c.b16 %v3636, %v3635
      %v3934 = vpack.c.b16 %v3638, %v3637
      %v3935 = vpack.c.b16 %v3640, %v3639
      %v3936 = vpack.c.b16 %v3642, %v3641
      %v3937 = vpack.c.b16 %v3644, %v3643
      %v3938 = vpack.c.b16 %v3646, %v3645
      %v3939 = vpack.c.b16 %v3648, %v3647
      %v3940 = vpack.c.b16 %v3650, %v3649
      %v3941 = vpack.c.b16 %v3652, %v3651
      %v3942 = vpack.c.b16 %v3654, %v3653
      %v3943 = vpack.c.b16 %v3656, %v3655
      %v3944 = vpack.c.b16 %v3658, %v3657
      %v3945 = vpack.c.b16 %v3660, %v3659
      %v3946 = vpack.c.b16 %v3662, %v3661
      %v3947 = vpack.c.b16 %v3664, %v3663
      %v3948 = vpack.c.b16 %v3666, %v3665
      %v3949 = vpack.c.b16 %v3668, %v3667
      %v3950 = vpack.c.b16 %v3670, %v3669
      %v3951 = vpack.c.b16 %v3672, %v3671
      %v3952 = vpack.c.b16 %v3674, %v3673
      %v3953 = vpack.c.b16 %v3676, %v3675
      %v3954 = vpack.c.b16 %v3678, %v3677
      %v3955 = vpack.c.b16 %v3680, %v3679
      %v3956 = vpack.c.b16 %v3682, %v3681
      %v3957 = vpack.c.b16 %v3684, %v3683
      %v3958 = vpack.c.b16 %v3686, %v3685
      %v3959 = vpack.c.b16 %v3688, %v3687
      %v3960 = vpack.c.b16 %v3690, %v3689
      %v3961 = vpack.c.b16 %v3692, %v3691
      %v3962 = vpack.c.b16 %v3694, %v3693
      %v3963 = vpack.c.b16 %v3696, %v3695
      %v3964 = vpack.c.b16 %v3698, %v3697
      %v3965 = vpack.c.b16 %v3700, %v3699
      %v3966 = vpack.c.b16 %v3702, %v3701
      %v3967 = vpack.c.b16 %v3704, %v3703
      %v3968 = vpack.c.b16 %v3706, %v3705
      %v3969 = vpack.c.b16 %v3708, %v3707
      %v3970 = vpack.c.b16 %v3710, %v3709
      %v3971 = vpack.c.b16 %v3712, %v3711
      %v3972 = vpack.c.b16 %v3714, %v3713
      %v3973 = vpack.c.b16 %v3716, %v3715
      %v3974 = vpack.c.b16 %v3718, %v3717
      %v3975 = vpack.c.b16 %v3720, %v3719
      %v3976 = vpack.c.b16 %v3722, %v3721
      %v3977 = vpack.c.b16 %v3724, %v3723
      %v3978 = vpack.c.b16 %v3726, %v3725
      %v3979 = vpack.c.b16 %v3728, %v3727
      %v3980 = vpack.c.b16 %v3730, %v3729
      %v3981 = vpack.c.b16 %v3732, %v3731
      %v3982 = vpack.c.b16 %v3734, %v3733
      %v3983 = vpack.c.b16 %v3736, %v3735
      %v3984 = vpack.c.b16 %v3738, %v3737
      %v3985 = vpack.c.b16 %v3740, %v3739
      %v3986 = vpack.c.b16 %v3742, %v3741
      %v3987 = vpack.c.b16 %v3744, %v3743
      %v3988 = vpack.c.b16 %v3746, %v3745
      %v3989 = vpack.c.b16 %v3748, %v3747
      %v3990 = vpack.c.b16 %v3750, %v3749
      %v3991 = vpack.c.b16 %v3752, %v3751
      %v3992 = vpack.c.b16 %v3754, %v3753
      %v3993 = vpack.c.b16 %v3756, %v3755
      %v3994 = vpack.c.b16 %v3758, %v3757
      %v3995 = vpack.c.b16 %v3760, %v3759
      %v3996 = vpack.c.b16 %v3762, %v3761
      %v3997 = vpack.c.b16 %v3764, %v3763
      %v3998 = vpack.c.b16 %v3766, %v3765
      %v3999 = vpack.c.b16 %v3768, %v3767
      %v4000 = vpack.c.b16 %v3770, %v3769
      %v4001 = vpack.c.b16 %v3772, %v3771
      %v4002 = vpack.c.b16 %v3774, %v3773
      %v4003 = vpack.c.b16 %v3776, %v3775
      %v4004 = vpack.c.b16 %v3778, %v3777
      %v4005 = vpack.c.b16 %v3780, %v3779
      %v4006 = vpack.c.b16 %v3782, %v3781
      %v4007 = vpack.c.b16 %v3784, %v3783
      %v4008 = vpack.c.b16 %v3786, %v3785
      %v4009 = vpack.c.b16 %v3788, %v3787
      %v4010 = vpack.c.b16 %v3790, %v3789
      %v4011 = vpack.c.b16 %v3792, %v3791
      %v4012 = vpack.c.b16 %v3794, %v3793
      %v4013 = vpack.c.b16 %v3796, %v3795
      %v4014 = vpack.c.b16 %v3798, %v3797
      %4231 = vmatpush.bf16.msra.mxu0 %v3806
      %4232 = vmatpush.bf16.msra.mxu0 %v3805
      %4233 = vmatpush.bf16.msra.mxu0 %v3804
      %4234 = vmatpush.bf16.msra.mxu0 %v3803
      %4235 = vmatpush.bf16.msra.mxu0 %v3802
      %4236 = vmatpush.bf16.msra.mxu0 %v3801
      %4237 = vmatpush.bf16.msra.mxu0 %v3800
      %4238 = vmatpush.bf16.msra.mxu0 %v3799
      %4239 = vmatmul.bf16.gmra.mxu0 %v1601
      %v4240 = vpop.f32.mrf.mxu0
      %v4241 = vadd.f32 0.0, %v4240
      %v4242 = vpop.f32.mrf.mxu0
      %v4243 = vadd.f32 0.0, %v4242
      %4244 = vmatmul.bf16.gmra.mxu0 %v1602
      %v4245 = vpop.f32.mrf.mxu0
      %v4246 = vadd.f32 0.0, %v4245
      %v4247 = vpop.f32.mrf.mxu0
      %v4248 = vadd.f32 0.0, %v4247
      %4249 = vmatmul.bf16.gmra.mxu0 %v1603
      %v4250 = vpop.f32.mrf.mxu0
      %v4251 = vadd.f32 0.0, %v4250
      %v4252 = vpop.f32.mrf.mxu0
      %v4253 = vadd.f32 0.0, %v4252
      %4254 = vmatmul.bf16.gmra.mxu0 %v1604
      %v4255 = vpop.f32.mrf.mxu0
      %v4256 = vadd.f32 0.0, %v4255
      %v4257 = vpop.f32.mrf.mxu0
      %v4258 = vadd.f32 0.0, %v4257
      %4259 = vmatmul.bf16.gmra.mxu0 %v1605
      %v4260 = vpop.f32.mrf.mxu0
      %v4261 = vadd.f32 0.0, %v4260
      %v4262 = vpop.f32.mrf.mxu0
      %v4263 = vadd.f32 0.0, %v4262
      %4264 = vmatmul.bf16.gmra.mxu0 %v1606
      %v4265 = vpop.f32.mrf.mxu0
      %v4266 = vadd.f32 0.0, %v4265
      %v4267 = vpop.f32.mrf.mxu0
      %v4268 = vadd.f32 0.0, %v4267
      %4269 = vmatmul.bf16.gmra.mxu0 %v1607
      %v4270 = vpop.f32.mrf.mxu0
      %v4271 = vadd.f32 0.0, %v4270
      %v4272 = vpop.f32.mrf.mxu0
      %v4273 = vadd.f32 0.0, %v4272
      %4274 = vmatmul.bf16.gmra.mxu0 %v1608
      %v4275 = vpop.f32.mrf.mxu0
      %v4276 = vadd.f32 0.0, %v4275
      %v4277 = vpop.f32.mrf.mxu0
      %v4278 = vadd.f32 0.0, %v4277
      %4279 = vdwg.mxu0
      %4280 = vmatpush.bf16.msra.mxu0 %v3814
      %4281 = vmatpush.bf16.msra.mxu0 %v3813
      %4282 = vmatpush.bf16.msra.mxu0 %v3812
      %4283 = vmatpush.bf16.msra.mxu0 %v3811
      %4284 = vmatpush.bf16.msra.mxu0 %v3810
      %4285 = vmatpush.bf16.msra.mxu0 %v3809
      %4286 = vmatpush.bf16.msra.mxu0 %v3808
      %4287 = vmatpush.bf16.msra.mxu0 %v3807
      %4288 = vmatmul.bf16.gmra.mxu0 %v1631
      %v4289 = vpop.f32.mrf.mxu0
      %v4290 = vadd.f32 %v4241, %v4289
      %v4291 = vpop.f32.mrf.mxu0
      %v4292 = vadd.f32 %v4243, %v4291
      %4293 = vmatmul.bf16.gmra.mxu0 %v1639
      %v4294 = vpop.f32.mrf.mxu0
      %v4295 = vadd.f32 %v4246, %v4294
      %v4296 = vpop.f32.mrf.mxu0
      %v4297 = vadd.f32 %v4248, %v4296
      %4298 = vmatmul.bf16.gmra.mxu0 %v1647
      %v4299 = vpop.f32.mrf.mxu0
      %v4300 = vadd.f32 %v4251, %v4299
      %v4301 = vpop.f32.mrf.mxu0
      %v4302 = vadd.f32 %v4253, %v4301
      %4303 = vmatmul.bf16.gmra.mxu0 %v1655
      %v4304 = vpop.f32.mrf.mxu0
      %v4305 = vadd.f32 %v4256, %v4304
      %v4306 = vpop.f32.mrf.mxu0
      %v4307 = vadd.f32 %v4258, %v4306
      %4308 = vmatmul.bf16.gmra.mxu0 %v1663
      %v4309 = vpop.f32.mrf.mxu0
      %v4310 = vadd.f32 %v4261, %v4309
      %v4311 = vpop.f32.mrf.mxu0
      %v4312 = vadd.f32 %v4263, %v4311
      %4313 = vmatmul.bf16.gmra.mxu0 %v1671
      %v4314 = vpop.f32.mrf.mxu0
      %v4315 = vadd.f32 %v4266, %v4314
      %v4316 = vpop.f32.mrf.mxu0
      %v4317 = vadd.f32 %v4268, %v4316
      %4318 = vmatmul.bf16.gmra.mxu0 %v1679
      %v4319 = vpop.f32.mrf.mxu0
      %v4320 = vadd.f32 %v4271, %v4319
      %v4321 = vpop.f32.mrf.mxu0
      %v4322 = vadd.f32 %v4273, %v4321
      %4323 = vmatmul.bf16.gmra.mxu0 %v1687
      %v4324 = vpop.f32.mrf.mxu0
      %v4325 = vadd.f32 %v4276, %v4324
      %v4326 = vpop.f32.mrf.mxu0
      %v4327 = vadd.f32 %v4278, %v4326
      %4328 = vdwg.mxu0
      %4329 = vmatpush.bf16.msra.mxu0 %v3822
      %4330 = vmatpush.bf16.msra.mxu0 %v3821
      %4331 = vmatpush.bf16.msra.mxu0 %v3820
      %4332 = vmatpush.bf16.msra.mxu0 %v3819
      %4333 = vmatpush.bf16.msra.mxu0 %v3818
      %4334 = vmatpush.bf16.msra.mxu0 %v3817
      %4335 = vmatpush.bf16.msra.mxu0 %v3816
      %4336 = vmatpush.bf16.msra.mxu0 %v3815
      %4337 = vmatmul.bf16.gmra.mxu0 %v1699
      %v4338 = vpop.f32.mrf.mxu0
      %v4339 = vadd.f32 %v4290, %v4338
      %v4340 = vpop.f32.mrf.mxu0
      %v4341 = vadd.f32 %v4292, %v4340
      %4342 = vmatmul.bf16.gmra.mxu0 %v1701
      %v4343 = vpop.f32.mrf.mxu0
      %v4344 = vadd.f32 %v4295, %v4343
      %v4345 = vpop.f32.mrf.mxu0
      %v4346 = vadd.f32 %v4297, %v4345
      %4347 = vmatmul.bf16.gmra.mxu0 %v1703
      %v4348 = vpop.f32.mrf.mxu0
      %v4349 = vadd.f32 %v4300, %v4348
      %v4350 = vpop.f32.mrf.mxu0
      %v4351 = vadd.f32 %v4302, %v4350
      %4352 = vmatmul.bf16.gmra.mxu0 %v1705
      %v4353 = vpop.f32.mrf.mxu0
      %v4354 = vadd.f32 %v4305, %v4353
      %v4355 = vpop.f32.mrf.mxu0
      %v4356 = vadd.f32 %v4307, %v4355
      %4357 = vmatmul.bf16.gmra.mxu0 %v1707
      %v4358 = vpop.f32.mrf.mxu0
      %v4359 = vadd.f32 %v4310, %v4358
      %v4360 = vpop.f32.mrf.mxu0
      %v4361 = vadd.f32 %v4312, %v4360
      %4362 = vmatmul.bf16.gmra.mxu0 %v1709
      %v4363 = vpop.f32.mrf.mxu0
      %v4364 = vadd.f32 %v4315, %v4363
      %v4365 = vpop.f32.mrf.mxu0
      %v4366 = vadd.f32 %v4317, %v4365
      %4367 = vmatmul.bf16.gmra.mxu0 %v1711
      %v4368 = vpop.f32.mrf.mxu0
      %v4369 = vadd.f32 %v4320, %v4368
      %v4370 = vpop.f32.mrf.mxu0
      %v4371 = vadd.f32 %v4322, %v4370
      %4372 = vmatmul.bf16.gmra.mxu0 %v1713
      %v4373 = vpop.f32.mrf.mxu0
      %v4374 = vadd.f32 %v4325, %v4373
      %v4375 = vpop.f32.mrf.mxu0
      %v4376 = vadd.f32 %v4327, %v4375
      %4377 = vdwg.mxu0
      %4378 = vmatpush.bf16.msra.mxu0 %v3830
      %4379 = vmatpush.bf16.msra.mxu0 %v3829
      %4380 = vmatpush.bf16.msra.mxu0 %v3828
      %4381 = vmatpush.bf16.msra.mxu0 %v3827
      %4382 = vmatpush.bf16.msra.mxu0 %v3826
      %4383 = vmatpush.bf16.msra.mxu0 %v3825
      %4384 = vmatpush.bf16.msra.mxu0 %v3824
      %4385 = vmatpush.bf16.msra.mxu0 %v3823
      %4386 = vmatmul.bf16.gmra.mxu0 %v1602
      %v4387 = vpop.f32.mrf.mxu0
      %v4388 = vadd.f32 %v4339, %v4387
      %v4389 = vpop.f32.mrf.mxu0
      %v4390 = vadd.f32 %v4341, %v4389
      %4391 = vmatmul.bf16.gmra.mxu0 %v1603
      %v4392 = vpop.f32.mrf.mxu0
      %v4393 = vadd.f32 %v4344, %v4392
      %v4394 = vpop.f32.mrf.mxu0
      %v4395 = vadd.f32 %v4346, %v4394
      %4396 = vmatmul.bf16.gmra.mxu0 %v1604
      %v4397 = vpop.f32.mrf.mxu0
      %v4398 = vadd.f32 %v4349, %v4397
      %v4399 = vpop.f32.mrf.mxu0
      %v4400 = vadd.f32 %v4351, %v4399
      %4401 = vmatmul.bf16.gmra.mxu0 %v1605
      %v4402 = vpop.f32.mrf.mxu0
      %v4403 = vadd.f32 %v4354, %v4402
      %v4404 = vpop.f32.mrf.mxu0
      %v4405 = vadd.f32 %v4356, %v4404
      %4406 = vmatmul.bf16.gmra.mxu0 %v1606
      %v4407 = vpop.f32.mrf.mxu0
      %v4408 = vadd.f32 %v4359, %v4407
      %v4409 = vpop.f32.mrf.mxu0
      %v4410 = vadd.f32 %v4361, %v4409
      %4411 = vmatmul.bf16.gmra.mxu0 %v1607
      %v4412 = vpop.f32.mrf.mxu0
      %v4413 = vadd.f32 %v4364, %v4412
      %v4414 = vpop.f32.mrf.mxu0
      %v4415 = vadd.f32 %v4366, %v4414
      %4416 = vmatmul.bf16.gmra.mxu0 %v1608
      %v4417 = vpop.f32.mrf.mxu0
      %v4418 = vadd.f32 %v4369, %v4417
      %v4419 = vpop.f32.mrf.mxu0
      %v4420 = vadd.f32 %v4371, %v4419
      %4421 = vmatmul.bf16.gmra.mxu0 %v1724
      %v4422 = vpop.f32.mrf.mxu0
      %v4423 = vadd.f32 %v4374, %v4422
      %v4424 = vpop.f32.mrf.mxu0
      %v4425 = vadd.f32 %v4376, %v4424
      %4426 = vdwg.mxu0
      %4427 = vmatpush.bf16.msra.mxu0 %v3838
      %4428 = vmatpush.bf16.msra.mxu0 %v3837
      %4429 = vmatpush.bf16.msra.mxu0 %v3836
      %4430 = vmatpush.bf16.msra.mxu0 %v3835
      %4431 = vmatpush.bf16.msra.mxu0 %v3834
      %4432 = vmatpush.bf16.msra.mxu0 %v3833
      %4433 = vmatpush.bf16.msra.mxu0 %v3832
      %4434 = vmatpush.bf16.msra.mxu0 %v3831
      %4435 = vmatmul.bf16.gmra.mxu0 %v1639
      %v4436 = vpop.f32.mrf.mxu0
      %v4437 = vadd.f32 %v4388, %v4436
      %v4438 = vpop.f32.mrf.mxu0
      %v4439 = vadd.f32 %v4390, %v4438
      %4440 = vmatmul.bf16.gmra.mxu0 %v1647
      %v4441 = vpop.f32.mrf.mxu0
      %v4442 = vadd.f32 %v4393, %v4441
      %v4443 = vpop.f32.mrf.mxu0
      %v4444 = vadd.f32 %v4395, %v4443
      %4445 = vmatmul.bf16.gmra.mxu0 %v1655
      %v4446 = vpop.f32.mrf.mxu0
      %v4447 = vadd.f32 %v4398, %v4446
      %v4448 = vpop.f32.mrf.mxu0
      %v4449 = vadd.f32 %v4400, %v4448
      %4450 = vmatmul.bf16.gmra.mxu0 %v1663
      %v4451 = vpop.f32.mrf.mxu0
      %v4452 = vadd.f32 %v4403, %v4451
      %v4453 = vpop.f32.mrf.mxu0
      %v4454 = vadd.f32 %v4405, %v4453
      %4455 = vmatmul.bf16.gmra.mxu0 %v1671
      %v4456 = vpop.f32.mrf.mxu0
      %v4457 = vadd.f32 %v4408, %v4456
      %v4458 = vpop.f32.mrf.mxu0
      %v4459 = vadd.f32 %v4410, %v4458
      %4460 = vmatmul.bf16.gmra.mxu0 %v1679
      %v4461 = vpop.f32.mrf.mxu0
      %v4462 = vadd.f32 %v4413, %v4461
      %v4463 = vpop.f32.mrf.mxu0
      %v4464 = vadd.f32 %v4415, %v4463
      %4465 = vmatmul.bf16.gmra.mxu0 %v1733
      %v4466 = vpop.f32.mrf.mxu0
      %v4467 = vadd.f32 %v4418, %v4466
      %v4468 = vpop.f32.mrf.mxu0
      %v4469 = vadd.f32 %v4420, %v4468
      %4470 = vmatmul.bf16.gmra.mxu0 %v1741
      %v4471 = vpop.f32.mrf.mxu0
      %v4472 = vadd.f32 %v4423, %v4471
      %v4473 = vpop.f32.mrf.mxu0
      %v4474 = vadd.f32 %v4425, %v4473
      %4475 = vdwg.mxu0
      %4476 = vmatpush.bf16.msra.mxu0 %v3846
      %4477 = vmatpush.bf16.msra.mxu0 %v3845
      %4478 = vmatpush.bf16.msra.mxu0 %v3844
      %4479 = vmatpush.bf16.msra.mxu0 %v3843
      %4480 = vmatpush.bf16.msra.mxu0 %v3842
      %4481 = vmatpush.bf16.msra.mxu0 %v3841
      %4482 = vmatpush.bf16.msra.mxu0 %v3840
      %4483 = vmatpush.bf16.msra.mxu0 %v3839
      %4484 = vmatmul.bf16.gmra.mxu0 %v1701
      %v4485 = vpop.f32.mrf.mxu0
      %v4486 = vadd.f32 %v4437, %v4485
      %v4487 = vpop.f32.mrf.mxu0
      %v4488 = vadd.f32 %v4439, %v4487
      %4489 = vmatmul.bf16.gmra.mxu0 %v1703
      %v4490 = vpop.f32.mrf.mxu0
      %v4491 = vadd.f32 %v4442, %v4490
      %v4492 = vpop.f32.mrf.mxu0
      %v4493 = vadd.f32 %v4444, %v4492
      %4494 = vmatmul.bf16.gmra.mxu0 %v1705
      %v4495 = vpop.f32.mrf.mxu0
      %v4496 = vadd.f32 %v4447, %v4495
      %v4497 = vpop.f32.mrf.mxu0
      %v4498 = vadd.f32 %v4449, %v4497
      %4499 = vmatmul.bf16.gmra.mxu0 %v1707
      %v4500 = vpop.f32.mrf.mxu0
      %v4501 = vadd.f32 %v4452, %v4500
      %v4502 = vpop.f32.mrf.mxu0
      %v4503 = vadd.f32 %v4454, %v4502
      %4504 = vmatmul.bf16.gmra.mxu0 %v1709
      %v4505 = vpop.f32.mrf.mxu0
      %v4506 = vadd.f32 %v4457, %v4505
      %v4507 = vpop.f32.mrf.mxu0
      %v4508 = vadd.f32 %v4459, %v4507
      %4509 = vmatmul.bf16.gmra.mxu0 %v1711
      %v4510 = vpop.f32.mrf.mxu0
      %v4511 = vadd.f32 %v4462, %v4510
      %v4512 = vpop.f32.mrf.mxu0
      %v4513 = vadd.f32 %v4464, %v4512
      %4514 = vmatmul.bf16.gmra.mxu0 %v1745
      %v4515 = vpop.f32.mrf.mxu0
      %v4516 = vadd.f32 %v4467, %v4515
      %v4517 = vpop.f32.mrf.mxu0
      %v4518 = vadd.f32 %v4469, %v4517
      %4519 = vmatmul.bf16.gmra.mxu0 %v1747
      %v4520 = vpop.f32.mrf.mxu0
      %v4521 = vadd.f32 %v4472, %v4520
      %v4522 = vpop.f32.mrf.mxu0
      %v4523 = vadd.f32 %v4474, %v4522
      %4524 = vdwg.mxu0
      %4525 = vmatpush.bf16.msra.mxu0 %v3854
      %4526 = vmatpush.bf16.msra.mxu0 %v3853
      %4527 = vmatpush.bf16.msra.mxu0 %v3852
      %4528 = vmatpush.bf16.msra.mxu0 %v3851
      %4529 = vmatpush.bf16.msra.mxu0 %v3850
      %4530 = vmatpush.bf16.msra.mxu0 %v3849
      %4531 = vmatpush.bf16.msra.mxu0 %v3848
      %4532 = vmatpush.bf16.msra.mxu0 %v3847
      %4533 = vmatmul.bf16.gmra.mxu0 %v1603
      %v4534 = vpop.f32.mrf.mxu0
      %v4535 = vadd.f32 %v4486, %v4534
      %v4536 = vpop.f32.mrf.mxu0
      %v4537 = vadd.f32 %v4488, %v4536
      %4538 = vmatmul.bf16.gmra.mxu0 %v1604
      %v4539 = vpop.f32.mrf.mxu0
      %v4540 = vadd.f32 %v4491, %v4539
      %v4541 = vpop.f32.mrf.mxu0
      %v4542 = vadd.f32 %v4493, %v4541
      %4543 = vmatmul.bf16.gmra.mxu0 %v1605
      %v4544 = vpop.f32.mrf.mxu0
      %v4545 = vadd.f32 %v4496, %v4544
      %v4546 = vpop.f32.mrf.mxu0
      %v4547 = vadd.f32 %v4498, %v4546
      %4548 = vmatmul.bf16.gmra.mxu0 %v1606
      %v4549 = vpop.f32.mrf.mxu0
      %v4550 = vadd.f32 %v4501, %v4549
      %v4551 = vpop.f32.mrf.mxu0
      %v4552 = vadd.f32 %v4503, %v4551
      %4553 = vmatmul.bf16.gmra.mxu0 %v1607
      %v4554 = vpop.f32.mrf.mxu0
      %v4555 = vadd.f32 %v4506, %v4554
      %v4556 = vpop.f32.mrf.mxu0
      %v4557 = vadd.f32 %v4508, %v4556
      %4558 = vmatmul.bf16.gmra.mxu0 %v1608
      %v4559 = vpop.f32.mrf.mxu0
      %v4560 = vadd.f32 %v4511, %v4559
      %v4561 = vpop.f32.mrf.mxu0
      %v4562 = vadd.f32 %v4513, %v4561
      %4563 = vmatmul.bf16.gmra.mxu0 %v1724
      %v4564 = vpop.f32.mrf.mxu0
      %v4565 = vadd.f32 %v4516, %v4564
      %v4566 = vpop.f32.mrf.mxu0
      %v4567 = vadd.f32 %v4518, %v4566
      %4568 = vmatmul.bf16.gmra.mxu0 %v1752
      %v4569 = vpop.f32.mrf.mxu0
      %v4570 = vadd.f32 %v4521, %v4569
      %v4571 = vpop.f32.mrf.mxu0
      %v4572 = vadd.f32 %v4523, %v4571
      %4573 = vdwg.mxu0
      %4574 = vmatpush.bf16.msra.mxu0 %v3862
      %4575 = vmatpush.bf16.msra.mxu0 %v3861
      %4576 = vmatpush.bf16.msra.mxu0 %v3860
      %4577 = vmatpush.bf16.msra.mxu0 %v3859
      %4578 = vmatpush.bf16.msra.mxu0 %v3858
      %4579 = vmatpush.bf16.msra.mxu0 %v3857
      %4580 = vmatpush.bf16.msra.mxu0 %v3856
      %4581 = vmatpush.bf16.msra.mxu0 %v3855
      %4582 = vmatmul.bf16.gmra.mxu0 %v1647
      %v4583 = vpop.f32.mrf.mxu0
      %v4584 = vadd.f32 %v4535, %v4583
      %v4585 = vpop.f32.mrf.mxu0
      %v4586 = vadd.f32 %v4537, %v4585
      %4587 = vmatmul.bf16.gmra.mxu0 %v1655
      %v4588 = vpop.f32.mrf.mxu0
      %v4589 = vadd.f32 %v4540, %v4588
      %v4590 = vpop.f32.mrf.mxu0
      %v4591 = vadd.f32 %v4542, %v4590
      %4592 = vmatmul.bf16.gmra.mxu0 %v1663
      %v4593 = vpop.f32.mrf.mxu0
      %v4594 = vadd.f32 %v4545, %v4593
      %v4595 = vpop.f32.mrf.mxu0
      %v4596 = vadd.f32 %v4547, %v4595
      %4597 = vmatmul.bf16.gmra.mxu0 %v1671
      %v4598 = vpop.f32.mrf.mxu0
      %v4599 = vadd.f32 %v4550, %v4598
      %v4600 = vpop.f32.mrf.mxu0
      %v4601 = vadd.f32 %v4552, %v4600
      %4602 = vmatmul.bf16.gmra.mxu0 %v1679
      %v4603 = vpop.f32.mrf.mxu0
      %v4604 = vadd.f32 %v4555, %v4603
      %v4605 = vpop.f32.mrf.mxu0
      %v4606 = vadd.f32 %v4557, %v4605
      %4607 = vmatmul.bf16.gmra.mxu0 %v1733
      %v4608 = vpop.f32.mrf.mxu0
      %v4609 = vadd.f32 %v4560, %v4608
      %v4610 = vpop.f32.mrf.mxu0
      %v4611 = vadd.f32 %v4562, %v4610
      %4612 = vmatmul.bf16.gmra.mxu0 %v1761
      %v4613 = vpop.f32.mrf.mxu0
      %v4614 = vadd.f32 %v4565, %v4613
      %v4615 = vpop.f32.mrf.mxu0
      %v4616 = vadd.f32 %v4567, %v4615
      %4617 = vmatmul.bf16.gmra.mxu0 %v1769
      %v4618 = vpop.f32.mrf.mxu0
      %v4619 = vadd.f32 %v4570, %v4618
      %v4620 = vpop.f32.mrf.mxu0
      %v4621 = vadd.f32 %v4572, %v4620
      %4622 = vdwg.mxu0
      %4623 = vmatpush.bf16.msra.mxu0 %v3870
      %4624 = vmatpush.bf16.msra.mxu0 %v3869
      %4625 = vmatpush.bf16.msra.mxu0 %v3868
      %4626 = vmatpush.bf16.msra.mxu0 %v3867
      %4627 = vmatpush.bf16.msra.mxu0 %v3866
      %4628 = vmatpush.bf16.msra.mxu0 %v3865
      %4629 = vmatpush.bf16.msra.mxu0 %v3864
      %4630 = vmatpush.bf16.msra.mxu0 %v3863
      %4631 = vmatmul.bf16.gmra.mxu0 %v1703
      %v4632 = vpop.f32.mrf.mxu0
      %v4633 = vadd.f32 %v4584, %v4632
      %v4634 = vpop.f32.mrf.mxu0
      %v4635 = vadd.f32 %v4586, %v4634
      %4636 = vmatmul.bf16.gmra.mxu0 %v1705
      %v4637 = vpop.f32.mrf.mxu0
      %v4638 = vadd.f32 %v4589, %v4637
      %v4639 = vpop.f32.mrf.mxu0
      %v4640 = vadd.f32 %v4591, %v4639
      %4641 = vmatmul.bf16.gmra.mxu0 %v1707
      %v4642 = vpop.f32.mrf.mxu0
      %v4643 = vadd.f32 %v4594, %v4642
      %v4644 = vpop.f32.mrf.mxu0
      %v4645 = vadd.f32 %v4596, %v4644
      %4646 = vmatmul.bf16.gmra.mxu0 %v1709
      %v4647 = vpop.f32.mrf.mxu0
      %v4648 = vadd.f32 %v4599, %v4647
      %v4649 = vpop.f32.mrf.mxu0
      %v4650 = vadd.f32 %v4601, %v4649
      %4651 = vmatmul.bf16.gmra.mxu0 %v1711
      %v4652 = vpop.f32.mrf.mxu0
      %v4653 = vadd.f32 %v4604, %v4652
      %v4654 = vpop.f32.mrf.mxu0
      %v4655 = vadd.f32 %v4606, %v4654
      %4656 = vmatmul.bf16.gmra.mxu0 %v1745
      %v4657 = vpop.f32.mrf.mxu0
      %v4658 = vadd.f32 %v4609, %v4657
      %v4659 = vpop.f32.mrf.mxu0
      %v4660 = vadd.f32 %v4611, %v4659
      %4661 = vmatmul.bf16.gmra.mxu0 %v1773
      %v4662 = vpop.f32.mrf.mxu0
      %v4663 = vadd.f32 %v4614, %v4662
      %v4664 = vpop.f32.mrf.mxu0
      %v4665 = vadd.f32 %v4616, %v4664
      %4666 = vmatmul.bf16.gmra.mxu0 %v1775
      %v4667 = vpop.f32.mrf.mxu0
      %v4668 = vadd.f32 %v4619, %v4667
      %v4669 = vpop.f32.mrf.mxu0
      %v4670 = vadd.f32 %v4621, %v4669
      %4671 = vdwg.mxu0
      %4672 = vmatpush.bf16.msra.mxu0 %v3878
      %4673 = vmatpush.bf16.msra.mxu0 %v3877
      %4674 = vmatpush.bf16.msra.mxu0 %v3876
      %4675 = vmatpush.bf16.msra.mxu0 %v3875
      %4676 = vmatpush.bf16.msra.mxu0 %v3874
      %4677 = vmatpush.bf16.msra.mxu0 %v3873
      %4678 = vmatpush.bf16.msra.mxu0 %v3872
      %4679 = vmatpush.bf16.msra.mxu0 %v3871
      %4680 = vmatmul.bf16.gmra.mxu0 %v1810
      %v4681 = vpop.f32.mrf.mxu0
      %v4682 = vadd.f32 %v4633, %v4681
      %v4683 = vpop.f32.mrf.mxu0
      %v4684 = vadd.f32 %v4635, %v4683
      %4685 = vmatmul.bf16.gmra.mxu0 %v1811
      %v4686 = vpop.f32.mrf.mxu0
      %v4687 = vadd.f32 %v4638, %v4686
      %v4688 = vpop.f32.mrf.mxu0
      %v4689 = vadd.f32 %v4640, %v4688
      %4690 = vmatmul.bf16.gmra.mxu0 %v1812
      %v4691 = vpop.f32.mrf.mxu0
      %v4692 = vadd.f32 %v4643, %v4691
      %v4693 = vpop.f32.mrf.mxu0
      %v4694 = vadd.f32 %v4645, %v4693
      %4695 = vmatmul.bf16.gmra.mxu0 %v1813
      %v4696 = vpop.f32.mrf.mxu0
      %v4697 = vadd.f32 %v4648, %v4696
      %v4698 = vpop.f32.mrf.mxu0
      %v4699 = vadd.f32 %v4650, %v4698
      %4700 = vmatmul.bf16.gmra.mxu0 %v1814
      %v4701 = vpop.f32.mrf.mxu0
      %v4702 = vadd.f32 %v4653, %v4701
      %v4703 = vpop.f32.mrf.mxu0
      %v4704 = vadd.f32 %v4655, %v4703
      %4705 = vmatmul.bf16.gmra.mxu0 %v1815
      %v4706 = vpop.f32.mrf.mxu0
      %v4707 = vadd.f32 %v4658, %v4706
      %v4708 = vpop.f32.mrf.mxu0
      %v4709 = vadd.f32 %v4660, %v4708
      %4710 = vmatmul.bf16.gmra.mxu0 %v1816
      %v4711 = vpop.f32.mrf.mxu0
      %v4712 = vadd.f32 %v4663, %v4711
      %v4713 = vpop.f32.mrf.mxu0
      %v4714 = vadd.f32 %v4665, %v4713
      %4715 = vmatmul.bf16.gmra.mxu0 %v1817
      %v4716 = vpop.f32.mrf.mxu0
      %v4717 = vadd.f32 %v4668, %v4716
      %v4718 = vpop.f32.mrf.mxu0
      %v4719 = vadd.f32 %v4670, %v4718
      %4720 = vdwg.mxu0
      %4721 = vmatpush.bf16.msra.mxu0 %v3886
      %4722 = vmatpush.bf16.msra.mxu0 %v3885
      %4723 = vmatpush.bf16.msra.mxu0 %v3884
      %4724 = vmatpush.bf16.msra.mxu0 %v3883
      %4725 = vmatpush.bf16.msra.mxu0 %v3882
      %4726 = vmatpush.bf16.msra.mxu0 %v3881
      %4727 = vmatpush.bf16.msra.mxu0 %v3880
      %4728 = vmatpush.bf16.msra.mxu0 %v3879
      %4729 = vmatmul.bf16.gmra.mxu0 %v1840
      %v4730 = vpop.f32.mrf.mxu0
      %v4731 = vadd.f32 %v4682, %v4730
      %v4732 = vpop.f32.mrf.mxu0
      %v4733 = vadd.f32 %v4684, %v4732
      %4734 = vmatmul.bf16.gmra.mxu0 %v1848
      %v4735 = vpop.f32.mrf.mxu0
      %v4736 = vadd.f32 %v4687, %v4735
      %v4737 = vpop.f32.mrf.mxu0
      %v4738 = vadd.f32 %v4689, %v4737
      %4739 = vmatmul.bf16.gmra.mxu0 %v1856
      %v4740 = vpop.f32.mrf.mxu0
      %v4741 = vadd.f32 %v4692, %v4740
      %v4742 = vpop.f32.mrf.mxu0
      %v4743 = vadd.f32 %v4694, %v4742
      %4744 = vmatmul.bf16.gmra.mxu0 %v1864
      %v4745 = vpop.f32.mrf.mxu0
      %v4746 = vadd.f32 %v4697, %v4745
      %v4747 = vpop.f32.mrf.mxu0
      %v4748 = vadd.f32 %v4699, %v4747
      %4749 = vmatmul.bf16.gmra.mxu0 %v1872
      %v4750 = vpop.f32.mrf.mxu0
      %v4751 = vadd.f32 %v4702, %v4750
      %v4752 = vpop.f32.mrf.mxu0
      %v4753 = vadd.f32 %v4704, %v4752
      %4754 = vmatmul.bf16.gmra.mxu0 %v1880
      %v4755 = vpop.f32.mrf.mxu0
      %v4756 = vadd.f32 %v4707, %v4755
      %v4757 = vpop.f32.mrf.mxu0
      %v4758 = vadd.f32 %v4709, %v4757
      %4759 = vmatmul.bf16.gmra.mxu0 %v1888
      %v4760 = vpop.f32.mrf.mxu0
      %v4761 = vadd.f32 %v4712, %v4760
      %v4762 = vpop.f32.mrf.mxu0
      %v4763 = vadd.f32 %v4714, %v4762
      %4764 = vmatmul.bf16.gmra.mxu0 %v1896
      %v4765 = vpop.f32.mrf.mxu0
      %v4766 = vadd.f32 %v4717, %v4765
      %v4767 = vpop.f32.mrf.mxu0
      %v4768 = vadd.f32 %v4719, %v4767
      %4769 = vdwg.mxu0
      %4770 = vmatpush.bf16.msra.mxu0 %v3894
      %4771 = vmatpush.bf16.msra.mxu0 %v3893
      %4772 = vmatpush.bf16.msra.mxu0 %v3892
      %4773 = vmatpush.bf16.msra.mxu0 %v3891
      %4774 = vmatpush.bf16.msra.mxu0 %v3890
      %4775 = vmatpush.bf16.msra.mxu0 %v3889
      %4776 = vmatpush.bf16.msra.mxu0 %v3888
      %4777 = vmatpush.bf16.msra.mxu0 %v3887
      %4778 = vmatmul.bf16.gmra.mxu0 %v1907
      %v4779 = vpop.f32.mrf.mxu0
      %v4780 = vadd.f32 %v4731, %v4779
      %v4781 = vpop.f32.mrf.mxu0
      %v4782 = vadd.f32 %v4733, %v4781
      %4783 = vmatmul.bf16.gmra.mxu0 %v1909
      %v4784 = vpop.f32.mrf.mxu0
      %v4785 = vadd.f32 %v4736, %v4784
      %v4786 = vpop.f32.mrf.mxu0
      %v4787 = vadd.f32 %v4738, %v4786
      %4788 = vmatmul.bf16.gmra.mxu0 %v1911
      %v4789 = vpop.f32.mrf.mxu0
      %v4790 = vadd.f32 %v4741, %v4789
      %v4791 = vpop.f32.mrf.mxu0
      %v4792 = vadd.f32 %v4743, %v4791
      %4793 = vmatmul.bf16.gmra.mxu0 %v1913
      %v4794 = vpop.f32.mrf.mxu0
      %v4795 = vadd.f32 %v4746, %v4794
      %v4796 = vpop.f32.mrf.mxu0
      %v4797 = vadd.f32 %v4748, %v4796
      %4798 = vmatmul.bf16.gmra.mxu0 %v1915
      %v4799 = vpop.f32.mrf.mxu0
      %v4800 = vadd.f32 %v4751, %v4799
      %v4801 = vpop.f32.mrf.mxu0
      %v4802 = vadd.f32 %v4753, %v4801
      %4803 = vmatmul.bf16.gmra.mxu0 %v1917
      %v4804 = vpop.f32.mrf.mxu0
      %v4805 = vadd.f32 %v4756, %v4804
      %v4806 = vpop.f32.mrf.mxu0
      %v4807 = vadd.f32 %v4758, %v4806
      %4808 = vmatmul.bf16.gmra.mxu0 %v1919
      %v4809 = vpop.f32.mrf.mxu0
      %v4810 = vadd.f32 %v4761, %v4809
      %v4811 = vpop.f32.mrf.mxu0
      %v4812 = vadd.f32 %v4763, %v4811
      %4813 = vmatmul.bf16.gmra.mxu0 %v1921
      %v4814 = vpop.f32.mrf.mxu0
      %v4815 = vadd.f32 %v4766, %v4814
      %v4816 = vpop.f32.mrf.mxu0
      %v4817 = vadd.f32 %v4768, %v4816
      %4818 = vdwg.mxu0
      %4819 = vmatpush.bf16.msra.mxu0 %v3902
      %4820 = vmatpush.bf16.msra.mxu0 %v3901
      %4821 = vmatpush.bf16.msra.mxu0 %v3900
      %4822 = vmatpush.bf16.msra.mxu0 %v3899
      %4823 = vmatpush.bf16.msra.mxu0 %v3898
      %4824 = vmatpush.bf16.msra.mxu0 %v3897
      %4825 = vmatpush.bf16.msra.mxu0 %v3896
      %4826 = vmatpush.bf16.msra.mxu0 %v3895
      %4827 = vmatmul.bf16.gmra.mxu0 %v1811
      %v4828 = vpop.f32.mrf.mxu0
      %v4829 = vadd.f32 %v4780, %v4828
      %v4830 = vpop.f32.mrf.mxu0
      %v4831 = vadd.f32 %v4782, %v4830
      %4832 = vmatmul.bf16.gmra.mxu0 %v1812
      %v4833 = vpop.f32.mrf.mxu0
      %v4834 = vadd.f32 %v4785, %v4833
      %v4835 = vpop.f32.mrf.mxu0
      %v4836 = vadd.f32 %v4787, %v4835
      %4837 = vmatmul.bf16.gmra.mxu0 %v1813
      %v4838 = vpop.f32.mrf.mxu0
      %v4839 = vadd.f32 %v4790, %v4838
      %v4840 = vpop.f32.mrf.mxu0
      %v4841 = vadd.f32 %v4792, %v4840
      %4842 = vmatmul.bf16.gmra.mxu0 %v1814
      %v4843 = vpop.f32.mrf.mxu0
      %v4844 = vadd.f32 %v4795, %v4843
      %v4845 = vpop.f32.mrf.mxu0
      %v4846 = vadd.f32 %v4797, %v4845
      %4847 = vmatmul.bf16.gmra.mxu0 %v1815
      %v4848 = vpop.f32.mrf.mxu0
      %v4849 = vadd.f32 %v4800, %v4848
      %v4850 = vpop.f32.mrf.mxu0
      %v4851 = vadd.f32 %v4802, %v4850
      %4852 = vmatmul.bf16.gmra.mxu0 %v1816
      %v4853 = vpop.f32.mrf.mxu0
      %v4854 = vadd.f32 %v4805, %v4853
      %v4855 = vpop.f32.mrf.mxu0
      %v4856 = vadd.f32 %v4807, %v4855
      %4857 = vmatmul.bf16.gmra.mxu0 %v1817
      %v4858 = vpop.f32.mrf.mxu0
      %v4859 = vadd.f32 %v4810, %v4858
      %v4860 = vpop.f32.mrf.mxu0
      %v4861 = vadd.f32 %v4812, %v4860
      %4862 = vmatmul.bf16.gmra.mxu0 %v1932
      %v4863 = vpop.f32.mrf.mxu0
      %v4864 = vadd.f32 %v4815, %v4863
      %v4865 = vpop.f32.mrf.mxu0
      %v4866 = vadd.f32 %v4817, %v4865
      %4867 = vdwg.mxu0
      %4868 = vmatpush.bf16.msra.mxu0 %v3910
      %4869 = vmatpush.bf16.msra.mxu0 %v3909
      %4870 = vmatpush.bf16.msra.mxu0 %v3908
      %4871 = vmatpush.bf16.msra.mxu0 %v3907
      %4872 = vmatpush.bf16.msra.mxu0 %v3906
      %4873 = vmatpush.bf16.msra.mxu0 %v3905
      %4874 = vmatpush.bf16.msra.mxu0 %v3904
      %4875 = vmatpush.bf16.msra.mxu0 %v3903
      %4876 = vmatmul.bf16.gmra.mxu0 %v1848
      %v4877 = vpop.f32.mrf.mxu0
      %v4878 = vadd.f32 %v4829, %v4877
      %v4879 = vpop.f32.mrf.mxu0
      %v4880 = vadd.f32 %v4831, %v4879
      %4881 = vmatmul.bf16.gmra.mxu0 %v1856
      %v4882 = vpop.f32.mrf.mxu0
      %v4883 = vadd.f32 %v4834, %v4882
      %v4884 = vpop.f32.mrf.mxu0
      %v4885 = vadd.f32 %v4836, %v4884
      %4886 = vmatmul.bf16.gmra.mxu0 %v1864
      %v4887 = vpop.f32.mrf.mxu0
      %v4888 = vadd.f32 %v4839, %v4887
      %v4889 = vpop.f32.mrf.mxu0
      %v4890 = vadd.f32 %v4841, %v4889
      %4891 = vmatmul.bf16.gmra.mxu0 %v1872
      %v4892 = vpop.f32.mrf.mxu0
      %v4893 = vadd.f32 %v4844, %v4892
      %v4894 = vpop.f32.mrf.mxu0
      %v4895 = vadd.f32 %v4846, %v4894
      %4896 = vmatmul.bf16.gmra.mxu0 %v1880
      %v4897 = vpop.f32.mrf.mxu0
      %v4898 = vadd.f32 %v4849, %v4897
      %v4899 = vpop.f32.mrf.mxu0
      %v4900 = vadd.f32 %v4851, %v4899
      %4901 = vmatmul.bf16.gmra.mxu0 %v1888
      %v4902 = vpop.f32.mrf.mxu0
      %v4903 = vadd.f32 %v4854, %v4902
      %v4904 = vpop.f32.mrf.mxu0
      %v4905 = vadd.f32 %v4856, %v4904
      %4906 = vmatmul.bf16.gmra.mxu0 %v1941
      %v4907 = vpop.f32.mrf.mxu0
      %v4908 = vadd.f32 %v4859, %v4907
      %v4909 = vpop.f32.mrf.mxu0
      %v4910 = vadd.f32 %v4861, %v4909
      %4911 = vmatmul.bf16.gmra.mxu0 %v1949
      %v4912 = vpop.f32.mrf.mxu0
      %v4913 = vadd.f32 %v4864, %v4912
      %v4914 = vpop.f32.mrf.mxu0
      %v4915 = vadd.f32 %v4866, %v4914
      %4916 = vdwg.mxu0
      %4917 = vmatpush.bf16.msra.mxu0 %v3918
      %4918 = vmatpush.bf16.msra.mxu0 %v3917
      %4919 = vmatpush.bf16.msra.mxu0 %v3916
      %4920 = vmatpush.bf16.msra.mxu0 %v3915
      %4921 = vmatpush.bf16.msra.mxu0 %v3914
      %4922 = vmatpush.bf16.msra.mxu0 %v3913
      %4923 = vmatpush.bf16.msra.mxu0 %v3912
      %4924 = vmatpush.bf16.msra.mxu0 %v3911
      %4925 = vmatmul.bf16.gmra.mxu0 %v1909
      %v4926 = vpop.f32.mrf.mxu0
      %v4927 = vadd.f32 %v4878, %v4926
      %v4928 = vpop.f32.mrf.mxu0
      %v4929 = vadd.f32 %v4880, %v4928
      %4930 = vmatmul.bf16.gmra.mxu0 %v1911
      %v4931 = vpop.f32.mrf.mxu0
      %v4932 = vadd.f32 %v4883, %v4931
      %v4933 = vpop.f32.mrf.mxu0
      %v4934 = vadd.f32 %v4885, %v4933
      %4935 = vmatmul.bf16.gmra.mxu0 %v1913
      %v4936 = vpop.f32.mrf.mxu0
      %v4937 = vadd.f32 %v4888, %v4936
      %v4938 = vpop.f32.mrf.mxu0
      %v4939 = vadd.f32 %v4890, %v4938
      %4940 = vmatmul.bf16.gmra.mxu0 %v1915
      %v4941 = vpop.f32.mrf.mxu0
      %v4942 = vadd.f32 %v4893, %v4941
      %v4943 = vpop.f32.mrf.mxu0
      %v4944 = vadd.f32 %v4895, %v4943
      %4945 = vmatmul.bf16.gmra.mxu0 %v1917
      %v4946 = vpop.f32.mrf.mxu0
      %v4947 = vadd.f32 %v4898, %v4946
      %v4948 = vpop.f32.mrf.mxu0
      %v4949 = vadd.f32 %v4900, %v4948
      %4950 = vmatmul.bf16.gmra.mxu0 %v1919
      %v4951 = vpop.f32.mrf.mxu0
      %v4952 = vadd.f32 %v4903, %v4951
      %v4953 = vpop.f32.mrf.mxu0
      %v4954 = vadd.f32 %v4905, %v4953
      %4955 = vmatmul.bf16.gmra.mxu0 %v1953
      %v4956 = vpop.f32.mrf.mxu0
      %v4957 = vadd.f32 %v4908, %v4956
      %v4958 = vpop.f32.mrf.mxu0
      %v4959 = vadd.f32 %v4910, %v4958
      %4960 = vmatmul.bf16.gmra.mxu0 %v1955
      %v4961 = vpop.f32.mrf.mxu0
      %v4962 = vadd.f32 %v4913, %v4961
      %v4963 = vpop.f32.mrf.mxu0
      %v4964 = vadd.f32 %v4915, %v4963
      %4965 = vdwg.mxu0
      %4966 = vmatpush.bf16.msra.mxu0 %v3926
      %4967 = vmatpush.bf16.msra.mxu0 %v3925
      %4968 = vmatpush.bf16.msra.mxu0 %v3924
      %4969 = vmatpush.bf16.msra.mxu0 %v3923
      %4970 = vmatpush.bf16.msra.mxu0 %v3922
      %4971 = vmatpush.bf16.msra.mxu0 %v3921
      %4972 = vmatpush.bf16.msra.mxu0 %v3920
      %4973 = vmatpush.bf16.msra.mxu0 %v3919
      %4974 = vmatmul.bf16.gmra.mxu0 %v1812
      %v4975 = vpop.f32.mrf.mxu0
      %v4976 = vadd.f32 %v4927, %v4975
      %v4977 = vpop.f32.mrf.mxu0
      %v4978 = vadd.f32 %v4929, %v4977
      %4979 = vmatmul.bf16.gmra.mxu0 %v1813
      %v4980 = vpop.f32.mrf.mxu0
      %v4981 = vadd.f32 %v4932, %v4980
      %v4982 = vpop.f32.mrf.mxu0
      %v4983 = vadd.f32 %v4934, %v4982
      %4984 = vmatmul.bf16.gmra.mxu0 %v1814
      %v4985 = vpop.f32.mrf.mxu0
      %v4986 = vadd.f32 %v4937, %v4985
      %v4987 = vpop.f32.mrf.mxu0
      %v4988 = vadd.f32 %v4939, %v4987
      %4989 = vmatmul.bf16.gmra.mxu0 %v1815
      %v4990 = vpop.f32.mrf.mxu0
      %v4991 = vadd.f32 %v4942, %v4990
      %v4992 = vpop.f32.mrf.mxu0
      %v4993 = vadd.f32 %v4944, %v4992
      %4994 = vmatmul.bf16.gmra.mxu0 %v1816
      %v4995 = vpop.f32.mrf.mxu0
      %v4996 = vadd.f32 %v4947, %v4995
      %v4997 = vpop.f32.mrf.mxu0
      %v4998 = vadd.f32 %v4949, %v4997
      %4999 = vmatmul.bf16.gmra.mxu0 %v1817
      %v5000 = vpop.f32.mrf.mxu0
      %v5001 = vadd.f32 %v4952, %v5000
      %v5002 = vpop.f32.mrf.mxu0
      %v5003 = vadd.f32 %v4954, %v5002
      %5004 = vmatmul.bf16.gmra.mxu0 %v1932
      %v5005 = vpop.f32.mrf.mxu0
      %v5006 = vadd.f32 %v4957, %v5005
      %v5007 = vpop.f32.mrf.mxu0
      %v5008 = vadd.f32 %v4959, %v5007
      %5009 = vmatmul.bf16.gmra.mxu0 %v1960
      %v5010 = vpop.f32.mrf.mxu0
      %v5011 = vadd.f32 %v4962, %v5010
      %v5012 = vpop.f32.mrf.mxu0
      %v5013 = vadd.f32 %v4964, %v5012
      %5014 = vdwg.mxu0
      %5015 = vmatpush.bf16.msra.mxu0 %v3934
      %5016 = vmatpush.bf16.msra.mxu0 %v3933
      %5017 = vmatpush.bf16.msra.mxu0 %v3932
      %5018 = vmatpush.bf16.msra.mxu0 %v3931
      %5019 = vmatpush.bf16.msra.mxu0 %v3930
      %5020 = vmatpush.bf16.msra.mxu0 %v3929
      %5021 = vmatpush.bf16.msra.mxu0 %v3928
      %5022 = vmatpush.bf16.msra.mxu0 %v3927
      %5023 = vmatmul.bf16.gmra.mxu0 %v1856
      %v5024 = vpop.f32.mrf.mxu0
      %v5025 = vadd.f32 %v4976, %v5024
      %v5026 = vpop.f32.mrf.mxu0
      %v5027 = vadd.f32 %v4978, %v5026
      %5028 = vmatmul.bf16.gmra.mxu0 %v1864
      %v5029 = vpop.f32.mrf.mxu0
      %v5030 = vadd.f32 %v4981, %v5029
      %v5031 = vpop.f32.mrf.mxu0
      %v5032 = vadd.f32 %v4983, %v5031
      %5033 = vmatmul.bf16.gmra.mxu0 %v1872
      %v5034 = vpop.f32.mrf.mxu0
      %v5035 = vadd.f32 %v4986, %v5034
      %v5036 = vpop.f32.mrf.mxu0
      %v5037 = vadd.f32 %v4988, %v5036
      %5038 = vmatmul.bf16.gmra.mxu0 %v1880
      %v5039 = vpop.f32.mrf.mxu0
      %v5040 = vadd.f32 %v4991, %v5039
      %v5041 = vpop.f32.mrf.mxu0
      %v5042 = vadd.f32 %v4993, %v5041
      %5043 = vmatmul.bf16.gmra.mxu0 %v1888
      %v5044 = vpop.f32.mrf.mxu0
      %v5045 = vadd.f32 %v4996, %v5044
      %v5046 = vpop.f32.mrf.mxu0
      %v5047 = vadd.f32 %v4998, %v5046
      %5048 = vmatmul.bf16.gmra.mxu0 %v1941
      %v5049 = vpop.f32.mrf.mxu0
      %v5050 = vadd.f32 %v5001, %v5049
      %v5051 = vpop.f32.mrf.mxu0
      %v5052 = vadd.f32 %v5003, %v5051
      %5053 = vmatmul.bf16.gmra.mxu0 %v1969
      %v5054 = vpop.f32.mrf.mxu0
      %v5055 = vadd.f32 %v5006, %v5054
      %v5056 = vpop.f32.mrf.mxu0
      %v5057 = vadd.f32 %v5008, %v5056
      %5058 = vmatmul.bf16.gmra.mxu0 %v1977
      %v5059 = vpop.f32.mrf.mxu0
      %v5060 = vadd.f32 %v5011, %v5059
      %v5061 = vpop.f32.mrf.mxu0
      %v5062 = vadd.f32 %v5013, %v5061
      %5063 = vdwg.mxu0
      %5064 = vmatpush.bf16.msra.mxu0 %v3942
      %5065 = vmatpush.bf16.msra.mxu0 %v3941
      %5066 = vmatpush.bf16.msra.mxu0 %v3940
      %5067 = vmatpush.bf16.msra.mxu0 %v3939
      %5068 = vmatpush.bf16.msra.mxu0 %v3938
      %5069 = vmatpush.bf16.msra.mxu0 %v3937
      %5070 = vmatpush.bf16.msra.mxu0 %v3936
      %5071 = vmatpush.bf16.msra.mxu0 %v3935
      %5072 = vmatmul.bf16.gmra.mxu0 %v2176
      %v5073 = vpop.f32.mrf.mxu0
      %v5074 = vadd.f32 %v5025, %v5073
      %v5075 = vpop.f32.mrf.mxu0
      %v5076 = vadd.f32 %v5027, %v5075
      %5077 = vmatmul.bf16.gmra.mxu0 %v2248
      %v5078 = vpop.f32.mrf.mxu0
      %v5079 = vadd.f32 %v5030, %v5078
      %v5080 = vpop.f32.mrf.mxu0
      %v5081 = vadd.f32 %v5032, %v5080
      %5082 = vmatmul.bf16.gmra.mxu0 %v2280
      %v5083 = vpop.f32.mrf.mxu0
      %v5084 = vadd.f32 %v5035, %v5083
      %v5085 = vpop.f32.mrf.mxu0
      %v5086 = vadd.f32 %v5037, %v5085
      %5087 = vmatmul.bf16.gmra.mxu0 %v2304
      %v5088 = vpop.f32.mrf.mxu0
      %v5089 = vadd.f32 %v5040, %v5088
      %v5090 = vpop.f32.mrf.mxu0
      %v5091 = vadd.f32 %v5042, %v5090
      %5092 = vmatmul.bf16.gmra.mxu0 %v2328
      %v5093 = vpop.f32.mrf.mxu0
      %v5094 = vadd.f32 %v5045, %v5093
      %v5095 = vpop.f32.mrf.mxu0
      %v5096 = vadd.f32 %v5047, %v5095
      %5097 = vmatmul.bf16.gmra.mxu0 %v2352
      %v5098 = vpop.f32.mrf.mxu0
      %v5099 = vadd.f32 %v5050, %v5098
      %v5100 = vpop.f32.mrf.mxu0
      %v5101 = vadd.f32 %v5052, %v5100
      %5102 = vmatmul.bf16.gmra.mxu0 %v2376
      %v5103 = vpop.f32.mrf.mxu0
      %v5104 = vadd.f32 %v5055, %v5103
      %v5105 = vpop.f32.mrf.mxu0
      %v5106 = vadd.f32 %v5057, %v5105
      %5107 = vmatmul.bf16.gmra.mxu0 %v2410
      %v5108 = vpop.f32.mrf.mxu0
      %v5109 = vadd.f32 %v5060, %v5108
      %v5110 = vpop.f32.mrf.mxu0
      %v5111 = vadd.f32 %v5062, %v5110
      %5112 = vdwg.mxu0
      %5113 = vmatpush.bf16.msra.mxu0 %v3950
      %5114 = vmatpush.bf16.msra.mxu0 %v3949
      %5115 = vmatpush.bf16.msra.mxu0 %v3948
      %5116 = vmatpush.bf16.msra.mxu0 %v3947
      %5117 = vmatpush.bf16.msra.mxu0 %v3946
      %5118 = vmatpush.bf16.msra.mxu0 %v3945
      %5119 = vmatpush.bf16.msra.mxu0 %v3944
      %5120 = vmatpush.bf16.msra.mxu0 %v3943
      %5121 = vmatmul.bf16.gmra.mxu0 %v2188
      %v5122 = vpop.f32.mrf.mxu0
      %v5123 = vadd.f32 %v5074, %v5122
      %v5124 = vpop.f32.mrf.mxu0
      %v5125 = vadd.f32 %v5076, %v5124
      %5126 = vmatmul.bf16.gmra.mxu0 %v2252
      %v5127 = vpop.f32.mrf.mxu0
      %v5128 = vadd.f32 %v5079, %v5127
      %v5129 = vpop.f32.mrf.mxu0
      %v5130 = vadd.f32 %v5081, %v5129
      %5131 = vmatmul.bf16.gmra.mxu0 %v2256
      %v5132 = vpop.f32.mrf.mxu0
      %v5133 = vadd.f32 %v5084, %v5132
      %v5134 = vpop.f32.mrf.mxu0
      %v5135 = vadd.f32 %v5086, %v5134
      %5136 = vmatmul.bf16.gmra.mxu0 %v2264
      %v5137 = vpop.f32.mrf.mxu0
      %v5138 = vadd.f32 %v5089, %v5137
      %v5139 = vpop.f32.mrf.mxu0
      %v5140 = vadd.f32 %v5091, %v5139
      %5141 = vmatmul.bf16.gmra.mxu0 %v2288
      %v5142 = vpop.f32.mrf.mxu0
      %v5143 = vadd.f32 %v5094, %v5142
      %v5144 = vpop.f32.mrf.mxu0
      %v5145 = vadd.f32 %v5096, %v5144
      %5146 = vmatmul.bf16.gmra.mxu0 %v2312
      %v5147 = vpop.f32.mrf.mxu0
      %v5148 = vadd.f32 %v5099, %v5147
      %v5149 = vpop.f32.mrf.mxu0
      %v5150 = vadd.f32 %v5101, %v5149
      %5151 = vmatmul.bf16.gmra.mxu0 %v2336
      %v5152 = vpop.f32.mrf.mxu0
      %v5153 = vadd.f32 %v5104, %v5152
      %v5154 = vpop.f32.mrf.mxu0
      %v5155 = vadd.f32 %v5106, %v5154
      %5156 = vmatmul.bf16.gmra.mxu0 %v2415
      %v5157 = vpop.f32.mrf.mxu0
      %v5158 = vadd.f32 %v5109, %v5157
      %v5159 = vpop.f32.mrf.mxu0
      %v5160 = vadd.f32 %v5111, %v5159
      %5161 = vdwg.mxu0
      %5162 = vmatpush.bf16.msra.mxu0 %v3958
      %5163 = vmatpush.bf16.msra.mxu0 %v3957
      %5164 = vmatpush.bf16.msra.mxu0 %v3956
      %5165 = vmatpush.bf16.msra.mxu0 %v3955
      %5166 = vmatpush.bf16.msra.mxu0 %v3954
      %5167 = vmatpush.bf16.msra.mxu0 %v3953
      %5168 = vmatpush.bf16.msra.mxu0 %v3952
      %5169 = vmatpush.bf16.msra.mxu0 %v3951
      %5170 = vmatmul.bf16.gmra.mxu0 %v2090
      %v5171 = vpop.f32.mrf.mxu0
      %v5172 = vadd.f32 %v5123, %v5171
      %v5173 = vpop.f32.mrf.mxu0
      %v5174 = vadd.f32 %v5125, %v5173
      %5175 = vmatmul.bf16.gmra.mxu0 %v2093
      %v5176 = vpop.f32.mrf.mxu0
      %v5177 = vadd.f32 %v5128, %v5176
      %v5178 = vpop.f32.mrf.mxu0
      %v5179 = vadd.f32 %v5130, %v5178
      %5180 = vmatmul.bf16.gmra.mxu0 %v2096
      %v5181 = vpop.f32.mrf.mxu0
      %v5182 = vadd.f32 %v5133, %v5181
      %v5183 = vpop.f32.mrf.mxu0
      %v5184 = vadd.f32 %v5135, %v5183
      %5185 = vmatmul.bf16.gmra.mxu0 %v2099
      %v5186 = vpop.f32.mrf.mxu0
      %v5187 = vadd.f32 %v5138, %v5186
      %v5188 = vpop.f32.mrf.mxu0
      %v5189 = vadd.f32 %v5140, %v5188
      %5190 = vmatmul.bf16.gmra.mxu0 %v2102
      %v5191 = vpop.f32.mrf.mxu0
      %v5192 = vadd.f32 %v5143, %v5191
      %v5193 = vpop.f32.mrf.mxu0
      %v5194 = vadd.f32 %v5145, %v5193
      %5195 = vmatmul.bf16.gmra.mxu0 %v2105
      %v5196 = vpop.f32.mrf.mxu0
      %v5197 = vadd.f32 %v5148, %v5196
      %v5198 = vpop.f32.mrf.mxu0
      %v5199 = vadd.f32 %v5150, %v5198
      %5200 = vmatmul.bf16.gmra.mxu0 %v2108
      %v5201 = vpop.f32.mrf.mxu0
      %v5202 = vadd.f32 %v5153, %v5201
      %v5203 = vpop.f32.mrf.mxu0
      %v5204 = vadd.f32 %v5155, %v5203
      %5205 = vmatmul.bf16.gmra.mxu0 %v2114
      %v5206 = vpop.f32.mrf.mxu0
      %v5207 = vadd.f32 %v5158, %v5206
      %v5208 = vpop.f32.mrf.mxu0
      %v5209 = vadd.f32 %v5160, %v5208
      %5210 = vdwg.mxu0
      %5211 = vmatpush.bf16.msra.mxu0 %v3966
      %5212 = vmatpush.bf16.msra.mxu0 %v3965
      %5213 = vmatpush.bf16.msra.mxu0 %v3964
      %5214 = vmatpush.bf16.msra.mxu0 %v3963
      %5215 = vmatpush.bf16.msra.mxu0 %v3962
      %5216 = vmatpush.bf16.msra.mxu0 %v3961
      %5217 = vmatpush.bf16.msra.mxu0 %v3960
      %5218 = vmatpush.bf16.msra.mxu0 %v3959
      %5219 = vmatmul.bf16.gmra.mxu0 %v2200
      %v5220 = vpop.f32.mrf.mxu0
      %v5221 = vadd.f32 %v5172, %v5220
      %v5222 = vpop.f32.mrf.mxu0
      %v5223 = vadd.f32 %v5174, %v5222
      %5224 = vmatmul.bf16.gmra.mxu0 %v2220
      %v5225 = vpop.f32.mrf.mxu0
      %v5226 = vadd.f32 %v5177, %v5225
      %v5227 = vpop.f32.mrf.mxu0
      %v5228 = vadd.f32 %v5179, %v5227
      %5229 = vmatmul.bf16.gmra.mxu0 %v2240
      %v5230 = vpop.f32.mrf.mxu0
      %v5231 = vadd.f32 %v5182, %v5230
      %v5232 = vpop.f32.mrf.mxu0
      %v5233 = vadd.f32 %v5184, %v5232
      %5234 = vmatmul.bf16.gmra.mxu0 %v2272
      %v5235 = vpop.f32.mrf.mxu0
      %v5236 = vadd.f32 %v5187, %v5235
      %v5237 = vpop.f32.mrf.mxu0
      %v5238 = vadd.f32 %v5189, %v5237
      %5239 = vmatmul.bf16.gmra.mxu0 %v2296
      %v5240 = vpop.f32.mrf.mxu0
      %v5241 = vadd.f32 %v5192, %v5240
      %v5242 = vpop.f32.mrf.mxu0
      %v5243 = vadd.f32 %v5194, %v5242
      %5244 = vmatmul.bf16.gmra.mxu0 %v2320
      %v5245 = vpop.f32.mrf.mxu0
      %v5246 = vadd.f32 %v5197, %v5245
      %v5247 = vpop.f32.mrf.mxu0
      %v5248 = vadd.f32 %v5199, %v5247
      %5249 = vmatmul.bf16.gmra.mxu0 %v2381
      %v5250 = vpop.f32.mrf.mxu0
      %v5251 = vadd.f32 %v5202, %v5250
      %v5252 = vpop.f32.mrf.mxu0
      %v5253 = vadd.f32 %v5204, %v5252
      %5254 = vmatmul.bf16.gmra.mxu0 %v2423
      %v5255 = vpop.f32.mrf.mxu0
      %v5256 = vadd.f32 %v5207, %v5255
      %v5257 = vpop.f32.mrf.mxu0
      %v5258 = vadd.f32 %v5209, %v5257
      %5259 = vdwg.mxu0
      %5260 = vmatpush.bf16.msra.mxu0 %v3974
      %5261 = vmatpush.bf16.msra.mxu0 %v3973
      %5262 = vmatpush.bf16.msra.mxu0 %v3972
      %5263 = vmatpush.bf16.msra.mxu0 %v3971
      %5264 = vmatpush.bf16.msra.mxu0 %v3970
      %5265 = vmatpush.bf16.msra.mxu0 %v3969
      %5266 = vmatpush.bf16.msra.mxu0 %v3968
      %5267 = vmatpush.bf16.msra.mxu0 %v3967
      %5268 = vmatmul.bf16.gmra.mxu0 %v2212
      %v5269 = vpop.f32.mrf.mxu0
      %v5270 = vadd.f32 %v5221, %v5269
      %v5271 = vpop.f32.mrf.mxu0
      %v5272 = vadd.f32 %v5223, %v5271
      %5273 = vmatmul.bf16.gmra.mxu0 %v2256
      %v5274 = vpop.f32.mrf.mxu0
      %v5275 = vadd.f32 %v5226, %v5274
      %v5276 = vpop.f32.mrf.mxu0
      %v5277 = vadd.f32 %v5228, %v5276
      %5278 = vmatmul.bf16.gmra.mxu0 %v2264
      %v5279 = vpop.f32.mrf.mxu0
      %v5280 = vadd.f32 %v5231, %v5279
      %v5281 = vpop.f32.mrf.mxu0
      %v5282 = vadd.f32 %v5233, %v5281
      %5283 = vmatmul.bf16.gmra.mxu0 %v2288
      %v5284 = vpop.f32.mrf.mxu0
      %v5285 = vadd.f32 %v5236, %v5284
      %v5286 = vpop.f32.mrf.mxu0
      %v5287 = vadd.f32 %v5238, %v5286
      %5288 = vmatmul.bf16.gmra.mxu0 %v2312
      %v5289 = vpop.f32.mrf.mxu0
      %v5290 = vadd.f32 %v5241, %v5289
      %v5291 = vpop.f32.mrf.mxu0
      %v5292 = vadd.f32 %v5243, %v5291
      %5293 = vmatmul.bf16.gmra.mxu0 %v2336
      %v5294 = vpop.f32.mrf.mxu0
      %v5295 = vadd.f32 %v5246, %v5294
      %v5296 = vpop.f32.mrf.mxu0
      %v5297 = vadd.f32 %v5248, %v5296
      %5298 = vmatmul.bf16.gmra.mxu0 %v2360
      %v5299 = vpop.f32.mrf.mxu0
      %v5300 = vadd.f32 %v5251, %v5299
      %v5301 = vpop.f32.mrf.mxu0
      %v5302 = vadd.f32 %v5253, %v5301
      %5303 = vmatmul.bf16.gmra.mxu0 %v2428
      %v5304 = vpop.f32.mrf.mxu0
      %v5305 = vadd.f32 %v5256, %v5304
      %v5306 = vpop.f32.mrf.mxu0
      %v5307 = vadd.f32 %v5258, %v5306
      %5308 = vdwg.mxu0
      %5309 = vmatpush.bf16.msra.mxu0 %v3982
      %5310 = vmatpush.bf16.msra.mxu0 %v3981
      %5311 = vmatpush.bf16.msra.mxu0 %v3980
      %5312 = vmatpush.bf16.msra.mxu0 %v3979
      %5313 = vmatpush.bf16.msra.mxu0 %v3978
      %5314 = vmatpush.bf16.msra.mxu0 %v3977
      %5315 = vmatpush.bf16.msra.mxu0 %v3976
      %5316 = vmatpush.bf16.msra.mxu0 %v3975
      %5317 = vmatmul.bf16.gmra.mxu0 %v2093
      %v5318 = vpop.f32.mrf.mxu0
      %v5319 = vadd.f32 %v5270, %v5318
      %v5320 = vpop.f32.mrf.mxu0
      %v5321 = vadd.f32 %v5272, %v5320
      %5322 = vmatmul.bf16.gmra.mxu0 %v2096
      %v5323 = vpop.f32.mrf.mxu0
      %v5324 = vadd.f32 %v5275, %v5323
      %v5325 = vpop.f32.mrf.mxu0
      %v5326 = vadd.f32 %v5277, %v5325
      %5327 = vmatmul.bf16.gmra.mxu0 %v2099
      %v5328 = vpop.f32.mrf.mxu0
      %v5329 = vadd.f32 %v5280, %v5328
      %v5330 = vpop.f32.mrf.mxu0
      %v5331 = vadd.f32 %v5282, %v5330
      %5332 = vmatmul.bf16.gmra.mxu0 %v2102
      %v5333 = vpop.f32.mrf.mxu0
      %v5334 = vadd.f32 %v5285, %v5333
      %v5335 = vpop.f32.mrf.mxu0
      %v5336 = vadd.f32 %v5287, %v5335
      %5337 = vmatmul.bf16.gmra.mxu0 %v2105
      %v5338 = vpop.f32.mrf.mxu0
      %v5339 = vadd.f32 %v5290, %v5338
      %v5340 = vpop.f32.mrf.mxu0
      %v5341 = vadd.f32 %v5292, %v5340
      %5342 = vmatmul.bf16.gmra.mxu0 %v2108
      %v5343 = vpop.f32.mrf.mxu0
      %v5344 = vadd.f32 %v5295, %v5343
      %v5345 = vpop.f32.mrf.mxu0
      %v5346 = vadd.f32 %v5297, %v5345
      %5347 = vmatmul.bf16.gmra.mxu0 %v2132
      %v5348 = vpop.f32.mrf.mxu0
      %v5349 = vadd.f32 %v5300, %v5348
      %v5350 = vpop.f32.mrf.mxu0
      %v5351 = vadd.f32 %v5302, %v5350
      %5352 = vmatmul.bf16.gmra.mxu0 %v2138
      %v5353 = vpop.f32.mrf.mxu0
      %v5354 = vadd.f32 %v5305, %v5353
      %v5355 = vpop.f32.mrf.mxu0
      %v5356 = vadd.f32 %v5307, %v5355
      %5357 = vdwg.mxu0
      %5358 = vmatpush.bf16.msra.mxu0 %v3990
      %5359 = vmatpush.bf16.msra.mxu0 %v3989
      %5360 = vmatpush.bf16.msra.mxu0 %v3988
      %5361 = vmatpush.bf16.msra.mxu0 %v3987
      %5362 = vmatpush.bf16.msra.mxu0 %v3986
      %5363 = vmatpush.bf16.msra.mxu0 %v3985
      %5364 = vmatpush.bf16.msra.mxu0 %v3984
      %5365 = vmatpush.bf16.msra.mxu0 %v3983
      %5366 = vmatmul.bf16.gmra.mxu0 %v2220
      %v5367 = vpop.f32.mrf.mxu0
      %v5368 = vadd.f32 %v5319, %v5367
      %v5369 = vpop.f32.mrf.mxu0
      %v5370 = vadd.f32 %v5321, %v5369
      %5371 = vmatmul.bf16.gmra.mxu0 %v2240
      %v5372 = vpop.f32.mrf.mxu0
      %v5373 = vadd.f32 %v5324, %v5372
      %v5374 = vpop.f32.mrf.mxu0
      %v5375 = vadd.f32 %v5326, %v5374
      %5376 = vmatmul.bf16.gmra.mxu0 %v2272
      %v5377 = vpop.f32.mrf.mxu0
      %v5378 = vadd.f32 %v5329, %v5377
      %v5379 = vpop.f32.mrf.mxu0
      %v5380 = vadd.f32 %v5331, %v5379
      %5381 = vmatmul.bf16.gmra.mxu0 %v2296
      %v5382 = vpop.f32.mrf.mxu0
      %v5383 = vadd.f32 %v5334, %v5382
      %v5384 = vpop.f32.mrf.mxu0
      %v5385 = vadd.f32 %v5336, %v5384
      %5386 = vmatmul.bf16.gmra.mxu0 %v2320
      %v5387 = vpop.f32.mrf.mxu0
      %v5388 = vadd.f32 %v5339, %v5387
      %v5389 = vpop.f32.mrf.mxu0
      %v5390 = vadd.f32 %v5341, %v5389
      %5391 = vmatmul.bf16.gmra.mxu0 %v2344
      %v5392 = vpop.f32.mrf.mxu0
      %v5393 = vadd.f32 %v5344, %v5392
      %v5394 = vpop.f32.mrf.mxu0
      %v5395 = vadd.f32 %v5346, %v5394
      %5396 = vmatmul.bf16.gmra.mxu0 %v2386
      %v5397 = vpop.f32.mrf.mxu0
      %v5398 = vadd.f32 %v5349, %v5397
      %v5399 = vpop.f32.mrf.mxu0
      %v5400 = vadd.f32 %v5351, %v5399
      %5401 = vmatmul.bf16.gmra.mxu0 %v2436
      %v5402 = vpop.f32.mrf.mxu0
      %v5403 = vadd.f32 %v5354, %v5402
      %v5404 = vpop.f32.mrf.mxu0
      %v5405 = vadd.f32 %v5356, %v5404
      %5406 = vdwg.mxu0
      %5407 = vmatpush.bf16.msra.mxu0 %v3998
      %5408 = vmatpush.bf16.msra.mxu0 %v3997
      %5409 = vmatpush.bf16.msra.mxu0 %v3996
      %5410 = vmatpush.bf16.msra.mxu0 %v3995
      %5411 = vmatpush.bf16.msra.mxu0 %v3994
      %5412 = vmatpush.bf16.msra.mxu0 %v3993
      %5413 = vmatpush.bf16.msra.mxu0 %v3992
      %5414 = vmatpush.bf16.msra.mxu0 %v3991
      %5415 = vmatmul.bf16.gmra.mxu0 %v2232
      %v5416 = vpop.f32.mrf.mxu0
      %v5417 = vadd.f32 %v5368, %v5416
      %v5418 = vpop.f32.mrf.mxu0
      %v5419 = vadd.f32 %v5370, %v5418
      %5420 = vmatmul.bf16.gmra.mxu0 %v2264
      %v5421 = vpop.f32.mrf.mxu0
      %v5422 = vadd.f32 %v5373, %v5421
      %v5423 = vpop.f32.mrf.mxu0
      %v5424 = vadd.f32 %v5375, %v5423
      %5425 = vmatmul.bf16.gmra.mxu0 %v2288
      %v5426 = vpop.f32.mrf.mxu0
      %v5427 = vadd.f32 %v5378, %v5426
      %v5428 = vpop.f32.mrf.mxu0
      %v5429 = vadd.f32 %v5380, %v5428
      %5430 = vmatmul.bf16.gmra.mxu0 %v2312
      %v5431 = vpop.f32.mrf.mxu0
      %v5432 = vadd.f32 %v5383, %v5431
      %v5433 = vpop.f32.mrf.mxu0
      %v5434 = vadd.f32 %v5385, %v5433
      %5435 = vmatmul.bf16.gmra.mxu0 %v2336
      %v5436 = vpop.f32.mrf.mxu0
      %v5437 = vadd.f32 %v5388, %v5436
      %v5438 = vpop.f32.mrf.mxu0
      %v5439 = vadd.f32 %v5390, %v5438
      %5440 = vmatmul.bf16.gmra.mxu0 %v2360
      %v5441 = vpop.f32.mrf.mxu0
      %v5442 = vadd.f32 %v5393, %v5441
      %v5443 = vpop.f32.mrf.mxu0
      %v5444 = vadd.f32 %v5395, %v5443
      %5445 = vmatmul.bf16.gmra.mxu0 %v2394
      %v5446 = vpop.f32.mrf.mxu0
      %v5447 = vadd.f32 %v5398, %v5446
      %v5448 = vpop.f32.mrf.mxu0
      %v5449 = vadd.f32 %v5400, %v5448
      %5450 = vmatmul.bf16.gmra.mxu0 %v2444
      %v5451 = vpop.f32.mrf.mxu0
      %v5452 = vadd.f32 %v5403, %v5451
      %v5453 = vpop.f32.mrf.mxu0
      %v5454 = vadd.f32 %v5405, %v5453
      %5455 = vdwg.mxu0
      %5456 = vmatpush.bf16.msra.mxu0 %v4006
      %5457 = vmatpush.bf16.msra.mxu0 %v4005
      %5458 = vmatpush.bf16.msra.mxu0 %v4004
      %5459 = vmatpush.bf16.msra.mxu0 %v4003
      %5460 = vmatpush.bf16.msra.mxu0 %v4002
      %5461 = vmatpush.bf16.msra.mxu0 %v4001
      %5462 = vmatpush.bf16.msra.mxu0 %v4000
      %5463 = vmatpush.bf16.msra.mxu0 %v3999
      %5464 = vmatmul.bf16.gmra.mxu0 %v2096
      %v5465 = vpop.f32.mrf.mxu0
      %v5466 = vadd.f32 %v5417, %v5465
      %v5467 = vpop.f32.mrf.mxu0
      %v5468 = vadd.f32 %v5419, %v5467
      %5469 = vmatmul.bf16.gmra.mxu0 %v2099
      %v5470 = vpop.f32.mrf.mxu0
      %v5471 = vadd.f32 %v5422, %v5470
      %v5472 = vpop.f32.mrf.mxu0
      %v5473 = vadd.f32 %v5424, %v5472
      %5474 = vmatmul.bf16.gmra.mxu0 %v2102
      %v5475 = vpop.f32.mrf.mxu0
      %v5476 = vadd.f32 %v5427, %v5475
      %v5477 = vpop.f32.mrf.mxu0
      %v5478 = vadd.f32 %v5429, %v5477
      %5479 = vmatmul.bf16.gmra.mxu0 %v2105
      %v5480 = vpop.f32.mrf.mxu0
      %v5481 = vadd.f32 %v5432, %v5480
      %v5482 = vpop.f32.mrf.mxu0
      %v5483 = vadd.f32 %v5434, %v5482
      %5484 = vmatmul.bf16.gmra.mxu0 %v2108
      %v5485 = vpop.f32.mrf.mxu0
      %v5486 = vadd.f32 %v5437, %v5485
      %v5487 = vpop.f32.mrf.mxu0
      %v5488 = vadd.f32 %v5439, %v5487
      %5489 = vmatmul.bf16.gmra.mxu0 %v2132
      %v5490 = vpop.f32.mrf.mxu0
      %v5491 = vadd.f32 %v5442, %v5490
      %v5492 = vpop.f32.mrf.mxu0
      %v5493 = vadd.f32 %v5444, %v5492
      %5494 = vmatmul.bf16.gmra.mxu0 %v2156
      %v5495 = vpop.f32.mrf.mxu0
      %v5496 = vadd.f32 %v5447, %v5495
      %v5497 = vpop.f32.mrf.mxu0
      %v5498 = vadd.f32 %v5449, %v5497
      %5499 = vmatmul.bf16.gmra.mxu0 %v2162
      %v5500 = vpop.f32.mrf.mxu0
      %v5501 = vadd.f32 %v5452, %v5500
      %v5502 = vpop.f32.mrf.mxu0
      %v5503 = vadd.f32 %v5454, %v5502
      %5504 = vdwg.mxu0
      %5505 = vmatpush.bf16.msra.mxu0 %v4014
      %5506 = vmatpush.bf16.msra.mxu0 %v4013
      %5507 = vmatpush.bf16.msra.mxu0 %v4012
      %5508 = vmatpush.bf16.msra.mxu0 %v4011
      %5509 = vmatpush.bf16.msra.mxu0 %v4010
      %5510 = vmatpush.bf16.msra.mxu0 %v4009
      %5511 = vmatpush.bf16.msra.mxu0 %v4008
      %5512 = vmatpush.bf16.msra.mxu0 %v4007
      %5513 = vmatmul.bf16.gmra.mxu0 %v2240
      %v5514 = vpop.f32.mrf.mxu0
      %v5515 = vadd.f32 %v5466, %v5514
      %v5516 = vpop.f32.mrf.mxu0
      %v5517 = vadd.f32 %v5468, %v5516
      %5518 = vmatmul.bf16.gmra.mxu0 %v2272
      %v5519 = vpop.f32.mrf.mxu0
      %v5520 = vadd.f32 %v5471, %v5519
      %v5521 = vpop.f32.mrf.mxu0
      %v5522 = vadd.f32 %v5473, %v5521
      %5523 = vmatmul.bf16.gmra.mxu0 %v2296
      %v5524 = vpop.f32.mrf.mxu0
      %v5525 = vadd.f32 %v5476, %v5524
      %v5526 = vpop.f32.mrf.mxu0
      %v5527 = vadd.f32 %v5478, %v5526
      %5528 = vmatmul.bf16.gmra.mxu0 %v2320
      %v5529 = vpop.f32.mrf.mxu0
      %v5530 = vadd.f32 %v5481, %v5529
      %v5531 = vpop.f32.mrf.mxu0
      %v5532 = vadd.f32 %v5483, %v5531
      %5533 = vmatmul.bf16.gmra.mxu0 %v2344
      %v5534 = vpop.f32.mrf.mxu0
      %v5535 = vadd.f32 %v5486, %v5534
      %v5536 = vpop.f32.mrf.mxu0
      %v5537 = vadd.f32 %v5488, %v5536
      %5538 = vmatmul.bf16.gmra.mxu0 %v2368
      %v5539 = vpop.f32.mrf.mxu0
      %v5540 = vadd.f32 %v5491, %v5539
      %v5541 = vpop.f32.mrf.mxu0
      %v5542 = vadd.f32 %v5493, %v5541
      %5543 = vmatmul.bf16.gmra.mxu0 %v2402
      %v5544 = vpop.f32.mrf.mxu0
      %v5545 = vadd.f32 %v5496, %v5544
      %v5546 = vpop.f32.mrf.mxu0
      %v5547 = vadd.f32 %v5498, %v5546
      %5548 = vmatmul.bf16.gmra.mxu0 %v2452
      %v5549 = vpop.f32.mrf.mxu0
      %v5550 = vadd.f32 %v5501, %v5549
      %v5551 = vpop.f32.mrf.mxu0
      %v5552 = vadd.f32 %v5503, %v5551
      %5553 = vdwg.mxu0
      %v5554 = vunpack.c.h.b16 %v1506
      %v5555 = vunpack.c.h.b16 %v1507
      %v5556 = vunpack.c.h.b16 %v1508
      %v5557 = vunpack.c.h.b16 %v1509
      %v5558 = vunpack.c.h.b16 %v1510
      %v5559 = vunpack.c.h.b16 %v1511
      %v5560 = vunpack.c.h.b16 %v1512
      %v5561 = vunpack.c.h.b16 %v1513
      %v5562 = vunpack.c.h.b16 %v1514
      %v5563 = vunpack.c.h.b16 %v1515
      %v5564 = vunpack.c.h.b16 %v1516
      %v5565 = vunpack.c.h.b16 %v1517
      %v5566 = vunpack.c.h.b16 %v1518
      %v5567 = vunpack.c.h.b16 %v1519
      %v5568 = vunpack.c.h.b16 %v1520
      %v5569 = vunpack.c.h.b16 %v1521
      %v5570 = vpack.c.b16 %v5555, %v5554
      %v5571 = vpack.c.b16 %v5557, %v5556
      %v5572 = vpack.c.b16 %v5559, %v5558
      %v5573 = vpack.c.b16 %v5561, %v5560
      %v5574 = vpack.c.b16 %v5563, %v5562
      %v5575 = vpack.c.b16 %v5565, %v5564
      %v5576 = vpack.c.b16 %v5567, %v5566
      %v5577 = vpack.c.b16 %v5569, %v5568
      %v5586 = vunpack.c.h.b16 %v1522
      %v5587 = vpack.c.b16 %v5586, %v5586
      %v5589 = vshrl.u32 %v5570, 16
      %v5591 = vshll.u32 %v5570, 16
      %v5593 = vrot.slane %v5591, 1
      %v5594 = vor.u32 %v5589, %v5593
      %v5596 = vshll.u32 %v5571, 16
      %v5598 = vrot.slane %v5596, 1
      %v5599 = vsel %vm756, %v5594, %v5598
      %v5600 = vshrl.u32 %v5571, 16
      %v5602 = vor.u32 %v5600, %v5598
      %v5604 = vshll.u32 %v5572, 16
      %v5606 = vrot.slane %v5604, 1
      %v5607 = vsel %vm756, %v5602, %v5606
      %v5608 = vshrl.u32 %v5572, 16
      %v5610 = vor.u32 %v5608, %v5606
      %v5612 = vshll.u32 %v5573, 16
      %v5614 = vrot.slane %v5612, 1
      %v5615 = vsel %vm756, %v5610, %v5614
      %v5616 = vshrl.u32 %v5573, 16
      %v5618 = vor.u32 %v5616, %v5614
      %v5620 = vshll.u32 %v5574, 16
      %v5622 = vrot.slane %v5620, 1
      %v5623 = vsel %vm756, %v5618, %v5622
      %v5624 = vshrl.u32 %v5574, 16
      %v5626 = vor.u32 %v5624, %v5622
      %v5628 = vshll.u32 %v5575, 16
      %v5630 = vrot.slane %v5628, 1
      %v5631 = vsel %vm756, %v5626, %v5630
      %v5632 = vshrl.u32 %v5575, 16
      %v5634 = vor.u32 %v5632, %v5630
      %v5636 = vshll.u32 %v5576, 16
      %v5638 = vrot.slane %v5636, 1
      %v5639 = vsel %vm756, %v5634, %v5638
      %v5640 = vshrl.u32 %v5576, 16
      %v5642 = vor.u32 %v5640, %v5638
      %v5644 = vshll.u32 %v5577, 16
      %v5646 = vrot.slane %v5644, 1
      %v5647 = vsel %vm756, %v5642, %v5646
      %v5648 = vshrl.u32 %v5577, 16
      %v5650 = vor.u32 %v5648, %v5646
      %v5652 = vshll.u32 %v5587, 16
      %v5654 = vrot.slane %v5652, 1
      %v5655 = vsel %vm756, %v5650, %v5654
      %v5664 = vrot.slane %v5570, 1
      %v5665 = vrot.slane %v5571, 1
      %v5666 = vsel %vm1696, %v5664, %v5665
      %v5667 = vrot.slane %v5572, 1
      %v5668 = vsel %vm1696, %v5665, %v5667
      %v5669 = vrot.slane %v5573, 1
      %v5670 = vsel %vm1696, %v5667, %v5669
      %v5671 = vrot.slane %v5574, 1
      %v5672 = vsel %vm1696, %v5669, %v5671
      %v5673 = vrot.slane %v5575, 1
      %v5674 = vsel %vm1696, %v5671, %v5673
      %v5675 = vrot.slane %v5576, 1
      %v5676 = vsel %vm1696, %v5673, %v5675
      %v5677 = vrot.slane %v5577, 1
      %v5678 = vsel %vm1696, %v5675, %v5677
      %v5679 = vrot.slane %v5587, 1
      %v5680 = vsel %vm1696, %v5677, %v5679
      %v5689 = vunpack.c.h.b16 %v1523
      %v5690 = vpack.c.b16 %v5689, %v5586
      %v5692 = vunpack.c.h.b16 %v1524
      %v5693 = vpack.c.b16 %v5692, %v5692
      %v5695 = vshll.u32 %v5690, 16
      %v5697 = vrot.slane %v5695, 1
      %v5698 = vsel %vm756, %v5650, %v5697
      %v5699 = vshrl.u32 %v5690, 16
      %v5701 = vor.u32 %v5699, %v5697
      %v5703 = vshll.u32 %v5693, 16
      %v5705 = vrot.slane %v5703, 1
      %v5706 = vsel %vm756, %v5701, %v5705
      %v5709 = vrot.slane %v5690, 1
      %v5710 = vsel %vm1696, %v5677, %v5709
      %v5711 = vrot.slane %v5693, 1
      %v5712 = vsel %vm1696, %v5709, %v5711
      %v5715 = vunpack.c.h.b16 %v1525
      %v5716 = vpack.c.b16 %v5715, %v5692
      %v5718 = vunpack.c.h.b16 %v1526
      %v5719 = vpack.c.b16 %v5718, %v5718
      %v5721 = vshll.u32 %v5716, 16
      %v5723 = vrot.slane %v5721, 1
      %v5724 = vsel %vm756, %v5701, %v5723
      %v5725 = vshrl.u32 %v5716, 16
      %v5727 = vor.u32 %v5725, %v5723
      %v5729 = vshll.u32 %v5719, 16
      %v5731 = vrot.slane %v5729, 1
      %v5732 = vsel %vm756, %v5727, %v5731
      %v5735 = vrot.slane %v5716, 1
      %v5736 = vsel %vm1696, %v5709, %v5735
      %v5737 = vrot.slane %v5719, 1
      %v5738 = vsel %vm1696, %v5735, %v5737
      %v5741 = vunpack.c.h.b16 %v1527
      %v5742 = vunpack.c.h.b16 %v1528
      %v5743 = vunpack.c.h.b16 %v1529
      %v5744 = vunpack.c.h.b16 %v1530
      %v5745 = vunpack.c.h.b16 %v1531
      %v5746 = vunpack.c.h.b16 %v1532
      %v5747 = vunpack.c.h.b16 %v1533
      %v5748 = vunpack.c.h.b16 %v1534
      %v5749 = vunpack.c.h.b16 %v1535
      %v5750 = vunpack.c.h.b16 %v1536
      %v5751 = vunpack.c.h.b16 %v1537
      %v5752 = vunpack.c.h.b16 %v1538
      %v5753 = vunpack.c.h.b16 %v1539
      %v5754 = vunpack.c.h.b16 %v1540
      %v5755 = vunpack.c.h.b16 %v1541
      %v5756 = vunpack.c.h.b16 %v1542
      %v5757 = vpack.c.b16 %v5742, %v5741
      %v5758 = vpack.c.b16 %v5744, %v5743
      %v5759 = vpack.c.b16 %v5746, %v5745
      %v5760 = vpack.c.b16 %v5748, %v5747
      %v5761 = vpack.c.b16 %v5750, %v5749
      %v5762 = vpack.c.b16 %v5752, %v5751
      %v5763 = vpack.c.b16 %v5754, %v5753
      %v5764 = vpack.c.b16 %v5756, %v5755
      %v5773 = vunpack.c.h.b16 %v1543
      %v5774 = vpack.c.b16 %v5773, %v5773
      %v5776 = vshrl.u32 %v5757, 16
      %v5778 = vshll.u32 %v5757, 16
      %v5780 = vrot.slane %v5778, 1
      %v5781 = vor.u32 %v5776, %v5780
      %v5783 = vshll.u32 %v5758, 16
      %v5785 = vrot.slane %v5783, 1
      %v5786 = vsel %vm756, %v5781, %v5785
      %v5787 = vshrl.u32 %v5758, 16
      %v5789 = vor.u32 %v5787, %v5785
      %v5791 = vshll.u32 %v5759, 16
      %v5793 = vrot.slane %v5791, 1
      %v5794 = vsel %vm756, %v5789, %v5793
      %v5795 = vshrl.u32 %v5759, 16
      %v5797 = vor.u32 %v5795, %v5793
      %v5799 = vshll.u32 %v5760, 16
      %v5801 = vrot.slane %v5799, 1
      %v5802 = vsel %vm756, %v5797, %v5801
      %v5803 = vshrl.u32 %v5760, 16
      %v5805 = vor.u32 %v5803, %v5801
      %v5807 = vshll.u32 %v5761, 16
      %v5809 = vrot.slane %v5807, 1
      %v5810 = vsel %vm756, %v5805, %v5809
      %v5811 = vshrl.u32 %v5761, 16
      %v5813 = vor.u32 %v5811, %v5809
      %v5815 = vshll.u32 %v5762, 16
      %v5817 = vrot.slane %v5815, 1
      %v5818 = vsel %vm756, %v5813, %v5817
      %v5819 = vshrl.u32 %v5762, 16
      %v5821 = vor.u32 %v5819, %v5817
      %v5823 = vshll.u32 %v5763, 16
      %v5825 = vrot.slane %v5823, 1
      %v5826 = vsel %vm756, %v5821, %v5825
      %v5827 = vshrl.u32 %v5763, 16
      %v5829 = vor.u32 %v5827, %v5825
      %v5831 = vshll.u32 %v5764, 16
      %v5833 = vrot.slane %v5831, 1
      %v5834 = vsel %vm756, %v5829, %v5833
      %v5835 = vshrl.u32 %v5764, 16
      %v5837 = vor.u32 %v5835, %v5833
      %v5839 = vshll.u32 %v5774, 16
      %v5841 = vrot.slane %v5839, 1
      %v5842 = vsel %vm756, %v5837, %v5841
      %v5851 = vrot.slane %v5757, 1
      %v5852 = vrot.slane %v5758, 1
      %v5853 = vsel %vm1696, %v5851, %v5852
      %v5854 = vrot.slane %v5759, 1
      %v5855 = vsel %vm1696, %v5852, %v5854
      %v5856 = vrot.slane %v5760, 1
      %v5857 = vsel %vm1696, %v5854, %v5856
      %v5858 = vrot.slane %v5761, 1
      %v5859 = vsel %vm1696, %v5856, %v5858
      %v5860 = vrot.slane %v5762, 1
      %v5861 = vsel %vm1696, %v5858, %v5860
      %v5862 = vrot.slane %v5763, 1
      %v5863 = vsel %vm1696, %v5860, %v5862
      %v5864 = vrot.slane %v5764, 1
      %v5865 = vsel %vm1696, %v5862, %v5864
      %v5866 = vrot.slane %v5774, 1
      %v5867 = vsel %vm1696, %v5864, %v5866
      %v5876 = vunpack.c.h.b16 %v1544
      %v5877 = vpack.c.b16 %v5876, %v5773
      %v5879 = vunpack.c.h.b16 %v1545
      %v5880 = vpack.c.b16 %v5879, %v5879
      %v5882 = vshll.u32 %v5877, 16
      %v5884 = vrot.slane %v5882, 1
      %v5885 = vsel %vm756, %v5837, %v5884
      %v5886 = vshrl.u32 %v5877, 16
      %v5888 = vor.u32 %v5886, %v5884
      %v5890 = vshll.u32 %v5880, 16
      %v5892 = vrot.slane %v5890, 1
      %v5893 = vsel %vm756, %v5888, %v5892
      %v5896 = vrot.slane %v5877, 1
      %v5897 = vsel %vm1696, %v5864, %v5896
      %v5898 = vrot.slane %v5880, 1
      %v5899 = vsel %vm1696, %v5896, %v5898
      %v5902 = vunpack.c.h.b16 %v1546
      %v5903 = vpack.c.b16 %v5902, %v5879
      %v5905 = vunpack.c.h.b16 %v1547
      %v5906 = vpack.c.b16 %v5905, %v5905
      %v5908 = vshll.u32 %v5903, 16
      %v5910 = vrot.slane %v5908, 1
      %v5911 = vsel %vm756, %v5888, %v5910
      %v5912 = vshrl.u32 %v5903, 16
      %v5914 = vor.u32 %v5912, %v5910
      %v5916 = vshll.u32 %v5906, 16
      %v5918 = vrot.slane %v5916, 1
      %v5919 = vsel %vm756, %v5914, %v5918
      %v5920 = vshrl.u32 %v5906, 16
      %v5922 = vunpack.c.h.b16 %v1548
      %v5923 = vunpack.c.h.b16 %v1549
      %v5924 = vunpack.c.h.b16 %v1550
      %v5925 = vunpack.c.h.b16 %v1551
      %v5926 = vunpack.c.h.b16 %v1552
      %v5927 = vunpack.c.h.b16 %v1553
      %v5928 = vunpack.c.h.b16 %v1554
      %v5929 = vunpack.c.h.b16 %v1555
      %v5930 = vunpack.c.h.b16 %v1556
      %v5931 = vunpack.c.h.b16 %v1557
      %v5932 = vunpack.c.h.b16 %v1558
      %v5933 = vunpack.c.h.b16 %v1559
      %v5934 = vunpack.c.h.b16 %v1560
      %v5935 = vunpack.c.h.b16 %v1561
      %v5936 = vunpack.c.h.b16 %v1562
      %v5937 = vunpack.c.h.b16 %v1563
      %v5938 = vpack.c.b16 %v5923, %v5922
      %v5939 = vpack.c.b16 %v5925, %v5924
      %v5940 = vpack.c.b16 %v5927, %v5926
      %v5941 = vpack.c.b16 %v5929, %v5928
      %v5942 = vpack.c.b16 %v5931, %v5930
      %v5943 = vpack.c.b16 %v5933, %v5932
      %v5944 = vpack.c.b16 %v5935, %v5934
      %v5945 = vpack.c.b16 %v5937, %v5936
      %v5947 = vshrl.u32 %v5938, 16
      %v5949 = vrot.slane %v5947, 7
      %v5950 = vshll.u32 %v5938, 16
      %v5952 = vor.u32 %v5949, %v5950
      %v5954 = vshrl.u32 %v5939, 16
      %v5956 = vrot.slane %v5954, 7
      %v5957 = vshll.u32 %v5939, 16
      %v5959 = vor.u32 %v5956, %v5957
      %v5960 = vsel %vm2020, %v5949, %v5959
      %v5962 = vshrl.u32 %v5940, 16
      %v5964 = vrot.slane %v5962, 7
      %v5965 = vshll.u32 %v5940, 16
      %v5967 = vor.u32 %v5964, %v5965
      %v5968 = vsel %vm2020, %v5956, %v5967
      %v5970 = vshrl.u32 %v5941, 16
      %v5972 = vrot.slane %v5970, 7
      %v5973 = vshll.u32 %v5941, 16
      %v5975 = vor.u32 %v5972, %v5973
      %v5976 = vsel %vm2020, %v5964, %v5975
      %v5978 = vshrl.u32 %v5942, 16
      %v5980 = vrot.slane %v5978, 7
      %v5981 = vshll.u32 %v5942, 16
      %v5983 = vor.u32 %v5980, %v5981
      %v5984 = vsel %vm2020, %v5972, %v5983
      %v5986 = vshrl.u32 %v5943, 16
      %v5988 = vrot.slane %v5986, 7
      %v5989 = vshll.u32 %v5943, 16
      %v5991 = vor.u32 %v5988, %v5989
      %v5992 = vsel %vm2020, %v5980, %v5991
      %v5994 = vshrl.u32 %v5944, 16
      %v5996 = vrot.slane %v5994, 7
      %v5997 = vshll.u32 %v5944, 16
      %v5999 = vor.u32 %v5996, %v5997
      %v6000 = vsel %vm2020, %v5988, %v5999
      %v6002 = vshrl.u32 %v5945, 16
      %v6004 = vrot.slane %v6002, 7
      %v6005 = vshll.u32 %v5945, 16
      %v6007 = vor.u32 %v6004, %v6005
      %v6008 = vsel %vm2020, %v5996, %v6007
      %v6009 = vunpack.c.h.b16 %v1564
      %v6010 = vpack.c.b16 %v6009, %v6009
      %v6011 = vrot.slane %v5950, 1
      %v6012 = vor.u32 %v5947, %v6011
      %v6013 = vrot.slane %v5957, 1
      %v6014 = vsel %vm756, %v6012, %v6013
      %v6015 = vor.u32 %v5954, %v6013
      %v6016 = vrot.slane %v5965, 1
      %v6017 = vsel %vm756, %v6015, %v6016
      %v6018 = vor.u32 %v5962, %v6016
      %v6019 = vrot.slane %v5973, 1
      %v6020 = vsel %vm756, %v6018, %v6019
      %v6021 = vor.u32 %v5970, %v6019
      %v6022 = vrot.slane %v5981, 1
      %v6023 = vsel %vm756, %v6021, %v6022
      %v6024 = vor.u32 %v5978, %v6022
      %v6025 = vrot.slane %v5989, 1
      %v6026 = vsel %vm756, %v6024, %v6025
      %v6027 = vor.u32 %v5986, %v6025
      %v6028 = vrot.slane %v5997, 1
      %v6029 = vsel %vm756, %v6027, %v6028
      %v6030 = vor.u32 %v5994, %v6028
      %v6031 = vrot.slane %v6005, 1
      %v6032 = vsel %vm756, %v6030, %v6031
      %v6033 = vor.u32 %v6002, %v6031
      %v6035 = vshll.u32 %v6010, 16
      %v6037 = vrot.slane %v6035, 1
      %v6038 = vsel %vm756, %v6033, %v6037
      %v6039 = vshrl.u32 %v6010, 16
      %v6041 = vunpack.c.h.b16 %v1565
      %v6042 = vpack.c.b16 %v6041, %v6009
      %v6044 = vshrl.u32 %v6042, 16
      %v6046 = vrot.slane %v6044, 7
      %v6047 = vshll.u32 %v6042, 16
      %v6049 = vor.u32 %v6046, %v6047
      %v6050 = vsel %vm2020, %v6004, %v6049
      %v6051 = vunpack.c.h.b16 %v1566
      %v6052 = vpack.c.b16 %v6051, %v6051
      %v6053 = vrot.slane %v6047, 1
      %v6054 = vsel %vm756, %v6033, %v6053
      %v6055 = vor.u32 %v6044, %v6053
      %v6057 = vshll.u32 %v6052, 16
      %v6059 = vrot.slane %v6057, 1
      %v6060 = vsel %vm756, %v6055, %v6059
      %v6061 = vshrl.u32 %v6052, 16
      %v6063 = vunpack.c.h.b16 %v1567
      %v6064 = vpack.c.b16 %v6063, %v6051
      %v6066 = vshrl.u32 %v6064, 16
      %v6068 = vrot.slane %v6066, 7
      %v6069 = vshll.u32 %v6064, 16
      %v6071 = vor.u32 %v6068, %v6069
      %v6072 = vsel %vm2020, %v6046, %v6071
      %v6073 = vunpack.c.h.b16 %v1568
      %v6074 = vpack.c.b16 %v6073, %v6073
      %v6075 = vrot.slane %v6069, 1
      %v6076 = vsel %vm756, %v6055, %v6075
      %v6077 = vor.u32 %v6066, %v6075
      %v6079 = vshll.u32 %v6074, 16
      %v6081 = vrot.slane %v6079, 1
      %v6082 = vsel %vm756, %v6077, %v6081
      %v6083 = vshrl.u32 %v6074, 16
      %v6086 = vshrl.u32 %v5802, 16
      %v6088 = vshll.u32 %v5802, 16
      %v6090 = vrot.slane %v6088, 1
      %v6091 = vor.u32 %v6086, %v6090
      %v6093 = vshll.u32 %v5810, 16
      %v6095 = vrot.slane %v6093, 1
      %v6096 = vsel %vm756, %v6091, %v6095
      %v6098 = vshrl.u32 %v5952, 16
      %v6100 = vshll.u32 %v5952, 16
      %v6102 = vrot.slane %v6100, 1
      %v6103 = vor.u32 %v6098, %v6102
      %v6105 = vshll.u32 %v5960, 16
      %v6107 = vrot.slane %v6105, 1
      %v6108 = vsel %vm756, %v6103, %v6107
      %v6110 = vshrl.u32 %v6014, 16
      %v6112 = vshll.u32 %v6014, 16
      %v6114 = vrot.slane %v6112, 1
      %v6115 = vor.u32 %v6110, %v6114
      %v6117 = vshll.u32 %v6017, 16
      %v6119 = vrot.slane %v6117, 1
      %v6120 = vsel %vm756, %v6115, %v6119
      %v6122 = vshrl.u32 %v5959, 16
      %v6124 = vshll.u32 %v5959, 16
      %v6126 = vrot.slane %v6124, 1
      %v6127 = vor.u32 %v6122, %v6126
      %v6129 = vshll.u32 %v5968, 16
      %v6131 = vrot.slane %v6129, 1
      %v6132 = vsel %vm756, %v6127, %v6131
      %v6133 = vshrl.u32 %v6017, 16
      %v6135 = vor.u32 %v6133, %v6119
      %v6137 = vshll.u32 %v6020, 16
      %v6139 = vrot.slane %v6137, 1
      %v6140 = vsel %vm756, %v6135, %v6139
      %v6142 = vshrl.u32 %v5967, 16
      %v6144 = vshll.u32 %v5967, 16
      %v6146 = vrot.slane %v6144, 1
      %v6147 = vor.u32 %v6142, %v6146
      %v6149 = vshll.u32 %v5976, 16
      %v6151 = vrot.slane %v6149, 1
      %v6152 = vsel %vm756, %v6147, %v6151
      %v6153 = vshrl.u32 %v6020, 16
      %v6155 = vor.u32 %v6153, %v6139
      %v6157 = vshll.u32 %v6023, 16
      %v6159 = vrot.slane %v6157, 1
      %v6160 = vsel %vm756, %v6155, %v6159
      %v6161 = vshrl.u32 %v5810, 16
      %v6163 = vor.u32 %v6161, %v6095
      %v6165 = vshll.u32 %v5818, 16
      %v6167 = vrot.slane %v6165, 1
      %v6168 = vsel %vm756, %v6163, %v6167
      %v6169 = vshrl.u32 %v5960, 16
      %v6171 = vor.u32 %v6169, %v6107
      %v6172 = vsel %vm756, %v6171, %v6131
      %v6173 = vshrl.u32 %v5968, 16
      %v6175 = vor.u32 %v6173, %v6131
      %v6176 = vsel %vm756, %v6175, %v6151
      %v6177 = vshrl.u32 %v5976, 16
      %v6179 = vor.u32 %v6177, %v6151
      %v6181 = vshll.u32 %v5984, 16
      %v6183 = vrot.slane %v6181, 1
      %v6184 = vsel %vm756, %v6179, %v6183
      %v6185 = vshrl.u32 %v6023, 16
      %v6187 = vor.u32 %v6185, %v6159
      %v6189 = vshll.u32 %v6026, 16
      %v6191 = vrot.slane %v6189, 1
      %v6192 = vsel %vm756, %v6187, %v6191
      %v6193 = vshrl.u32 %v5818, 16
      %v6195 = vor.u32 %v6193, %v6167
      %v6197 = vshll.u32 %v5826, 16
      %v6199 = vrot.slane %v6197, 1
      %v6200 = vsel %vm756, %v6195, %v6199
      %v6201 = vshrl.u32 %v5984, 16
      %v6203 = vor.u32 %v6201, %v6183
      %v6205 = vshll.u32 %v5992, 16
      %v6207 = vrot.slane %v6205, 1
      %v6208 = vsel %vm756, %v6203, %v6207
      %v6209 = vshrl.u32 %v6026, 16
      %v6211 = vor.u32 %v6209, %v6191
      %v6213 = vshll.u32 %v6029, 16
      %v6215 = vrot.slane %v6213, 1
      %v6216 = vsel %vm756, %v6211, %v6215
      %v6217 = vshrl.u32 %v5826, 16
      %v6219 = vor.u32 %v6217, %v6199
      %v6221 = vshll.u32 %v5834, 16
      %v6223 = vrot.slane %v6221, 1
      %v6224 = vsel %vm756, %v6219, %v6223
      %v6225 = vshrl.u32 %v5992, 16
      %v6227 = vor.u32 %v6225, %v6207
      %v6229 = vshll.u32 %v6000, 16
      %v6231 = vrot.slane %v6229, 1
      %v6232 = vsel %vm756, %v6227, %v6231
      %v6233 = vshrl.u32 %v6029, 16
      %v6235 = vor.u32 %v6233, %v6215
      %v6237 = vshll.u32 %v6032, 16
      %v6239 = vrot.slane %v6237, 1
      %v6240 = vsel %vm756, %v6235, %v6239
      %v6241 = vshrl.u32 %v5834, 16
      %v6243 = vor.u32 %v6241, %v6223
      %v6245 = vshll.u32 %v5885, 16
      %v6247 = vrot.slane %v6245, 1
      %v6248 = vsel %vm756, %v6243, %v6247
      %v6249 = vshrl.u32 %v6000, 16
      %v6251 = vor.u32 %v6249, %v6231
      %v6253 = vshll.u32 %v6008, 16
      %v6255 = vrot.slane %v6253, 1
      %v6256 = vsel %vm756, %v6251, %v6255
      %v6257 = vshrl.u32 %v6032, 16
      %v6259 = vor.u32 %v6257, %v6239
      %v6261 = vshll.u32 %v6054, 16
      %v6263 = vrot.slane %v6261, 1
      %v6264 = vsel %vm756, %v6259, %v6263
      %v6265 = vshrl.u32 %v5885, 16
      %v6267 = vor.u32 %v6265, %v6247
      %v6269 = vshll.u32 %v5911, 16
      %v6271 = vrot.slane %v6269, 1
      %v6272 = vsel %vm756, %v6267, %v6271
      %v6273 = vshrl.u32 %v6008, 16
      %v6275 = vor.u32 %v6273, %v6255
      %v6277 = vshll.u32 %v6050, 16
      %v6279 = vrot.slane %v6277, 1
      %v6280 = vsel %vm756, %v6275, %v6279
      %v6281 = vshrl.u32 %v6054, 16
      %v6283 = vor.u32 %v6281, %v6263
      %v6285 = vshll.u32 %v6076, 16
      %v6287 = vrot.slane %v6285, 1
      %v6288 = vsel %vm756, %v6283, %v6287
      %v6289 = vshrl.u32 %v5911, 16
      %v6291 = vor.u32 %v6289, %v6271
      %v6293 = vshll.u32 %v5919, 16
      %v6295 = vrot.slane %v6293, 1
      %v6296 = vsel %vm756, %v6291, %v6295
      %v6298 = vshll.u32 %v6038, 16
      %v6300 = vrot.slane %v6298, 1
      %v6301 = vsel %vm756, %v6259, %v6300
      %v6303 = vshll.u32 %v6060, 16
      %v6305 = vrot.slane %v6303, 1
      %v6306 = vsel %vm756, %v6283, %v6305
      %v6307 = vshrl.u32 %v6050, 16
      %v6309 = vor.u32 %v6307, %v6279
      %v6311 = vshll.u32 %v6072, 16
      %v6313 = vrot.slane %v6311, 1
      %v6314 = vsel %vm756, %v6309, %v6313
      %v6315 = vshrl.u32 %v6076, 16
      %v6317 = vor.u32 %v6315, %v6287
      %v6319 = vshll.u32 %v6082, 16
      %v6321 = vrot.slane %v6319, 1
      %v6322 = vsel %vm756, %v6317, %v6321
      %v6323 = vshrl.u32 %v5919, 16
      %v6325 = vor.u32 %v6323, %v6295
      %v6327 = vshll.u32 %v5920, 16
      %v6329 = vrot.slane %v6327, 1
      %v6330 = vsel %vm756, %v6325, %v6329
      %v6332 = vshll.u32 %v6004, 16
      %v6334 = vrot.slane %v6332, 1
      %v6335 = vsel %vm756, %v6275, %v6334
      %v6336 = vshrl.u32 %v6038, 16
      %v6338 = vor.u32 %v6336, %v6300
      %v6340 = vshll.u32 %v6039, 16
      %v6342 = vrot.slane %v6340, 1
      %v6343 = vsel %vm756, %v6338, %v6342
      %v6345 = vshll.u32 %v6046, 16
      %v6347 = vrot.slane %v6345, 1
      %v6348 = vsel %vm756, %v6309, %v6347
      %v6349 = vshrl.u32 %v6060, 16
      %v6351 = vor.u32 %v6349, %v6305
      %v6353 = vshll.u32 %v6061, 16
      %v6355 = vrot.slane %v6353, 1
      %v6356 = vsel %vm756, %v6351, %v6355
      %v6357 = vshrl.u32 %v6072, 16
      %v6359 = vor.u32 %v6357, %v6313
      %v6361 = vshll.u32 %v6068, 16
      %v6363 = vrot.slane %v6361, 1
      %v6364 = vsel %vm756, %v6359, %v6363
      %v6365 = vshrl.u32 %v6082, 16
      %v6367 = vor.u32 %v6365, %v6321
      %v6369 = vshll.u32 %v6083, 16
      %v6371 = vrot.slane %v6369, 1
      %v6372 = vsel %vm756, %v6367, %v6371
      %v6423 = vld [vmem:[%s8] sm:$0xf]
      %v6424 = vld [vmem:[%s8 + $0x4] sm:$0xf]
      %v6425 = vld [vmem:[%s8 + $0x8] sm:$0xf]
      %v6426 = vld [vmem:[%s8 + $0xc] sm:$0xf]
      %v6427 = vld [vmem:[%s8 + $0x10] sm:$0xf]
      %v6428 = vld [vmem:[%s8 + $0x14] sm:$0xf]
      %v6429 = vld [vmem:[%s8 + $0x18] sm:$0xf]
      %v6430 = vld [vmem:[%s8 + $0x1c] sm:$0xf]
      %v6431 = vld [vmem:[%s8 + $0x20] sm:$0xf]
      %v6432 = vld [vmem:[%s8 + $0x24] sm:$0xf]
      %v6433 = vld [vmem:[%s8 + $0x28] sm:$0xf]
      %v6434 = vld [vmem:[%s8 + $0x2c] sm:$0xf]
      %v6435 = vld [vmem:[%s8 + $0x30] sm:$0xf]
      %v6436 = vld [vmem:[%s8 + $0x34] sm:$0xf]
      %v6437 = vld [vmem:[%s8 + $0x38] sm:$0xf]
      %v6438 = vld [vmem:[%s8 + $0x3c] sm:$0xf]
      %v6439 = vld [vmem:[%s8 + $0x40] sm:$0xf]
      %v6440 = vld [vmem:[%s8 + $0x44] sm:$0xf]
      %v6441 = vld [vmem:[%s8 + $0x48] sm:$0xf]
      %v6442 = vld [vmem:[%s8 + $0x4c] sm:$0xf]
      %v6443 = vld [vmem:[%s8 + $0x50] sm:$0xf]
      %v6444 = vld [vmem:[%s8 + $0x54] sm:$0xf]
      %v6445 = vld [vmem:[%s8 + $0x58] sm:$0xf]
      %v6446 = vld [vmem:[%s8 + $0x5c] sm:$0xf]
      %v6447 = vld [vmem:[%s8 + $0x60] sm:$0xf]
      %v6448 = vld [vmem:[%s8 + $0x64] sm:$0xf]
      %v6449 = vld [vmem:[%s8 + $0x68] sm:$0xf]
      %v6450 = vld [vmem:[%s8 + $0x6c] sm:$0xf]
      %v6451 = vld [vmem:[%s8 + $0x70] sm:$0xf]
      %v6452 = vld [vmem:[%s8 + $0x74] sm:$0xf]
      %v6453 = vld [vmem:[%s8 + $0x78] sm:$0xf]
      %v6454 = vld [vmem:[%s8 + $0x7c] sm:$0xf]
      %v6455 = vld [vmem:[%s8 + $0x80] sm:$0xf]
      %v6456 = vld [vmem:[%s8 + $0x84] sm:$0xf]
      %v6457 = vld [vmem:[%s8 + $0x88] sm:$0xf]
      %v6458 = vld [vmem:[%s8 + $0x8c] sm:$0xf]
      %v6459 = vld [vmem:[%s8 + $0x90] sm:$0xf]
      %v6460 = vld [vmem:[%s8 + $0x94] sm:$0xf]
      %v6461 = vld [vmem:[%s8 + $0x98] sm:$0xf]
      %v6462 = vld [vmem:[%s8 + $0x9c] sm:$0xf]
      %v6463 = vld [vmem:[%s8 + $0xa0] sm:$0xf]
      %v6464 = vld [vmem:[%s8 + $0xa4] sm:$0xf]
      %v6465 = vld [vmem:[%s8 + $0xa8] sm:$0xf]
      %v6466 = vld [vmem:[%s8 + $0xac] sm:$0xf]
      %v6467 = vld [vmem:[%s8 + $0xb0] sm:$0xf]
      %v6468 = vld [vmem:[%s8 + $0xb4] sm:$0xf]
      %v6469 = vld [vmem:[%s8 + $0xb8] sm:$0xf]
      %v6470 = vld [vmem:[%s8 + $0xbc] sm:$0xf]
      %v6471 = vld [vmem:[%s8 + $0xc0] sm:$0xf]
      %v6472 = vld [vmem:[%s8 + $0xc4] sm:$0xf]
      %v6473 = vld [vmem:[%s8 + $0xc8] sm:$0xf]
      %v6474 = vld [vmem:[%s8 + $0xcc] sm:$0xf]
      %v6475 = vld [vmem:[%s8 + $0xd0] sm:$0xf]
      %v6476 = vld [vmem:[%s8 + $0xd4] sm:$0xf]
      %v6477 = vld [vmem:[%s8 + $0xd8] sm:$0xf]
      %v6478 = vld [vmem:[%s8 + $0xdc] sm:$0xf]
      %v6479 = vld [vmem:[%s8 + $0xe0] sm:$0xf]
      %v6480 = vld [vmem:[%s8 + $0xe4] sm:$0xf]
      %v6481 = vld [vmem:[%s8 + $0xe8] sm:$0xf]
      %v6482 = vld [vmem:[%s8 + $0xec] sm:$0xf]
      %v6483 = vld [vmem:[%s8 + $0xf0] sm:$0xf]
      %v6484 = vld [vmem:[%s8 + $0xf4] sm:$0xf]
      %v6485 = vld [vmem:[%s8 + $0xf8] sm:$0xf]
      %v6486 = vld [vmem:[%s8 + $0xfc] sm:$0xf]
      %v6487 = vld [vmem:[%s8 + $0x100] sm:$0xf]
      %v6488 = vld [vmem:[%s8 + $0x104] sm:$0xf]
      %v6489 = vld [vmem:[%s8 + $0x108] sm:$0xf]
      %v6490 = vld [vmem:[%s8 + $0x10c] sm:$0xf]
      %v6491 = vld [vmem:[%s8 + $0x110] sm:$0xf]
      %v6492 = vld [vmem:[%s8 + $0x114] sm:$0xf]
      %v6493 = vld [vmem:[%s8 + $0x118] sm:$0xf]
      %v6494 = vld [vmem:[%s8 + $0x11c] sm:$0xf]
      %v6495 = vld [vmem:[%s8 + $0x120] sm:$0xf]
      %v6496 = vld [vmem:[%s8 + $0x124] sm:$0xf]
      %v6497 = vld [vmem:[%s8 + $0x128] sm:$0xf]
      %v6498 = vld [vmem:[%s8 + $0x12c] sm:$0xf]
      %v6499 = vld [vmem:[%s8 + $0x130] sm:$0xf]
      %v6500 = vld [vmem:[%s8 + $0x134] sm:$0xf]
      %v6501 = vld [vmem:[%s8 + $0x138] sm:$0xf]
      %v6502 = vld [vmem:[%s8 + $0x13c] sm:$0xf]
      %v6503 = vld [vmem:[%s8 + $0x140] sm:$0xf]
      %v6504 = vld [vmem:[%s8 + $0x144] sm:$0xf]
      %v6505 = vld [vmem:[%s8 + $0x148] sm:$0xf]
      %v6506 = vld [vmem:[%s8 + $0x14c] sm:$0xf]
      %v6507 = vld [vmem:[%s8 + $0x150] sm:$0xf]
      %v6508 = vld [vmem:[%s8 + $0x154] sm:$0xf]
      %v6509 = vld [vmem:[%s8 + $0x158] sm:$0xf]
      %v6510 = vld [vmem:[%s8 + $0x15c] sm:$0xf]
      %v6511 = vld [vmem:[%s8 + $0x160] sm:$0xf]
      %v6512 = vld [vmem:[%s8 + $0x164] sm:$0xf]
      %v6513 = vld [vmem:[%s8 + $0x168] sm:$0xf]
      %v6514 = vld [vmem:[%s8 + $0x16c] sm:$0xf]
      %v6515 = vld [vmem:[%s8 + $0x170] sm:$0xf]
      %v6516 = vld [vmem:[%s8 + $0x174] sm:$0xf]
      %v6517 = vld [vmem:[%s8 + $0x178] sm:$0xf]
      %v6518 = vld [vmem:[%s8 + $0x17c] sm:$0xf]
      %v6519 = vld [vmem:[%s8 + $0x180] sm:$0xf]
      %v6520 = vld [vmem:[%s8 + $0x184] sm:$0xf]
      %v6521 = vld [vmem:[%s8 + $0x188] sm:$0xf]
      %v6522 = vld [vmem:[%s8 + $0x18c] sm:$0xf]
      %v6523 = vld [vmem:[%s8 + $0x190] sm:$0xf]
      %v6524 = vld [vmem:[%s8 + $0x194] sm:$0xf]
      %v6525 = vld [vmem:[%s8 + $0x198] sm:$0xf]
      %v6526 = vld [vmem:[%s8 + $0x19c] sm:$0xf]
      %v6527 = vld [vmem:[%s8 + $0x1a0] sm:$0xf]
      %v6528 = vld [vmem:[%s8 + $0x1a4] sm:$0xf]
      %v6529 = vld [vmem:[%s8 + $0x1a8] sm:$0xf]
      %v6530 = vld [vmem:[%s8 + $0x1ac] sm:$0xf]
      %v6531 = vld [vmem:[%s8 + $0x1b0] sm:$0xf]
      %v6532 = vld [vmem:[%s8 + $0x1b4] sm:$0xf]
      %v6533 = vld [vmem:[%s8 + $0x1b8] sm:$0xf]
      %v6534 = vld [vmem:[%s8 + $0x1bc] sm:$0xf]
      %v6535 = vld [vmem:[%s8 + $0x1c0] sm:$0xf]
      %v6536 = vld [vmem:[%s8 + $0x1c4] sm:$0xf]
      %v6537 = vld [vmem:[%s8 + $0x1c8] sm:$0xf]
      %v6538 = vld [vmem:[%s8 + $0x1cc] sm:$0xf]
      %v6539 = vld [vmem:[%s8 + $0x1d0] sm:$0xf]
      %v6540 = vld [vmem:[%s8 + $0x1d4] sm:$0xf]
      %v6541 = vld [vmem:[%s8 + $0x1d8] sm:$0xf]
      %v6542 = vld [vmem:[%s8 + $0x1dc] sm:$0xf]
      %v6543 = vld [vmem:[%s8 + $0x1e0] sm:$0xf]
      %v6544 = vld [vmem:[%s8 + $0x1e4] sm:$0xf]
      %v6545 = vld [vmem:[%s8 + $0x1e8] sm:$0xf]
      %v6546 = vld [vmem:[%s8 + $0x1ec] sm:$0xf]
      %v6547 = vld [vmem:[%s8 + $0x1f0] sm:$0xf]
      %v6548 = vld [vmem:[%s8 + $0x1f4] sm:$0xf]
      %v6549 = vld [vmem:[%s8 + $0x1f8] sm:$0xf]
      %v6550 = vld [vmem:[%s8 + $0x1fc] sm:$0xf]
      %v6551 = vld [vmem:[%s8 + $0x200] sm:$0xf]
      %v6552 = vld [vmem:[%s8 + $0x204] sm:$0xf]
      %v6553 = vld [vmem:[%s8 + $0x208] sm:$0xf]
      %v6554 = vld [vmem:[%s8 + $0x20c] sm:$0xf]
      %v6555 = vld [vmem:[%s8 + $0x210] sm:$0xf]
      %v6556 = vld [vmem:[%s8 + $0x214] sm:$0xf]
      %v6557 = vld [vmem:[%s8 + $0x218] sm:$0xf]
      %v6558 = vld [vmem:[%s8 + $0x21c] sm:$0xf]
      %v6559 = vld [vmem:[%s8 + $0x220] sm:$0xf]
      %v6560 = vld [vmem:[%s8 + $0x224] sm:$0xf]
      %v6561 = vld [vmem:[%s8 + $0x228] sm:$0xf]
      %v6562 = vld [vmem:[%s8 + $0x22c] sm:$0xf]
      %v6563 = vld [vmem:[%s8 + $0x230] sm:$0xf]
      %v6564 = vld [vmem:[%s8 + $0x234] sm:$0xf]
      %v6565 = vld [vmem:[%s8 + $0x238] sm:$0xf]
      %v6566 = vld [vmem:[%s8 + $0x23c] sm:$0xf]
      %v6567 = vld [vmem:[%s8 + $0x240] sm:$0xf]
      %v6568 = vld [vmem:[%s8 + $0x244] sm:$0xf]
      %v6569 = vld [vmem:[%s8 + $0x248] sm:$0xf]
      %v6570 = vld [vmem:[%s8 + $0x24c] sm:$0xf]
      %v6571 = vld [vmem:[%s8 + $0x250] sm:$0xf]
      %v6572 = vld [vmem:[%s8 + $0x254] sm:$0xf]
      %v6573 = vld [vmem:[%s8 + $0x258] sm:$0xf]
      %v6574 = vld [vmem:[%s8 + $0x25c] sm:$0xf]
      %v6575 = vld [vmem:[%s8 + $0x260] sm:$0xf]
      %v6576 = vld [vmem:[%s8 + $0x264] sm:$0xf]
      %v6577 = vld [vmem:[%s8 + $0x268] sm:$0xf]
      %v6578 = vld [vmem:[%s8 + $0x26c] sm:$0xf]
      %v6579 = vld [vmem:[%s8 + $0x270] sm:$0xf]
      %v6580 = vld [vmem:[%s8 + $0x274] sm:$0xf]
      %v6581 = vld [vmem:[%s8 + $0x278] sm:$0xf]
      %v6582 = vld [vmem:[%s8 + $0x27c] sm:$0xf]
      %v6583 = vld [vmem:[%s8 + $0x280] sm:$0xf]
      %v6584 = vld [vmem:[%s8 + $0x284] sm:$0xf]
      %v6585 = vld [vmem:[%s8 + $0x288] sm:$0xf]
      %v6586 = vld [vmem:[%s8 + $0x28c] sm:$0xf]
      %v6587 = vld [vmem:[%s8 + $0x290] sm:$0xf]
      %v6588 = vld [vmem:[%s8 + $0x294] sm:$0xf]
      %v6589 = vld [vmem:[%s8 + $0x298] sm:$0xf]
      %v6590 = vld [vmem:[%s8 + $0x29c] sm:$0xf]
      %v6591 = vld [vmem:[%s8 + $0x2a0] sm:$0xf]
      %v6592 = vld [vmem:[%s8 + $0x2a4] sm:$0xf]
      %v6593 = vld [vmem:[%s8 + $0x2a8] sm:$0xf]
      %v6594 = vld [vmem:[%s8 + $0x2ac] sm:$0xf]
      %v6595 = vld [vmem:[%s8 + $0x2b0] sm:$0xf]
      %v6596 = vld [vmem:[%s8 + $0x2b4] sm:$0xf]
      %v6597 = vld [vmem:[%s8 + $0x2b8] sm:$0xf]
      %v6598 = vld [vmem:[%s8 + $0x2bc] sm:$0xf]
      %v6599 = vld [vmem:[%s8 + $0x2c0] sm:$0xf]
      %v6600 = vld [vmem:[%s8 + $0x2c4] sm:$0xf]
      %v6601 = vld [vmem:[%s8 + $0x2c8] sm:$0xf]
      %v6602 = vld [vmem:[%s8 + $0x2cc] sm:$0xf]
      %v6603 = vld [vmem:[%s8 + $0x2d0] sm:$0xf]
      %v6604 = vld [vmem:[%s8 + $0x2d4] sm:$0xf]
      %v6605 = vld [vmem:[%s8 + $0x2d8] sm:$0xf]
      %v6606 = vld [vmem:[%s8 + $0x2dc] sm:$0xf]
      %v6607 = vld [vmem:[%s8 + $0x2e0] sm:$0xf]
      %v6608 = vld [vmem:[%s8 + $0x2e4] sm:$0xf]
      %v6609 = vld [vmem:[%s8 + $0x2e8] sm:$0xf]
      %v6610 = vld [vmem:[%s8 + $0x2ec] sm:$0xf]
      %v6611 = vld [vmem:[%s8 + $0x2f0] sm:$0xf]
      %v6612 = vld [vmem:[%s8 + $0x2f4] sm:$0xf]
      %v6613 = vld [vmem:[%s8 + $0x2f8] sm:$0xf]
      %v6614 = vld [vmem:[%s8 + $0x2fc] sm:$0xf]
      %v6615 = vld [vmem:[%s8 + $0x300] sm:$0xf]
      %v6616 = vld [vmem:[%s8 + $0x304] sm:$0xf]
      %v6617 = vld [vmem:[%s8 + $0x308] sm:$0xf]
      %v6618 = vld [vmem:[%s8 + $0x30c] sm:$0xf]
      %v6619 = vld [vmem:[%s8 + $0x310] sm:$0xf]
      %v6620 = vld [vmem:[%s8 + $0x314] sm:$0xf]
      %v6621 = vld [vmem:[%s8 + $0x318] sm:$0xf]
      %v6622 = vld [vmem:[%s8 + $0x31c] sm:$0xf]
      %v6623 = vld [vmem:[%s8 + $0x320] sm:$0xf]
      %v6624 = vld [vmem:[%s8 + $0x324] sm:$0xf]
      %v6625 = vld [vmem:[%s8 + $0x328] sm:$0xf]
      %v6626 = vld [vmem:[%s8 + $0x32c] sm:$0xf]
      %v6627 = vld [vmem:[%s8 + $0x330] sm:$0xf]
      %v6628 = vld [vmem:[%s8 + $0x334] sm:$0xf]
      %v6629 = vld [vmem:[%s8 + $0x338] sm:$0xf]
      %v6630 = vld [vmem:[%s8 + $0x33c] sm:$0xf]
      %v6631 = vld [vmem:[%s8 + $0x340] sm:$0xf]
      %v6632 = vld [vmem:[%s8 + $0x344] sm:$0xf]
      %v6633 = vld [vmem:[%s8 + $0x348] sm:$0xf]
      %v6634 = vld [vmem:[%s8 + $0x34c] sm:$0xf]
      %v6635 = vld [vmem:[%s8 + $0x350] sm:$0xf]
      %v6636 = vld [vmem:[%s8 + $0x354] sm:$0xf]
      %v6637 = vld [vmem:[%s8 + $0x358] sm:$0xf]
      %v6638 = vld [vmem:[%s8 + $0x35c] sm:$0xf]
      %v6639 = vld [vmem:[%s8 + $0x360] sm:$0xf]
      %v6640 = vld [vmem:[%s8 + $0x364] sm:$0xf]
      %v6641 = vld [vmem:[%s8 + $0x368] sm:$0xf]
      %v6642 = vld [vmem:[%s8 + $0x36c] sm:$0xf]
      %v6643 = vld [vmem:[%s8 + $0x370] sm:$0xf]
      %v6644 = vld [vmem:[%s8 + $0x374] sm:$0xf]
      %v6645 = vld [vmem:[%s8 + $0x378] sm:$0xf]
      %v6646 = vld [vmem:[%s8 + $0x37c] sm:$0xf]
      %v6647 = vld [vmem:[%s8 + $0x380] sm:$0xf]
      %v6648 = vld [vmem:[%s8 + $0x384] sm:$0xf]
      %v6649 = vld [vmem:[%s8 + $0x388] sm:$0xf]
      %v6650 = vld [vmem:[%s8 + $0x38c] sm:$0xf]
      %v6651 = vld [vmem:[%s8 + $0x390] sm:$0xf]
      %v6652 = vld [vmem:[%s8 + $0x394] sm:$0xf]
      %v6653 = vld [vmem:[%s8 + $0x398] sm:$0xf]
      %v6654 = vld [vmem:[%s8 + $0x39c] sm:$0xf]
      %v6655 = vld [vmem:[%s8 + $0x3a0] sm:$0xf]
      %v6656 = vld [vmem:[%s8 + $0x3a4] sm:$0xf]
      %v6657 = vld [vmem:[%s8 + $0x3a8] sm:$0xf]
      %v6658 = vld [vmem:[%s8 + $0x3ac] sm:$0xf]
      %v6659 = vld [vmem:[%s8 + $0x3b0] sm:$0xf]
      %v6660 = vld [vmem:[%s8 + $0x3b4] sm:$0xf]
      %v6661 = vld [vmem:[%s8 + $0x3b8] sm:$0xf]
      %v6662 = vld [vmem:[%s8 + $0x3bc] sm:$0xf]
      %v6663 = vld [vmem:[%s8 + $0x3c0] sm:$0xf]
      %v6664 = vld [vmem:[%s8 + $0x3c4] sm:$0xf]
      %v6665 = vld [vmem:[%s8 + $0x3c8] sm:$0xf]
      %v6666 = vld [vmem:[%s8 + $0x3cc] sm:$0xf]
      %v6667 = vld [vmem:[%s8 + $0x3d0] sm:$0xf]
      %v6668 = vld [vmem:[%s8 + $0x3d4] sm:$0xf]
      %v6669 = vld [vmem:[%s8 + $0x3d8] sm:$0xf]
      %v6670 = vld [vmem:[%s8 + $0x3dc] sm:$0xf]
      %v6671 = vld [vmem:[%s8 + $0x3e0] sm:$0xf]
      %v6672 = vld [vmem:[%s8 + $0x3e4] sm:$0xf]
      %v6673 = vld [vmem:[%s8 + $0x3e8] sm:$0xf]
      %v6674 = vld [vmem:[%s8 + $0x3ec] sm:$0xf]
      %v6675 = vld [vmem:[%s8 + $0x3f0] sm:$0xf]
      %v6676 = vld [vmem:[%s8 + $0x3f4] sm:$0xf]
      %v6677 = vld [vmem:[%s8 + $0x3f8] sm:$0xf]
      %v6678 = vld [vmem:[%s8 + $0x3fc] sm:$0xf]
      %v6679 = vld [vmem:[%s8 + $0x400] sm:$0xf]
      %v6680 = vld [vmem:[%s8 + $0x404] sm:$0xf]
      %v6681 = vld [vmem:[%s8 + $0x408] sm:$0xf]
      %v6682 = vld [vmem:[%s8 + $0x40c] sm:$0xf]
      %v6683 = vld [vmem:[%s8 + $0x410] sm:$0xf]
      %v6684 = vld [vmem:[%s8 + $0x414] sm:$0xf]
      %v6685 = vld [vmem:[%s8 + $0x418] sm:$0xf]
      %v6686 = vld [vmem:[%s8 + $0x41c] sm:$0xf]
      %v6687 = vld [vmem:[%s8 + $0x420] sm:$0xf]
      %v6688 = vld [vmem:[%s8 + $0x424] sm:$0xf]
      %v6689 = vld [vmem:[%s8 + $0x428] sm:$0xf]
      %v6690 = vld [vmem:[%s8 + $0x42c] sm:$0xf]
      %v6691 = vld [vmem:[%s8 + $0x430] sm:$0xf]
      %v6692 = vld [vmem:[%s8 + $0x434] sm:$0xf]
      %v6693 = vld [vmem:[%s8 + $0x438] sm:$0xf]
      %v6694 = vld [vmem:[%s8 + $0x43c] sm:$0xf]
      %v6695 = vld [vmem:[%s8 + $0x440] sm:$0xf]
      %v6696 = vld [vmem:[%s8 + $0x444] sm:$0xf]
      %v6697 = vld [vmem:[%s8 + $0x448] sm:$0xf]
      %v6698 = vld [vmem:[%s8 + $0x44c] sm:$0xf]
      %v6699 = vld [vmem:[%s8 + $0x450] sm:$0xf]
      %v6700 = vld [vmem:[%s8 + $0x454] sm:$0xf]
      %v6701 = vld [vmem:[%s8 + $0x458] sm:$0xf]
      %v6702 = vld [vmem:[%s8 + $0x45c] sm:$0xf]
      %v6703 = vld [vmem:[%s8 + $0x460] sm:$0xf]
      %v6704 = vld [vmem:[%s8 + $0x464] sm:$0xf]
      %v6705 = vld [vmem:[%s8 + $0x468] sm:$0xf]
      %v6706 = vld [vmem:[%s8 + $0x46c] sm:$0xf]
      %v6707 = vld [vmem:[%s8 + $0x470] sm:$0xf]
      %v6708 = vld [vmem:[%s8 + $0x474] sm:$0xf]
      %v6709 = vld [vmem:[%s8 + $0x478] sm:$0xf]
      %v6710 = vld [vmem:[%s8 + $0x47c] sm:$0xf]
      %v6711 = vld [vmem:[%s8 + $0x480] sm:$0xf]
      %v6712 = vld [vmem:[%s8 + $0x484] sm:$0xf]
      %v6713 = vld [vmem:[%s8 + $0x488] sm:$0xf]
      %v6714 = vld [vmem:[%s8 + $0x48c] sm:$0xf]
      %v6715 = vld [vmem:[%s8 + $0x490] sm:$0xf]
      %v6716 = vld [vmem:[%s8 + $0x494] sm:$0xf]
      %v6717 = vld [vmem:[%s8 + $0x498] sm:$0xf]
      %v6718 = vld [vmem:[%s8 + $0x49c] sm:$0xf]
      %v6719 = vld [vmem:[%s8 + $0x4a0] sm:$0xf]
      %v6720 = vld [vmem:[%s8 + $0x4a4] sm:$0xf]
      %v6721 = vld [vmem:[%s8 + $0x4a8] sm:$0xf]
      %v6722 = vld [vmem:[%s8 + $0x4ac] sm:$0xf]
      %v6723 = vld [vmem:[%s8 + $0x4b0] sm:$0xf]
      %v6724 = vld [vmem:[%s8 + $0x4b4] sm:$0xf]
      %v6725 = vld [vmem:[%s8 + $0x4b8] sm:$0xf]
      %v6726 = vld [vmem:[%s8 + $0x4bc] sm:$0xf]
      %v6727 = vld [vmem:[%s8 + $0x4c0] sm:$0xf]
      %v6728 = vld [vmem:[%s8 + $0x4c4] sm:$0xf]
      %v6729 = vld [vmem:[%s8 + $0x4c8] sm:$0xf]
      %v6730 = vld [vmem:[%s8 + $0x4cc] sm:$0xf]
      %v6731 = vld [vmem:[%s8 + $0x4d0] sm:$0xf]
      %v6732 = vld [vmem:[%s8 + $0x4d4] sm:$0xf]
      %v6733 = vld [vmem:[%s8 + $0x4d8] sm:$0xf]
      %v6734 = vld [vmem:[%s8 + $0x4dc] sm:$0xf]
      %v6735 = vld [vmem:[%s8 + $0x4e0] sm:$0xf]
      %v6736 = vld [vmem:[%s8 + $0x4e4] sm:$0xf]
      %v6737 = vld [vmem:[%s8 + $0x4e8] sm:$0xf]
      %v6738 = vld [vmem:[%s8 + $0x4ec] sm:$0xf]
      %v6739 = vld [vmem:[%s8 + $0x4f0] sm:$0xf]
      %v6740 = vld [vmem:[%s8 + $0x4f4] sm:$0xf]
      %v6741 = vld [vmem:[%s8 + $0x4f8] sm:$0xf]
      %v6742 = vld [vmem:[%s8 + $0x4fc] sm:$0xf]
      %v6743 = vld [vmem:[%s8 + $0x500] sm:$0xf]
      %v6744 = vld [vmem:[%s8 + $0x504] sm:$0xf]
      %v6745 = vld [vmem:[%s8 + $0x508] sm:$0xf]
      %v6746 = vld [vmem:[%s8 + $0x50c] sm:$0xf]
      %v6747 = vld [vmem:[%s8 + $0x510] sm:$0xf]
      %v6748 = vld [vmem:[%s8 + $0x514] sm:$0xf]
      %v6749 = vld [vmem:[%s8 + $0x518] sm:$0xf]
      %v6750 = vld [vmem:[%s8 + $0x51c] sm:$0xf]
      %v6751 = vld [vmem:[%s8 + $0x520] sm:$0xf]
      %v6752 = vld [vmem:[%s8 + $0x524] sm:$0xf]
      %v6753 = vld [vmem:[%s8 + $0x528] sm:$0xf]
      %v6754 = vld [vmem:[%s8 + $0x52c] sm:$0xf]
      %v6755 = vld [vmem:[%s8 + $0x530] sm:$0xf]
      %v6756 = vld [vmem:[%s8 + $0x534] sm:$0xf]
      %v6757 = vld [vmem:[%s8 + $0x538] sm:$0xf]
      %v6758 = vld [vmem:[%s8 + $0x53c] sm:$0xf]
      %v6759 = vld [vmem:[%s8 + $0x540] sm:$0xf]
      %v6760 = vld [vmem:[%s8 + $0x544] sm:$0xf]
      %v6761 = vld [vmem:[%s8 + $0x548] sm:$0xf]
      %v6762 = vld [vmem:[%s8 + $0x54c] sm:$0xf]
      %v6763 = vld [vmem:[%s8 + $0x550] sm:$0xf]
      %v6764 = vld [vmem:[%s8 + $0x554] sm:$0xf]
      %v6765 = vld [vmem:[%s8 + $0x558] sm:$0xf]
      %v6766 = vld [vmem:[%s8 + $0x55c] sm:$0xf]
      %v6767 = vld [vmem:[%s8 + $0x560] sm:$0xf]
      %v6768 = vld [vmem:[%s8 + $0x564] sm:$0xf]
      %v6769 = vld [vmem:[%s8 + $0x568] sm:$0xf]
      %v6770 = vld [vmem:[%s8 + $0x56c] sm:$0xf]
      %v6771 = vld [vmem:[%s8 + $0x570] sm:$0xf]
      %v6772 = vld [vmem:[%s8 + $0x574] sm:$0xf]
      %v6773 = vld [vmem:[%s8 + $0x578] sm:$0xf]
      %v6774 = vld [vmem:[%s8 + $0x57c] sm:$0xf]
      %v6775 = vld [vmem:[%s8 + $0x580] sm:$0xf]
      %v6776 = vld [vmem:[%s8 + $0x584] sm:$0xf]
      %v6777 = vld [vmem:[%s8 + $0x588] sm:$0xf]
      %v6778 = vld [vmem:[%s8 + $0x58c] sm:$0xf]
      %v6779 = vld [vmem:[%s8 + $0x590] sm:$0xf]
      %v6780 = vld [vmem:[%s8 + $0x594] sm:$0xf]
      %v6781 = vld [vmem:[%s8 + $0x598] sm:$0xf]
      %v6782 = vld [vmem:[%s8 + $0x59c] sm:$0xf]
      %v6783 = vld [vmem:[%s8 + $0x5a0] sm:$0xf]
      %v6784 = vld [vmem:[%s8 + $0x5a4] sm:$0xf]
      %v6785 = vld [vmem:[%s8 + $0x5a8] sm:$0xf]
      %v6786 = vld [vmem:[%s8 + $0x5ac] sm:$0xf]
      %v6787 = vld [vmem:[%s8 + $0x5b0] sm:$0xf]
      %v6788 = vld [vmem:[%s8 + $0x5b4] sm:$0xf]
      %v6789 = vld [vmem:[%s8 + $0x5b8] sm:$0xf]
      %v6790 = vld [vmem:[%s8 + $0x5bc] sm:$0xf]
      %v6791 = vld [vmem:[%s8 + $0x5c0] sm:$0xf]
      %v6792 = vld [vmem:[%s8 + $0x5c4] sm:$0xf]
      %v6793 = vld [vmem:[%s8 + $0x5c8] sm:$0xf]
      %v6794 = vld [vmem:[%s8 + $0x5cc] sm:$0xf]
      %v6795 = vld [vmem:[%s8 + $0x5d0] sm:$0xf]
      %v6796 = vld [vmem:[%s8 + $0x5d4] sm:$0xf]
      %v6797 = vld [vmem:[%s8 + $0x5d8] sm:$0xf]
      %v6798 = vld [vmem:[%s8 + $0x5dc] sm:$0xf]
      %v6799 = vld [vmem:[%s8 + $0x5e0] sm:$0xf]
      %v6800 = vld [vmem:[%s8 + $0x5e4] sm:$0xf]
      %v6801 = vld [vmem:[%s8 + $0x5e8] sm:$0xf]
      %v6802 = vld [vmem:[%s8 + $0x5ec] sm:$0xf]
      %v6803 = vld [vmem:[%s8 + $0x5f0] sm:$0xf]
      %v6804 = vld [vmem:[%s8 + $0x5f4] sm:$0xf]
      %v6805 = vld [vmem:[%s8 + $0x5f8] sm:$0xf]
      %v6806 = vld [vmem:[%s8 + $0x5fc] sm:$0xf]
      %v6807 = vld [vmem:[%s8 + $0x600] sm:$0xf]
      %v6808 = vld [vmem:[%s8 + $0x604] sm:$0xf]
      %v6809 = vld [vmem:[%s8 + $0x608] sm:$0xf]
      %v6810 = vld [vmem:[%s8 + $0x60c] sm:$0xf]
      %v6811 = vld [vmem:[%s8 + $0x610] sm:$0xf]
      %v6812 = vld [vmem:[%s8 + $0x614] sm:$0xf]
      %v6813 = vld [vmem:[%s8 + $0x618] sm:$0xf]
      %v6814 = vld [vmem:[%s8 + $0x61c] sm:$0xf]
      %v6815 = vld [vmem:[%s8 + $0x620] sm:$0xf]
      %v6816 = vld [vmem:[%s8 + $0x624] sm:$0xf]
      %v6817 = vld [vmem:[%s8 + $0x628] sm:$0xf]
      %v6818 = vld [vmem:[%s8 + $0x62c] sm:$0xf]
      %v6819 = vld [vmem:[%s8 + $0x630] sm:$0xf]
      %v6820 = vld [vmem:[%s8 + $0x634] sm:$0xf]
      %v6821 = vld [vmem:[%s8 + $0x638] sm:$0xf]
      %v6822 = vld [vmem:[%s8 + $0x63c] sm:$0xf]
      %v6823 = vld [vmem:[%s8 + $0x640] sm:$0xf]
      %v6824 = vld [vmem:[%s8 + $0x644] sm:$0xf]
      %v6825 = vld [vmem:[%s8 + $0x648] sm:$0xf]
      %v6826 = vld [vmem:[%s8 + $0x64c] sm:$0xf]
      %v6827 = vld [vmem:[%s8 + $0x650] sm:$0xf]
      %v6828 = vld [vmem:[%s8 + $0x654] sm:$0xf]
      %v6829 = vld [vmem:[%s8 + $0x658] sm:$0xf]
      %v6830 = vld [vmem:[%s8 + $0x65c] sm:$0xf]
      %v6831 = vld [vmem:[%s8 + $0x660] sm:$0xf]
      %v6832 = vld [vmem:[%s8 + $0x664] sm:$0xf]
      %v6833 = vld [vmem:[%s8 + $0x668] sm:$0xf]
      %v6834 = vld [vmem:[%s8 + $0x66c] sm:$0xf]
      %v6835 = vld [vmem:[%s8 + $0x670] sm:$0xf]
      %v6836 = vld [vmem:[%s8 + $0x674] sm:$0xf]
      %v6837 = vld [vmem:[%s8 + $0x678] sm:$0xf]
      %v6838 = vld [vmem:[%s8 + $0x67c] sm:$0xf]
      %v6839 = vld [vmem:[%s8 + $0x680] sm:$0xf]
      %v6840 = vld [vmem:[%s8 + $0x684] sm:$0xf]
      %v6841 = vld [vmem:[%s8 + $0x688] sm:$0xf]
      %v6842 = vld [vmem:[%s8 + $0x68c] sm:$0xf]
      %v6843 = vld [vmem:[%s8 + $0x690] sm:$0xf]
      %v6844 = vld [vmem:[%s8 + $0x694] sm:$0xf]
      %v6845 = vld [vmem:[%s8 + $0x698] sm:$0xf]
      %v6846 = vld [vmem:[%s8 + $0x69c] sm:$0xf]
      %v6847 = vld [vmem:[%s8 + $0x6a0] sm:$0xf]
      %v6848 = vld [vmem:[%s8 + $0x6a4] sm:$0xf]
      %v6849 = vld [vmem:[%s8 + $0x6a8] sm:$0xf]
      %v6850 = vld [vmem:[%s8 + $0x6ac] sm:$0xf]
      %v6851 = vld [vmem:[%s8 + $0x6b0] sm:$0xf]
      %v6852 = vld [vmem:[%s8 + $0x6b4] sm:$0xf]
      %v6853 = vld [vmem:[%s8 + $0x6b8] sm:$0xf]
      %v6854 = vld [vmem:[%s8 + $0x6bc] sm:$0xf]
      %v7287 = vunpack.c.l.b16 %v6423
      %v7288 = vunpack.c.l.b16 %v6424
      %v7289 = vunpack.c.l.b16 %v6425
      %v7290 = vunpack.c.l.b16 %v6426
      %v7291 = vunpack.c.l.b16 %v6427
      %v7292 = vunpack.c.l.b16 %v6428
      %v7293 = vunpack.c.l.b16 %v6429
      %v7294 = vunpack.c.l.b16 %v6430
      %v7295 = vunpack.c.l.b16 %v6431
      %v7296 = vunpack.c.l.b16 %v6432
      %v7297 = vunpack.c.l.b16 %v6433
      %v7298 = vunpack.c.l.b16 %v6434
      %v7299 = vunpack.c.l.b16 %v6435
      %v7300 = vunpack.c.l.b16 %v6436
      %v7301 = vunpack.c.l.b16 %v6437
      %v7302 = vunpack.c.l.b16 %v6438
      %v7303 = vunpack.c.l.b16 %v6439
      %v7304 = vunpack.c.l.b16 %v6440
      %v7305 = vunpack.c.l.b16 %v6441
      %v7306 = vunpack.c.l.b16 %v6442
      %v7307 = vunpack.c.l.b16 %v6443
      %v7308 = vunpack.c.l.b16 %v6444
      %v7309 = vunpack.c.l.b16 %v6445
      %v7310 = vunpack.c.l.b16 %v6446
      %v7311 = vunpack.c.l.b16 %v6447
      %v7312 = vunpack.c.l.b16 %v6448
      %v7313 = vunpack.c.l.b16 %v6449
      %v7314 = vunpack.c.l.b16 %v6450
      %v7315 = vunpack.c.l.b16 %v6451
      %v7316 = vunpack.c.l.b16 %v6452
      %v7317 = vunpack.c.l.b16 %v6453
      %v7318 = vunpack.c.l.b16 %v6454
      %v7319 = vunpack.c.l.b16 %v6455
      %v7320 = vunpack.c.l.b16 %v6456
      %v7321 = vunpack.c.l.b16 %v6457
      %v7322 = vunpack.c.l.b16 %v6458
      %v7323 = vunpack.c.l.b16 %v6459
      %v7324 = vunpack.c.l.b16 %v6460
      %v7325 = vunpack.c.l.b16 %v6461
      %v7326 = vunpack.c.l.b16 %v6462
      %v7327 = vunpack.c.l.b16 %v6463
      %v7328 = vunpack.c.l.b16 %v6464
      %v7329 = vunpack.c.l.b16 %v6465
      %v7330 = vunpack.c.l.b16 %v6466
      %v7331 = vunpack.c.l.b16 %v6467
      %v7332 = vunpack.c.l.b16 %v6468
      %v7333 = vunpack.c.l.b16 %v6469
      %v7334 = vunpack.c.l.b16 %v6470
      %v7335 = vunpack.c.l.b16 %v6471
      %v7336 = vunpack.c.l.b16 %v6472
      %v7337 = vunpack.c.l.b16 %v6473
      %v7338 = vunpack.c.l.b16 %v6474
      %v7339 = vunpack.c.l.b16 %v6475
      %v7340 = vunpack.c.l.b16 %v6476
      %v7341 = vunpack.c.l.b16 %v6477
      %v7342 = vunpack.c.l.b16 %v6478
      %v7343 = vunpack.c.l.b16 %v6479
      %v7344 = vunpack.c.l.b16 %v6480
      %v7345 = vunpack.c.l.b16 %v6481
      %v7346 = vunpack.c.l.b16 %v6482
      %v7347 = vunpack.c.l.b16 %v6483
      %v7348 = vunpack.c.l.b16 %v6484
      %v7349 = vunpack.c.l.b16 %v6485
      %v7350 = vunpack.c.l.b16 %v6486
      %v7351 = vunpack.c.l.b16 %v6487
      %v7352 = vunpack.c.l.b16 %v6488
      %v7353 = vunpack.c.l.b16 %v6489
      %v7354 = vunpack.c.l.b16 %v6490
      %v7355 = vunpack.c.l.b16 %v6491
      %v7356 = vunpack.c.l.b16 %v6492
      %v7357 = vunpack.c.l.b16 %v6493
      %v7358 = vunpack.c.l.b16 %v6494
      %v7359 = vunpack.c.l.b16 %v6495
      %v7360 = vunpack.c.l.b16 %v6496
      %v7361 = vunpack.c.l.b16 %v6497
      %v7362 = vunpack.c.l.b16 %v6498
      %v7363 = vunpack.c.l.b16 %v6499
      %v7364 = vunpack.c.l.b16 %v6500
      %v7365 = vunpack.c.l.b16 %v6501
      %v7366 = vunpack.c.l.b16 %v6502
      %v7367 = vunpack.c.l.b16 %v6503
      %v7368 = vunpack.c.l.b16 %v6504
      %v7369 = vunpack.c.l.b16 %v6505
      %v7370 = vunpack.c.l.b16 %v6506
      %v7371 = vunpack.c.l.b16 %v6507
      %v7372 = vunpack.c.l.b16 %v6508
      %v7373 = vunpack.c.l.b16 %v6509
      %v7374 = vunpack.c.l.b16 %v6510
      %v7375 = vunpack.c.l.b16 %v6511
      %v7376 = vunpack.c.l.b16 %v6512
      %v7377 = vunpack.c.l.b16 %v6513
      %v7378 = vunpack.c.l.b16 %v6514
      %v7379 = vunpack.c.l.b16 %v6515
      %v7380 = vunpack.c.l.b16 %v6516
      %v7381 = vunpack.c.l.b16 %v6517
      %v7382 = vunpack.c.l.b16 %v6518
      %v7383 = vunpack.c.l.b16 %v6519
      %v7384 = vunpack.c.l.b16 %v6520
      %v7385 = vunpack.c.l.b16 %v6521
      %v7386 = vunpack.c.l.b16 %v6522
      %v7387 = vunpack.c.l.b16 %v6523
      %v7388 = vunpack.c.l.b16 %v6524
      %v7389 = vunpack.c.l.b16 %v6525
      %v7390 = vunpack.c.l.b16 %v6526
      %v7391 = vunpack.c.l.b16 %v6527
      %v7392 = vunpack.c.l.b16 %v6528
      %v7393 = vunpack.c.l.b16 %v6529
      %v7394 = vunpack.c.l.b16 %v6530
      %v7395 = vunpack.c.l.b16 %v6531
      %v7396 = vunpack.c.l.b16 %v6532
      %v7397 = vunpack.c.l.b16 %v6533
      %v7398 = vunpack.c.l.b16 %v6534
      %v7399 = vunpack.c.l.b16 %v6535
      %v7400 = vunpack.c.l.b16 %v6536
      %v7401 = vunpack.c.l.b16 %v6537
      %v7402 = vunpack.c.l.b16 %v6538
      %v7403 = vunpack.c.l.b16 %v6539
      %v7404 = vunpack.c.l.b16 %v6540
      %v7405 = vunpack.c.l.b16 %v6541
      %v7406 = vunpack.c.l.b16 %v6542
      %v7407 = vunpack.c.l.b16 %v6543
      %v7408 = vunpack.c.l.b16 %v6544
      %v7409 = vunpack.c.l.b16 %v6545
      %v7410 = vunpack.c.l.b16 %v6546
      %v7411 = vunpack.c.l.b16 %v6547
      %v7412 = vunpack.c.l.b16 %v6548
      %v7413 = vunpack.c.l.b16 %v6549
      %v7414 = vunpack.c.l.b16 %v6550
      %v7415 = vunpack.c.l.b16 %v6551
      %v7416 = vunpack.c.l.b16 %v6552
      %v7417 = vunpack.c.l.b16 %v6553
      %v7418 = vunpack.c.l.b16 %v6554
      %v7419 = vunpack.c.l.b16 %v6555
      %v7420 = vunpack.c.l.b16 %v6556
      %v7421 = vunpack.c.l.b16 %v6557
      %v7422 = vunpack.c.l.b16 %v6558
      %v7423 = vunpack.c.l.b16 %v6559
      %v7424 = vunpack.c.l.b16 %v6560
      %v7425 = vunpack.c.l.b16 %v6561
      %v7426 = vunpack.c.l.b16 %v6562
      %v7427 = vunpack.c.l.b16 %v6563
      %v7428 = vunpack.c.l.b16 %v6564
      %v7429 = vunpack.c.l.b16 %v6565
      %v7430 = vunpack.c.l.b16 %v6566
      %v7431 = vunpack.c.l.b16 %v6567
      %v7432 = vunpack.c.l.b16 %v6568
      %v7433 = vunpack.c.l.b16 %v6569
      %v7434 = vunpack.c.l.b16 %v6570
      %v7435 = vunpack.c.l.b16 %v6571
      %v7436 = vunpack.c.l.b16 %v6572
      %v7437 = vunpack.c.l.b16 %v6573
      %v7438 = vunpack.c.l.b16 %v6574
      %v7439 = vunpack.c.l.b16 %v6575
      %v7440 = vunpack.c.l.b16 %v6576
      %v7441 = vunpack.c.l.b16 %v6577
      %v7442 = vunpack.c.l.b16 %v6578
      %v7443 = vunpack.c.l.b16 %v6579
      %v7444 = vunpack.c.l.b16 %v6580
      %v7445 = vunpack.c.l.b16 %v6581
      %v7446 = vunpack.c.l.b16 %v6582
      %v7447 = vunpack.c.l.b16 %v6583
      %v7448 = vunpack.c.l.b16 %v6584
      %v7449 = vunpack.c.l.b16 %v6585
      %v7450 = vunpack.c.l.b16 %v6586
      %v7451 = vunpack.c.l.b16 %v6587
      %v7452 = vunpack.c.l.b16 %v6588
      %v7453 = vunpack.c.l.b16 %v6589
      %v7454 = vunpack.c.l.b16 %v6590
      %v7455 = vunpack.c.l.b16 %v6591
      %v7456 = vunpack.c.l.b16 %v6592
      %v7457 = vunpack.c.l.b16 %v6593
      %v7458 = vunpack.c.l.b16 %v6594
      %v7459 = vunpack.c.l.b16 %v6595
      %v7460 = vunpack.c.l.b16 %v6596
      %v7461 = vunpack.c.l.b16 %v6597
      %v7462 = vunpack.c.l.b16 %v6598
      %v7463 = vunpack.c.l.b16 %v6599
      %v7464 = vunpack.c.l.b16 %v6600
      %v7465 = vunpack.c.l.b16 %v6601
      %v7466 = vunpack.c.l.b16 %v6602
      %v7467 = vunpack.c.l.b16 %v6603
      %v7468 = vunpack.c.l.b16 %v6604
      %v7469 = vunpack.c.l.b16 %v6605
      %v7470 = vunpack.c.l.b16 %v6606
      %v7471 = vunpack.c.l.b16 %v6607
      %v7472 = vunpack.c.l.b16 %v6608
      %v7473 = vunpack.c.l.b16 %v6609
      %v7474 = vunpack.c.l.b16 %v6610
      %v7475 = vunpack.c.l.b16 %v6611
      %v7476 = vunpack.c.l.b16 %v6612
      %v7477 = vunpack.c.l.b16 %v6613
      %v7478 = vunpack.c.l.b16 %v6614
      %v7479 = vunpack.c.l.b16 %v6615
      %v7480 = vunpack.c.l.b16 %v6616
      %v7481 = vunpack.c.l.b16 %v6617
      %v7482 = vunpack.c.l.b16 %v6618
      %v7483 = vunpack.c.l.b16 %v6619
      %v7484 = vunpack.c.l.b16 %v6620
      %v7485 = vunpack.c.l.b16 %v6621
      %v7486 = vunpack.c.l.b16 %v6622
      %v7487 = vunpack.c.l.b16 %v6623
      %v7488 = vunpack.c.l.b16 %v6624
      %v7489 = vunpack.c.l.b16 %v6625
      %v7490 = vunpack.c.l.b16 %v6626
      %v7491 = vunpack.c.l.b16 %v6627
      %v7492 = vunpack.c.l.b16 %v6628
      %v7493 = vunpack.c.l.b16 %v6629
      %v7494 = vunpack.c.l.b16 %v6630
      %v7495 = vunpack.c.l.b16 %v6631
      %v7496 = vunpack.c.l.b16 %v6632
      %v7497 = vunpack.c.l.b16 %v6633
      %v7498 = vunpack.c.l.b16 %v6634
      %v7499 = vunpack.c.l.b16 %v6635
      %v7500 = vunpack.c.l.b16 %v6636
      %v7501 = vunpack.c.l.b16 %v6637
      %v7502 = vunpack.c.l.b16 %v6638
      %v7503 = vunpack.c.l.b16 %v6639
      %v7504 = vunpack.c.l.b16 %v6640
      %v7505 = vunpack.c.l.b16 %v6641
      %v7506 = vunpack.c.l.b16 %v6642
      %v7507 = vunpack.c.l.b16 %v6643
      %v7508 = vunpack.c.l.b16 %v6644
      %v7509 = vunpack.c.l.b16 %v6645
      %v7510 = vunpack.c.l.b16 %v6646
      %v7511 = vunpack.c.l.b16 %v6647
      %v7512 = vunpack.c.l.b16 %v6648
      %v7513 = vunpack.c.l.b16 %v6649
      %v7514 = vunpack.c.l.b16 %v6650
      %v7515 = vunpack.c.l.b16 %v6651
      %v7516 = vunpack.c.l.b16 %v6652
      %v7517 = vunpack.c.l.b16 %v6653
      %v7518 = vunpack.c.l.b16 %v6654
      %v7519 = vunpack.c.l.b16 %v6655
      %v7520 = vunpack.c.l.b16 %v6656
      %v7521 = vunpack.c.l.b16 %v6657
      %v7522 = vunpack.c.l.b16 %v6658
      %v7523 = vunpack.c.l.b16 %v6659
      %v7524 = vunpack.c.l.b16 %v6660
      %v7525 = vunpack.c.l.b16 %v6661
      %v7526 = vunpack.c.l.b16 %v6662
      %v7527 = vunpack.c.l.b16 %v6663
      %v7528 = vunpack.c.l.b16 %v6664
      %v7529 = vunpack.c.l.b16 %v6665
      %v7530 = vunpack.c.l.b16 %v6666
      %v7531 = vunpack.c.l.b16 %v6667
      %v7532 = vunpack.c.l.b16 %v6668
      %v7533 = vunpack.c.l.b16 %v6669
      %v7534 = vunpack.c.l.b16 %v6670
      %v7535 = vunpack.c.l.b16 %v6671
      %v7536 = vunpack.c.l.b16 %v6672
      %v7537 = vunpack.c.l.b16 %v6673
      %v7538 = vunpack.c.l.b16 %v6674
      %v7539 = vunpack.c.l.b16 %v6675
      %v7540 = vunpack.c.l.b16 %v6676
      %v7541 = vunpack.c.l.b16 %v6677
      %v7542 = vunpack.c.l.b16 %v6678
      %v7543 = vunpack.c.l.b16 %v6679
      %v7544 = vunpack.c.l.b16 %v6680
      %v7545 = vunpack.c.l.b16 %v6681
      %v7546 = vunpack.c.l.b16 %v6682
      %v7547 = vunpack.c.l.b16 %v6683
      %v7548 = vunpack.c.l.b16 %v6684
      %v7549 = vunpack.c.l.b16 %v6685
      %v7550 = vunpack.c.l.b16 %v6686
      %v7551 = vunpack.c.l.b16 %v6687
      %v7552 = vunpack.c.l.b16 %v6688
      %v7553 = vunpack.c.l.b16 %v6689
      %v7554 = vunpack.c.l.b16 %v6690
      %v7555 = vunpack.c.l.b16 %v6691
      %v7556 = vunpack.c.l.b16 %v6692
      %v7557 = vunpack.c.l.b16 %v6693
      %v7558 = vunpack.c.l.b16 %v6694
      %v7559 = vunpack.c.l.b16 %v6695
      %v7560 = vunpack.c.l.b16 %v6696
      %v7561 = vunpack.c.l.b16 %v6697
      %v7562 = vunpack.c.l.b16 %v6698
      %v7563 = vunpack.c.l.b16 %v6699
      %v7564 = vunpack.c.l.b16 %v6700
      %v7565 = vunpack.c.l.b16 %v6701
      %v7566 = vunpack.c.l.b16 %v6702
      %v7567 = vunpack.c.l.b16 %v6703
      %v7568 = vunpack.c.l.b16 %v6704
      %v7569 = vunpack.c.l.b16 %v6705
      %v7570 = vunpack.c.l.b16 %v6706
      %v7571 = vunpack.c.l.b16 %v6707
      %v7572 = vunpack.c.l.b16 %v6708
      %v7573 = vunpack.c.l.b16 %v6709
      %v7574 = vunpack.c.l.b16 %v6710
      %v7575 = vunpack.c.l.b16 %v6711
      %v7576 = vunpack.c.l.b16 %v6712
      %v7577 = vunpack.c.l.b16 %v6713
      %v7578 = vunpack.c.l.b16 %v6714
      %v7579 = vunpack.c.l.b16 %v6715
      %v7580 = vunpack.c.l.b16 %v6716
      %v7581 = vunpack.c.l.b16 %v6717
      %v7582 = vunpack.c.l.b16 %v6718
      %v7583 = vunpack.c.l.b16 %v6719
      %v7584 = vunpack.c.l.b16 %v6720
      %v7585 = vunpack.c.l.b16 %v6721
      %v7586 = vunpack.c.l.b16 %v6722
      %v7587 = vunpack.c.l.b16 %v6723
      %v7588 = vunpack.c.l.b16 %v6724
      %v7589 = vunpack.c.l.b16 %v6725
      %v7590 = vunpack.c.l.b16 %v6726
      %v7591 = vunpack.c.l.b16 %v6727
      %v7592 = vunpack.c.l.b16 %v6728
      %v7593 = vunpack.c.l.b16 %v6729
      %v7594 = vunpack.c.l.b16 %v6730
      %v7595 = vunpack.c.l.b16 %v6731
      %v7596 = vunpack.c.l.b16 %v6732
      %v7597 = vunpack.c.l.b16 %v6733
      %v7598 = vunpack.c.l.b16 %v6734
      %v7599 = vunpack.c.l.b16 %v6735
      %v7600 = vunpack.c.l.b16 %v6736
      %v7601 = vunpack.c.l.b16 %v6737
      %v7602 = vunpack.c.l.b16 %v6738
      %v7603 = vunpack.c.l.b16 %v6739
      %v7604 = vunpack.c.l.b16 %v6740
      %v7605 = vunpack.c.l.b16 %v6741
      %v7606 = vunpack.c.l.b16 %v6742
      %v7607 = vunpack.c.l.b16 %v6743
      %v7608 = vunpack.c.l.b16 %v6744
      %v7609 = vunpack.c.l.b16 %v6745
      %v7610 = vunpack.c.l.b16 %v6746
      %v7611 = vunpack.c.l.b16 %v6747
      %v7612 = vunpack.c.l.b16 %v6748
      %v7613 = vunpack.c.l.b16 %v6749
      %v7614 = vunpack.c.l.b16 %v6750
      %v7615 = vunpack.c.l.b16 %v6751
      %v7616 = vunpack.c.l.b16 %v6752
      %v7617 = vunpack.c.l.b16 %v6753
      %v7618 = vunpack.c.l.b16 %v6754
      %v7619 = vunpack.c.l.b16 %v6755
      %v7620 = vunpack.c.l.b16 %v6756
      %v7621 = vunpack.c.l.b16 %v6757
      %v7622 = vunpack.c.l.b16 %v6758
      %v7623 = vunpack.c.l.b16 %v6759
      %v7624 = vunpack.c.l.b16 %v6760
      %v7625 = vunpack.c.l.b16 %v6761
      %v7626 = vunpack.c.l.b16 %v6762
      %v7627 = vunpack.c.l.b16 %v6763
      %v7628 = vunpack.c.l.b16 %v6764
      %v7629 = vunpack.c.l.b16 %v6765
      %v7630 = vunpack.c.l.b16 %v6766
      %v7631 = vunpack.c.l.b16 %v6767
      %v7632 = vunpack.c.l.b16 %v6768
      %v7633 = vunpack.c.l.b16 %v6769
      %v7634 = vunpack.c.l.b16 %v6770
      %v7635 = vunpack.c.l.b16 %v6771
      %v7636 = vunpack.c.l.b16 %v6772
      %v7637 = vunpack.c.l.b16 %v6773
      %v7638 = vunpack.c.l.b16 %v6774
      %v7639 = vunpack.c.l.b16 %v6775
      %v7640 = vunpack.c.l.b16 %v6776
      %v7641 = vunpack.c.l.b16 %v6777
      %v7642 = vunpack.c.l.b16 %v6778
      %v7643 = vunpack.c.l.b16 %v6779
      %v7644 = vunpack.c.l.b16 %v6780
      %v7645 = vunpack.c.l.b16 %v6781
      %v7646 = vunpack.c.l.b16 %v6782
      %v7647 = vunpack.c.l.b16 %v6783
      %v7648 = vunpack.c.l.b16 %v6784
      %v7649 = vunpack.c.l.b16 %v6785
      %v7650 = vunpack.c.l.b16 %v6786
      %v7651 = vunpack.c.l.b16 %v6787
      %v7652 = vunpack.c.l.b16 %v6788
      %v7653 = vunpack.c.l.b16 %v6789
      %v7654 = vunpack.c.l.b16 %v6790
      %v7655 = vunpack.c.l.b16 %v6791
      %v7656 = vunpack.c.l.b16 %v6792
      %v7657 = vunpack.c.l.b16 %v6793
      %v7658 = vunpack.c.l.b16 %v6794
      %v7659 = vunpack.c.l.b16 %v6795
      %v7660 = vunpack.c.l.b16 %v6796
      %v7661 = vunpack.c.l.b16 %v6797
      %v7662 = vunpack.c.l.b16 %v6798
      %v7663 = vunpack.c.l.b16 %v6799
      %v7664 = vunpack.c.l.b16 %v6800
      %v7665 = vunpack.c.l.b16 %v6801
      %v7666 = vunpack.c.l.b16 %v6802
      %v7667 = vunpack.c.l.b16 %v6803
      %v7668 = vunpack.c.l.b16 %v6804
      %v7669 = vunpack.c.l.b16 %v6805
      %v7670 = vunpack.c.l.b16 %v6806
      %v7671 = vunpack.c.l.b16 %v6807
      %v7672 = vunpack.c.l.b16 %v6808
      %v7673 = vunpack.c.l.b16 %v6809
      %v7674 = vunpack.c.l.b16 %v6810
      %v7675 = vunpack.c.l.b16 %v6811
      %v7676 = vunpack.c.l.b16 %v6812
      %v7677 = vunpack.c.l.b16 %v6813
      %v7678 = vunpack.c.l.b16 %v6814
      %v7679 = vunpack.c.l.b16 %v6815
      %v7680 = vunpack.c.l.b16 %v6816
      %v7681 = vunpack.c.l.b16 %v6817
      %v7682 = vunpack.c.l.b16 %v6818
      %v7683 = vunpack.c.l.b16 %v6819
      %v7684 = vunpack.c.l.b16 %v6820
      %v7685 = vunpack.c.l.b16 %v6821
      %v7686 = vunpack.c.l.b16 %v6822
      %v7687 = vunpack.c.l.b16 %v6823
      %v7688 = vunpack.c.l.b16 %v6824
      %v7689 = vunpack.c.l.b16 %v6825
      %v7690 = vunpack.c.l.b16 %v6826
      %v7691 = vunpack.c.l.b16 %v6827
      %v7692 = vunpack.c.l.b16 %v6828
      %v7693 = vunpack.c.l.b16 %v6829
      %v7694 = vunpack.c.l.b16 %v6830
      %v7695 = vunpack.c.l.b16 %v6831
      %v7696 = vunpack.c.l.b16 %v6832
      %v7697 = vunpack.c.l.b16 %v6833
      %v7698 = vunpack.c.l.b16 %v6834
      %v7699 = vunpack.c.l.b16 %v6835
      %v7700 = vunpack.c.l.b16 %v6836
      %v7701 = vunpack.c.l.b16 %v6837
      %v7702 = vunpack.c.l.b16 %v6838
      %v7703 = vunpack.c.l.b16 %v6839
      %v7704 = vunpack.c.l.b16 %v6840
      %v7705 = vunpack.c.l.b16 %v6841
      %v7706 = vunpack.c.l.b16 %v6842
      %v7707 = vunpack.c.l.b16 %v6843
      %v7708 = vunpack.c.l.b16 %v6844
      %v7709 = vunpack.c.l.b16 %v6845
      %v7710 = vunpack.c.l.b16 %v6846
      %v7711 = vunpack.c.l.b16 %v6847
      %v7712 = vunpack.c.l.b16 %v6848
      %v7713 = vunpack.c.l.b16 %v6849
      %v7714 = vunpack.c.l.b16 %v6850
      %v7715 = vunpack.c.l.b16 %v6851
      %v7716 = vunpack.c.l.b16 %v6852
      %v7717 = vunpack.c.l.b16 %v6853
      %v7718 = vunpack.c.l.b16 %v6854
      %v7719 = vpack.c.b16 %v7288, %v7287
      %v7720 = vpack.c.b16 %v7290, %v7289
      %v7721 = vpack.c.b16 %v7292, %v7291
      %v7722 = vpack.c.b16 %v7294, %v7293
      %v7723 = vpack.c.b16 %v7296, %v7295
      %v7724 = vpack.c.b16 %v7298, %v7297
      %v7725 = vpack.c.b16 %v7300, %v7299
      %v7726 = vpack.c.b16 %v7302, %v7301
      %v7727 = vpack.c.b16 %v7304, %v7303
      %v7728 = vpack.c.b16 %v7306, %v7305
      %v7729 = vpack.c.b16 %v7308, %v7307
      %v7730 = vpack.c.b16 %v7310, %v7309
      %v7731 = vpack.c.b16 %v7312, %v7311
      %v7732 = vpack.c.b16 %v7314, %v7313
      %v7733 = vpack.c.b16 %v7316, %v7315
      %v7734 = vpack.c.b16 %v7318, %v7317
      %v7735 = vpack.c.b16 %v7320, %v7319
      %v7736 = vpack.c.b16 %v7322, %v7321
      %v7737 = vpack.c.b16 %v7324, %v7323
      %v7738 = vpack.c.b16 %v7326, %v7325
      %v7739 = vpack.c.b16 %v7328, %v7327
      %v7740 = vpack.c.b16 %v7330, %v7329
      %v7741 = vpack.c.b16 %v7332, %v7331
      %v7742 = vpack.c.b16 %v7334, %v7333
      %v7743 = vpack.c.b16 %v7336, %v7335
      %v7744 = vpack.c.b16 %v7338, %v7337
      %v7745 = vpack.c.b16 %v7340, %v7339
      %v7746 = vpack.c.b16 %v7342, %v7341
      %v7747 = vpack.c.b16 %v7344, %v7343
      %v7748 = vpack.c.b16 %v7346, %v7345
      %v7749 = vpack.c.b16 %v7348, %v7347
      %v7750 = vpack.c.b16 %v7350, %v7349
      %v7751 = vpack.c.b16 %v7352, %v7351
      %v7752 = vpack.c.b16 %v7354, %v7353
      %v7753 = vpack.c.b16 %v7356, %v7355
      %v7754 = vpack.c.b16 %v7358, %v7357
      %v7755 = vpack.c.b16 %v7360, %v7359
      %v7756 = vpack.c.b16 %v7362, %v7361
      %v7757 = vpack.c.b16 %v7364, %v7363
      %v7758 = vpack.c.b16 %v7366, %v7365
      %v7759 = vpack.c.b16 %v7368, %v7367
      %v7760 = vpack.c.b16 %v7370, %v7369
      %v7761 = vpack.c.b16 %v7372, %v7371
      %v7762 = vpack.c.b16 %v7374, %v7373
      %v7763 = vpack.c.b16 %v7376, %v7375
      %v7764 = vpack.c.b16 %v7378, %v7377
      %v7765 = vpack.c.b16 %v7380, %v7379
      %v7766 = vpack.c.b16 %v7382, %v7381
      %v7767 = vpack.c.b16 %v7384, %v7383
      %v7768 = vpack.c.b16 %v7386, %v7385
      %v7769 = vpack.c.b16 %v7388, %v7387
      %v7770 = vpack.c.b16 %v7390, %v7389
      %v7771 = vpack.c.b16 %v7392, %v7391
      %v7772 = vpack.c.b16 %v7394, %v7393
      %v7773 = vpack.c.b16 %v7396, %v7395
      %v7774 = vpack.c.b16 %v7398, %v7397
      %v7775 = vpack.c.b16 %v7400, %v7399
      %v7776 = vpack.c.b16 %v7402, %v7401
      %v7777 = vpack.c.b16 %v7404, %v7403
      %v7778 = vpack.c.b16 %v7406, %v7405
      %v7779 = vpack.c.b16 %v7408, %v7407
      %v7780 = vpack.c.b16 %v7410, %v7409
      %v7781 = vpack.c.b16 %v7412, %v7411
      %v7782 = vpack.c.b16 %v7414, %v7413
      %v7783 = vpack.c.b16 %v7416, %v7415
      %v7784 = vpack.c.b16 %v7418, %v7417
      %v7785 = vpack.c.b16 %v7420, %v7419
      %v7786 = vpack.c.b16 %v7422, %v7421
      %v7787 = vpack.c.b16 %v7424, %v7423
      %v7788 = vpack.c.b16 %v7426, %v7425
      %v7789 = vpack.c.b16 %v7428, %v7427
      %v7790 = vpack.c.b16 %v7430, %v7429
      %v7791 = vpack.c.b16 %v7432, %v7431
      %v7792 = vpack.c.b16 %v7434, %v7433
      %v7793 = vpack.c.b16 %v7436, %v7435
      %v7794 = vpack.c.b16 %v7438, %v7437
      %v7795 = vpack.c.b16 %v7440, %v7439
      %v7796 = vpack.c.b16 %v7442, %v7441
      %v7797 = vpack.c.b16 %v7444, %v7443
      %v7798 = vpack.c.b16 %v7446, %v7445
      %v7799 = vpack.c.b16 %v7448, %v7447
      %v7800 = vpack.c.b16 %v7450, %v7449
      %v7801 = vpack.c.b16 %v7452, %v7451
      %v7802 = vpack.c.b16 %v7454, %v7453
      %v7803 = vpack.c.b16 %v7456, %v7455
      %v7804 = vpack.c.b16 %v7458, %v7457
      %v7805 = vpack.c.b16 %v7460, %v7459
      %v7806 = vpack.c.b16 %v7462, %v7461
      %v7807 = vpack.c.b16 %v7464, %v7463
      %v7808 = vpack.c.b16 %v7466, %v7465
      %v7809 = vpack.c.b16 %v7468, %v7467
      %v7810 = vpack.c.b16 %v7470, %v7469
      %v7811 = vpack.c.b16 %v7472, %v7471
      %v7812 = vpack.c.b16 %v7474, %v7473
      %v7813 = vpack.c.b16 %v7476, %v7475
      %v7814 = vpack.c.b16 %v7478, %v7477
      %v7815 = vpack.c.b16 %v7480, %v7479
      %v7816 = vpack.c.b16 %v7482, %v7481
      %v7817 = vpack.c.b16 %v7484, %v7483
      %v7818 = vpack.c.b16 %v7486, %v7485
      %v7819 = vpack.c.b16 %v7488, %v7487
      %v7820 = vpack.c.b16 %v7490, %v7489
      %v7821 = vpack.c.b16 %v7492, %v7491
      %v7822 = vpack.c.b16 %v7494, %v7493
      %v7823 = vpack.c.b16 %v7496, %v7495
      %v7824 = vpack.c.b16 %v7498, %v7497
      %v7825 = vpack.c.b16 %v7500, %v7499
      %v7826 = vpack.c.b16 %v7502, %v7501
      %v7827 = vpack.c.b16 %v7504, %v7503
      %v7828 = vpack.c.b16 %v7506, %v7505
      %v7829 = vpack.c.b16 %v7508, %v7507
      %v7830 = vpack.c.b16 %v7510, %v7509
      %v7831 = vpack.c.b16 %v7512, %v7511
      %v7832 = vpack.c.b16 %v7514, %v7513
      %v7833 = vpack.c.b16 %v7516, %v7515
      %v7834 = vpack.c.b16 %v7518, %v7517
      %v7835 = vpack.c.b16 %v7520, %v7519
      %v7836 = vpack.c.b16 %v7522, %v7521
      %v7837 = vpack.c.b16 %v7524, %v7523
      %v7838 = vpack.c.b16 %v7526, %v7525
      %v7839 = vpack.c.b16 %v7528, %v7527
      %v7840 = vpack.c.b16 %v7530, %v7529
      %v7841 = vpack.c.b16 %v7532, %v7531
      %v7842 = vpack.c.b16 %v7534, %v7533
      %v7843 = vpack.c.b16 %v7536, %v7535
      %v7844 = vpack.c.b16 %v7538, %v7537
      %v7845 = vpack.c.b16 %v7540, %v7539
      %v7846 = vpack.c.b16 %v7542, %v7541
      %v7847 = vpack.c.b16 %v7544, %v7543
      %v7848 = vpack.c.b16 %v7546, %v7545
      %v7849 = vpack.c.b16 %v7548, %v7547
      %v7850 = vpack.c.b16 %v7550, %v7549
      %v7851 = vpack.c.b16 %v7552, %v7551
      %v7852 = vpack.c.b16 %v7554, %v7553
      %v7853 = vpack.c.b16 %v7556, %v7555
      %v7854 = vpack.c.b16 %v7558, %v7557
      %v7855 = vpack.c.b16 %v7560, %v7559
      %v7856 = vpack.c.b16 %v7562, %v7561
      %v7857 = vpack.c.b16 %v7564, %v7563
      %v7858 = vpack.c.b16 %v7566, %v7565
      %v7859 = vpack.c.b16 %v7568, %v7567
      %v7860 = vpack.c.b16 %v7570, %v7569
      %v7861 = vpack.c.b16 %v7572, %v7571
      %v7862 = vpack.c.b16 %v7574, %v7573
      %v7863 = vpack.c.b16 %v7576, %v7575
      %v7864 = vpack.c.b16 %v7578, %v7577
      %v7865 = vpack.c.b16 %v7580, %v7579
      %v7866 = vpack.c.b16 %v7582, %v7581
      %v7867 = vpack.c.b16 %v7584, %v7583
      %v7868 = vpack.c.b16 %v7586, %v7585
      %v7869 = vpack.c.b16 %v7588, %v7587
      %v7870 = vpack.c.b16 %v7590, %v7589
      %v7871 = vpack.c.b16 %v7592, %v7591
      %v7872 = vpack.c.b16 %v7594, %v7593
      %v7873 = vpack.c.b16 %v7596, %v7595
      %v7874 = vpack.c.b16 %v7598, %v7597
      %v7875 = vpack.c.b16 %v7600, %v7599
      %v7876 = vpack.c.b16 %v7602, %v7601
      %v7877 = vpack.c.b16 %v7604, %v7603
      %v7878 = vpack.c.b16 %v7606, %v7605
      %v7879 = vpack.c.b16 %v7608, %v7607
      %v7880 = vpack.c.b16 %v7610, %v7609
      %v7881 = vpack.c.b16 %v7612, %v7611
      %v7882 = vpack.c.b16 %v7614, %v7613
      %v7883 = vpack.c.b16 %v7616, %v7615
      %v7884 = vpack.c.b16 %v7618, %v7617
      %v7885 = vpack.c.b16 %v7620, %v7619
      %v7886 = vpack.c.b16 %v7622, %v7621
      %v7887 = vpack.c.b16 %v7624, %v7623
      %v7888 = vpack.c.b16 %v7626, %v7625
      %v7889 = vpack.c.b16 %v7628, %v7627
      %v7890 = vpack.c.b16 %v7630, %v7629
      %v7891 = vpack.c.b16 %v7632, %v7631
      %v7892 = vpack.c.b16 %v7634, %v7633
      %v7893 = vpack.c.b16 %v7636, %v7635
      %v7894 = vpack.c.b16 %v7638, %v7637
      %v7895 = vpack.c.b16 %v7640, %v7639
      %v7896 = vpack.c.b16 %v7642, %v7641
      %v7897 = vpack.c.b16 %v7644, %v7643
      %v7898 = vpack.c.b16 %v7646, %v7645
      %v7899 = vpack.c.b16 %v7648, %v7647
      %v7900 = vpack.c.b16 %v7650, %v7649
      %v7901 = vpack.c.b16 %v7652, %v7651
      %v7902 = vpack.c.b16 %v7654, %v7653
      %v7903 = vpack.c.b16 %v7656, %v7655
      %v7904 = vpack.c.b16 %v7658, %v7657
      %v7905 = vpack.c.b16 %v7660, %v7659
      %v7906 = vpack.c.b16 %v7662, %v7661
      %v7907 = vpack.c.b16 %v7664, %v7663
      %v7908 = vpack.c.b16 %v7666, %v7665
      %v7909 = vpack.c.b16 %v7668, %v7667
      %v7910 = vpack.c.b16 %v7670, %v7669
      %v7911 = vpack.c.b16 %v7672, %v7671
      %v7912 = vpack.c.b16 %v7674, %v7673
      %v7913 = vpack.c.b16 %v7676, %v7675
      %v7914 = vpack.c.b16 %v7678, %v7677
      %v7915 = vpack.c.b16 %v7680, %v7679
      %v7916 = vpack.c.b16 %v7682, %v7681
      %v7917 = vpack.c.b16 %v7684, %v7683
      %v7918 = vpack.c.b16 %v7686, %v7685
      %v7919 = vpack.c.b16 %v7688, %v7687
      %v7920 = vpack.c.b16 %v7690, %v7689
      %v7921 = vpack.c.b16 %v7692, %v7691
      %v7922 = vpack.c.b16 %v7694, %v7693
      %v7923 = vpack.c.b16 %v7696, %v7695
      %v7924 = vpack.c.b16 %v7698, %v7697
      %v7925 = vpack.c.b16 %v7700, %v7699
      %v7926 = vpack.c.b16 %v7702, %v7701
      %v7927 = vpack.c.b16 %v7704, %v7703
      %v7928 = vpack.c.b16 %v7706, %v7705
      %v7929 = vpack.c.b16 %v7708, %v7707
      %v7930 = vpack.c.b16 %v7710, %v7709
      %v7931 = vpack.c.b16 %v7712, %v7711
      %v7932 = vpack.c.b16 %v7714, %v7713
      %v7933 = vpack.c.b16 %v7716, %v7715
      %v7934 = vpack.c.b16 %v7718, %v7717
      %8151 = vmatpush.bf16.msra.mxu0 %v7726
      %8152 = vmatpush.bf16.msra.mxu0 %v7725
      %8153 = vmatpush.bf16.msra.mxu0 %v7724
      %8154 = vmatpush.bf16.msra.mxu0 %v7723
      %8155 = vmatpush.bf16.msra.mxu0 %v7722
      %8156 = vmatpush.bf16.msra.mxu0 %v7721
      %8157 = vmatpush.bf16.msra.mxu0 %v7720
      %8158 = vmatpush.bf16.msra.mxu0 %v7719
      %8159 = vmatmul.bf16.gmra.mxu0 %v5570
      %v8160 = vpop.f32.mrf.mxu0
      %v8161 = vadd.f32 0.0, %v8160
      %v8162 = vpop.f32.mrf.mxu0
      %v8163 = vadd.f32 0.0, %v8162
      %8164 = vmatmul.bf16.gmra.mxu0 %v5571
      %v8165 = vpop.f32.mrf.mxu0
      %v8166 = vadd.f32 0.0, %v8165
      %v8167 = vpop.f32.mrf.mxu0
      %v8168 = vadd.f32 0.0, %v8167
      %8169 = vmatmul.bf16.gmra.mxu0 %v5572
      %v8170 = vpop.f32.mrf.mxu0
      %v8171 = vadd.f32 0.0, %v8170
      %v8172 = vpop.f32.mrf.mxu0
      %v8173 = vadd.f32 0.0, %v8172
      %8174 = vmatmul.bf16.gmra.mxu0 %v5573
      %v8175 = vpop.f32.mrf.mxu0
      %v8176 = vadd.f32 0.0, %v8175
      %v8177 = vpop.f32.mrf.mxu0
      %v8178 = vadd.f32 0.0, %v8177
      %8179 = vmatmul.bf16.gmra.mxu0 %v5574
      %v8180 = vpop.f32.mrf.mxu0
      %v8181 = vadd.f32 0.0, %v8180
      %v8182 = vpop.f32.mrf.mxu0
      %v8183 = vadd.f32 0.0, %v8182
      %8184 = vmatmul.bf16.gmra.mxu0 %v5575
      %v8185 = vpop.f32.mrf.mxu0
      %v8186 = vadd.f32 0.0, %v8185
      %v8187 = vpop.f32.mrf.mxu0
      %v8188 = vadd.f32 0.0, %v8187
      %8189 = vmatmul.bf16.gmra.mxu0 %v5576
      %v8190 = vpop.f32.mrf.mxu0
      %v8191 = vadd.f32 0.0, %v8190
      %v8192 = vpop.f32.mrf.mxu0
      %v8193 = vadd.f32 0.0, %v8192
      %8194 = vmatmul.bf16.gmra.mxu0 %v5577
      %v8195 = vpop.f32.mrf.mxu0
      %v8196 = vadd.f32 0.0, %v8195
      %v8197 = vpop.f32.mrf.mxu0
      %v8198 = vadd.f32 0.0, %v8197
      %8199 = vdwg.mxu0
      %8200 = vmatpush.bf16.msra.mxu0 %v7734
      %8201 = vmatpush.bf16.msra.mxu0 %v7733
      %8202 = vmatpush.bf16.msra.mxu0 %v7732
      %8203 = vmatpush.bf16.msra.mxu0 %v7731
      %8204 = vmatpush.bf16.msra.mxu0 %v7730
      %8205 = vmatpush.bf16.msra.mxu0 %v7729
      %8206 = vmatpush.bf16.msra.mxu0 %v7728
      %8207 = vmatpush.bf16.msra.mxu0 %v7727
      %8208 = vmatmul.bf16.gmra.mxu0 %v5599
      %v8209 = vpop.f32.mrf.mxu0
      %v8210 = vadd.f32 %v8161, %v8209
      %v8211 = vpop.f32.mrf.mxu0
      %v8212 = vadd.f32 %v8163, %v8211
      %8213 = vmatmul.bf16.gmra.mxu0 %v5607
      %v8214 = vpop.f32.mrf.mxu0
      %v8215 = vadd.f32 %v8166, %v8214
      %v8216 = vpop.f32.mrf.mxu0
      %v8217 = vadd.f32 %v8168, %v8216
      %8218 = vmatmul.bf16.gmra.mxu0 %v5615
      %v8219 = vpop.f32.mrf.mxu0
      %v8220 = vadd.f32 %v8171, %v8219
      %v8221 = vpop.f32.mrf.mxu0
      %v8222 = vadd.f32 %v8173, %v8221
      %8223 = vmatmul.bf16.gmra.mxu0 %v5623
      %v8224 = vpop.f32.mrf.mxu0
      %v8225 = vadd.f32 %v8176, %v8224
      %v8226 = vpop.f32.mrf.mxu0
      %v8227 = vadd.f32 %v8178, %v8226
      %8228 = vmatmul.bf16.gmra.mxu0 %v5631
      %v8229 = vpop.f32.mrf.mxu0
      %v8230 = vadd.f32 %v8181, %v8229
      %v8231 = vpop.f32.mrf.mxu0
      %v8232 = vadd.f32 %v8183, %v8231
      %8233 = vmatmul.bf16.gmra.mxu0 %v5639
      %v8234 = vpop.f32.mrf.mxu0
      %v8235 = vadd.f32 %v8186, %v8234
      %v8236 = vpop.f32.mrf.mxu0
      %v8237 = vadd.f32 %v8188, %v8236
      %8238 = vmatmul.bf16.gmra.mxu0 %v5647
      %v8239 = vpop.f32.mrf.mxu0
      %v8240 = vadd.f32 %v8191, %v8239
      %v8241 = vpop.f32.mrf.mxu0
      %v8242 = vadd.f32 %v8193, %v8241
      %8243 = vmatmul.bf16.gmra.mxu0 %v5655
      %v8244 = vpop.f32.mrf.mxu0
      %v8245 = vadd.f32 %v8196, %v8244
      %v8246 = vpop.f32.mrf.mxu0
      %v8247 = vadd.f32 %v8198, %v8246
      %8248 = vdwg.mxu0
      %8249 = vmatpush.bf16.msra.mxu0 %v7742
      %8250 = vmatpush.bf16.msra.mxu0 %v7741
      %8251 = vmatpush.bf16.msra.mxu0 %v7740
      %8252 = vmatpush.bf16.msra.mxu0 %v7739
      %8253 = vmatpush.bf16.msra.mxu0 %v7738
      %8254 = vmatpush.bf16.msra.mxu0 %v7737
      %8255 = vmatpush.bf16.msra.mxu0 %v7736
      %8256 = vmatpush.bf16.msra.mxu0 %v7735
      %8257 = vmatmul.bf16.gmra.mxu0 %v5666
      %v8258 = vpop.f32.mrf.mxu0
      %v8259 = vadd.f32 %v8210, %v8258
      %v8260 = vpop.f32.mrf.mxu0
      %v8261 = vadd.f32 %v8212, %v8260
      %8262 = vmatmul.bf16.gmra.mxu0 %v5668
      %v8263 = vpop.f32.mrf.mxu0
      %v8264 = vadd.f32 %v8215, %v8263
      %v8265 = vpop.f32.mrf.mxu0
      %v8266 = vadd.f32 %v8217, %v8265
      %8267 = vmatmul.bf16.gmra.mxu0 %v5670
      %v8268 = vpop.f32.mrf.mxu0
      %v8269 = vadd.f32 %v8220, %v8268
      %v8270 = vpop.f32.mrf.mxu0
      %v8271 = vadd.f32 %v8222, %v8270
      %8272 = vmatmul.bf16.gmra.mxu0 %v5672
      %v8273 = vpop.f32.mrf.mxu0
      %v8274 = vadd.f32 %v8225, %v8273
      %v8275 = vpop.f32.mrf.mxu0
      %v8276 = vadd.f32 %v8227, %v8275
      %8277 = vmatmul.bf16.gmra.mxu0 %v5674
      %v8278 = vpop.f32.mrf.mxu0
      %v8279 = vadd.f32 %v8230, %v8278
      %v8280 = vpop.f32.mrf.mxu0
      %v8281 = vadd.f32 %v8232, %v8280
      %8282 = vmatmul.bf16.gmra.mxu0 %v5676
      %v8283 = vpop.f32.mrf.mxu0
      %v8284 = vadd.f32 %v8235, %v8283
      %v8285 = vpop.f32.mrf.mxu0
      %v8286 = vadd.f32 %v8237, %v8285
      %8287 = vmatmul.bf16.gmra.mxu0 %v5678
      %v8288 = vpop.f32.mrf.mxu0
      %v8289 = vadd.f32 %v8240, %v8288
      %v8290 = vpop.f32.mrf.mxu0
      %v8291 = vadd.f32 %v8242, %v8290
      %8292 = vmatmul.bf16.gmra.mxu0 %v5680
      %v8293 = vpop.f32.mrf.mxu0
      %v8294 = vadd.f32 %v8245, %v8293
      %v8295 = vpop.f32.mrf.mxu0
      %v8296 = vadd.f32 %v8247, %v8295
      %8297 = vdwg.mxu0
      %8298 = vmatpush.bf16.msra.mxu0 %v7750
      %8299 = vmatpush.bf16.msra.mxu0 %v7749
      %8300 = vmatpush.bf16.msra.mxu0 %v7748
      %8301 = vmatpush.bf16.msra.mxu0 %v7747
      %8302 = vmatpush.bf16.msra.mxu0 %v7746
      %8303 = vmatpush.bf16.msra.mxu0 %v7745
      %8304 = vmatpush.bf16.msra.mxu0 %v7744
      %8305 = vmatpush.bf16.msra.mxu0 %v7743
      %8306 = vmatmul.bf16.gmra.mxu0 %v5571
      %v8307 = vpop.f32.mrf.mxu0
      %v8308 = vadd.f32 %v8259, %v8307
      %v8309 = vpop.f32.mrf.mxu0
      %v8310 = vadd.f32 %v8261, %v8309
      %8311 = vmatmul.bf16.gmra.mxu0 %v5572
      %v8312 = vpop.f32.mrf.mxu0
      %v8313 = vadd.f32 %v8264, %v8312
      %v8314 = vpop.f32.mrf.mxu0
      %v8315 = vadd.f32 %v8266, %v8314
      %8316 = vmatmul.bf16.gmra.mxu0 %v5573
      %v8317 = vpop.f32.mrf.mxu0
      %v8318 = vadd.f32 %v8269, %v8317
      %v8319 = vpop.f32.mrf.mxu0
      %v8320 = vadd.f32 %v8271, %v8319
      %8321 = vmatmul.bf16.gmra.mxu0 %v5574
      %v8322 = vpop.f32.mrf.mxu0
      %v8323 = vadd.f32 %v8274, %v8322
      %v8324 = vpop.f32.mrf.mxu0
      %v8325 = vadd.f32 %v8276, %v8324
      %8326 = vmatmul.bf16.gmra.mxu0 %v5575
      %v8327 = vpop.f32.mrf.mxu0
      %v8328 = vadd.f32 %v8279, %v8327
      %v8329 = vpop.f32.mrf.mxu0
      %v8330 = vadd.f32 %v8281, %v8329
      %8331 = vmatmul.bf16.gmra.mxu0 %v5576
      %v8332 = vpop.f32.mrf.mxu0
      %v8333 = vadd.f32 %v8284, %v8332
      %v8334 = vpop.f32.mrf.mxu0
      %v8335 = vadd.f32 %v8286, %v8334
      %8336 = vmatmul.bf16.gmra.mxu0 %v5577
      %v8337 = vpop.f32.mrf.mxu0
      %v8338 = vadd.f32 %v8289, %v8337
      %v8339 = vpop.f32.mrf.mxu0
      %v8340 = vadd.f32 %v8291, %v8339
      %8341 = vmatmul.bf16.gmra.mxu0 %v5690
      %v8342 = vpop.f32.mrf.mxu0
      %v8343 = vadd.f32 %v8294, %v8342
      %v8344 = vpop.f32.mrf.mxu0
      %v8345 = vadd.f32 %v8296, %v8344
      %8346 = vdwg.mxu0
      %8347 = vmatpush.bf16.msra.mxu0 %v7758
      %8348 = vmatpush.bf16.msra.mxu0 %v7757
      %8349 = vmatpush.bf16.msra.mxu0 %v7756
      %8350 = vmatpush.bf16.msra.mxu0 %v7755
      %8351 = vmatpush.bf16.msra.mxu0 %v7754
      %8352 = vmatpush.bf16.msra.mxu0 %v7753
      %8353 = vmatpush.bf16.msra.mxu0 %v7752
      %8354 = vmatpush.bf16.msra.mxu0 %v7751
      %8355 = vmatmul.bf16.gmra.mxu0 %v5607
      %v8356 = vpop.f32.mrf.mxu0
      %v8357 = vadd.f32 %v8308, %v8356
      %v8358 = vpop.f32.mrf.mxu0
      %v8359 = vadd.f32 %v8310, %v8358
      %8360 = vmatmul.bf16.gmra.mxu0 %v5615
      %v8361 = vpop.f32.mrf.mxu0
      %v8362 = vadd.f32 %v8313, %v8361
      %v8363 = vpop.f32.mrf.mxu0
      %v8364 = vadd.f32 %v8315, %v8363
      %8365 = vmatmul.bf16.gmra.mxu0 %v5623
      %v8366 = vpop.f32.mrf.mxu0
      %v8367 = vadd.f32 %v8318, %v8366
      %v8368 = vpop.f32.mrf.mxu0
      %v8369 = vadd.f32 %v8320, %v8368
      %8370 = vmatmul.bf16.gmra.mxu0 %v5631
      %v8371 = vpop.f32.mrf.mxu0
      %v8372 = vadd.f32 %v8323, %v8371
      %v8373 = vpop.f32.mrf.mxu0
      %v8374 = vadd.f32 %v8325, %v8373
      %8375 = vmatmul.bf16.gmra.mxu0 %v5639
      %v8376 = vpop.f32.mrf.mxu0
      %v8377 = vadd.f32 %v8328, %v8376
      %v8378 = vpop.f32.mrf.mxu0
      %v8379 = vadd.f32 %v8330, %v8378
      %8380 = vmatmul.bf16.gmra.mxu0 %v5647
      %v8381 = vpop.f32.mrf.mxu0
      %v8382 = vadd.f32 %v8333, %v8381
      %v8383 = vpop.f32.mrf.mxu0
      %v8384 = vadd.f32 %v8335, %v8383
      %8385 = vmatmul.bf16.gmra.mxu0 %v5698
      %v8386 = vpop.f32.mrf.mxu0
      %v8387 = vadd.f32 %v8338, %v8386
      %v8388 = vpop.f32.mrf.mxu0
      %v8389 = vadd.f32 %v8340, %v8388
      %8390 = vmatmul.bf16.gmra.mxu0 %v5706
      %v8391 = vpop.f32.mrf.mxu0
      %v8392 = vadd.f32 %v8343, %v8391
      %v8393 = vpop.f32.mrf.mxu0
      %v8394 = vadd.f32 %v8345, %v8393
      %8395 = vdwg.mxu0
      %8396 = vmatpush.bf16.msra.mxu0 %v7766
      %8397 = vmatpush.bf16.msra.mxu0 %v7765
      %8398 = vmatpush.bf16.msra.mxu0 %v7764
      %8399 = vmatpush.bf16.msra.mxu0 %v7763
      %8400 = vmatpush.bf16.msra.mxu0 %v7762
      %8401 = vmatpush.bf16.msra.mxu0 %v7761
      %8402 = vmatpush.bf16.msra.mxu0 %v7760
      %8403 = vmatpush.bf16.msra.mxu0 %v7759
      %8404 = vmatmul.bf16.gmra.mxu0 %v5668
      %v8405 = vpop.f32.mrf.mxu0
      %v8406 = vadd.f32 %v8357, %v8405
      %v8407 = vpop.f32.mrf.mxu0
      %v8408 = vadd.f32 %v8359, %v8407
      %8409 = vmatmul.bf16.gmra.mxu0 %v5670
      %v8410 = vpop.f32.mrf.mxu0
      %v8411 = vadd.f32 %v8362, %v8410
      %v8412 = vpop.f32.mrf.mxu0
      %v8413 = vadd.f32 %v8364, %v8412
      %8414 = vmatmul.bf16.gmra.mxu0 %v5672
      %v8415 = vpop.f32.mrf.mxu0
      %v8416 = vadd.f32 %v8367, %v8415
      %v8417 = vpop.f32.mrf.mxu0
      %v8418 = vadd.f32 %v8369, %v8417
      %8419 = vmatmul.bf16.gmra.mxu0 %v5674
      %v8420 = vpop.f32.mrf.mxu0
      %v8421 = vadd.f32 %v8372, %v8420
      %v8422 = vpop.f32.mrf.mxu0
      %v8423 = vadd.f32 %v8374, %v8422
      %8424 = vmatmul.bf16.gmra.mxu0 %v5676
      %v8425 = vpop.f32.mrf.mxu0
      %v8426 = vadd.f32 %v8377, %v8425
      %v8427 = vpop.f32.mrf.mxu0
      %v8428 = vadd.f32 %v8379, %v8427
      %8429 = vmatmul.bf16.gmra.mxu0 %v5678
      %v8430 = vpop.f32.mrf.mxu0
      %v8431 = vadd.f32 %v8382, %v8430
      %v8432 = vpop.f32.mrf.mxu0
      %v8433 = vadd.f32 %v8384, %v8432
      %8434 = vmatmul.bf16.gmra.mxu0 %v5710
      %v8435 = vpop.f32.mrf.mxu0
      %v8436 = vadd.f32 %v8387, %v8435
      %v8437 = vpop.f32.mrf.mxu0
      %v8438 = vadd.f32 %v8389, %v8437
      %8439 = vmatmul.bf16.gmra.mxu0 %v5712
      %v8440 = vpop.f32.mrf.mxu0
      %v8441 = vadd.f32 %v8392, %v8440
      %v8442 = vpop.f32.mrf.mxu0
      %v8443 = vadd.f32 %v8394, %v8442
      %8444 = vdwg.mxu0
      %8445 = vmatpush.bf16.msra.mxu0 %v7774
      %8446 = vmatpush.bf16.msra.mxu0 %v7773
      %8447 = vmatpush.bf16.msra.mxu0 %v7772
      %8448 = vmatpush.bf16.msra.mxu0 %v7771
      %8449 = vmatpush.bf16.msra.mxu0 %v7770
      %8450 = vmatpush.bf16.msra.mxu0 %v7769
      %8451 = vmatpush.bf16.msra.mxu0 %v7768
      %8452 = vmatpush.bf16.msra.mxu0 %v7767
      %8453 = vmatmul.bf16.gmra.mxu0 %v5572
      %v8454 = vpop.f32.mrf.mxu0
      %v8455 = vadd.f32 %v8406, %v8454
      %v8456 = vpop.f32.mrf.mxu0
      %v8457 = vadd.f32 %v8408, %v8456
      %8458 = vmatmul.bf16.gmra.mxu0 %v5573
      %v8459 = vpop.f32.mrf.mxu0
      %v8460 = vadd.f32 %v8411, %v8459
      %v8461 = vpop.f32.mrf.mxu0
      %v8462 = vadd.f32 %v8413, %v8461
      %8463 = vmatmul.bf16.gmra.mxu0 %v5574
      %v8464 = vpop.f32.mrf.mxu0
      %v8465 = vadd.f32 %v8416, %v8464
      %v8466 = vpop.f32.mrf.mxu0
      %v8467 = vadd.f32 %v8418, %v8466
      %8468 = vmatmul.bf16.gmra.mxu0 %v5575
      %v8469 = vpop.f32.mrf.mxu0
      %v8470 = vadd.f32 %v8421, %v8469
      %v8471 = vpop.f32.mrf.mxu0
      %v8472 = vadd.f32 %v8423, %v8471
      %8473 = vmatmul.bf16.gmra.mxu0 %v5576
      %v8474 = vpop.f32.mrf.mxu0
      %v8475 = vadd.f32 %v8426, %v8474
      %v8476 = vpop.f32.mrf.mxu0
      %v8477 = vadd.f32 %v8428, %v8476
      %8478 = vmatmul.bf16.gmra.mxu0 %v5577
      %v8479 = vpop.f32.mrf.mxu0
      %v8480 = vadd.f32 %v8431, %v8479
      %v8481 = vpop.f32.mrf.mxu0
      %v8482 = vadd.f32 %v8433, %v8481
      %8483 = vmatmul.bf16.gmra.mxu0 %v5690
      %v8484 = vpop.f32.mrf.mxu0
      %v8485 = vadd.f32 %v8436, %v8484
      %v8486 = vpop.f32.mrf.mxu0
      %v8487 = vadd.f32 %v8438, %v8486
      %8488 = vmatmul.bf16.gmra.mxu0 %v5716
      %v8489 = vpop.f32.mrf.mxu0
      %v8490 = vadd.f32 %v8441, %v8489
      %v8491 = vpop.f32.mrf.mxu0
      %v8492 = vadd.f32 %v8443, %v8491
      %8493 = vdwg.mxu0
      %8494 = vmatpush.bf16.msra.mxu0 %v7782
      %8495 = vmatpush.bf16.msra.mxu0 %v7781
      %8496 = vmatpush.bf16.msra.mxu0 %v7780
      %8497 = vmatpush.bf16.msra.mxu0 %v7779
      %8498 = vmatpush.bf16.msra.mxu0 %v7778
      %8499 = vmatpush.bf16.msra.mxu0 %v7777
      %8500 = vmatpush.bf16.msra.mxu0 %v7776
      %8501 = vmatpush.bf16.msra.mxu0 %v7775
      %8502 = vmatmul.bf16.gmra.mxu0 %v5615
      %v8503 = vpop.f32.mrf.mxu0
      %v8504 = vadd.f32 %v8455, %v8503
      %v8505 = vpop.f32.mrf.mxu0
      %v8506 = vadd.f32 %v8457, %v8505
      %8507 = vmatmul.bf16.gmra.mxu0 %v5623
      %v8508 = vpop.f32.mrf.mxu0
      %v8509 = vadd.f32 %v8460, %v8508
      %v8510 = vpop.f32.mrf.mxu0
      %v8511 = vadd.f32 %v8462, %v8510
      %8512 = vmatmul.bf16.gmra.mxu0 %v5631
      %v8513 = vpop.f32.mrf.mxu0
      %v8514 = vadd.f32 %v8465, %v8513
      %v8515 = vpop.f32.mrf.mxu0
      %v8516 = vadd.f32 %v8467, %v8515
      %8517 = vmatmul.bf16.gmra.mxu0 %v5639
      %v8518 = vpop.f32.mrf.mxu0
      %v8519 = vadd.f32 %v8470, %v8518
      %v8520 = vpop.f32.mrf.mxu0
      %v8521 = vadd.f32 %v8472, %v8520
      %8522 = vmatmul.bf16.gmra.mxu0 %v5647
      %v8523 = vpop.f32.mrf.mxu0
      %v8524 = vadd.f32 %v8475, %v8523
      %v8525 = vpop.f32.mrf.mxu0
      %v8526 = vadd.f32 %v8477, %v8525
      %8527 = vmatmul.bf16.gmra.mxu0 %v5698
      %v8528 = vpop.f32.mrf.mxu0
      %v8529 = vadd.f32 %v8480, %v8528
      %v8530 = vpop.f32.mrf.mxu0
      %v8531 = vadd.f32 %v8482, %v8530
      %8532 = vmatmul.bf16.gmra.mxu0 %v5724
      %v8533 = vpop.f32.mrf.mxu0
      %v8534 = vadd.f32 %v8485, %v8533
      %v8535 = vpop.f32.mrf.mxu0
      %v8536 = vadd.f32 %v8487, %v8535
      %8537 = vmatmul.bf16.gmra.mxu0 %v5732
      %v8538 = vpop.f32.mrf.mxu0
      %v8539 = vadd.f32 %v8490, %v8538
      %v8540 = vpop.f32.mrf.mxu0
      %v8541 = vadd.f32 %v8492, %v8540
      %8542 = vdwg.mxu0
      %8543 = vmatpush.bf16.msra.mxu0 %v7790
      %8544 = vmatpush.bf16.msra.mxu0 %v7789
      %8545 = vmatpush.bf16.msra.mxu0 %v7788
      %8546 = vmatpush.bf16.msra.mxu0 %v7787
      %8547 = vmatpush.bf16.msra.mxu0 %v7786
      %8548 = vmatpush.bf16.msra.mxu0 %v7785
      %8549 = vmatpush.bf16.msra.mxu0 %v7784
      %8550 = vmatpush.bf16.msra.mxu0 %v7783
      %8551 = vmatmul.bf16.gmra.mxu0 %v5670
      %v8552 = vpop.f32.mrf.mxu0
      %v8553 = vadd.f32 %v8504, %v8552
      %v8554 = vpop.f32.mrf.mxu0
      %v8555 = vadd.f32 %v8506, %v8554
      %8556 = vmatmul.bf16.gmra.mxu0 %v5672
      %v8557 = vpop.f32.mrf.mxu0
      %v8558 = vadd.f32 %v8509, %v8557
      %v8559 = vpop.f32.mrf.mxu0
      %v8560 = vadd.f32 %v8511, %v8559
      %8561 = vmatmul.bf16.gmra.mxu0 %v5674
      %v8562 = vpop.f32.mrf.mxu0
      %v8563 = vadd.f32 %v8514, %v8562
      %v8564 = vpop.f32.mrf.mxu0
      %v8565 = vadd.f32 %v8516, %v8564
      %8566 = vmatmul.bf16.gmra.mxu0 %v5676
      %v8567 = vpop.f32.mrf.mxu0
      %v8568 = vadd.f32 %v8519, %v8567
      %v8569 = vpop.f32.mrf.mxu0
      %v8570 = vadd.f32 %v8521, %v8569
      %8571 = vmatmul.bf16.gmra.mxu0 %v5678
      %v8572 = vpop.f32.mrf.mxu0
      %v8573 = vadd.f32 %v8524, %v8572
      %v8574 = vpop.f32.mrf.mxu0
      %v8575 = vadd.f32 %v8526, %v8574
      %8576 = vmatmul.bf16.gmra.mxu0 %v5710
      %v8577 = vpop.f32.mrf.mxu0
      %v8578 = vadd.f32 %v8529, %v8577
      %v8579 = vpop.f32.mrf.mxu0
      %v8580 = vadd.f32 %v8531, %v8579
      %8581 = vmatmul.bf16.gmra.mxu0 %v5736
      %v8582 = vpop.f32.mrf.mxu0
      %v8583 = vadd.f32 %v8534, %v8582
      %v8584 = vpop.f32.mrf.mxu0
      %v8585 = vadd.f32 %v8536, %v8584
      %8586 = vmatmul.bf16.gmra.mxu0 %v5738
      %v8587 = vpop.f32.mrf.mxu0
      %v8588 = vadd.f32 %v8539, %v8587
      %v8589 = vpop.f32.mrf.mxu0
      %v8590 = vadd.f32 %v8541, %v8589
      %8591 = vdwg.mxu0
      %8592 = vmatpush.bf16.msra.mxu0 %v7798
      %8593 = vmatpush.bf16.msra.mxu0 %v7797
      %8594 = vmatpush.bf16.msra.mxu0 %v7796
      %8595 = vmatpush.bf16.msra.mxu0 %v7795
      %8596 = vmatpush.bf16.msra.mxu0 %v7794
      %8597 = vmatpush.bf16.msra.mxu0 %v7793
      %8598 = vmatpush.bf16.msra.mxu0 %v7792
      %8599 = vmatpush.bf16.msra.mxu0 %v7791
      %8600 = vmatmul.bf16.gmra.mxu0 %v5757
      %v8601 = vpop.f32.mrf.mxu0
      %v8602 = vadd.f32 %v8553, %v8601
      %v8603 = vpop.f32.mrf.mxu0
      %v8604 = vadd.f32 %v8555, %v8603
      %8605 = vmatmul.bf16.gmra.mxu0 %v5758
      %v8606 = vpop.f32.mrf.mxu0
      %v8607 = vadd.f32 %v8558, %v8606
      %v8608 = vpop.f32.mrf.mxu0
      %v8609 = vadd.f32 %v8560, %v8608
      %8610 = vmatmul.bf16.gmra.mxu0 %v5759
      %v8611 = vpop.f32.mrf.mxu0
      %v8612 = vadd.f32 %v8563, %v8611
      %v8613 = vpop.f32.mrf.mxu0
      %v8614 = vadd.f32 %v8565, %v8613
      %8615 = vmatmul.bf16.gmra.mxu0 %v5760
      %v8616 = vpop.f32.mrf.mxu0
      %v8617 = vadd.f32 %v8568, %v8616
      %v8618 = vpop.f32.mrf.mxu0
      %v8619 = vadd.f32 %v8570, %v8618
      %8620 = vmatmul.bf16.gmra.mxu0 %v5761
      %v8621 = vpop.f32.mrf.mxu0
      %v8622 = vadd.f32 %v8573, %v8621
      %v8623 = vpop.f32.mrf.mxu0
      %v8624 = vadd.f32 %v8575, %v8623
      %8625 = vmatmul.bf16.gmra.mxu0 %v5762
      %v8626 = vpop.f32.mrf.mxu0
      %v8627 = vadd.f32 %v8578, %v8626
      %v8628 = vpop.f32.mrf.mxu0
      %v8629 = vadd.f32 %v8580, %v8628
      %8630 = vmatmul.bf16.gmra.mxu0 %v5763
      %v8631 = vpop.f32.mrf.mxu0
      %v8632 = vadd.f32 %v8583, %v8631
      %v8633 = vpop.f32.mrf.mxu0
      %v8634 = vadd.f32 %v8585, %v8633
      %8635 = vmatmul.bf16.gmra.mxu0 %v5764
      %v8636 = vpop.f32.mrf.mxu0
      %v8637 = vadd.f32 %v8588, %v8636
      %v8638 = vpop.f32.mrf.mxu0
      %v8639 = vadd.f32 %v8590, %v8638
      %8640 = vdwg.mxu0
      %8641 = vmatpush.bf16.msra.mxu0 %v7806
      %8642 = vmatpush.bf16.msra.mxu0 %v7805
      %8643 = vmatpush.bf16.msra.mxu0 %v7804
      %8644 = vmatpush.bf16.msra.mxu0 %v7803
      %8645 = vmatpush.bf16.msra.mxu0 %v7802
      %8646 = vmatpush.bf16.msra.mxu0 %v7801
      %8647 = vmatpush.bf16.msra.mxu0 %v7800
      %8648 = vmatpush.bf16.msra.mxu0 %v7799
      %8649 = vmatmul.bf16.gmra.mxu0 %v5786
      %v8650 = vpop.f32.mrf.mxu0
      %v8651 = vadd.f32 %v8602, %v8650
      %v8652 = vpop.f32.mrf.mxu0
      %v8653 = vadd.f32 %v8604, %v8652
      %8654 = vmatmul.bf16.gmra.mxu0 %v5794
      %v8655 = vpop.f32.mrf.mxu0
      %v8656 = vadd.f32 %v8607, %v8655
      %v8657 = vpop.f32.mrf.mxu0
      %v8658 = vadd.f32 %v8609, %v8657
      %8659 = vmatmul.bf16.gmra.mxu0 %v5802
      %v8660 = vpop.f32.mrf.mxu0
      %v8661 = vadd.f32 %v8612, %v8660
      %v8662 = vpop.f32.mrf.mxu0
      %v8663 = vadd.f32 %v8614, %v8662
      %8664 = vmatmul.bf16.gmra.mxu0 %v5810
      %v8665 = vpop.f32.mrf.mxu0
      %v8666 = vadd.f32 %v8617, %v8665
      %v8667 = vpop.f32.mrf.mxu0
      %v8668 = vadd.f32 %v8619, %v8667
      %8669 = vmatmul.bf16.gmra.mxu0 %v5818
      %v8670 = vpop.f32.mrf.mxu0
      %v8671 = vadd.f32 %v8622, %v8670
      %v8672 = vpop.f32.mrf.mxu0
      %v8673 = vadd.f32 %v8624, %v8672
      %8674 = vmatmul.bf16.gmra.mxu0 %v5826
      %v8675 = vpop.f32.mrf.mxu0
      %v8676 = vadd.f32 %v8627, %v8675
      %v8677 = vpop.f32.mrf.mxu0
      %v8678 = vadd.f32 %v8629, %v8677
      %8679 = vmatmul.bf16.gmra.mxu0 %v5834
      %v8680 = vpop.f32.mrf.mxu0
      %v8681 = vadd.f32 %v8632, %v8680
      %v8682 = vpop.f32.mrf.mxu0
      %v8683 = vadd.f32 %v8634, %v8682
      %8684 = vmatmul.bf16.gmra.mxu0 %v5842
      %v8685 = vpop.f32.mrf.mxu0
      %v8686 = vadd.f32 %v8637, %v8685
      %v8687 = vpop.f32.mrf.mxu0
      %v8688 = vadd.f32 %v8639, %v8687
      %8689 = vdwg.mxu0
      %8690 = vmatpush.bf16.msra.mxu0 %v7814
      %8691 = vmatpush.bf16.msra.mxu0 %v7813
      %8692 = vmatpush.bf16.msra.mxu0 %v7812
      %8693 = vmatpush.bf16.msra.mxu0 %v7811
      %8694 = vmatpush.bf16.msra.mxu0 %v7810
      %8695 = vmatpush.bf16.msra.mxu0 %v7809
      %8696 = vmatpush.bf16.msra.mxu0 %v7808
      %8697 = vmatpush.bf16.msra.mxu0 %v7807
      %8698 = vmatmul.bf16.gmra.mxu0 %v5853
      %v8699 = vpop.f32.mrf.mxu0
      %v8700 = vadd.f32 %v8651, %v8699
      %v8701 = vpop.f32.mrf.mxu0
      %v8702 = vadd.f32 %v8653, %v8701
      %8703 = vmatmul.bf16.gmra.mxu0 %v5855
      %v8704 = vpop.f32.mrf.mxu0
      %v8705 = vadd.f32 %v8656, %v8704
      %v8706 = vpop.f32.mrf.mxu0
      %v8707 = vadd.f32 %v8658, %v8706
      %8708 = vmatmul.bf16.gmra.mxu0 %v5857
      %v8709 = vpop.f32.mrf.mxu0
      %v8710 = vadd.f32 %v8661, %v8709
      %v8711 = vpop.f32.mrf.mxu0
      %v8712 = vadd.f32 %v8663, %v8711
      %8713 = vmatmul.bf16.gmra.mxu0 %v5859
      %v8714 = vpop.f32.mrf.mxu0
      %v8715 = vadd.f32 %v8666, %v8714
      %v8716 = vpop.f32.mrf.mxu0
      %v8717 = vadd.f32 %v8668, %v8716
      %8718 = vmatmul.bf16.gmra.mxu0 %v5861
      %v8719 = vpop.f32.mrf.mxu0
      %v8720 = vadd.f32 %v8671, %v8719
      %v8721 = vpop.f32.mrf.mxu0
      %v8722 = vadd.f32 %v8673, %v8721
      %8723 = vmatmul.bf16.gmra.mxu0 %v5863
      %v8724 = vpop.f32.mrf.mxu0
      %v8725 = vadd.f32 %v8676, %v8724
      %v8726 = vpop.f32.mrf.mxu0
      %v8727 = vadd.f32 %v8678, %v8726
      %8728 = vmatmul.bf16.gmra.mxu0 %v5865
      %v8729 = vpop.f32.mrf.mxu0
      %v8730 = vadd.f32 %v8681, %v8729
      %v8731 = vpop.f32.mrf.mxu0
      %v8732 = vadd.f32 %v8683, %v8731
      %8733 = vmatmul.bf16.gmra.mxu0 %v5867
      %v8734 = vpop.f32.mrf.mxu0
      %v8735 = vadd.f32 %v8686, %v8734
      %v8736 = vpop.f32.mrf.mxu0
      %v8737 = vadd.f32 %v8688, %v8736
      %8738 = vdwg.mxu0
      %8739 = vmatpush.bf16.msra.mxu0 %v7822
      %8740 = vmatpush.bf16.msra.mxu0 %v7821
      %8741 = vmatpush.bf16.msra.mxu0 %v7820
      %8742 = vmatpush.bf16.msra.mxu0 %v7819
      %8743 = vmatpush.bf16.msra.mxu0 %v7818
      %8744 = vmatpush.bf16.msra.mxu0 %v7817
      %8745 = vmatpush.bf16.msra.mxu0 %v7816
      %8746 = vmatpush.bf16.msra.mxu0 %v7815
      %8747 = vmatmul.bf16.gmra.mxu0 %v5758
      %v8748 = vpop.f32.mrf.mxu0
      %v8749 = vadd.f32 %v8700, %v8748
      %v8750 = vpop.f32.mrf.mxu0
      %v8751 = vadd.f32 %v8702, %v8750
      %8752 = vmatmul.bf16.gmra.mxu0 %v5759
      %v8753 = vpop.f32.mrf.mxu0
      %v8754 = vadd.f32 %v8705, %v8753
      %v8755 = vpop.f32.mrf.mxu0
      %v8756 = vadd.f32 %v8707, %v8755
      %8757 = vmatmul.bf16.gmra.mxu0 %v5760
      %v8758 = vpop.f32.mrf.mxu0
      %v8759 = vadd.f32 %v8710, %v8758
      %v8760 = vpop.f32.mrf.mxu0
      %v8761 = vadd.f32 %v8712, %v8760
      %8762 = vmatmul.bf16.gmra.mxu0 %v5761
      %v8763 = vpop.f32.mrf.mxu0
      %v8764 = vadd.f32 %v8715, %v8763
      %v8765 = vpop.f32.mrf.mxu0
      %v8766 = vadd.f32 %v8717, %v8765
      %8767 = vmatmul.bf16.gmra.mxu0 %v5762
      %v8768 = vpop.f32.mrf.mxu0
      %v8769 = vadd.f32 %v8720, %v8768
      %v8770 = vpop.f32.mrf.mxu0
      %v8771 = vadd.f32 %v8722, %v8770
      %8772 = vmatmul.bf16.gmra.mxu0 %v5763
      %v8773 = vpop.f32.mrf.mxu0
      %v8774 = vadd.f32 %v8725, %v8773
      %v8775 = vpop.f32.mrf.mxu0
      %v8776 = vadd.f32 %v8727, %v8775
      %8777 = vmatmul.bf16.gmra.mxu0 %v5764
      %v8778 = vpop.f32.mrf.mxu0
      %v8779 = vadd.f32 %v8730, %v8778
      %v8780 = vpop.f32.mrf.mxu0
      %v8781 = vadd.f32 %v8732, %v8780
      %8782 = vmatmul.bf16.gmra.mxu0 %v5877
      %v8783 = vpop.f32.mrf.mxu0
      %v8784 = vadd.f32 %v8735, %v8783
      %v8785 = vpop.f32.mrf.mxu0
      %v8786 = vadd.f32 %v8737, %v8785
      %8787 = vdwg.mxu0
      %8788 = vmatpush.bf16.msra.mxu0 %v7830
      %8789 = vmatpush.bf16.msra.mxu0 %v7829
      %8790 = vmatpush.bf16.msra.mxu0 %v7828
      %8791 = vmatpush.bf16.msra.mxu0 %v7827
      %8792 = vmatpush.bf16.msra.mxu0 %v7826
      %8793 = vmatpush.bf16.msra.mxu0 %v7825
      %8794 = vmatpush.bf16.msra.mxu0 %v7824
      %8795 = vmatpush.bf16.msra.mxu0 %v7823
      %8796 = vmatmul.bf16.gmra.mxu0 %v5794
      %v8797 = vpop.f32.mrf.mxu0
      %v8798 = vadd.f32 %v8749, %v8797
      %v8799 = vpop.f32.mrf.mxu0
      %v8800 = vadd.f32 %v8751, %v8799
      %8801 = vmatmul.bf16.gmra.mxu0 %v5802
      %v8802 = vpop.f32.mrf.mxu0
      %v8803 = vadd.f32 %v8754, %v8802
      %v8804 = vpop.f32.mrf.mxu0
      %v8805 = vadd.f32 %v8756, %v8804
      %8806 = vmatmul.bf16.gmra.mxu0 %v5810
      %v8807 = vpop.f32.mrf.mxu0
      %v8808 = vadd.f32 %v8759, %v8807
      %v8809 = vpop.f32.mrf.mxu0
      %v8810 = vadd.f32 %v8761, %v8809
      %8811 = vmatmul.bf16.gmra.mxu0 %v5818
      %v8812 = vpop.f32.mrf.mxu0
      %v8813 = vadd.f32 %v8764, %v8812
      %v8814 = vpop.f32.mrf.mxu0
      %v8815 = vadd.f32 %v8766, %v8814
      %8816 = vmatmul.bf16.gmra.mxu0 %v5826
      %v8817 = vpop.f32.mrf.mxu0
      %v8818 = vadd.f32 %v8769, %v8817
      %v8819 = vpop.f32.mrf.mxu0
      %v8820 = vadd.f32 %v8771, %v8819
      %8821 = vmatmul.bf16.gmra.mxu0 %v5834
      %v8822 = vpop.f32.mrf.mxu0
      %v8823 = vadd.f32 %v8774, %v8822
      %v8824 = vpop.f32.mrf.mxu0
      %v8825 = vadd.f32 %v8776, %v8824
      %8826 = vmatmul.bf16.gmra.mxu0 %v5885
      %v8827 = vpop.f32.mrf.mxu0
      %v8828 = vadd.f32 %v8779, %v8827
      %v8829 = vpop.f32.mrf.mxu0
      %v8830 = vadd.f32 %v8781, %v8829
      %8831 = vmatmul.bf16.gmra.mxu0 %v5893
      %v8832 = vpop.f32.mrf.mxu0
      %v8833 = vadd.f32 %v8784, %v8832
      %v8834 = vpop.f32.mrf.mxu0
      %v8835 = vadd.f32 %v8786, %v8834
      %8836 = vdwg.mxu0
      %8837 = vmatpush.bf16.msra.mxu0 %v7838
      %8838 = vmatpush.bf16.msra.mxu0 %v7837
      %8839 = vmatpush.bf16.msra.mxu0 %v7836
      %8840 = vmatpush.bf16.msra.mxu0 %v7835
      %8841 = vmatpush.bf16.msra.mxu0 %v7834
      %8842 = vmatpush.bf16.msra.mxu0 %v7833
      %8843 = vmatpush.bf16.msra.mxu0 %v7832
      %8844 = vmatpush.bf16.msra.mxu0 %v7831
      %8845 = vmatmul.bf16.gmra.mxu0 %v5855
      %v8846 = vpop.f32.mrf.mxu0
      %v8847 = vadd.f32 %v8798, %v8846
      %v8848 = vpop.f32.mrf.mxu0
      %v8849 = vadd.f32 %v8800, %v8848
      %8850 = vmatmul.bf16.gmra.mxu0 %v5857
      %v8851 = vpop.f32.mrf.mxu0
      %v8852 = vadd.f32 %v8803, %v8851
      %v8853 = vpop.f32.mrf.mxu0
      %v8854 = vadd.f32 %v8805, %v8853
      %8855 = vmatmul.bf16.gmra.mxu0 %v5859
      %v8856 = vpop.f32.mrf.mxu0
      %v8857 = vadd.f32 %v8808, %v8856
      %v8858 = vpop.f32.mrf.mxu0
      %v8859 = vadd.f32 %v8810, %v8858
      %8860 = vmatmul.bf16.gmra.mxu0 %v5861
      %v8861 = vpop.f32.mrf.mxu0
      %v8862 = vadd.f32 %v8813, %v8861
      %v8863 = vpop.f32.mrf.mxu0
      %v8864 = vadd.f32 %v8815, %v8863
      %8865 = vmatmul.bf16.gmra.mxu0 %v5863
      %v8866 = vpop.f32.mrf.mxu0
      %v8867 = vadd.f32 %v8818, %v8866
      %v8868 = vpop.f32.mrf.mxu0
      %v8869 = vadd.f32 %v8820, %v8868
      %8870 = vmatmul.bf16.gmra.mxu0 %v5865
      %v8871 = vpop.f32.mrf.mxu0
      %v8872 = vadd.f32 %v8823, %v8871
      %v8873 = vpop.f32.mrf.mxu0
      %v8874 = vadd.f32 %v8825, %v8873
      %8875 = vmatmul.bf16.gmra.mxu0 %v5897
      %v8876 = vpop.f32.mrf.mxu0
      %v8877 = vadd.f32 %v8828, %v8876
      %v8878 = vpop.f32.mrf.mxu0
      %v8879 = vadd.f32 %v8830, %v8878
      %8880 = vmatmul.bf16.gmra.mxu0 %v5899
      %v8881 = vpop.f32.mrf.mxu0
      %v8882 = vadd.f32 %v8833, %v8881
      %v8883 = vpop.f32.mrf.mxu0
      %v8884 = vadd.f32 %v8835, %v8883
      %8885 = vdwg.mxu0
      %8886 = vmatpush.bf16.msra.mxu0 %v7846
      %8887 = vmatpush.bf16.msra.mxu0 %v7845
      %8888 = vmatpush.bf16.msra.mxu0 %v7844
      %8889 = vmatpush.bf16.msra.mxu0 %v7843
      %8890 = vmatpush.bf16.msra.mxu0 %v7842
      %8891 = vmatpush.bf16.msra.mxu0 %v7841
      %8892 = vmatpush.bf16.msra.mxu0 %v7840
      %8893 = vmatpush.bf16.msra.mxu0 %v7839
      %8894 = vmatmul.bf16.gmra.mxu0 %v5759
      %v8895 = vpop.f32.mrf.mxu0
      %v8896 = vadd.f32 %v8847, %v8895
      %v8897 = vpop.f32.mrf.mxu0
      %v8898 = vadd.f32 %v8849, %v8897
      %8899 = vmatmul.bf16.gmra.mxu0 %v5760
      %v8900 = vpop.f32.mrf.mxu0
      %v8901 = vadd.f32 %v8852, %v8900
      %v8902 = vpop.f32.mrf.mxu0
      %v8903 = vadd.f32 %v8854, %v8902
      %8904 = vmatmul.bf16.gmra.mxu0 %v5761
      %v8905 = vpop.f32.mrf.mxu0
      %v8906 = vadd.f32 %v8857, %v8905
      %v8907 = vpop.f32.mrf.mxu0
      %v8908 = vadd.f32 %v8859, %v8907
      %8909 = vmatmul.bf16.gmra.mxu0 %v5762
      %v8910 = vpop.f32.mrf.mxu0
      %v8911 = vadd.f32 %v8862, %v8910
      %v8912 = vpop.f32.mrf.mxu0
      %v8913 = vadd.f32 %v8864, %v8912
      %8914 = vmatmul.bf16.gmra.mxu0 %v5763
      %v8915 = vpop.f32.mrf.mxu0
      %v8916 = vadd.f32 %v8867, %v8915
      %v8917 = vpop.f32.mrf.mxu0
      %v8918 = vadd.f32 %v8869, %v8917
      %8919 = vmatmul.bf16.gmra.mxu0 %v5764
      %v8920 = vpop.f32.mrf.mxu0
      %v8921 = vadd.f32 %v8872, %v8920
      %v8922 = vpop.f32.mrf.mxu0
      %v8923 = vadd.f32 %v8874, %v8922
      %8924 = vmatmul.bf16.gmra.mxu0 %v5877
      %v8925 = vpop.f32.mrf.mxu0
      %v8926 = vadd.f32 %v8877, %v8925
      %v8927 = vpop.f32.mrf.mxu0
      %v8928 = vadd.f32 %v8879, %v8927
      %8929 = vmatmul.bf16.gmra.mxu0 %v5903
      %v8930 = vpop.f32.mrf.mxu0
      %v8931 = vadd.f32 %v8882, %v8930
      %v8932 = vpop.f32.mrf.mxu0
      %v8933 = vadd.f32 %v8884, %v8932
      %8934 = vdwg.mxu0
      %8935 = vmatpush.bf16.msra.mxu0 %v7854
      %8936 = vmatpush.bf16.msra.mxu0 %v7853
      %8937 = vmatpush.bf16.msra.mxu0 %v7852
      %8938 = vmatpush.bf16.msra.mxu0 %v7851
      %8939 = vmatpush.bf16.msra.mxu0 %v7850
      %8940 = vmatpush.bf16.msra.mxu0 %v7849
      %8941 = vmatpush.bf16.msra.mxu0 %v7848
      %8942 = vmatpush.bf16.msra.mxu0 %v7847
      %8943 = vmatmul.bf16.gmra.mxu0 %v5802
      %v8944 = vpop.f32.mrf.mxu0
      %v8945 = vadd.f32 %v8896, %v8944
      %v8946 = vpop.f32.mrf.mxu0
      %v8947 = vadd.f32 %v8898, %v8946
      %8948 = vmatmul.bf16.gmra.mxu0 %v5810
      %v8949 = vpop.f32.mrf.mxu0
      %v8950 = vadd.f32 %v8901, %v8949
      %v8951 = vpop.f32.mrf.mxu0
      %v8952 = vadd.f32 %v8903, %v8951
      %8953 = vmatmul.bf16.gmra.mxu0 %v5818
      %v8954 = vpop.f32.mrf.mxu0
      %v8955 = vadd.f32 %v8906, %v8954
      %v8956 = vpop.f32.mrf.mxu0
      %v8957 = vadd.f32 %v8908, %v8956
      %8958 = vmatmul.bf16.gmra.mxu0 %v5826
      %v8959 = vpop.f32.mrf.mxu0
      %v8960 = vadd.f32 %v8911, %v8959
      %v8961 = vpop.f32.mrf.mxu0
      %v8962 = vadd.f32 %v8913, %v8961
      %8963 = vmatmul.bf16.gmra.mxu0 %v5834
      %v8964 = vpop.f32.mrf.mxu0
      %v8965 = vadd.f32 %v8916, %v8964
      %v8966 = vpop.f32.mrf.mxu0
      %v8967 = vadd.f32 %v8918, %v8966
      %8968 = vmatmul.bf16.gmra.mxu0 %v5885
      %v8969 = vpop.f32.mrf.mxu0
      %v8970 = vadd.f32 %v8921, %v8969
      %v8971 = vpop.f32.mrf.mxu0
      %v8972 = vadd.f32 %v8923, %v8971
      %8973 = vmatmul.bf16.gmra.mxu0 %v5911
      %v8974 = vpop.f32.mrf.mxu0
      %v8975 = vadd.f32 %v8926, %v8974
      %v8976 = vpop.f32.mrf.mxu0
      %v8977 = vadd.f32 %v8928, %v8976
      %8978 = vmatmul.bf16.gmra.mxu0 %v5919
      %v8979 = vpop.f32.mrf.mxu0
      %v8980 = vadd.f32 %v8931, %v8979
      %v8981 = vpop.f32.mrf.mxu0
      %v8982 = vadd.f32 %v8933, %v8981
      %8983 = vdwg.mxu0
      %8984 = vmatpush.bf16.msra.mxu0 %v7862
      %8985 = vmatpush.bf16.msra.mxu0 %v7861
      %8986 = vmatpush.bf16.msra.mxu0 %v7860
      %8987 = vmatpush.bf16.msra.mxu0 %v7859
      %8988 = vmatpush.bf16.msra.mxu0 %v7858
      %8989 = vmatpush.bf16.msra.mxu0 %v7857
      %8990 = vmatpush.bf16.msra.mxu0 %v7856
      %8991 = vmatpush.bf16.msra.mxu0 %v7855
      %8992 = vmatmul.bf16.gmra.mxu0 %v6096
      %v8993 = vpop.f32.mrf.mxu0
      %v8994 = vadd.f32 %v8945, %v8993
      %v8995 = vpop.f32.mrf.mxu0
      %v8996 = vadd.f32 %v8947, %v8995
      %8997 = vmatmul.bf16.gmra.mxu0 %v6168
      %v8998 = vpop.f32.mrf.mxu0
      %v8999 = vadd.f32 %v8950, %v8998
      %v9000 = vpop.f32.mrf.mxu0
      %v9001 = vadd.f32 %v8952, %v9000
      %9002 = vmatmul.bf16.gmra.mxu0 %v6200
      %v9003 = vpop.f32.mrf.mxu0
      %v9004 = vadd.f32 %v8955, %v9003
      %v9005 = vpop.f32.mrf.mxu0
      %v9006 = vadd.f32 %v8957, %v9005
      %9007 = vmatmul.bf16.gmra.mxu0 %v6224
      %v9008 = vpop.f32.mrf.mxu0
      %v9009 = vadd.f32 %v8960, %v9008
      %v9010 = vpop.f32.mrf.mxu0
      %v9011 = vadd.f32 %v8962, %v9010
      %9012 = vmatmul.bf16.gmra.mxu0 %v6248
      %v9013 = vpop.f32.mrf.mxu0
      %v9014 = vadd.f32 %v8965, %v9013
      %v9015 = vpop.f32.mrf.mxu0
      %v9016 = vadd.f32 %v8967, %v9015
      %9017 = vmatmul.bf16.gmra.mxu0 %v6272
      %v9018 = vpop.f32.mrf.mxu0
      %v9019 = vadd.f32 %v8970, %v9018
      %v9020 = vpop.f32.mrf.mxu0
      %v9021 = vadd.f32 %v8972, %v9020
      %9022 = vmatmul.bf16.gmra.mxu0 %v6296
      %v9023 = vpop.f32.mrf.mxu0
      %v9024 = vadd.f32 %v8975, %v9023
      %v9025 = vpop.f32.mrf.mxu0
      %v9026 = vadd.f32 %v8977, %v9025
      %9027 = vmatmul.bf16.gmra.mxu0 %v6330
      %v9028 = vpop.f32.mrf.mxu0
      %v9029 = vadd.f32 %v8980, %v9028
      %v9030 = vpop.f32.mrf.mxu0
      %v9031 = vadd.f32 %v8982, %v9030
      %9032 = vdwg.mxu0
      %9033 = vmatpush.bf16.msra.mxu0 %v7870
      %9034 = vmatpush.bf16.msra.mxu0 %v7869
      %9035 = vmatpush.bf16.msra.mxu0 %v7868
      %9036 = vmatpush.bf16.msra.mxu0 %v7867
      %9037 = vmatpush.bf16.msra.mxu0 %v7866
      %9038 = vmatpush.bf16.msra.mxu0 %v7865
      %9039 = vmatpush.bf16.msra.mxu0 %v7864
      %9040 = vmatpush.bf16.msra.mxu0 %v7863
      %9041 = vmatmul.bf16.gmra.mxu0 %v6108
      %v9042 = vpop.f32.mrf.mxu0
      %v9043 = vadd.f32 %v8994, %v9042
      %v9044 = vpop.f32.mrf.mxu0
      %v9045 = vadd.f32 %v8996, %v9044
      %9046 = vmatmul.bf16.gmra.mxu0 %v6172
      %v9047 = vpop.f32.mrf.mxu0
      %v9048 = vadd.f32 %v8999, %v9047
      %v9049 = vpop.f32.mrf.mxu0
      %v9050 = vadd.f32 %v9001, %v9049
      %9051 = vmatmul.bf16.gmra.mxu0 %v6176
      %v9052 = vpop.f32.mrf.mxu0
      %v9053 = vadd.f32 %v9004, %v9052
      %v9054 = vpop.f32.mrf.mxu0
      %v9055 = vadd.f32 %v9006, %v9054
      %9056 = vmatmul.bf16.gmra.mxu0 %v6184
      %v9057 = vpop.f32.mrf.mxu0
      %v9058 = vadd.f32 %v9009, %v9057
      %v9059 = vpop.f32.mrf.mxu0
      %v9060 = vadd.f32 %v9011, %v9059
      %9061 = vmatmul.bf16.gmra.mxu0 %v6208
      %v9062 = vpop.f32.mrf.mxu0
      %v9063 = vadd.f32 %v9014, %v9062
      %v9064 = vpop.f32.mrf.mxu0
      %v9065 = vadd.f32 %v9016, %v9064
      %9066 = vmatmul.bf16.gmra.mxu0 %v6232
      %v9067 = vpop.f32.mrf.mxu0
      %v9068 = vadd.f32 %v9019, %v9067
      %v9069 = vpop.f32.mrf.mxu0
      %v9070 = vadd.f32 %v9021, %v9069
      %9071 = vmatmul.bf16.gmra.mxu0 %v6256
      %v9072 = vpop.f32.mrf.mxu0
      %v9073 = vadd.f32 %v9024, %v9072
      %v9074 = vpop.f32.mrf.mxu0
      %v9075 = vadd.f32 %v9026, %v9074
      %9076 = vmatmul.bf16.gmra.mxu0 %v6335
      %v9077 = vpop.f32.mrf.mxu0
      %v9078 = vadd.f32 %v9029, %v9077
      %v9079 = vpop.f32.mrf.mxu0
      %v9080 = vadd.f32 %v9031, %v9079
      %9081 = vdwg.mxu0
      %9082 = vmatpush.bf16.msra.mxu0 %v7878
      %9083 = vmatpush.bf16.msra.mxu0 %v7877
      %9084 = vmatpush.bf16.msra.mxu0 %v7876
      %9085 = vmatpush.bf16.msra.mxu0 %v7875
      %9086 = vmatpush.bf16.msra.mxu0 %v7874
      %9087 = vmatpush.bf16.msra.mxu0 %v7873
      %9088 = vmatpush.bf16.msra.mxu0 %v7872
      %9089 = vmatpush.bf16.msra.mxu0 %v7871
      %9090 = vmatmul.bf16.gmra.mxu0 %v6014
      %v9091 = vpop.f32.mrf.mxu0
      %v9092 = vadd.f32 %v9043, %v9091
      %v9093 = vpop.f32.mrf.mxu0
      %v9094 = vadd.f32 %v9045, %v9093
      %9095 = vmatmul.bf16.gmra.mxu0 %v6017
      %v9096 = vpop.f32.mrf.mxu0
      %v9097 = vadd.f32 %v9048, %v9096
      %v9098 = vpop.f32.mrf.mxu0
      %v9099 = vadd.f32 %v9050, %v9098
      %9100 = vmatmul.bf16.gmra.mxu0 %v6020
      %v9101 = vpop.f32.mrf.mxu0
      %v9102 = vadd.f32 %v9053, %v9101
      %v9103 = vpop.f32.mrf.mxu0
      %v9104 = vadd.f32 %v9055, %v9103
      %9105 = vmatmul.bf16.gmra.mxu0 %v6023
      %v9106 = vpop.f32.mrf.mxu0
      %v9107 = vadd.f32 %v9058, %v9106
      %v9108 = vpop.f32.mrf.mxu0
      %v9109 = vadd.f32 %v9060, %v9108
      %9110 = vmatmul.bf16.gmra.mxu0 %v6026
      %v9111 = vpop.f32.mrf.mxu0
      %v9112 = vadd.f32 %v9063, %v9111
      %v9113 = vpop.f32.mrf.mxu0
      %v9114 = vadd.f32 %v9065, %v9113
      %9115 = vmatmul.bf16.gmra.mxu0 %v6029
      %v9116 = vpop.f32.mrf.mxu0
      %v9117 = vadd.f32 %v9068, %v9116
      %v9118 = vpop.f32.mrf.mxu0
      %v9119 = vadd.f32 %v9070, %v9118
      %9120 = vmatmul.bf16.gmra.mxu0 %v6032
      %v9121 = vpop.f32.mrf.mxu0
      %v9122 = vadd.f32 %v9073, %v9121
      %v9123 = vpop.f32.mrf.mxu0
      %v9124 = vadd.f32 %v9075, %v9123
      %9125 = vmatmul.bf16.gmra.mxu0 %v6038
      %v9126 = vpop.f32.mrf.mxu0
      %v9127 = vadd.f32 %v9078, %v9126
      %v9128 = vpop.f32.mrf.mxu0
      %v9129 = vadd.f32 %v9080, %v9128
      %9130 = vdwg.mxu0
      %9131 = vmatpush.bf16.msra.mxu0 %v7886
      %9132 = vmatpush.bf16.msra.mxu0 %v7885
      %9133 = vmatpush.bf16.msra.mxu0 %v7884
      %9134 = vmatpush.bf16.msra.mxu0 %v7883
      %9135 = vmatpush.bf16.msra.mxu0 %v7882
      %9136 = vmatpush.bf16.msra.mxu0 %v7881
      %9137 = vmatpush.bf16.msra.mxu0 %v7880
      %9138 = vmatpush.bf16.msra.mxu0 %v7879
      %9139 = vmatmul.bf16.gmra.mxu0 %v6120
      %v9140 = vpop.f32.mrf.mxu0
      %v9141 = vadd.f32 %v9092, %v9140
      %v9142 = vpop.f32.mrf.mxu0
      %v9143 = vadd.f32 %v9094, %v9142
      %9144 = vmatmul.bf16.gmra.mxu0 %v6140
      %v9145 = vpop.f32.mrf.mxu0
      %v9146 = vadd.f32 %v9097, %v9145
      %v9147 = vpop.f32.mrf.mxu0
      %v9148 = vadd.f32 %v9099, %v9147
      %9149 = vmatmul.bf16.gmra.mxu0 %v6160
      %v9150 = vpop.f32.mrf.mxu0
      %v9151 = vadd.f32 %v9102, %v9150
      %v9152 = vpop.f32.mrf.mxu0
      %v9153 = vadd.f32 %v9104, %v9152
      %9154 = vmatmul.bf16.gmra.mxu0 %v6192
      %v9155 = vpop.f32.mrf.mxu0
      %v9156 = vadd.f32 %v9107, %v9155
      %v9157 = vpop.f32.mrf.mxu0
      %v9158 = vadd.f32 %v9109, %v9157
      %9159 = vmatmul.bf16.gmra.mxu0 %v6216
      %v9160 = vpop.f32.mrf.mxu0
      %v9161 = vadd.f32 %v9112, %v9160
      %v9162 = vpop.f32.mrf.mxu0
      %v9163 = vadd.f32 %v9114, %v9162
      %9164 = vmatmul.bf16.gmra.mxu0 %v6240
      %v9165 = vpop.f32.mrf.mxu0
      %v9166 = vadd.f32 %v9117, %v9165
      %v9167 = vpop.f32.mrf.mxu0
      %v9168 = vadd.f32 %v9119, %v9167
      %9169 = vmatmul.bf16.gmra.mxu0 %v6301
      %v9170 = vpop.f32.mrf.mxu0
      %v9171 = vadd.f32 %v9122, %v9170
      %v9172 = vpop.f32.mrf.mxu0
      %v9173 = vadd.f32 %v9124, %v9172
      %9174 = vmatmul.bf16.gmra.mxu0 %v6343
      %v9175 = vpop.f32.mrf.mxu0
      %v9176 = vadd.f32 %v9127, %v9175
      %v9177 = vpop.f32.mrf.mxu0
      %v9178 = vadd.f32 %v9129, %v9177
      %9179 = vdwg.mxu0
      %9180 = vmatpush.bf16.msra.mxu0 %v7894
      %9181 = vmatpush.bf16.msra.mxu0 %v7893
      %9182 = vmatpush.bf16.msra.mxu0 %v7892
      %9183 = vmatpush.bf16.msra.mxu0 %v7891
      %9184 = vmatpush.bf16.msra.mxu0 %v7890
      %9185 = vmatpush.bf16.msra.mxu0 %v7889
      %9186 = vmatpush.bf16.msra.mxu0 %v7888
      %9187 = vmatpush.bf16.msra.mxu0 %v7887
      %9188 = vmatmul.bf16.gmra.mxu0 %v6132
      %v9189 = vpop.f32.mrf.mxu0
      %v9190 = vadd.f32 %v9141, %v9189
      %v9191 = vpop.f32.mrf.mxu0
      %v9192 = vadd.f32 %v9143, %v9191
      %9193 = vmatmul.bf16.gmra.mxu0 %v6176
      %v9194 = vpop.f32.mrf.mxu0
      %v9195 = vadd.f32 %v9146, %v9194
      %v9196 = vpop.f32.mrf.mxu0
      %v9197 = vadd.f32 %v9148, %v9196
      %9198 = vmatmul.bf16.gmra.mxu0 %v6184
      %v9199 = vpop.f32.mrf.mxu0
      %v9200 = vadd.f32 %v9151, %v9199
      %v9201 = vpop.f32.mrf.mxu0
      %v9202 = vadd.f32 %v9153, %v9201
      %9203 = vmatmul.bf16.gmra.mxu0 %v6208
      %v9204 = vpop.f32.mrf.mxu0
      %v9205 = vadd.f32 %v9156, %v9204
      %v9206 = vpop.f32.mrf.mxu0
      %v9207 = vadd.f32 %v9158, %v9206
      %9208 = vmatmul.bf16.gmra.mxu0 %v6232
      %v9209 = vpop.f32.mrf.mxu0
      %v9210 = vadd.f32 %v9161, %v9209
      %v9211 = vpop.f32.mrf.mxu0
      %v9212 = vadd.f32 %v9163, %v9211
      %9213 = vmatmul.bf16.gmra.mxu0 %v6256
      %v9214 = vpop.f32.mrf.mxu0
      %v9215 = vadd.f32 %v9166, %v9214
      %v9216 = vpop.f32.mrf.mxu0
      %v9217 = vadd.f32 %v9168, %v9216
      %9218 = vmatmul.bf16.gmra.mxu0 %v6280
      %v9219 = vpop.f32.mrf.mxu0
      %v9220 = vadd.f32 %v9171, %v9219
      %v9221 = vpop.f32.mrf.mxu0
      %v9222 = vadd.f32 %v9173, %v9221
      %9223 = vmatmul.bf16.gmra.mxu0 %v6348
      %v9224 = vpop.f32.mrf.mxu0
      %v9225 = vadd.f32 %v9176, %v9224
      %v9226 = vpop.f32.mrf.mxu0
      %v9227 = vadd.f32 %v9178, %v9226
      %9228 = vdwg.mxu0
      %9229 = vmatpush.bf16.msra.mxu0 %v7902
      %9230 = vmatpush.bf16.msra.mxu0 %v7901
      %9231 = vmatpush.bf16.msra.mxu0 %v7900
      %9232 = vmatpush.bf16.msra.mxu0 %v7899
      %9233 = vmatpush.bf16.msra.mxu0 %v7898
      %9234 = vmatpush.bf16.msra.mxu0 %v7897
      %9235 = vmatpush.bf16.msra.mxu0 %v7896
      %9236 = vmatpush.bf16.msra.mxu0 %v7895
      %9237 = vmatmul.bf16.gmra.mxu0 %v6017
      %v9238 = vpop.f32.mrf.mxu0
      %v9239 = vadd.f32 %v9190, %v9238
      %v9240 = vpop.f32.mrf.mxu0
      %v9241 = vadd.f32 %v9192, %v9240
      %9242 = vmatmul.bf16.gmra.mxu0 %v6020
      %v9243 = vpop.f32.mrf.mxu0
      %v9244 = vadd.f32 %v9195, %v9243
      %v9245 = vpop.f32.mrf.mxu0
      %v9246 = vadd.f32 %v9197, %v9245
      %9247 = vmatmul.bf16.gmra.mxu0 %v6023
      %v9248 = vpop.f32.mrf.mxu0
      %v9249 = vadd.f32 %v9200, %v9248
      %v9250 = vpop.f32.mrf.mxu0
      %v9251 = vadd.f32 %v9202, %v9250
      %9252 = vmatmul.bf16.gmra.mxu0 %v6026
      %v9253 = vpop.f32.mrf.mxu0
      %v9254 = vadd.f32 %v9205, %v9253
      %v9255 = vpop.f32.mrf.mxu0
      %v9256 = vadd.f32 %v9207, %v9255
      %9257 = vmatmul.bf16.gmra.mxu0 %v6029
      %v9258 = vpop.f32.mrf.mxu0
      %v9259 = vadd.f32 %v9210, %v9258
      %v9260 = vpop.f32.mrf.mxu0
      %v9261 = vadd.f32 %v9212, %v9260
      %9262 = vmatmul.bf16.gmra.mxu0 %v6032
      %v9263 = vpop.f32.mrf.mxu0
      %v9264 = vadd.f32 %v9215, %v9263
      %v9265 = vpop.f32.mrf.mxu0
      %v9266 = vadd.f32 %v9217, %v9265
      %9267 = vmatmul.bf16.gmra.mxu0 %v6054
      %v9268 = vpop.f32.mrf.mxu0
      %v9269 = vadd.f32 %v9220, %v9268
      %v9270 = vpop.f32.mrf.mxu0
      %v9271 = vadd.f32 %v9222, %v9270
      %9272 = vmatmul.bf16.gmra.mxu0 %v6060
      %v9273 = vpop.f32.mrf.mxu0
      %v9274 = vadd.f32 %v9225, %v9273
      %v9275 = vpop.f32.mrf.mxu0
      %v9276 = vadd.f32 %v9227, %v9275
      %9277 = vdwg.mxu0
      %9278 = vmatpush.bf16.msra.mxu0 %v7910
      %9279 = vmatpush.bf16.msra.mxu0 %v7909
      %9280 = vmatpush.bf16.msra.mxu0 %v7908
      %9281 = vmatpush.bf16.msra.mxu0 %v7907
      %9282 = vmatpush.bf16.msra.mxu0 %v7906
      %9283 = vmatpush.bf16.msra.mxu0 %v7905
      %9284 = vmatpush.bf16.msra.mxu0 %v7904
      %9285 = vmatpush.bf16.msra.mxu0 %v7903
      %9286 = vmatmul.bf16.gmra.mxu0 %v6140
      %v9287 = vpop.f32.mrf.mxu0
      %v9288 = vadd.f32 %v9239, %v9287
      %v9289 = vpop.f32.mrf.mxu0
      %v9290 = vadd.f32 %v9241, %v9289
      %9291 = vmatmul.bf16.gmra.mxu0 %v6160
      %v9292 = vpop.f32.mrf.mxu0
      %v9293 = vadd.f32 %v9244, %v9292
      %v9294 = vpop.f32.mrf.mxu0
      %v9295 = vadd.f32 %v9246, %v9294
      %9296 = vmatmul.bf16.gmra.mxu0 %v6192
      %v9297 = vpop.f32.mrf.mxu0
      %v9298 = vadd.f32 %v9249, %v9297
      %v9299 = vpop.f32.mrf.mxu0
      %v9300 = vadd.f32 %v9251, %v9299
      %9301 = vmatmul.bf16.gmra.mxu0 %v6216
      %v9302 = vpop.f32.mrf.mxu0
      %v9303 = vadd.f32 %v9254, %v9302
      %v9304 = vpop.f32.mrf.mxu0
      %v9305 = vadd.f32 %v9256, %v9304
      %9306 = vmatmul.bf16.gmra.mxu0 %v6240
      %v9307 = vpop.f32.mrf.mxu0
      %v9308 = vadd.f32 %v9259, %v9307
      %v9309 = vpop.f32.mrf.mxu0
      %v9310 = vadd.f32 %v9261, %v9309
      %9311 = vmatmul.bf16.gmra.mxu0 %v6264
      %v9312 = vpop.f32.mrf.mxu0
      %v9313 = vadd.f32 %v9264, %v9312
      %v9314 = vpop.f32.mrf.mxu0
      %v9315 = vadd.f32 %v9266, %v9314
      %9316 = vmatmul.bf16.gmra.mxu0 %v6306
      %v9317 = vpop.f32.mrf.mxu0
      %v9318 = vadd.f32 %v9269, %v9317
      %v9319 = vpop.f32.mrf.mxu0
      %v9320 = vadd.f32 %v9271, %v9319
      %9321 = vmatmul.bf16.gmra.mxu0 %v6356
      %v9322 = vpop.f32.mrf.mxu0
      %v9323 = vadd.f32 %v9274, %v9322
      %v9324 = vpop.f32.mrf.mxu0
      %v9325 = vadd.f32 %v9276, %v9324
      %9326 = vdwg.mxu0
      %9327 = vmatpush.bf16.msra.mxu0 %v7918
      %9328 = vmatpush.bf16.msra.mxu0 %v7917
      %9329 = vmatpush.bf16.msra.mxu0 %v7916
      %9330 = vmatpush.bf16.msra.mxu0 %v7915
      %9331 = vmatpush.bf16.msra.mxu0 %v7914
      %9332 = vmatpush.bf16.msra.mxu0 %v7913
      %9333 = vmatpush.bf16.msra.mxu0 %v7912
      %9334 = vmatpush.bf16.msra.mxu0 %v7911
      %9335 = vmatmul.bf16.gmra.mxu0 %v6152
      %v9336 = vpop.f32.mrf.mxu0
      %v9337 = vadd.f32 %v9288, %v9336
      %v9338 = vpop.f32.mrf.mxu0
      %v9339 = vadd.f32 %v9290, %v9338
      %9340 = vmatmul.bf16.gmra.mxu0 %v6184
      %v9341 = vpop.f32.mrf.mxu0
      %v9342 = vadd.f32 %v9293, %v9341
      %v9343 = vpop.f32.mrf.mxu0
      %v9344 = vadd.f32 %v9295, %v9343
      %9345 = vmatmul.bf16.gmra.mxu0 %v6208
      %v9346 = vpop.f32.mrf.mxu0
      %v9347 = vadd.f32 %v9298, %v9346
      %v9348 = vpop.f32.mrf.mxu0
      %v9349 = vadd.f32 %v9300, %v9348
      %9350 = vmatmul.bf16.gmra.mxu0 %v6232
      %v9351 = vpop.f32.mrf.mxu0
      %v9352 = vadd.f32 %v9303, %v9351
      %v9353 = vpop.f32.mrf.mxu0
      %v9354 = vadd.f32 %v9305, %v9353
      %9355 = vmatmul.bf16.gmra.mxu0 %v6256
      %v9356 = vpop.f32.mrf.mxu0
      %v9357 = vadd.f32 %v9308, %v9356
      %v9358 = vpop.f32.mrf.mxu0
      %v9359 = vadd.f32 %v9310, %v9358
      %9360 = vmatmul.bf16.gmra.mxu0 %v6280
      %v9361 = vpop.f32.mrf.mxu0
      %v9362 = vadd.f32 %v9313, %v9361
      %v9363 = vpop.f32.mrf.mxu0
      %v9364 = vadd.f32 %v9315, %v9363
      %9365 = vmatmul.bf16.gmra.mxu0 %v6314
      %v9366 = vpop.f32.mrf.mxu0
      %v9367 = vadd.f32 %v9318, %v9366
      %v9368 = vpop.f32.mrf.mxu0
      %v9369 = vadd.f32 %v9320, %v9368
      %9370 = vmatmul.bf16.gmra.mxu0 %v6364
      %v9371 = vpop.f32.mrf.mxu0
      %v9372 = vadd.f32 %v9323, %v9371
      %v9373 = vpop.f32.mrf.mxu0
      %v9374 = vadd.f32 %v9325, %v9373
      %9375 = vdwg.mxu0
      %9376 = vmatpush.bf16.msra.mxu0 %v7926
      %9377 = vmatpush.bf16.msra.mxu0 %v7925
      %9378 = vmatpush.bf16.msra.mxu0 %v7924
      %9379 = vmatpush.bf16.msra.mxu0 %v7923
      %9380 = vmatpush.bf16.msra.mxu0 %v7922
      %9381 = vmatpush.bf16.msra.mxu0 %v7921
      %9382 = vmatpush.bf16.msra.mxu0 %v7920
      %9383 = vmatpush.bf16.msra.mxu0 %v7919
      %9384 = vmatmul.bf16.gmra.mxu0 %v6020
      %v9385 = vpop.f32.mrf.mxu0
      %v9386 = vadd.f32 %v9337, %v9385
      %v9387 = vpop.f32.mrf.mxu0
      %v9388 = vadd.f32 %v9339, %v9387
      %9389 = vmatmul.bf16.gmra.mxu0 %v6023
      %v9390 = vpop.f32.mrf.mxu0
      %v9391 = vadd.f32 %v9342, %v9390
      %v9392 = vpop.f32.mrf.mxu0
      %v9393 = vadd.f32 %v9344, %v9392
      %9394 = vmatmul.bf16.gmra.mxu0 %v6026
      %v9395 = vpop.f32.mrf.mxu0
      %v9396 = vadd.f32 %v9347, %v9395
      %v9397 = vpop.f32.mrf.mxu0
      %v9398 = vadd.f32 %v9349, %v9397
      %9399 = vmatmul.bf16.gmra.mxu0 %v6029
      %v9400 = vpop.f32.mrf.mxu0
      %v9401 = vadd.f32 %v9352, %v9400
      %v9402 = vpop.f32.mrf.mxu0
      %v9403 = vadd.f32 %v9354, %v9402
      %9404 = vmatmul.bf16.gmra.mxu0 %v6032
      %v9405 = vpop.f32.mrf.mxu0
      %v9406 = vadd.f32 %v9357, %v9405
      %v9407 = vpop.f32.mrf.mxu0
      %v9408 = vadd.f32 %v9359, %v9407
      %9409 = vmatmul.bf16.gmra.mxu0 %v6054
      %v9410 = vpop.f32.mrf.mxu0
      %v9411 = vadd.f32 %v9362, %v9410
      %v9412 = vpop.f32.mrf.mxu0
      %v9413 = vadd.f32 %v9364, %v9412
      %9414 = vmatmul.bf16.gmra.mxu0 %v6076
      %v9415 = vpop.f32.mrf.mxu0
      %v9416 = vadd.f32 %v9367, %v9415
      %v9417 = vpop.f32.mrf.mxu0
      %v9418 = vadd.f32 %v9369, %v9417
      %9419 = vmatmul.bf16.gmra.mxu0 %v6082
      %v9420 = vpop.f32.mrf.mxu0
      %v9421 = vadd.f32 %v9372, %v9420
      %v9422 = vpop.f32.mrf.mxu0
      %v9423 = vadd.f32 %v9374, %v9422
      %9424 = vdwg.mxu0
      %9425 = vmatpush.bf16.msra.mxu0 %v7934
      %9426 = vmatpush.bf16.msra.mxu0 %v7933
      %9427 = vmatpush.bf16.msra.mxu0 %v7932
      %9428 = vmatpush.bf16.msra.mxu0 %v7931
      %9429 = vmatpush.bf16.msra.mxu0 %v7930
      %9430 = vmatpush.bf16.msra.mxu0 %v7929
      %9431 = vmatpush.bf16.msra.mxu0 %v7928
      %9432 = vmatpush.bf16.msra.mxu0 %v7927
      %9433 = vmatmul.bf16.gmra.mxu0 %v6160
      %v9434 = vpop.f32.mrf.mxu0
      %v9435 = vadd.f32 %v9386, %v9434
      %v9436 = vpop.f32.mrf.mxu0
      %v9437 = vadd.f32 %v9388, %v9436
      %9438 = vmatmul.bf16.gmra.mxu0 %v6192
      %v9439 = vpop.f32.mrf.mxu0
      %v9440 = vadd.f32 %v9391, %v9439
      %v9441 = vpop.f32.mrf.mxu0
      %v9442 = vadd.f32 %v9393, %v9441
      %9443 = vmatmul.bf16.gmra.mxu0 %v6216
      %v9444 = vpop.f32.mrf.mxu0
      %v9445 = vadd.f32 %v9396, %v9444
      %v9446 = vpop.f32.mrf.mxu0
      %v9447 = vadd.f32 %v9398, %v9446
      %9448 = vmatmul.bf16.gmra.mxu0 %v6240
      %v9449 = vpop.f32.mrf.mxu0
      %v9450 = vadd.f32 %v9401, %v9449
      %v9451 = vpop.f32.mrf.mxu0
      %v9452 = vadd.f32 %v9403, %v9451
      %9453 = vmatmul.bf16.gmra.mxu0 %v6264
      %v9454 = vpop.f32.mrf.mxu0
      %v9455 = vadd.f32 %v9406, %v9454
      %v9456 = vpop.f32.mrf.mxu0
      %v9457 = vadd.f32 %v9408, %v9456
      %9458 = vmatmul.bf16.gmra.mxu0 %v6288
      %v9459 = vpop.f32.mrf.mxu0
      %v9460 = vadd.f32 %v9411, %v9459
      %v9461 = vpop.f32.mrf.mxu0
      %v9462 = vadd.f32 %v9413, %v9461
      %9463 = vmatmul.bf16.gmra.mxu0 %v6322
      %v9464 = vpop.f32.mrf.mxu0
      %v9465 = vadd.f32 %v9416, %v9464
      %v9466 = vpop.f32.mrf.mxu0
      %v9467 = vadd.f32 %v9418, %v9466
      %9468 = vmatmul.bf16.gmra.mxu0 %v6372
      %v9469 = vpop.f32.mrf.mxu0
      %v9470 = vadd.f32 %v9421, %v9469
      %v9471 = vpop.f32.mrf.mxu0
      %v9472 = vadd.f32 %v9423, %v9471
      %9473 = vdwg.mxu0
      %v9474 = vld [vmem:[%s10] sm:$0x1]
      %v9475 = vld [vmem:[%s11] sm:$0x1]
      %v9477 = vperm.slane %v9474, 0
      %v9479 = vmul.f32 %v864, %v9477
      %v9480 = vmul.f32 %v866, %v9477
      %v9481 = vmul.f32 %v869, %v9477
      %v9482 = vmul.f32 %v871, %v9477
      %v9483 = vmul.f32 %v874, %v9477
      %v9484 = vmul.f32 %v876, %v9477
      %v9485 = vmul.f32 %v879, %v9477
      %v9486 = vmul.f32 %v881, %v9477
      %v9487 = vmul.f32 %v884, %v9477
      %v9488 = vmul.f32 %v886, %v9477
      %v9489 = vmul.f32 %v889, %v9477
      %v9490 = vmul.f32 %v891, %v9477
      %v9491 = vmul.f32 %v894, %v9477
      %v9492 = vmul.f32 %v896, %v9477
      %v9493 = vmul.f32 %v899, %v9477
      %v9494 = vmul.f32 %v901, %v9477
      %v9496 = vperm.slane %v9475, 0
      %v9498 = vadd.f32 %v9479, %v9496
      %v9499 = vadd.f32 %v9480, %v9496
      %v9500 = vadd.f32 %v9481, %v9496
      %v9501 = vadd.f32 %v9482, %v9496
      %v9502 = vadd.f32 %v9483, %v9496
      %v9503 = vadd.f32 %v9484, %v9496
      %v9504 = vadd.f32 %v9485, %v9496
      %v9505 = vadd.f32 %v9486, %v9496
      %v9506 = vadd.f32 %v9487, %v9496
      %v9507 = vadd.f32 %v9488, %v9496
      %v9508 = vadd.f32 %v9489, %v9496
      %v9509 = vadd.f32 %v9490, %v9496
      %v9510 = vadd.f32 %v9491, %v9496
      %v9511 = vadd.f32 %v9492, %v9496
      %v9512 = vadd.f32 %v9493, %v9496
      %v9513 = vadd.f32 %v9494, %v9496
      %v9514 = vmax.f32 %v9498, 0.0
      %v9515 = vmax.f32 %v9499, 0.0
      %v9516 = vmax.f32 %v9500, 0.0
      %v9517 = vmax.f32 %v9501, 0.0
      %v9518 = vmax.f32 %v9502, 0.0
      %v9519 = vmax.f32 %v9503, 0.0
      %v9520 = vmax.f32 %v9504, 0.0
      %v9521 = vmax.f32 %v9505, 0.0
      %v9522 = vmax.f32 %v9506, 0.0
      %v9523 = vmax.f32 %v9507, 0.0
      %v9524 = vmax.f32 %v9508, 0.0
      %v9525 = vmax.f32 %v9509, 0.0
      %v9526 = vmax.f32 %v9510, 0.0
      %v9527 = vmax.f32 %v9511, 0.0
      %v9528 = vmax.f32 %v9512, 0.0
      %v9529 = vmax.f32 %v9513, 0.0
      %v9530 = vpack.c.bf16 %v9514, %v9514
      %v9531 = vpack.c.bf16 %v9515, %v9515
      %v9532 = vpack.c.bf16 %v9516, %v9516
      %v9533 = vpack.c.bf16 %v9517, %v9517
      %v9534 = vpack.c.bf16 %v9518, %v9518
      %v9535 = vpack.c.bf16 %v9519, %v9519
      %v9536 = vpack.c.bf16 %v9520, %v9520
      %v9537 = vpack.c.bf16 %v9521, %v9521
      %v9538 = vpack.c.bf16 %v9522, %v9522
      %v9539 = vpack.c.bf16 %v9523, %v9523
      %v9540 = vpack.c.bf16 %v9524, %v9524
      %v9541 = vpack.c.bf16 %v9525, %v9525
      %v9542 = vpack.c.bf16 %v9526, %v9526
      %v9543 = vpack.c.bf16 %v9527, %v9527
      %v9544 = vpack.c.bf16 %v9528, %v9528
      %v9545 = vpack.c.bf16 %v9529, %v9529
      %vm9546 = vcmask 125952
      %9547 = vst.msk [vmem:[%s647] sm:$0xf] %vm9546, %v9530
      %9548 = vst.msk [vmem:[%s647 + $0x4] sm:$0xf] %vm9546, %v9531
      %9549 = vst.msk [vmem:[%s647 + $0x8] sm:$0xf] %vm9546, %v9532
      %9550 = vst.msk [vmem:[%s647 + $0xc] sm:$0xf] %vm9546, %v9533
      %9551 = vst.msk [vmem:[%s647 + $0x10] sm:$0xf] %vm9546, %v9534
      %9552 = vst.msk [vmem:[%s647 + $0x14] sm:$0xf] %vm9546, %v9535
      %9553 = vst.msk [vmem:[%s647 + $0x18] sm:$0xf] %vm9546, %v9536
      %9554 = vst.msk [vmem:[%s647 + $0x1c] sm:$0xf] %vm9546, %v9537
      %9555 = vst.msk [vmem:[%s647 + $0x20] sm:$0xf] %vm9546, %v9538
      %9556 = vst.msk [vmem:[%s647 + $0x24] sm:$0xf] %vm9546, %v9539
      %9557 = vst.msk [vmem:[%s647 + $0x28] sm:$0xf] %vm9546, %v9540
      %9558 = vst.msk [vmem:[%s647 + $0x2c] sm:$0xf] %vm9546, %v9541
      %9559 = vst.msk [vmem:[%s647 + $0x30] sm:$0xf] %vm9546, %v9542
      %9560 = vst.msk [vmem:[%s647 + $0x34] sm:$0xf] %vm9546, %v9543
      %9561 = vst.msk [vmem:[%s647 + $0x38] sm:$0xf] %vm9546, %v9544
      %9562 = vst.msk [vmem:[%s647 + $0x3c] sm:$0xf] %vm9546, %v9545
      %9563 = vrot.lane.b32.xlu0 %v9477, 112
      %v9564 = vpop.permute.xlu0 %9563
      %v9566 = vmul.f32 %v5515, %v9564
      %v9567 = vmul.f32 %v5517, %v9564
      %v9568 = vmul.f32 %v5520, %v9564
      %v9569 = vmul.f32 %v5522, %v9564
      %v9570 = vmul.f32 %v5525, %v9564
      %v9571 = vmul.f32 %v5527, %v9564
      %v9572 = vmul.f32 %v5530, %v9564
      %v9573 = vmul.f32 %v5532, %v9564
      %v9574 = vmul.f32 %v5535, %v9564
      %v9575 = vmul.f32 %v5537, %v9564
      %v9576 = vmul.f32 %v5540, %v9564
      %v9577 = vmul.f32 %v5542, %v9564
      %v9578 = vmul.f32 %v5545, %v9564
      %v9579 = vmul.f32 %v5547, %v9564
      %v9580 = vmul.f32 %v5550, %v9564
      %v9581 = vmul.f32 %v5552, %v9564
      %9582 = vrot.lane.b32.xlu0 %v9496, 112
      %v9583 = vpop.permute.xlu0 %9582
      %v9585 = vadd.f32 %v9566, %v9583
      %v9586 = vadd.f32 %v9567, %v9583
      %v9587 = vadd.f32 %v9568, %v9583
      %v9588 = vadd.f32 %v9569, %v9583
      %v9589 = vadd.f32 %v9570, %v9583
      %v9590 = vadd.f32 %v9571, %v9583
      %v9591 = vadd.f32 %v9572, %v9583
      %v9592 = vadd.f32 %v9573, %v9583
      %v9593 = vadd.f32 %v9574, %v9583
      %v9594 = vadd.f32 %v9575, %v9583
      %v9595 = vadd.f32 %v9576, %v9583
      %v9596 = vadd.f32 %v9577, %v9583
      %v9597 = vadd.f32 %v9578, %v9583
      %v9598 = vadd.f32 %v9579, %v9583
      %v9599 = vadd.f32 %v9580, %v9583
      %v9600 = vadd.f32 %v9581, %v9583
      %v9601 = vmax.f32 %v9585, 0.0
      %v9602 = vmax.f32 %v9586, 0.0
      %v9603 = vmax.f32 %v9587, 0.0
      %v9604 = vmax.f32 %v9588, 0.0
      %v9605 = vmax.f32 %v9589, 0.0
      %v9606 = vmax.f32 %v9590, 0.0
      %v9607 = vmax.f32 %v9591, 0.0
      %v9608 = vmax.f32 %v9592, 0.0
      %v9609 = vmax.f32 %v9593, 0.0
      %v9610 = vmax.f32 %v9594, 0.0
      %v9611 = vmax.f32 %v9595, 0.0
      %v9612 = vmax.f32 %v9596, 0.0
      %v9613 = vmax.f32 %v9597, 0.0
      %v9614 = vmax.f32 %v9598, 0.0
      %v9615 = vmax.f32 %v9599, 0.0
      %v9616 = vmax.f32 %v9600, 0.0
      %v9617 = vpack.c.bf16 %v9601, %v9601
      %v9618 = vpack.c.bf16 %v9602, %v9602
      %v9619 = vpack.c.bf16 %v9603, %v9603
      %v9620 = vpack.c.bf16 %v9604, %v9604
      %v9621 = vpack.c.bf16 %v9605, %v9605
      %v9622 = vpack.c.bf16 %v9606, %v9606
      %v9623 = vpack.c.bf16 %v9607, %v9607
      %v9624 = vpack.c.bf16 %v9608, %v9608
      %v9625 = vpack.c.bf16 %v9609, %v9609
      %v9626 = vpack.c.bf16 %v9610, %v9610
      %v9627 = vpack.c.bf16 %v9611, %v9611
      %v9628 = vpack.c.bf16 %v9612, %v9612
      %v9629 = vpack.c.bf16 %v9613, %v9613
      %v9630 = vpack.c.bf16 %v9614, %v9614
      %v9631 = vpack.c.bf16 %v9615, %v9615
      %v9632 = vpack.c.bf16 %v9616, %v9616
      %9649 = vrot.lane.b32.xlu0 %v9617, 16
      %v9650 = vpop.permute.xlu0 %9649
      %9651 = vrot.lane.b32.xlu0 %v9618, 16
      %v9652 = vpop.permute.xlu0 %9651
      %9653 = vrot.lane.b32.xlu0 %v9619, 16
      %v9654 = vpop.permute.xlu0 %9653
      %9655 = vrot.lane.b32.xlu0 %v9620, 16
      %v9656 = vpop.permute.xlu0 %9655
      %9657 = vrot.lane.b32.xlu0 %v9621, 16
      %v9658 = vpop.permute.xlu0 %9657
      %9659 = vrot.lane.b32.xlu0 %v9622, 16
      %v9660 = vpop.permute.xlu0 %9659
      %9661 = vrot.lane.b32.xlu0 %v9623, 16
      %v9662 = vpop.permute.xlu0 %9661
      %9663 = vrot.lane.b32.xlu0 %v9624, 16
      %v9664 = vpop.permute.xlu0 %9663
      %9665 = vrot.lane.b32.xlu0 %v9625, 16
      %v9666 = vpop.permute.xlu0 %9665
      %9667 = vrot.lane.b32.xlu0 %v9626, 16
      %v9668 = vpop.permute.xlu0 %9667
      %9669 = vrot.lane.b32.xlu0 %v9627, 16
      %v9670 = vpop.permute.xlu0 %9669
      %9671 = vrot.lane.b32.xlu0 %v9628, 16
      %v9672 = vpop.permute.xlu0 %9671
      %9673 = vrot.lane.b32.xlu0 %v9629, 16
      %v9674 = vpop.permute.xlu0 %9673
      %9675 = vrot.lane.b32.xlu0 %v9630, 16
      %v9676 = vpop.permute.xlu0 %9675
      %9677 = vrot.lane.b32.xlu0 %v9631, 16
      %v9678 = vpop.permute.xlu0 %9677
      %9679 = vrot.lane.b32.xlu0 %v9632, 16
      %v9680 = vpop.permute.xlu0 %9679
      %vm9697 = vcmask 257152
      %9698 = vst.msk [vmem:[%s647] sm:$0xf] %vm9697, %v9650
      %9699 = vst.msk [vmem:[%s647 + $0x4] sm:$0xf] %vm9697, %v9652
      %9700 = vst.msk [vmem:[%s647 + $0x8] sm:$0xf] %vm9697, %v9654
      %9701 = vst.msk [vmem:[%s647 + $0xc] sm:$0xf] %vm9697, %v9656
      %9702 = vst.msk [vmem:[%s647 + $0x10] sm:$0xf] %vm9697, %v9658
      %9703 = vst.msk [vmem:[%s647 + $0x14] sm:$0xf] %vm9697, %v9660
      %9704 = vst.msk [vmem:[%s647 + $0x18] sm:$0xf] %vm9697, %v9662
      %9705 = vst.msk [vmem:[%s647 + $0x1c] sm:$0xf] %vm9697, %v9664
      %9706 = vst.msk [vmem:[%s647 + $0x20] sm:$0xf] %vm9697, %v9666
      %9707 = vst.msk [vmem:[%s647 + $0x24] sm:$0xf] %vm9697, %v9668
      %9708 = vst.msk [vmem:[%s647 + $0x28] sm:$0xf] %vm9697, %v9670
      %9709 = vst.msk [vmem:[%s647 + $0x2c] sm:$0xf] %vm9697, %v9672
      %9710 = vst.msk [vmem:[%s647 + $0x30] sm:$0xf] %vm9697, %v9674
      %9711 = vst.msk [vmem:[%s647 + $0x34] sm:$0xf] %vm9697, %v9676
      %9712 = vst.msk [vmem:[%s647 + $0x38] sm:$0xf] %vm9697, %v9678
      %9713 = vst.msk [vmem:[%s647 + $0x3c] sm:$0xf] %vm9697, %v9680
      %9714 = vrot.lane.b32.xlu0 %v9477, 96
      %v9715 = vpop.permute.xlu0 %9714
      %v9717 = vmul.f32 %v9435, %v9715
      %v9718 = vmul.f32 %v9437, %v9715
      %v9719 = vmul.f32 %v9440, %v9715
      %v9720 = vmul.f32 %v9442, %v9715
      %v9721 = vmul.f32 %v9445, %v9715
      %v9722 = vmul.f32 %v9447, %v9715
      %v9723 = vmul.f32 %v9450, %v9715
      %v9724 = vmul.f32 %v9452, %v9715
      %v9725 = vmul.f32 %v9455, %v9715
      %v9726 = vmul.f32 %v9457, %v9715
      %v9727 = vmul.f32 %v9460, %v9715
      %v9728 = vmul.f32 %v9462, %v9715
      %v9729 = vmul.f32 %v9465, %v9715
      %v9730 = vmul.f32 %v9467, %v9715
      %v9731 = vmul.f32 %v9470, %v9715
      %v9732 = vmul.f32 %v9472, %v9715
      %9733 = vrot.lane.b32.xlu0 %v9496, 96
      %v9734 = vpop.permute.xlu0 %9733
      %v9736 = vadd.f32 %v9717, %v9734
      %v9737 = vadd.f32 %v9718, %v9734
      %v9738 = vadd.f32 %v9719, %v9734
      %v9739 = vadd.f32 %v9720, %v9734
      %v9740 = vadd.f32 %v9721, %v9734
      %v9741 = vadd.f32 %v9722, %v9734
      %v9742 = vadd.f32 %v9723, %v9734
      %v9743 = vadd.f32 %v9724, %v9734
      %v9744 = vadd.f32 %v9725, %v9734
      %v9745 = vadd.f32 %v9726, %v9734
      %v9746 = vadd.f32 %v9727, %v9734
      %v9747 = vadd.f32 %v9728, %v9734
      %v9748 = vadd.f32 %v9729, %v9734
      %v9749 = vadd.f32 %v9730, %v9734
      %v9750 = vadd.f32 %v9731, %v9734
      %v9751 = vadd.f32 %v9732, %v9734
      %v9752 = vmax.f32 %v9736, 0.0
      %v9753 = vmax.f32 %v9737, 0.0
      %v9754 = vmax.f32 %v9738, 0.0
      %v9755 = vmax.f32 %v9739, 0.0
      %v9756 = vmax.f32 %v9740, 0.0
      %v9757 = vmax.f32 %v9741, 0.0
      %v9758 = vmax.f32 %v9742, 0.0
      %v9759 = vmax.f32 %v9743, 0.0
      %v9760 = vmax.f32 %v9744, 0.0
      %v9761 = vmax.f32 %v9745, 0.0
      %v9762 = vmax.f32 %v9746, 0.0
      %v9763 = vmax.f32 %v9747, 0.0
      %v9764 = vmax.f32 %v9748, 0.0
      %v9765 = vmax.f32 %v9749, 0.0
      %v9766 = vmax.f32 %v9750, 0.0
      %v9767 = vmax.f32 %v9751, 0.0
      %v9768 = vpack.c.bf16 %v9752, %v9752
      %v9769 = vpack.c.bf16 %v9753, %v9753
      %v9770 = vpack.c.bf16 %v9754, %v9754
      %v9771 = vpack.c.bf16 %v9755, %v9755
      %v9772 = vpack.c.bf16 %v9756, %v9756
      %v9773 = vpack.c.bf16 %v9757, %v9757
      %v9774 = vpack.c.bf16 %v9758, %v9758
      %v9775 = vpack.c.bf16 %v9759, %v9759
      %v9776 = vpack.c.bf16 %v9760, %v9760
      %v9777 = vpack.c.bf16 %v9761, %v9761
      %v9778 = vpack.c.bf16 %v9762, %v9762
      %v9779 = vpack.c.bf16 %v9763, %v9763
      %v9780 = vpack.c.bf16 %v9764, %v9764
      %v9781 = vpack.c.bf16 %v9765, %v9765
      %v9782 = vpack.c.bf16 %v9766, %v9766
      %v9783 = vpack.c.bf16 %v9767, %v9767
      %9800 = vrot.lane.b32.xlu0 %v9768, 32
      %v9801 = vpop.permute.xlu0 %9800
      %9802 = vrot.lane.b32.xlu0 %v9769, 32
      %v9803 = vpop.permute.xlu0 %9802
      %9804 = vrot.lane.b32.xlu0 %v9770, 32
      %v9805 = vpop.permute.xlu0 %9804
      %9806 = vrot.lane.b32.xlu0 %v9771, 32
      %v9807 = vpop.permute.xlu0 %9806
      %9808 = vrot.lane.b32.xlu0 %v9772, 32
      %v9809 = vpop.permute.xlu0 %9808
      %9810 = vrot.lane.b32.xlu0 %v9773, 32
      %v9811 = vpop.permute.xlu0 %9810
      %9812 = vrot.lane.b32.xlu0 %v9774, 32
      %v9813 = vpop.permute.xlu0 %9812
      %9814 = vrot.lane.b32.xlu0 %v9775, 32
      %v9815 = vpop.permute.xlu0 %9814
      %9816 = vrot.lane.b32.xlu0 %v9776, 32
      %v9817 = vpop.permute.xlu0 %9816
      %9818 = vrot.lane.b32.xlu0 %v9777, 32
      %v9819 = vpop.permute.xlu0 %9818
      %9820 = vrot.lane.b32.xlu0 %v9778, 32
      %v9821 = vpop.permute.xlu0 %9820
      %9822 = vrot.lane.b32.xlu0 %v9779, 32
      %v9823 = vpop.permute.xlu0 %9822
      %9824 = vrot.lane.b32.xlu0 %v9780, 32
      %v9825 = vpop.permute.xlu0 %9824
      %9826 = vrot.lane.b32.xlu0 %v9781, 32
      %v9827 = vpop.permute.xlu0 %9826
      %9828 = vrot.lane.b32.xlu0 %v9782, 32
      %v9829 = vpop.permute.xlu0 %9828
      %9830 = vrot.lane.b32.xlu0 %v9783, 32
      %v9831 = vpop.permute.xlu0 %9830
      %vm9848 = vcmask 388352
      %9849 = vst.msk [vmem:[%s647] sm:$0xf] %vm9848, %v9801
      %9850 = vst.msk [vmem:[%s647 + $0x4] sm:$0xf] %vm9848, %v9803
      %9851 = vst.msk [vmem:[%s647 + $0x8] sm:$0xf] %vm9848, %v9805
      %9852 = vst.msk [vmem:[%s647 + $0xc] sm:$0xf] %vm9848, %v9807
      %9853 = vst.msk [vmem:[%s647 + $0x10] sm:$0xf] %vm9848, %v9809
      %9854 = vst.msk [vmem:[%s647 + $0x14] sm:$0xf] %vm9848, %v9811
      %9855 = vst.msk [vmem:[%s647 + $0x18] sm:$0xf] %vm9848, %v9813
      %9856 = vst.msk [vmem:[%s647 + $0x1c] sm:$0xf] %vm9848, %v9815
      %9857 = vst.msk [vmem:[%s647 + $0x20] sm:$0xf] %vm9848, %v9817
      %9858 = vst.msk [vmem:[%s647 + $0x24] sm:$0xf] %vm9848, %v9819
      %9859 = vst.msk [vmem:[%s647 + $0x28] sm:$0xf] %vm9848, %v9821
      %9860 = vst.msk [vmem:[%s647 + $0x2c] sm:$0xf] %vm9848, %v9823
      %9861 = vst.msk [vmem:[%s647 + $0x30] sm:$0xf] %vm9848, %v9825
      %9862 = vst.msk [vmem:[%s647 + $0x34] sm:$0xf] %vm9848, %v9827
      %9863 = vst.msk [vmem:[%s647 + $0x38] sm:$0xf] %vm9848, %v9829
      %9864 = vst.msk [vmem:[%s647 + $0x3c] sm:$0xf] %vm9848, %v9831
      %9865 = vrot.lane.b32.xlu0 %v9477, 80
      %v9866 = vpop.permute.xlu0 %9865
      %v9868 = vmul.f32 %v1467, %v9866
      %v9869 = vmul.f32 %v1469, %v9866
      %v9870 = vmul.f32 %v1472, %v9866
      %v9871 = vmul.f32 %v1474, %v9866
      %v9872 = vmul.f32 %v1477, %v9866
      %v9873 = vmul.f32 %v1479, %v9866
      %v9874 = vmul.f32 %v1482, %v9866
      %v9875 = vmul.f32 %v1484, %v9866
      %v9876 = vmul.f32 %v1487, %v9866
      %v9877 = vmul.f32 %v1489, %v9866
      %v9878 = vmul.f32 %v1492, %v9866
      %v9879 = vmul.f32 %v1494, %v9866
      %v9880 = vmul.f32 %v1497, %v9866
      %v9881 = vmul.f32 %v1499, %v9866
      %v9882 = vmul.f32 %v1502, %v9866
      %v9883 = vmul.f32 %v1504, %v9866
      %9884 = vrot.lane.b32.xlu0 %v9496, 80
      %v9885 = vpop.permute.xlu0 %9884
      %v9887 = vadd.f32 %v9868, %v9885
      %v9888 = vadd.f32 %v9869, %v9885
      %v9889 = vadd.f32 %v9870, %v9885
      %v9890 = vadd.f32 %v9871, %v9885
      %v9891 = vadd.f32 %v9872, %v9885
      %v9892 = vadd.f32 %v9873, %v9885
      %v9893 = vadd.f32 %v9874, %v9885
      %v9894 = vadd.f32 %v9875, %v9885
      %v9895 = vadd.f32 %v9876, %v9885
      %v9896 = vadd.f32 %v9877, %v9885
      %v9897 = vadd.f32 %v9878, %v9885
      %v9898 = vadd.f32 %v9879, %v9885
      %v9899 = vadd.f32 %v9880, %v9885
      %v9900 = vadd.f32 %v9881, %v9885
      %v9901 = vadd.f32 %v9882, %v9885
      %v9902 = vadd.f32 %v9883, %v9885
      %v9903 = vmax.f32 %v9887, 0.0
      %v9904 = vmax.f32 %v9888, 0.0
      %v9905 = vmax.f32 %v9889, 0.0
      %v9906 = vmax.f32 %v9890, 0.0
      %v9907 = vmax.f32 %v9891, 0.0
      %v9908 = vmax.f32 %v9892, 0.0
      %v9909 = vmax.f32 %v9893, 0.0
      %v9910 = vmax.f32 %v9894, 0.0
      %v9911 = vmax.f32 %v9895, 0.0
      %v9912 = vmax.f32 %v9896, 0.0
      %v9913 = vmax.f32 %v9897, 0.0
      %v9914 = vmax.f32 %v9898, 0.0
      %v9915 = vmax.f32 %v9899, 0.0
      %v9916 = vmax.f32 %v9900, 0.0
      %v9917 = vmax.f32 %v9901, 0.0
      %v9918 = vmax.f32 %v9902, 0.0
      %v9919 = vpack.c.bf16 %v9903, %v9903
      %v9920 = vpack.c.bf16 %v9904, %v9904
      %v9921 = vpack.c.bf16 %v9905, %v9905
      %v9922 = vpack.c.bf16 %v9906, %v9906
      %v9923 = vpack.c.bf16 %v9907, %v9907
      %v9924 = vpack.c.bf16 %v9908, %v9908
      %v9925 = vpack.c.bf16 %v9909, %v9909
      %v9926 = vpack.c.bf16 %v9910, %v9910
      %v9927 = vpack.c.bf16 %v9911, %v9911
      %v9928 = vpack.c.bf16 %v9912, %v9912
      %v9929 = vpack.c.bf16 %v9913, %v9913
      %v9930 = vpack.c.bf16 %v9914, %v9914
      %v9931 = vpack.c.bf16 %v9915, %v9915
      %v9932 = vpack.c.bf16 %v9916, %v9916
      %v9933 = vpack.c.bf16 %v9917, %v9917
      %v9934 = vpack.c.bf16 %v9918, %v9918
      %9951 = vrot.lane.b32.xlu0 %v9919, 48
      %v9952 = vpop.permute.xlu0 %9951
      %9953 = vrot.lane.b32.xlu0 %v9920, 48
      %v9954 = vpop.permute.xlu0 %9953
      %9955 = vrot.lane.b32.xlu0 %v9921, 48
      %v9956 = vpop.permute.xlu0 %9955
      %9957 = vrot.lane.b32.xlu0 %v9922, 48
      %v9958 = vpop.permute.xlu0 %9957
      %9959 = vrot.lane.b32.xlu0 %v9923, 48
      %v9960 = vpop.permute.xlu0 %9959
      %9961 = vrot.lane.b32.xlu0 %v9924, 48
      %v9962 = vpop.permute.xlu0 %9961
      %9963 = vrot.lane.b32.xlu0 %v9925, 48
      %v9964 = vpop.permute.xlu0 %9963
      %9965 = vrot.lane.b32.xlu0 %v9926, 48
      %v9966 = vpop.permute.xlu0 %9965
      %9967 = vrot.lane.b32.xlu0 %v9927, 48
      %v9968 = vpop.permute.xlu0 %9967
      %9969 = vrot.lane.b32.xlu0 %v9928, 48
      %v9970 = vpop.permute.xlu0 %9969
      %9971 = vrot.lane.b32.xlu0 %v9929, 48
      %v9972 = vpop.permute.xlu0 %9971
      %9973 = vrot.lane.b32.xlu0 %v9930, 48
      %v9974 = vpop.permute.xlu0 %9973
      %9975 = vrot.lane.b32.xlu0 %v9931, 48
      %v9976 = vpop.permute.xlu0 %9975
      %9977 = vrot.lane.b32.xlu0 %v9932, 48
      %v9978 = vpop.permute.xlu0 %9977
      %9979 = vrot.lane.b32.xlu0 %v9933, 48
      %v9980 = vpop.permute.xlu0 %9979
      %9981 = vrot.lane.b32.xlu0 %v9934, 48
      %v9982 = vpop.permute.xlu0 %9981
      %vm9999 = vcmask 519552
      %10000 = vst.msk [vmem:[%s647] sm:$0xf] %vm9999, %v9952
      %10001 = vst.msk [vmem:[%s647 + $0x4] sm:$0xf] %vm9999, %v9954
      %10002 = vst.msk [vmem:[%s647 + $0x8] sm:$0xf] %vm9999, %v9956
      %10003 = vst.msk [vmem:[%s647 + $0xc] sm:$0xf] %vm9999, %v9958
      %10004 = vst.msk [vmem:[%s647 + $0x10] sm:$0xf] %vm9999, %v9960
      %10005 = vst.msk [vmem:[%s647 + $0x14] sm:$0xf] %vm9999, %v9962
      %10006 = vst.msk [vmem:[%s647 + $0x18] sm:$0xf] %vm9999, %v9964
      %10007 = vst.msk [vmem:[%s647 + $0x1c] sm:$0xf] %vm9999, %v9966
      %10008 = vst.msk [vmem:[%s647 + $0x20] sm:$0xf] %vm9999, %v9968
      %10009 = vst.msk [vmem:[%s647 + $0x24] sm:$0xf] %vm9999, %v9970
      %10010 = vst.msk [vmem:[%s647 + $0x28] sm:$0xf] %vm9999, %v9972
      %10011 = vst.msk [vmem:[%s647 + $0x2c] sm:$0xf] %vm9999, %v9974
      %10012 = vst.msk [vmem:[%s647 + $0x30] sm:$0xf] %vm9999, %v9976
      %10013 = vst.msk [vmem:[%s647 + $0x34] sm:$0xf] %vm9999, %v9978
      %10014 = vst.msk [vmem:[%s647 + $0x38] sm:$0xf] %vm9999, %v9980
      %10015 = vst.msk [vmem:[%s647 + $0x3c] sm:$0xf] %vm9999, %v9982
      %p10016 = scmp.lt.s32.totalorder %s27, 1
      %s10017 = scalar_select %p10016, %s27, 1
      %p10018 = scmp.lt.s32.totalorder %s28, 3
      %s10019 = scalar_select %p10018, %s28, 3
      %s10020 = smul.addr %s10019, 16
      %s10021 = smul.addr %s10017, 64
      %s10022 = sadd.s32 %s10020, %s10021
      %s10023 = smul.addr %s10022, 4
      %s10024 = scalar_lea.vmem %s12, %s10023
      // Predicated region
      $region69: #{inception_forward.3} parent=67 // pred_check
        %p10025 = pneg %p357
      $region70: #{inception_forward.3} parent=67 // pred_check_branch
        %10027 = sbr.rel (%p10025) target = $region72
      $region71: #{inception_forward.3} parent=67 // pred_region
        _
      $region72: #{inception_forward.3} parent=67 // pred_fallthru
        _
    $region68: #{inception_forward.3} parent=5 // pred_fallthru
      _
    %p10028 = scmp.le.s32.totalorder 2, %s18
    // Predicated region
    $region73: #{inception_forward.3} parent=5 // pred_check
      %p10029 = pneg %p10028
    $region74: #{inception_forward.3} parent=5 // pred_check_branch
      %10031 = sbr.rel (%p10029) target = $region76
    $region75: #{inception_forward.3} parent=5 // pred_region
      %s10032 = ssub.s32 %s18, 2
      // Predicated region
      $region77: #{inception_forward.3} parent=75 // pred_check
        %p10033 = pneg %p363
      $region78: #{inception_forward.3} parent=75 // pred_check_branch
        %10035 = sbr.rel (%p10033) target = $region80
      $region79: #{inception_forward.3} parent=75 // pred_region
        %p10036 = scmp.lt.s32.totalorder %s29, 1
        %s10037 = scalar_select %p10036, %s29, 1
        %p10038 = scmp.lt.s32.totalorder %s30, 3
        %s10039 = scalar_select %p10038, %s30, 3
        %s10040 = smul.addr %s10039, 16
        %s10041 = smul.addr %s10037, 64
        %s10042 = sadd.s32 %s10040, %s10041
        %s10043 = smul.addr %s10042, 4
        %s10044 = scalar_lea.vmem %s12, %s10043
      $region80: #{inception_forward.3} parent=75 // pred_fallthru
        _
    $region76: #{inception_forward.3} parent=5 // pred_fallthru
      _
  $region6: #{inception_forward.3} parent=0 // loop_footer
    %s22 = sadd.s32 1, %s18
  $region7: #{inception_forward.3} parent=0 // loop_footer_branch
    %17 = sbr.rel target = $region3
  $region8: #{inception_forward.3} parent=0 // loop_exit
    _

</llo_original>
